<compile_context>
chip_gen: v7x
topology: tpu7x:2x2x1
jax: 0.10.0
libtpu: 0.0.40
codegen_flags: <defaults>
</compile_context>

<pallas_src>
import functools

import jax
import jax.numpy as jnp
from jax.experimental import pallas as pl
from jax.experimental.pallas import tpu as pltpu


def _pick_channel_block(C, N, target=1152):
    """Channel block: divisor of C, multiple of 128, <= target (else C).

    When N == 1 the only source of v7x two-TensorCore parallelism is the
    channel grid axis, so prefer an even number of channel blocks (cap the
    target at C//2 when that is still a multiple of 128)."""
    if N == 1:
        half = C // 2
        if half >= 128 and half % 128 == 0 and C % half == 0:
            target = min(target, half)
    if C <= target:
        return C
    best = None
    for cb in range(128, target + 1, 128):
        if C % cb == 0:
            best = cb
    return best if best is not None else C


def _pick_sub_block(CB, target=384):
    """Largest divisor of CB that is a multiple of 128 and <= target (else CB)."""
    if CB <= target:
        return CB
    best = CB
    for cs in range(128, target + 1, 128):
        if CB % cs == 0:
            best = cs
    return best


def _dwconv_kernel(x_ref, w_ref, o_ref, cols_ref, *,
                   H_in, W_in, H_out, W_out, KH, KW, PH, PW, CSUB):
    # x_ref:    (1, H_in, W_in, CB)    unpadded NHWC input channel-block
    # w_ref:    (KH, KW, CB)           depthwise taps
    # o_ref:    (1, H_out, W_out, CB)  NHWC output channel-block
    # cols_ref: (KW, H_in, W_out, CB)  VMEM scratch: KW column-shifted,
    #           width-zero-padded copies: cols[kw][ih, ow] = x[ih, ow + kw - PW]
    #           (or 0 when out of range).  No vertical halo is stored.
    cb = cols_ref.shape[-1]
    dt = cols_ref.dtype

    # ---- build the KW column-shifted copies (width halo only) --------------
    for kw in range(KW):
        dlo = max(0, PW - kw)                     # first in-range output col
        dhi = min(W_out, W_in + PW - kw)          # one past the last in-range
        if dlo > 0:                               # left zero columns
            cols_ref[kw, :, 0:dlo, :] = jnp.zeros((H_in, dlo, cb), dt)
        if dhi < W_out:                           # right zero columns
            cols_ref[kw, :, dhi:W_out, :] = jnp.zeros((H_in, W_out - dhi, cb), dt)
        if dhi > dlo:                             # interior shifted copy
            slo = dlo + kw - PW
            shi = dhi + kw - PW
            cols_ref[kw, :, dlo:dhi, :] = x_ref[0, :, slo:shi, :]

    # ---- row-resident accumulation ------------------------------------------
    # For each channel chunk, keep the whole (H_out, W_out, CSUB) accumulator
    # in registers (as H_out row tiles), load every input row of cols once per
    # kw, and scatter-accumulate it into each output row it contributes to.
    n_sub = cb // CSUB
    for cs in range(n_sub):
        lo = cs * CSUB
        acc = [None] * H_out
        for kw in range(KW):
            # One broadcast per tap, hoisted out of the row loop.
            taps = [
                jnp.broadcast_to(
                    w_ref[kh, kw, lo:lo + CSUB].astype(jnp.float32),
                    (W_out, CSUB))
                for kh in range(KH)
            ]
            for ih in range(H_in):
                # Aligned load: ih / kw are major-axis indices, lo is a
                # 128-aligned lane offset -> no sublane relayout.
                row = cols_ref[kw, ih, :, lo:lo + CSUB].astype(jnp.float32)
                for kh in range(KH):
                    oh = ih + PH - kh
                    if 0 <= oh < H_out:
                        term = row * taps[kh]
                        acc[oh] = term if acc[oh] is None else acc[oh] + term
        for oh in range(H_out):
            val = acc[oh]
            if val is None:   # unreachable for pad < kernel, kept for safety
                val = jnp.zeros((W_out, CSUB), jnp.float32)
            o_ref[0, oh, :, lo:lo + CSUB] = val.astype(o_ref.dtype)


def depthwise_conv2d_nhwc(x_nhwc, w_khwc, *, padding=(2, 2),
                          allow_input_fusion=True):
    """Depthwise conv, stride 1. x: (N,H,W,C); w: (KH,KW,C); returns NHWC."""
    N, H, W, C = x_nhwc.shape
    KH, KW, Cw = w_khwc.shape
    assert Cw == C
    ph, pw = padding
    Ho = H + 2 * ph - KH + 1
    Wo = W + 2 * pw - KW + 1

    CB = _pick_channel_block(C, N)
    CSUB = _pick_sub_block(CB)
    assert C % CB == 0 and CB % CSUB == 0

    kernel = functools.partial(
        _dwconv_kernel,
        H_in=H, W_in=W, H_out=Ho, W_out=Wo,
        KH=KH, KW=KW, PH=ph, PW=pw, CSUB=CSUB)

    return pl.pallas_call(
        kernel,
        out_shape=jax.ShapeDtypeStruct((N, Ho, Wo, C), x_nhwc.dtype),
        grid_spec=pltpu.PrefetchScalarGridSpec(
            num_scalar_prefetch=0,
            # Channel blocks outermost, batch innermost: the weight block
            # index is constant across consecutive steps (no re-DMA for N>1).
            grid=(C // CB, N),
            in_specs=[
                pl.BlockSpec((1, H, W, CB), lambda c, n: (n, 0, 0, c)),
                pl.BlockSpec((KH, KW, CB), lambda c, n: (0, 0, c)),
            ],
            out_specs=pl.BlockSpec((1, Ho, Wo, CB), lambda c, n: (n, 0, 0, c)),
            scratch_shapes=[
                pltpu.VMEM((KW, H, Wo, CB), x_nhwc.dtype),
            ],
        ),
        compiler_params=pltpu.CompilerParams(
            dimension_semantics=("parallel", "parallel"),
            # Let XLA fuse the producing transpose (NCHW->NHWC relayout) into
            # this kernel's operand pipeline instead of a standalone HBM pass.
            allow_input_fusion=[True, True] if allow_input_fusion else None,
        ),
    )(x_nhwc, w_khwc)


def depthwise_conv2d(x_nchw, weight_oihw, *, padding=(2, 2)):
    """Drop-in NCHW interface matching the PyTorch module.

    x: (N,C,H,W); weight: (C,1,KH,KW); returns (N,C,Ho,Wo).
    """
    # TODO(synk): keep producer/consumer in NHWC to remove these relayouts
    # completely (the input-side one can be fused via allow_input_fusion).
    x_nhwc = jnp.transpose(x_nchw, (0, 2, 3, 1))                  # (N,H,W,C)
    w_khwc = jnp.transpose(weight_oihw[:, 0, :, :], (1, 2, 0))    # (KH,KW,C)
    out_nhwc = depthwise_conv2d_nhwc(x_nhwc, w_khwc, padding=padding)
    return jnp.transpose(out_nhwc, (0, 3, 1, 2))                  # (N,C,Ho,Wo)


if __name__ == "__main__":
    # Exact module configuration: depthwise 5x5, stride 1, pad 2, 7x7 spatial.
    N, C, H, W = 1, 2304, 7, 7
    KH, KW = 5, 5

    key = jax.random.PRNGKey(0)
    k_x, k_w = jax.random.split(key)
    x = jax.random.normal(k_x, (N, C, H, W), dtype=jnp.float32)
    weight = jax.random.normal(k_w, (C, 1, KH, KW), dtype=jnp.float32) * 0.05

    out = jax.jit(depthwise_conv2d)(x, weight)
    out = jax.block_until_ready(out)

    # Reference: XLA grouped conv (same semantics as the PyTorch module).
    ref = jax.lax.conv_general_dilated(
        x, weight,
        window_strides=(1, 1),
        padding=((2, 2), (2, 2)),
        dimension_numbers=("NCHW", "OIHW", "NCHW"),
        feature_group_count=C,
    )
    assert out.shape == (N, C, H, W)
    assert jnp.allclose(out, ref, atol=1e-4, rtol=1e-4)

    # Also exercise the small / multi-block path (CB=128 -> 2 channel blocks).
    Cs = 256
    xs = jax.random.normal(k_x, (N, Cs, H, W), dtype=jnp.float32)
    ws = jax.random.normal(k_w, (Cs, 1, KH, KW), dtype=jnp.float32) * 0.05
    outs = jax.block_until_ready(jax.jit(depthwise_conv2d)(xs, ws))
    refs = jax.lax.conv_general_dilated(
        xs, ws, window_strides=(1, 1), padding=((2, 2), (2, 2)),
        dimension_numbers=("NCHW", "OIHW", "NCHW"), feature_group_count=Cs)
    assert jnp.allclose(outs, refs, atol=1e-4, rtol=1e-4)

    print("KERNEL_OK")
</pallas_src>

<mosaic_0001>
module attributes {stable_mosaic.version = 11 : i64} {
  func.func @_dwconv_kernel(%arg0: i32, %arg1: i32, %arg2: memref<1x7x7x1152xf32, #tpu.memory_space<vmem>>, %arg3: memref<5x5x1152xf32, #tpu.memory_space<vmem>>, %arg4: memref<1x7x7x1152xf32, #tpu.memory_space<vmem>>, %arg5: memref<5x7x7x1152xf32, #tpu.memory_space<vmem>>) attributes {dimension_semantics = [#tpu.dimension_semantics<parallel>, #tpu.dimension_semantics<parallel>], iteration_bounds = array<i64: 2, 1>, scalar_prefetch = 0 : i64, scratch_operands = 1 : i64, tpu.core_type = #tpu.core_type<tc>, window_params = [{transform_indices = @transform_0, window_bounds = array<i64: 1, 7, 7, 1152>}, {transform_indices = @transform_1, window_bounds = array<i64: 5, 5, 1152>}, {transform_indices = @transform_2, window_bounds = array<i64: 1, 7, 7, 1152>}]} {
    %cst = arith.constant 0.000000e+00 : f32
    %0 = vector.broadcast %cst : f32 to vector<7x2x1152xf32>
    %c0 = arith.constant 0 : index
    %c0_0 = arith.constant 0 : index
    %c0_1 = arith.constant 0 : index
    %c0_2 = arith.constant 0 : index
    %1 = vector.load %arg5[%c0, %c0_0, %c0_1, %c0_2] : memref<5x7x7x1152xf32, #tpu.memory_space<vmem>>, vector<1x7x2x1152xf32>
    %2 = vector.shape_cast %1 : vector<1x7x2x1152xf32> to vector<7x2x1152xf32>
    %3 = vector.shape_cast %0 : vector<7x2x1152xf32> to vector<1x7x2x1152xf32>
    tpu.vector_store %arg5[%c0, %c0_0, %c0_1, %c0_2], %3 {strides = array<i32>} : memref<5x7x7x1152xf32, #tpu.memory_space<vmem>>, vector<1x7x2x1152xf32>,
    %c0_3 = arith.constant 0 : index
    %c0_4 = arith.constant 0 : index
    %c0_5 = arith.constant 0 : index
    %c0_6 = arith.constant 0 : index
    %4 = vector.load %arg2[%c0_3, %c0_4, %c0_5, %c0_6] : memref<1x7x7x1152xf32, #tpu.memory_space<vmem>>, vector<1x7x5x1152xf32>
    %5 = vector.shape_cast %4 : vector<1x7x5x1152xf32> to vector<7x5x1152xf32>
    %c0_7 = arith.constant 0 : index
    %c0_8 = arith.constant 0 : index
    %c2 = arith.constant 2 : index
    %c0_9 = arith.constant 0 : index
    %6 = vector.load %arg5[%c0_7, %c0_8, %c2, %c0_9] : memref<5x7x7x1152xf32, #tpu.memory_space<vmem>>, vector<1x7x5x1152xf32>
    %7 = vector.shape_cast %6 : vector<1x7x5x1152xf32> to vector<7x5x1152xf32>
    %8 = vector.shape_cast %5 : vector<7x5x1152xf32> to vector<1x7x5x1152xf32>
    tpu.vector_store %arg5[%c0_7, %c0_8, %c2, %c0_9], %8 {strides = array<i32>} : memref<5x7x7x1152xf32, #tpu.memory_space<vmem>>, vector<1x7x5x1152xf32>,
    %cst_10 = arith.constant 0.000000e+00 : f32
    %9 = vector.broadcast %cst_10 : f32 to vector<7x1x1152xf32>
    %c1 = arith.constant 1 : index
    %c0_11 = arith.constant 0 : index
    %c0_12 = arith.constant 0 : index
    %c0_13 = arith.constant 0 : index
    %10 = vector.load %arg5[%c1, %c0_11, %c0_12, %c0_13] : memref<5x7x7x1152xf32, #tpu.memory_space<vmem>>, vector<1x7x1x1152xf32>
    %11 = vector.shape_cast %10 : vector<1x7x1x1152xf32> to vector<7x1x1152xf32>
    %12 = vector.shape_cast %9 : vector<7x1x1152xf32> to vector<1x7x1x1152xf32>
    tpu.vector_store %arg5[%c1, %c0_11, %c0_12, %c0_13], %12 {strides = array<i32>} : memref<5x7x7x1152xf32, #tpu.memory_space<vmem>>, vector<1x7x1x1152xf32>,
    %c0_14 = arith.constant 0 : index
    %c0_15 = arith.constant 0 : index
    %c0_16 = arith.constant 0 : index
    %c0_17 = arith.constant 0 : index
    %13 = vector.load %arg2[%c0_14, %c0_15, %c0_16, %c0_17] : memref<1x7x7x1152xf32, #tpu.memory_space<vmem>>, vector<1x7x6x1152xf32>
    %14 = vector.shape_cast %13 : vector<1x7x6x1152xf32> to vector<7x6x1152xf32>
    %c1_18 = arith.constant 1 : index
    %c0_19 = arith.constant 0 : index
    %c1_20 = arith.constant 1 : index
    %c0_21 = arith.constant 0 : index
    %15 = vector.load %arg5[%c1_18, %c0_19, %c1_20, %c0_21] : memref<5x7x7x1152xf32, #tpu.memory_space<vmem>>, vector<1x7x6x1152xf32>
    %16 = vector.shape_cast %15 : vector<1x7x6x1152xf32> to vector<7x6x1152xf32>
    %17 = vector.shape_cast %14 : vector<7x6x1152xf32> to vector<1x7x6x1152xf32>
    tpu.vector_store %arg5[%c1_18, %c0_19, %c1_20, %c0_21], %17 {strides = array<i32>} : memref<5x7x7x1152xf32, #tpu.memory_space<vmem>>, vector<1x7x6x1152xf32>,
    %c0_22 = arith.constant 0 : index
    %c0_23 = arith.constant 0 : index
    %c0_24 = arith.constant 0 : index
    %c0_25 = arith.constant 0 : index
    %18 = vector.load %arg2[%c0_22, %c0_23, %c0_24, %c0_25] : memref<1x7x7x1152xf32, #tpu.memory_space<vmem>>, vector<1x7x7x1152xf32>
    %19 = vector.shape_cast %18 : vector<1x7x7x1152xf32> to vector<7x7x1152xf32>
    %c2_26 = arith.constant 2 : index
    %c0_27 = arith.constant 0 : index
    %c0_28 = arith.constant 0 : index
    %c0_29 = arith.constant 0 : index
    %20 = vector.load %arg5[%c2_26, %c0_27, %c0_28, %c0_29] : memref<5x7x7x1152xf32, #tpu.memory_space<vmem>>, vector<1x7x7x1152xf32>
    %21 = vector.shape_cast %20 : vector<1x7x7x1152xf32> to vector<7x7x1152xf32>
    %22 = vector.shape_cast %19 : vector<7x7x1152xf32> to vector<1x7x7x1152xf32>
    tpu.vector_store %arg5[%c2_26, %c0_27, %c0_28, %c0_29], %22 {strides = array<i32>} : memref<5x7x7x1152xf32, #tpu.memory_space<vmem>>, vector<1x7x7x1152xf32>,
    %cst_30 = arith.constant 0.000000e+00 : f32
    %23 = vector.broadcast %cst_30 : f32 to vector<7x1x1152xf32>
    %c3 = arith.constant 3 : index
    %c0_31 = arith.constant 0 : index
    %c6 = arith.constant 6 : index
    %c0_32 = arith.constant 0 : index
    %24 = vector.load %arg5[%c3, %c0_31, %c6, %c0_32] : memref<5x7x7x1152xf32, #tpu.memory_space<vmem>>, vector<1x7x1x1152xf32>
    %25 = vector.shape_cast %24 : vector<1x7x1x1152xf32> to vector<7x1x1152xf32>
    %26 = vector.shape_cast %23 : vector<7x1x1152xf32> to vector<1x7x1x1152xf32>
    tpu.vector_store %arg5[%c3, %c0_31, %c6, %c0_32], %26 {strides = array<i32>} : memref<5x7x7x1152xf32, #tpu.memory_space<vmem>>, vector<1x7x1x1152xf32>,
    %c0_33 = arith.constant 0 : index
    %c0_34 = arith.constant 0 : index
    %c1_35 = arith.constant 1 : index
    %c0_36 = arith.constant 0 : index
    %27 = vector.load %arg2[%c0_33, %c0_34, %c1_35, %c0_36] : memref<1x7x7x1152xf32, #tpu.memory_space<vmem>>, vector<1x7x6x1152xf32>
    %28 = vector.shape_cast %27 : vector<1x7x6x1152xf32> to vector<7x6x1152xf32>
    %c3_37 = arith.constant 3 : index
    %c0_38 = arith.constant 0 : index
    %c0_39 = arith.constant 0 : index
    %c0_40 = arith.constant 0 : index
    %29 = vector.load %arg5[%c3_37, %c0_38, %c0_39, %c0_40] : memref<5x7x7x1152xf32, #tpu.memory_space<vmem>>, vector<1x7x6x1152xf32>
    %30 = vector.shape_cast %29 : vector<1x7x6x1152xf32> to vector<7x6x1152xf32>
    %31 = vector.shape_cast %28 : vector<7x6x1152xf32> to vector<1x7x6x1152xf32>
    tpu.vector_store %arg5[%c3_37, %c0_38, %c0_39, %c0_40], %31 {strides = array<i32>} : memref<5x7x7x1152xf32, #tpu.memory_space<vmem>>, vector<1x7x6x1152xf32>,
    %cst_41 = arith.constant 0.000000e+00 : f32
    %32 = vector.broadcast %cst_41 : f32 to vector<7x2x1152xf32>
    %c4 = arith.constant 4 : index
    %c0_42 = arith.constant 0 : index
    %c5 = arith.constant 5 : index
    %c0_43 = arith.constant 0 : index
    %33 = vector.load %arg5[%c4, %c0_42, %c5, %c0_43] : memref<5x7x7x1152xf32, #tpu.memory_space<vmem>>, vector<1x7x2x1152xf32>
    %34 = vector.shape_cast %33 : vector<1x7x2x1152xf32> to vector<7x2x1152xf32>
    %35 = vector.shape_cast %32 : vector<7x2x1152xf32> to vector<1x7x2x1152xf32>
    tpu.vector_store %arg5[%c4, %c0_42, %c5, %c0_43], %35 {strides = array<i32>} : memref<5x7x7x1152xf32, #tpu.memory_space<vmem>>, vector<1x7x2x1152xf32>,
    %c0_44 = arith.constant 0 : index
    %c0_45 = arith.constant 0 : index
    %c2_46 = arith.constant 2 : index
    %c0_47 = arith.constant 0 : index
    %36 = vector.load %arg2[%c0_44, %c0_45, %c2_46, %c0_47] : memref<1x7x7x1152xf32, #tpu.memory_space<vmem>>, vector<1x7x5x1152xf32>
    %37 = vector.shape_cast %36 : vector<1x7x5x1152xf32> to vector<7x5x1152xf32>
    %c4_48 = arith.constant 4 : index
    %c0_49 = arith.constant 0 : index
    %c0_50 = arith.constant 0 : index
    %c0_51 = arith.constant 0 : index
    %38 = vector.load %arg5[%c4_48, %c0_49, %c0_50, %c0_51] : memref<5x7x7x1152xf32, #tpu.memory_space<vmem>>, vector<1x7x5x1152xf32>
    %39 = vector.shape_cast %38 : vector<1x7x5x1152xf32> to vector<7x5x1152xf32>
    %40 = vector.shape_cast %37 : vector<7x5x1152xf32> to vector<1x7x5x1152xf32>
    tpu.vector_store %arg5[%c4_48, %c0_49, %c0_50, %c0_51], %40 {strides = array<i32>} : memref<5x7x7x1152xf32, #tpu.memory_space<vmem>>, vector<1x7x5x1152xf32>,
    %c0_52 = arith.constant 0 : index
    %c0_53 = arith.constant 0 : index
    %c0_54 = arith.constant 0 : index
    %41 = vector.load %arg3[%c0_52, %c0_53, %c0_54] : memref<5x5x1152xf32, #tpu.memory_space<vmem>>, vector<1x1x384xf32>
    %42 = vector.shape_cast %41 : vector<1x1x384xf32> to vector<384xf32>
    %43 = vector.shape_cast %42 : vector<384xf32> to vector<1x384xf32>
    %44 = vector.broadcast %43 : vector<1x384xf32> to vector<7x384xf32>
    %c1_55 = arith.constant 1 : index
    %c0_56 = arith.constant 0 : index
    %c0_57 = arith.constant 0 : index
    %45 = vector.load %arg3[%c1_55, %c0_56, %c0_57] : memref<5x5x1152xf32, #tpu.memory_space<vmem>>, vector<1x1x384xf32>
    %46 = vector.shape_cast %45 : vector<1x1x384xf32> to vector<384xf32>
    %47 = vector.shape_cast %46 : vector<384xf32> to vector<1x384xf32>
    %48 = vector.broadcast %47 : vector<1x384xf32> to vector<7x384xf32>
    %c2_58 = arith.constant 2 : index
    %c0_59 = arith.constant 0 : index
    %c0_60 = arith.constant 0 : index
    %49 = vector.load %arg3[%c2_58, %c0_59, %c0_60] : memref<5x5x1152xf32, #tpu.memory_space<vmem>>, vector<1x1x384xf32>
    %50 = vector.shape_cast %49 : vector<1x1x384xf32> to vector<384xf32>
    %51 = vector.shape_cast %50 : vector<384xf32> to vector<1x384xf32>
    %52 = vector.broadcast %51 : vector<1x384xf32> to vector<7x384xf32>
    %c3_61 = arith.constant 3 : index
    %c0_62 = arith.constant 0 : index
    %c0_63 = arith.constant 0 : index
    %53 = vector.load %arg3[%c3_61, %c0_62, %c0_63] : memref<5x5x1152xf32, #tpu.memory_space<vmem>>, vector<1x1x384xf32>
    %54 = vector.shape_cast %53 : vector<1x1x384xf32> to vector<384xf32>
    %55 = vector.shape_cast %54 : vector<384xf32> to vector<1x384xf32>
    %56 = vector.broadcast %55 : vector<1x384xf32> to vector<7x384xf32>
    %c4_64 = arith.constant 4 : index
    %c0_65 = arith.constant 0 : index
    %c0_66 = arith.constant 0 : index
    %57 = vector.load %arg3[%c4_64, %c0_65, %c0_66] : memref<5x5x1152xf32, #tpu.memory_space<vmem>>, vector<1x1x384xf32>
    %58 = vector.shape_cast %57 : vector<1x1x384xf32> to vector<384xf32>
    %59 = vector.shape_cast %58 : vector<384xf32> to vector<1x384xf32>
    %60 = vector.broadcast %59 : vector<1x384xf32> to vector<7x384xf32>
    %c0_67 = arith.constant 0 : index
    %c0_68 = arith.constant 0 : index
    %c0_69 = arith.constant 0 : index
    %c0_70 = arith.constant 0 : index
    %61 = vector.load %arg5[%c0_67, %c0_68, %c0_69, %c0_70] : memref<5x7x7x1152xf32, #tpu.memory_space<vmem>>, vector<1x1x7x384xf32>
    %62 = vector.shape_cast %61 : vector<1x1x7x384xf32> to vector<7x384xf32>
    %63 = arith.mulf %62, %44 : vector<7x384xf32>
    %64 = arith.mulf %62, %48 : vector<7x384xf32>
    %65 = arith.mulf %62, %52 : vector<7x384xf32>
    %c0_71 = arith.constant 0 : index
    %c1_72 = arith.constant 1 : index
    %c0_73 = arith.constant 0 : index
    %c0_74 = arith.constant 0 : index
    %66 = vector.load %arg5[%c0_71, %c1_72, %c0_73, %c0_74] : memref<5x7x7x1152xf32, #tpu.memory_space<vmem>>, vector<1x1x7x384xf32>
    %67 = vector.shape_cast %66 : vector<1x1x7x384xf32> to vector<7x384xf32>
    %68 = arith.mulf %67, %44 : vector<7x384xf32>
    %69 = arith.mulf %67, %48 : vector<7x384xf32>
    %70 = arith.addf %63, %69 : vector<7x384xf32>
    %71 = arith.mulf %67, %52 : vector<7x384xf32>
    %72 = arith.addf %64, %71 : vector<7x384xf32>
    %73 = arith.mulf %67, %56 : vector<7x384xf32>
    %74 = arith.addf %65, %73 : vector<7x384xf32>
    %c0_75 = arith.constant 0 : index
    %c2_76 = arith.constant 2 : index
    %c0_77 = arith.constant 0 : index
    %c0_78 = arith.constant 0 : index
    %75 = vector.load %arg5[%c0_75, %c2_76, %c0_77, %c0_78] : memref<5x7x7x1152xf32, #tpu.memory_space<vmem>>, vector<1x1x7x384xf32>
    %76 = vector.shape_cast %75 : vector<1x1x7x384xf32> to vector<7x384xf32>
    %77 = arith.mulf %76, %44 : vector<7x384xf32>
    %78 = arith.mulf %76, %48 : vector<7x384xf32>
    %79 = arith.addf %68, %78 : vector<7x384xf32>
    %80 = arith.mulf %76, %52 : vector<7x384xf32>
    %81 = arith.addf %70, %80 : vector<7x384xf32>
    %82 = arith.mulf %76, %56 : vector<7x384xf32>
    %83 = arith.addf %72, %82 : vector<7x384xf32>
    %84 = arith.mulf %76, %60 : vector<7x384xf32>
    %85 = arith.addf %74, %84 : vector<7x384xf32>
    %c0_79 = arith.constant 0 : index
    %c3_80 = arith.constant 3 : index
    %c0_81 = arith.constant 0 : index
    %c0_82 = arith.constant 0 : index
    %86 = vector.load %arg5[%c0_79, %c3_80, %c0_81, %c0_82] : memref<5x7x7x1152xf32, #tpu.memory_space<vmem>>, vector<1x1x7x384xf32>
    %87 = vector.shape_cast %86 : vector<1x1x7x384xf32> to vector<7x384xf32>
    %88 = arith.mulf %87, %44 : vector<7x384xf32>
    %89 = arith.mulf %87, %48 : vector<7x384xf32>
    %90 = arith.addf %77, %89 : vector<7x384xf32>
    %91 = arith.mulf %87, %52 : vector<7x384xf32>
    %92 = arith.addf %79, %91 : vector<7x384xf32>
    %93 = arith.mulf %87, %56 : vector<7x384xf32>
    %94 = arith.addf %81, %93 : vector<7x384xf32>
    %95 = arith.mulf %87, %60 : vector<7x384xf32>
    %96 = arith.addf %83, %95 : vector<7x384xf32>
    %c0_83 = arith.constant 0 : index
    %c4_84 = arith.constant 4 : index
    %c0_85 = arith.constant 0 : index
    %c0_86 = arith.constant 0 : index
    %97 = vector.load %arg5[%c0_83, %c4_84, %c0_85, %c0_86] : memref<5x7x7x1152xf32, #tpu.memory_space<vmem>>, vector<1x1x7x384xf32>
    %98 = vector.shape_cast %97 : vector<1x1x7x384xf32> to vector<7x384xf32>
    %99 = arith.mulf %98, %44 : vector<7x384xf32>
    %100 = arith.mulf %98, %48 : vector<7x384xf32>
    %101 = arith.addf %88, %100 : vector<7x384xf32>
    %102 = arith.mulf %98, %52 : vector<7x384xf32>
    %103 = arith.addf %90, %102 : vector<7x384xf32>
    %104 = arith.mulf %98, %56 : vector<7x384xf32>
    %105 = arith.addf %92, %104 : vector<7x384xf32>
    %106 = arith.mulf %98, %60 : vector<7x384xf32>
    %107 = arith.addf %94, %106 : vector<7x384xf32>
    %c0_87 = arith.constant 0 : index
    %c5_88 = arith.constant 5 : index
    %c0_89 = arith.constant 0 : index
    %c0_90 = arith.constant 0 : index
    %108 = vector.load %arg5[%c0_87, %c5_88, %c0_89, %c0_90] : memref<5x7x7x1152xf32, #tpu.memory_space<vmem>>, vector<1x1x7x384xf32>
    %109 = vector.shape_cast %108 : vector<1x1x7x384xf32> to vector<7x384xf32>
    %110 = arith.mulf %109, %48 : vector<7x384xf32>
    %111 = arith.addf %99, %110 : vector<7x384xf32>
    %112 = arith.mulf %109, %52 : vector<7x384xf32>
    %113 = arith.addf %101, %112 : vector<7x384xf32>
    %114 = arith.mulf %109, %56 : vector<7x384xf32>
    %115 = arith.addf %103, %114 : vector<7x384xf32>
    %116 = arith.mulf %109, %60 : vector<7x384xf32>
    %117 = arith.addf %105, %116 : vector<7x384xf32>
    %c0_91 = arith.constant 0 : index
    %c6_92 = arith.constant 6 : index
    %c0_93 = arith.constant 0 : index
    %c0_94 = arith.constant 0 : index
    %118 = vector.load %arg5[%c0_91, %c6_92, %c0_93, %c0_94] : memref<5x7x7x1152xf32, #tpu.memory_space<vmem>>, vector<1x1x7x384xf32>
    %119 = vector.shape_cast %118 : vector<1x1x7x384xf32> to vector<7x384xf32>
    %120 = arith.mulf %119, %52 : vector<7x384xf32>
    %121 = arith.addf %111, %120 : vector<7x384xf32>
    %122 = arith.mulf %119, %56 : vector<7x384xf32>
    %123 = arith.addf %113, %122 : vector<7x384xf32>
    %124 = arith.mulf %119, %60 : vector<7x384xf32>
    %125 = arith.addf %115, %124 : vector<7x384xf32>
    %c0_95 = arith.constant 0 : index
    %c1_96 = arith.constant 1 : index
    %c0_97 = arith.constant 0 : index
    %126 = vector.load %arg3[%c0_95, %c1_96, %c0_97] : memref<5x5x1152xf32, #tpu.memory_space<vmem>>, vector<1x1x384xf32>
    %127 = vector.shape_cast %126 : vector<1x1x384xf32> to vector<384xf32>
    %128 = vector.shape_cast %127 : vector<384xf32> to vector<1x384xf32>
    %129 = vector.broadcast %128 : vector<1x384xf32> to vector<7x384xf32>
    %c1_98 = arith.constant 1 : index
    %c1_99 = arith.constant 1 : index
    %c0_100 = arith.constant 0 : index
    %130 = vector.load %arg3[%c1_98, %c1_99, %c0_100] : memref<5x5x1152xf32, #tpu.memory_space<vmem>>, vector<1x1x384xf32>
    %131 = vector.shape_cast %130 : vector<1x1x384xf32> to vector<384xf32>
    %132 = vector.shape_cast %131 : vector<384xf32> to vector<1x384xf32>
    %133 = vector.broadcast %132 : vector<1x384xf32> to vector<7x384xf32>
    %c2_101 = arith.constant 2 : index
    %c1_102 = arith.constant 1 : index
    %c0_103 = arith.constant 0 : index
    %134 = vector.load %arg3[%c2_101, %c1_102, %c0_103] : memref<5x5x1152xf32, #tpu.memory_space<vmem>>, vector<1x1x384xf32>
    %135 = vector.shape_cast %134 : vector<1x1x384xf32> to vector<384xf32>
    %136 = vector.shape_cast %135 : vector<384xf32> to vector<1x384xf32>
    %137 = vector.broadcast %136 : vector<1x384xf32> to vector<7x384xf32>
    %c3_104 = arith.constant 3 : index
    %c1_105 = arith.constant 1 : index
    %c0_106 = arith.constant 0 : index
    %138 = vector.load %arg3[%c3_104, %c1_105, %c0_106] : memref<5x5x1152xf32, #tpu.memory_space<vmem>>, vector<1x1x384xf32>
    %139 = vector.shape_cast %138 : vector<1x1x384xf32> to vector<384xf32>
    %140 = vector.shape_cast %139 : vector<384xf32> to vector<1x384xf32>
    %141 = vector.broadcast %140 : vector<1x384xf32> to vector<7x384xf32>
    %c4_107 = arith.constant 4 : index
    %c1_108 = arith.constant 1 : index
    %c0_109 = arith.constant 0 : index
    %142 = vector.load %arg3[%c4_107, %c1_108, %c0_109] : memref<5x5x1152xf32, #tpu.memory_space<vmem>>, vector<1x1x384xf32>
    %143 = vector.shape_cast %142 : vector<1x1x384xf32> to vector<384xf32>
    %144 = vector.shape_cast %143 : vector<384xf32> to vector<1x384xf32>
    %145 = vector.broadcast %144 : vector<1x384xf32> to vector<7x384xf32>
    %c1_110 = arith.constant 1 : index
    %c0_111 = arith.constant 0 : index
    %c0_112 = arith.constant 0 : index
    %c0_113 = arith.constant 0 : index
    %146 = vector.load %arg5[%c1_110, %c0_111, %c0_112, %c0_113] : memref<5x7x7x1152xf32, #tpu.memory_space<vmem>>, vector<1x1x7x384xf32>
    %147 = vector.shape_cast %146 : vector<1x1x7x384xf32> to vector<7x384xf32>
    %148 = arith.mulf %147, %129 : vector<7x384xf32>
    %149 = arith.addf %107, %148 : vector<7x384xf32>
    %150 = arith.mulf %147, %133 : vector<7x384xf32>
    %151 = arith.addf %96, %150 : vector<7x384xf32>
    %152 = arith.mulf %147, %137 : vector<7x384xf32>
    %153 = arith.addf %85, %152 : vector<7x384xf32>
    %c1_114 = arith.constant 1 : index
    %c1_115 = arith.constant 1 : index
    %c0_116 = arith.constant 0 : index
    %c0_117 = arith.constant 0 : index
    %154 = vector.load %arg5[%c1_114, %c1_115, %c0_116, %c0_117] : memref<5x7x7x1152xf32, #tpu.memory_space<vmem>>, vector<1x1x7x384xf32>
    %155 = vector.shape_cast %154 : vector<1x1x7x384xf32> to vector<7x384xf32>
    %156 = arith.mulf %155, %129 : vector<7x384xf32>
    %157 = arith.addf %117, %156 : vector<7x384xf32>
    %158 = arith.mulf %155, %133 : vector<7x384xf32>
    %159 = arith.addf %149, %158 : vector<7x384xf32>
    %160 = arith.mulf %155, %137 : vector<7x384xf32>
    %161 = arith.addf %151, %160 : vector<7x384xf32>
    %162 = arith.mulf %155, %141 : vector<7x384xf32>
    %163 = arith.addf %153, %162 : vector<7x384xf32>
    %c1_118 = arith.constant 1 : index
    %c2_119 = arith.constant 2 : index
    %c0_120 = arith.constant 0 : index
    %c0_121 = arith.constant 0 : index
    %164 = vector.load %arg5[%c1_118, %c2_119, %c0_120, %c0_121] : memref<5x7x7x1152xf32, #tpu.memory_space<vmem>>, vector<1x1x7x384xf32>
    %165 = vector.shape_cast %164 : vector<1x1x7x384xf32> to vector<7x384xf32>
    %166 = arith.mulf %165, %129 : vector<7x384xf32>
    %167 = arith.addf %125, %166 : vector<7x384xf32>
    %168 = arith.mulf %165, %133 : vector<7x384xf32>
    %169 = arith.addf %157, %168 : vector<7x384xf32>
    %170 = arith.mulf %165, %137 : vector<7x384xf32>
    %171 = arith.addf %159, %170 : vector<7x384xf32>
    %172 = arith.mulf %165, %141 : vector<7x384xf32>
    %173 = arith.addf %161, %172 : vector<7x384xf32>
    %174 = arith.mulf %165, %145 : vector<7x384xf32>
    %175 = arith.addf %163, %174 : vector<7x384xf32>
    %c1_122 = arith.constant 1 : index
    %c3_123 = arith.constant 3 : index
    %c0_124 = arith.constant 0 : index
    %c0_125 = arith.constant 0 : index
    %176 = vector.load %arg5[%c1_122, %c3_123, %c0_124, %c0_125] : memref<5x7x7x1152xf32, #tpu.memory_space<vmem>>, vector<1x1x7x384xf32>
    %177 = vector.shape_cast %176 : vector<1x1x7x384xf32> to vector<7x384xf32>
    %178 = arith.mulf %177, %129 : vector<7x384xf32>
    %179 = arith.addf %123, %178 : vector<7x384xf32>
    %180 = arith.mulf %177, %133 : vector<7x384xf32>
    %181 = arith.addf %167, %180 : vector<7x384xf32>
    %182 = arith.mulf %177, %137 : vector<7x384xf32>
    %183 = arith.addf %169, %182 : vector<7x384xf32>
    %184 = arith.mulf %177, %141 : vector<7x384xf32>
    %185 = arith.addf %171, %184 : vector<7x384xf32>
    %186 = arith.mulf %177, %145 : vector<7x384xf32>
    %187 = arith.addf %173, %186 : vector<7x384xf32>
    %c1_126 = arith.constant 1 : index
    %c4_127 = arith.constant 4 : index
    %c0_128 = arith.constant 0 : index
    %c0_129 = arith.constant 0 : index
    %188 = vector.load %arg5[%c1_126, %c4_127, %c0_128, %c0_129] : memref<5x7x7x1152xf32, #tpu.memory_space<vmem>>, vector<1x1x7x384xf32>
    %189 = vector.shape_cast %188 : vector<1x1x7x384xf32> to vector<7x384xf32>
    %190 = arith.mulf %189, %129 : vector<7x384xf32>
    %191 = arith.addf %121, %190 : vector<7x384xf32>
    %192 = arith.mulf %189, %133 : vector<7x384xf32>
    %193 = arith.addf %179, %192 : vector<7x384xf32>
    %194 = arith.mulf %189, %137 : vector<7x384xf32>
    %195 = arith.addf %181, %194 : vector<7x384xf32>
    %196 = arith.mulf %189, %141 : vector<7x384xf32>
    %197 = arith.addf %183, %196 : vector<7x384xf32>
    %198 = arith.mulf %189, %145 : vector<7x384xf32>
    %199 = arith.addf %185, %198 : vector<7x384xf32>
    %c1_130 = arith.constant 1 : index
    %c5_131 = arith.constant 5 : index
    %c0_132 = arith.constant 0 : index
    %c0_133 = arith.constant 0 : index
    %200 = vector.load %arg5[%c1_130, %c5_131, %c0_132, %c0_133] : memref<5x7x7x1152xf32, #tpu.memory_space<vmem>>, vector<1x1x7x384xf32>
    %201 = vector.shape_cast %200 : vector<1x1x7x384xf32> to vector<7x384xf32>
    %202 = arith.mulf %201, %133 : vector<7x384xf32>
    %203 = arith.addf %191, %202 : vector<7x384xf32>
    %204 = arith.mulf %201, %137 : vector<7x384xf32>
    %205 = arith.addf %193, %204 : vector<7x384xf32>
    %206 = arith.mulf %201, %141 : vector<7x384xf32>
    %207 = arith.addf %195, %206 : vector<7x384xf32>
    %208 = arith.mulf %201, %145 : vector<7x384xf32>
    %209 = arith.addf %197, %208 : vector<7x384xf32>
    %c1_134 = arith.constant 1 : index
    %c6_135 = arith.constant 6 : index
    %c0_136 = arith.constant 0 : index
    %c0_137 = arith.constant 0 : index
    %210 = vector.load %arg5[%c1_134, %c6_135, %c0_136, %c0_137] : memref<5x7x7x1152xf32, #tpu.memory_space<vmem>>, vector<1x1x7x384xf32>
    %211 = vector.shape_cast %210 : vector<1x1x7x384xf32> to vector<7x384xf32>
    %212 = arith.mulf %211, %137 : vector<7x384xf32>
    %213 = arith.addf %203, %212 : vector<7x384xf32>
    %214 = arith.mulf %211, %141 : vector<7x384xf32>
    %215 = arith.addf %205, %214 : vector<7x384xf32>
    %216 = arith.mulf %211, %145 : vector<7x384xf32>
    %217 = arith.addf %207, %216 : vector<7x384xf32>
    %c0_138 = arith.constant 0 : index
    %c2_139 = arith.constant 2 : index
    %c0_140 = arith.constant 0 : index
    %218 = vector.load %arg3[%c0_138, %c2_139, %c0_140] : memref<5x5x1152xf32, #tpu.memory_space<vmem>>, vector<1x1x384xf32>
    %219 = vector.shape_cast %218 : vector<1x1x384xf32> to vector<384xf32>
    %220 = vector.shape_cast %219 : vector<384xf32> to vector<1x384xf32>
    %221 = vector.broadcast %220 : vector<1x384xf32> to vector<7x384xf32>
    %c1_141 = arith.constant 1 : index
    %c2_142 = arith.constant 2 : index
    %c0_143 = arith.constant 0 : index
    %222 = vector.load %arg3[%c1_141, %c2_142, %c0_143] : memref<5x5x1152xf32, #tpu.memory_space<vmem>>, vector<1x1x384xf32>
    %223 = vector.shape_cast %222 : vector<1x1x384xf32> to vector<384xf32>
    %224 = vector.shape_cast %223 : vector<384xf32> to vector<1x384xf32>
    %225 = vector.broadcast %224 : vector<1x384xf32> to vector<7x384xf32>
    %c2_144 = arith.constant 2 : index
    %c2_145 = arith.constant 2 : index
    %c0_146 = arith.constant 0 : index
    %226 = vector.load %arg3[%c2_144, %c2_145, %c0_146] : memref<5x5x1152xf32, #tpu.memory_space<vmem>>, vector<1x1x384xf32>
    %227 = vector.shape_cast %226 : vector<1x1x384xf32> to vector<384xf32>
    %228 = vector.shape_cast %227 : vector<384xf32> to vector<1x384xf32>
    %229 = vector.broadcast %228 : vector<1x384xf32> to vector<7x384xf32>
    %c3_147 = arith.constant 3 : index
    %c2_148 = arith.constant 2 : index
    %c0_149 = arith.constant 0 : index
    %230 = vector.load %arg3[%c3_147, %c2_148, %c0_149] : memref<5x5x1152xf32, #tpu.memory_space<vmem>>, vector<1x1x384xf32>
    %231 = vector.shape_cast %230 : vector<1x1x384xf32> to vector<384xf32>
    %232 = vector.shape_cast %231 : vector<384xf32> to vector<1x384xf32>
    %233 = vector.broadcast %232 : vector<1x384xf32> to vector<7x384xf32>
    %c4_150 = arith.constant 4 : index
    %c2_151 = arith.constant 2 : index
    %c0_152 = arith.constant 0 : index
    %234 = vector.load %arg3[%c4_150, %c2_151, %c0_152] : memref<5x5x1152xf32, #tpu.memory_space<vmem>>, vector<1x1x384xf32>
    %235 = vector.shape_cast %234 : vector<1x1x384xf32> to vector<384xf32>
    %236 = vector.shape_cast %235 : vector<384xf32> to vector<1x384xf32>
    %237 = vector.broadcast %236 : vector<1x384xf32> to vector<7x384xf32>
    %c2_153 = arith.constant 2 : index
    %c0_154 = arith.constant 0 : index
    %c0_155 = arith.constant 0 : index
    %c0_156 = arith.constant 0 : index
    %238 = vector.load %arg5[%c2_153, %c0_154, %c0_155, %c0_156] : memref<5x7x7x1152xf32, #tpu.memory_space<vmem>>, vector<1x1x7x384xf32>
    %239 = vector.shape_cast %238 : vector<1x1x7x384xf32> to vector<7x384xf32>
    %240 = arith.mulf %239, %221 : vector<7x384xf32>
    %241 = arith.addf %199, %240 : vector<7x384xf32>
    %242 = arith.mulf %239, %225 : vector<7x384xf32>
    %243 = arith.addf %187, %242 : vector<7x384xf32>
    %244 = arith.mulf %239, %229 : vector<7x384xf32>
    %245 = arith.addf %175, %244 : vector<7x384xf32>
    %c2_157 = arith.constant 2 : index
    %c1_158 = arith.constant 1 : index
    %c0_159 = arith.constant 0 : index
    %c0_160 = arith.constant 0 : index
    %246 = vector.load %arg5[%c2_157, %c1_158, %c0_159, %c0_160] : memref<5x7x7x1152xf32, #tpu.memory_space<vmem>>, vector<1x1x7x384xf32>
    %247 = vector.shape_cast %246 : vector<1x1x7x384xf32> to vector<7x384xf32>
    %248 = arith.mulf %247, %221 : vector<7x384xf32>
    %249 = arith.addf %209, %248 : vector<7x384xf32>
    %250 = arith.mulf %247, %225 : vector<7x384xf32>
    %251 = arith.addf %241, %250 : vector<7x384xf32>
    %252 = arith.mulf %247, %229 : vector<7x384xf32>
    %253 = arith.addf %243, %252 : vector<7x384xf32>
    %254 = arith.mulf %247, %233 : vector<7x384xf32>
    %255 = arith.addf %245, %254 : vector<7x384xf32>
    %c2_161 = arith.constant 2 : index
    %c2_162 = arith.constant 2 : index
    %c0_163 = arith.constant 0 : index
    %c0_164 = arith.constant 0 : index
    %256 = vector.load %arg5[%c2_161, %c2_162, %c0_163, %c0_164] : memref<5x7x7x1152xf32, #tpu.memory_space<vmem>>, vector<1x1x7x384xf32>
    %257 = vector.shape_cast %256 : vector<1x1x7x384xf32> to vector<7x384xf32>
    %258 = arith.mulf %257, %221 : vector<7x384xf32>
    %259 = arith.addf %217, %258 : vector<7x384xf32>
    %260 = arith.mulf %257, %225 : vector<7x384xf32>
    %261 = arith.addf %249, %260 : vector<7x384xf32>
    %262 = arith.mulf %257, %229 : vector<7x384xf32>
    %263 = arith.addf %251, %262 : vector<7x384xf32>
    %264 = arith.mulf %257, %233 : vector<7x384xf32>
    %265 = arith.addf %253, %264 : vector<7x384xf32>
    %266 = arith.mulf %257, %237 : vector<7x384xf32>
    %267 = arith.addf %255, %266 : vector<7x384xf32>
    %c2_165 = arith.constant 2 : index
    %c3_166 = arith.constant 3 : index
    %c0_167 = arith.constant 0 : index
    %c0_168 = arith.constant 0 : index
    %268 = vector.load %arg5[%c2_165, %c3_166, %c0_167, %c0_168] : memref<5x7x7x1152xf32, #tpu.memory_space<vmem>>, vector<1x1x7x384xf32>
    %269 = vector.shape_cast %268 : vector<1x1x7x384xf32> to vector<7x384xf32>
    %270 = arith.mulf %269, %221 : vector<7x384xf32>
    %271 = arith.addf %215, %270 : vector<7x384xf32>
    %272 = arith.mulf %269, %225 : vector<7x384xf32>
    %273 = arith.addf %259, %272 : vector<7x384xf32>
    %274 = arith.mulf %269, %229 : vector<7x384xf32>
    %275 = arith.addf %261, %274 : vector<7x384xf32>
    %276 = arith.mulf %269, %233 : vector<7x384xf32>
    %277 = arith.addf %263, %276 : vector<7x384xf32>
    %278 = arith.mulf %269, %237 : vector<7x384xf32>
    %279 = arith.addf %265, %278 : vector<7x384xf32>
    %c2_169 = arith.constant 2 : index
    %c4_170 = arith.constant 4 : index
    %c0_171 = arith.constant 0 : index
    %c0_172 = arith.constant 0 : index
    %280 = vector.load %arg5[%c2_169, %c4_170, %c0_171, %c0_172] : memref<5x7x7x1152xf32, #tpu.memory_space<vmem>>, vector<1x1x7x384xf32>
    %281 = vector.shape_cast %280 : vector<1x1x7x384xf32> to vector<7x384xf32>
    %282 = arith.mulf %281, %221 : vector<7x384xf32>
    %283 = arith.addf %213, %282 : vector<7x384xf32>
    %284 = arith.mulf %281, %225 : vector<7x384xf32>
    %285 = arith.addf %271, %284 : vector<7x384xf32>
    %286 = arith.mulf %281, %229 : vector<7x384xf32>
    %287 = arith.addf %273, %286 : vector<7x384xf32>
    %288 = arith.mulf %281, %233 : vector<7x384xf32>
    %289 = arith.addf %275, %288 : vector<7x384xf32>
    %290 = arith.mulf %281, %237 : vector<7x384xf32>
    %291 = arith.addf %277, %290 : vector<7x384xf32>
    %c2_173 = arith.constant 2 : index
    %c5_174 = arith.constant 5 : index
    %c0_175 = arith.constant 0 : index
    %c0_176 = arith.constant 0 : index
    %292 = vector.load %arg5[%c2_173, %c5_174, %c0_175, %c0_176] : memref<5x7x7x1152xf32, #tpu.memory_space<vmem>>, vector<1x1x7x384xf32>
    %293 = vector.shape_cast %292 : vector<1x1x7x384xf32> to vector<7x384xf32>
    %294 = arith.mulf %293, %225 : vector<7x384xf32>
    %295 = arith.addf %283, %294 : vector<7x384xf32>
    %296 = arith.mulf %293, %229 : vector<7x384xf32>
    %297 = arith.addf %285, %296 : vector<7x384xf32>
    %298 = arith.mulf %293, %233 : vector<7x384xf32>
    %299 = arith.addf %287, %298 : vector<7x384xf32>
    %300 = arith.mulf %293, %237 : vector<7x384xf32>
    %301 = arith.addf %289, %300 : vector<7x384xf32>
    %c2_177 = arith.constant 2 : index
    %c6_178 = arith.constant 6 : index
    %c0_179 = arith.constant 0 : index
    %c0_180 = arith.constant 0 : index
    %302 = vector.load %arg5[%c2_177, %c6_178, %c0_179, %c0_180] : memref<5x7x7x1152xf32, #tpu.memory_space<vmem>>, vector<1x1x7x384xf32>
    %303 = vector.shape_cast %302 : vector<1x1x7x384xf32> to vector<7x384xf32>
    %304 = arith.mulf %303, %229 : vector<7x384xf32>
    %305 = arith.addf %295, %304 : vector<7x384xf32>
    %306 = arith.mulf %303, %233 : vector<7x384xf32>
    %307 = arith.addf %297, %306 : vector<7x384xf32>
    %308 = arith.mulf %303, %237 : vector<7x384xf32>
    %309 = arith.addf %299, %308 : vector<7x384xf32>
    %c0_181 = arith.constant 0 : index
    %c3_182 = arith.constant 3 : index
    %c0_183 = arith.constant 0 : index
    %310 = vector.load %arg3[%c0_181, %c3_182, %c0_183] : memref<5x5x1152xf32, #tpu.memory_space<vmem>>, vector<1x1x384xf32>
    %311 = vector.shape_cast %310 : vector<1x1x384xf32> to vector<384xf32>
    %312 = vector.shape_cast %311 : vector<384xf32> to vector<1x384xf32>
    %313 = vector.broadcast %312 : vector<1x384xf32> to vector<7x384xf32>
    %c1_184 = arith.constant 1 : index
    %c3_185 = arith.constant 3 : index
    %c0_186 = arith.constant 0 : index
    %314 = vector.load %arg3[%c1_184, %c3_185, %c0_186] : memref<5x5x1152xf32, #tpu.memory_space<vmem>>, vector<1x1x384xf32>
    %315 = vector.shape_cast %314 : vector<1x1x384xf32> to vector<384xf32>
    %316 = vector.shape_cast %315 : vector<384xf32> to vector<1x384xf32>
    %317 = vector.broadcast %316 : vector<1x384xf32> to vector<7x384xf32>
    %c2_187 = arith.constant 2 : index
    %c3_188 = arith.constant 3 : index
    %c0_189 = arith.constant 0 : index
    %318 = vector.load %arg3[%c2_187, %c3_188, %c0_189] : memref<5x5x1152xf32, #tpu.memory_space<vmem>>, vector<1x1x384xf32>
    %319 = vector.shape_cast %318 : vector<1x1x384xf32> to vector<384xf32>
    %320 = vector.shape_cast %319 : vector<384xf32> to vector<1x384xf32>
    %321 = vector.broadcast %320 : vector<1x384xf32> to vector<7x384xf32>
    %c3_190 = arith.constant 3 : index
    %c3_191 = arith.constant 3 : index
    %c0_192 = arith.constant 0 : index
    %322 = vector.load %arg3[%c3_190, %c3_191, %c0_192] : memref<5x5x1152xf32, #tpu.memory_space<vmem>>, vector<1x1x384xf32>
    %323 = vector.shape_cast %322 : vector<1x1x384xf32> to vector<384xf32>
    %324 = vector.shape_cast %323 : vector<384xf32> to vector<1x384xf32>
    %325 = vector.broadcast %324 : vector<1x384xf32> to vector<7x384xf32>
    %c4_193 = arith.constant 4 : index
    %c3_194 = arith.constant 3 : index
    %c0_195 = arith.constant 0 : index
    %326 = vector.load %arg3[%c4_193, %c3_194, %c0_195] : memref<5x5x1152xf32, #tpu.memory_space<vmem>>, vector<1x1x384xf32>
    %327 = vector.shape_cast %326 : vector<1x1x384xf32> to vector<384xf32>
    %328 = vector.shape_cast %327 : vector<384xf32> to vector<1x384xf32>
    %329 = vector.broadcast %328 : vector<1x384xf32> to vector<7x384xf32>
    %c3_196 = arith.constant 3 : index
    %c0_197 = arith.constant 0 : index
    %c0_198 = arith.constant 0 : index
    %c0_199 = arith.constant 0 : index
    %330 = vector.load %arg5[%c3_196, %c0_197, %c0_198, %c0_199] : memref<5x7x7x1152xf32, #tpu.memory_space<vmem>>, vector<1x1x7x384xf32>
    %331 = vector.shape_cast %330 : vector<1x1x7x384xf32> to vector<7x384xf32>
    %332 = arith.mulf %331, %313 : vector<7x384xf32>
    %333 = arith.addf %291, %332 : vector<7x384xf32>
    %334 = arith.mulf %331, %317 : vector<7x384xf32>
    %335 = arith.addf %279, %334 : vector<7x384xf32>
    %336 = arith.mulf %331, %321 : vector<7x384xf32>
    %337 = arith.addf %267, %336 : vector<7x384xf32>
    %c3_200 = arith.constant 3 : index
    %c1_201 = arith.constant 1 : index
    %c0_202 = arith.constant 0 : index
    %c0_203 = arith.constant 0 : index
    %338 = vector.load %arg5[%c3_200, %c1_201, %c0_202, %c0_203] : memref<5x7x7x1152xf32, #tpu.memory_space<vmem>>, vector<1x1x7x384xf32>
    %339 = vector.shape_cast %338 : vector<1x1x7x384xf32> to vector<7x384xf32>
    %340 = arith.mulf %339, %313 : vector<7x384xf32>
    %341 = arith.addf %301, %340 : vector<7x384xf32>
    %342 = arith.mulf %339, %317 : vector<7x384xf32>
    %343 = arith.addf %333, %342 : vector<7x384xf32>
    %344 = arith.mulf %339, %321 : vector<7x384xf32>
    %345 = arith.addf %335, %344 : vector<7x384xf32>
    %346 = arith.mulf %339, %325 : vector<7x384xf32>
    %347 = arith.addf %337, %346 : vector<7x384xf32>
    %c3_204 = arith.constant 3 : index
    %c2_205 = arith.constant 2 : index
    %c0_206 = arith.constant 0 : index
    %c0_207 = arith.constant 0 : index
    %348 = vector.load %arg5[%c3_204, %c2_205, %c0_206, %c0_207] : memref<5x7x7x1152xf32, #tpu.memory_space<vmem>>, vector<1x1x7x384xf32>
    %349 = vector.shape_cast %348 : vector<1x1x7x384xf32> to vector<7x384xf32>
    %350 = arith.mulf %349, %313 : vector<7x384xf32>
    %351 = arith.addf %309, %350 : vector<7x384xf32>
    %352 = arith.mulf %349, %317 : vector<7x384xf32>
    %353 = arith.addf %341, %352 : vector<7x384xf32>
    %354 = arith.mulf %349, %321 : vector<7x384xf32>
    %355 = arith.addf %343, %354 : vector<7x384xf32>
    %356 = arith.mulf %349, %325 : vector<7x384xf32>
    %357 = arith.addf %345, %356 : vector<7x384xf32>
    %358 = arith.mulf %349, %329 : vector<7x384xf32>
    %359 = arith.addf %347, %358 : vector<7x384xf32>
    %c3_208 = arith.constant 3 : index
    %c3_209 = arith.constant 3 : index
    %c0_210 = arith.constant 0 : index
    %c0_211 = arith.constant 0 : index
    %360 = vector.load %arg5[%c3_208, %c3_209, %c0_210, %c0_211] : memref<5x7x7x1152xf32, #tpu.memory_space<vmem>>, vector<1x1x7x384xf32>
    %361 = vector.shape_cast %360 : vector<1x1x7x384xf32> to vector<7x384xf32>
    %362 = arith.mulf %361, %313 : vector<7x384xf32>
    %363 = arith.addf %307, %362 : vector<7x384xf32>
    %364 = arith.mulf %361, %317 : vector<7x384xf32>
    %365 = arith.addf %351, %364 : vector<7x384xf32>
    %366 = arith.mulf %361, %321 : vector<7x384xf32>
    %367 = arith.addf %353, %366 : vector<7x384xf32>
    %368 = arith.mulf %361, %325 : vector<7x384xf32>
    %369 = arith.addf %355, %368 : vector<7x384xf32>
    %370 = arith.mulf %361, %329 : vector<7x384xf32>
    %371 = arith.addf %357, %370 : vector<7x384xf32>
    %c3_212 = arith.constant 3 : index
    %c4_213 = arith.constant 4 : index
    %c0_214 = arith.constant 0 : index
    %c0_215 = arith.constant 0 : index
    %372 = vector.load %arg5[%c3_212, %c4_213, %c0_214, %c0_215] : memref<5x7x7x1152xf32, #tpu.memory_space<vmem>>, vector<1x1x7x384xf32>
    %373 = vector.shape_cast %372 : vector<1x1x7x384xf32> to vector<7x384xf32>
    %374 = arith.mulf %373, %313 : vector<7x384xf32>
    %375 = arith.addf %305, %374 : vector<7x384xf32>
    %376 = arith.mulf %373, %317 : vector<7x384xf32>
    %377 = arith.addf %363, %376 : vector<7x384xf32>
    %378 = arith.mulf %373, %321 : vector<7x384xf32>
    %379 = arith.addf %365, %378 : vector<7x384xf32>
    %380 = arith.mulf %373, %325 : vector<7x384xf32>
    %381 = arith.addf %367, %380 : vector<7x384xf32>
    %382 = arith.mulf %373, %329 : vector<7x384xf32>
    %383 = arith.addf %369, %382 : vector<7x384xf32>
    %c3_216 = arith.constant 3 : index
    %c5_217 = arith.constant 5 : index
    %c0_218 = arith.constant 0 : index
    %c0_219 = arith.constant 0 : index
    %384 = vector.load %arg5[%c3_216, %c5_217, %c0_218, %c0_219] : memref<5x7x7x1152xf32, #tpu.memory_space<vmem>>, vector<1x1x7x384xf32>
    %385 = vector.shape_cast %384 : vector<1x1x7x384xf32> to vector<7x384xf32>
    %386 = arith.mulf %385, %317 : vector<7x384xf32>
    %387 = arith.addf %375, %386 : vector<7x384xf32>
    %388 = arith.mulf %385, %321 : vector<7x384xf32>
    %389 = arith.addf %377, %388 : vector<7x384xf32>
    %390 = arith.mulf %385, %325 : vector<7x384xf32>
    %391 = arith.addf %379, %390 : vector<7x384xf32>
    %392 = arith.mulf %385, %329 : vector<7x384xf32>
    %393 = arith.addf %381, %392 : vector<7x384xf32>
    %c3_220 = arith.constant 3 : index
    %c6_221 = arith.constant 6 : index
    %c0_222 = arith.constant 0 : index
    %c0_223 = arith.constant 0 : index
    %394 = vector.load %arg5[%c3_220, %c6_221, %c0_222, %c0_223] : memref<5x7x7x1152xf32, #tpu.memory_space<vmem>>, vector<1x1x7x384xf32>
    %395 = vector.shape_cast %394 : vector<1x1x7x384xf32> to vector<7x384xf32>
    %396 = arith.mulf %395, %321 : vector<7x384xf32>
    %397 = arith.addf %387, %396 : vector<7x384xf32>
    %398 = arith.mulf %395, %325 : vector<7x384xf32>
    %399 = arith.addf %389, %398 : vector<7x384xf32>
    %400 = arith.mulf %395, %329 : vector<7x384xf32>
    %401 = arith.addf %391, %400 : vector<7x384xf32>
    %c0_224 = arith.constant 0 : index
    %c4_225 = arith.constant 4 : index
    %c0_226 = arith.constant 0 : index
    %402 = vector.load %arg3[%c0_224, %c4_225, %c0_226] : memref<5x5x1152xf32, #tpu.memory_space<vmem>>, vector<1x1x384xf32>
    %403 = vector.shape_cast %402 : vector<1x1x384xf32> to vector<384xf32>
    %404 = vector.shape_cast %403 : vector<384xf32> to vector<1x384xf32>
    %405 = vector.broadcast %404 : vector<1x384xf32> to vector<7x384xf32>
    %c1_227 = arith.constant 1 : index
    %c4_228 = arith.constant 4 : index
    %c0_229 = arith.constant 0 : index
    %406 = vector.load %arg3[%c1_227, %c4_228, %c0_229] : memref<5x5x1152xf32, #tpu.memory_space<vmem>>, vector<1x1x384xf32>
    %407 = vector.shape_cast %406 : vector<1x1x384xf32> to vector<384xf32>
    %408 = vector.shape_cast %407 : vector<384xf32> to vector<1x384xf32>
    %409 = vector.broadcast %408 : vector<1x384xf32> to vector<7x384xf32>
    %c2_230 = arith.constant 2 : index
    %c4_231 = arith.constant 4 : index
    %c0_232 = arith.constant 0 : index
    %410 = vector.load %arg3[%c2_230, %c4_231, %c0_232] : memref<5x5x1152xf32, #tpu.memory_space<vmem>>, vector<1x1x384xf32>
    %411 = vector.shape_cast %410 : vector<1x1x384xf32> to vector<384xf32>
    %412 = vector.shape_cast %411 : vector<384xf32> to vector<1x384xf32>
    %413 = vector.broadcast %412 : vector<1x384xf32> to vector<7x384xf32>
    %c3_233 = arith.constant 3 : index
    %c4_234 = arith.constant 4 : index
    %c0_235 = arith.constant 0 : index
    %414 = vector.load %arg3[%c3_233, %c4_234, %c0_235] : memref<5x5x1152xf32, #tpu.memory_space<vmem>>, vector<1x1x384xf32>
    %415 = vector.shape_cast %414 : vector<1x1x384xf32> to vector<384xf32>
    %416 = vector.shape_cast %415 : vector<384xf32> to vector<1x384xf32>
    %417 = vector.broadcast %416 : vector<1x384xf32> to vector<7x384xf32>
    %c4_236 = arith.constant 4 : index
    %c4_237 = arith.constant 4 : index
    %c0_238 = arith.constant 0 : index
    %418 = vector.load %arg3[%c4_236, %c4_237, %c0_238] : memref<5x5x1152xf32, #tpu.memory_space<vmem>>, vector<1x1x384xf32>
    %419 = vector.shape_cast %418 : vector<1x1x384xf32> to vector<384xf32>
    %420 = vector.shape_cast %419 : vector<384xf32> to vector<1x384xf32>
    %421 = vector.broadcast %420 : vector<1x384xf32> to vector<7x384xf32>
    %c4_239 = arith.constant 4 : index
    %c0_240 = arith.constant 0 : index
    %c0_241 = arith.constant 0 : index
    %c0_242 = arith.constant 0 : index
    %422 = vector.load %arg5[%c4_239, %c0_240, %c0_241, %c0_242] : memref<5x7x7x1152xf32, #tpu.memory_space<vmem>>, vector<1x1x7x384xf32>
    %423 = vector.shape_cast %422 : vector<1x1x7x384xf32> to vector<7x384xf32>
    %424 = arith.mulf %423, %405 : vector<7x384xf32>
    %425 = arith.addf %383, %424 : vector<7x384xf32>
    %426 = arith.mulf %423, %409 : vector<7x384xf32>
    %427 = arith.addf %371, %426 : vector<7x384xf32>
    %428 = arith.mulf %423, %413 : vector<7x384xf32>
    %429 = arith.addf %359, %428 : vector<7x384xf32>
    %c4_243 = arith.constant 4 : index
    %c1_244 = arith.constant 1 : index
    %c0_245 = arith.constant 0 : index
    %c0_246 = arith.constant 0 : index
    %430 = vector.load %arg5[%c4_243, %c1_244, %c0_245, %c0_246] : memref<5x7x7x1152xf32, #tpu.memory_space<vmem>>, vector<1x1x7x384xf32>
    %431 = vector.shape_cast %430 : vector<1x1x7x384xf32> to vector<7x384xf32>
    %432 = arith.mulf %431, %405 : vector<7x384xf32>
    %433 = arith.addf %393, %432 : vector<7x384xf32>
    %434 = arith.mulf %431, %409 : vector<7x384xf32>
    %435 = arith.addf %425, %434 : vector<7x384xf32>
    %436 = arith.mulf %431, %413 : vector<7x384xf32>
    %437 = arith.addf %427, %436 : vector<7x384xf32>
    %438 = arith.mulf %431, %417 : vector<7x384xf32>
    %439 = arith.addf %429, %438 : vector<7x384xf32>
    %c4_247 = arith.constant 4 : index
    %c2_248 = arith.constant 2 : index
    %c0_249 = arith.constant 0 : index
    %c0_250 = arith.constant 0 : index
    %440 = vector.load %arg5[%c4_247, %c2_248, %c0_249, %c0_250] : memref<5x7x7x1152xf32, #tpu.memory_space<vmem>>, vector<1x1x7x384xf32>
    %441 = vector.shape_cast %440 : vector<1x1x7x384xf32> to vector<7x384xf32>
    %442 = arith.mulf %441, %405 : vector<7x384xf32>
    %443 = arith.addf %401, %442 : vector<7x384xf32>
    %444 = arith.mulf %441, %409 : vector<7x384xf32>
    %445 = arith.addf %433, %444 : vector<7x384xf32>
    %446 = arith.mulf %441, %413 : vector<7x384xf32>
    %447 = arith.addf %435, %446 : vector<7x384xf32>
    %448 = arith.mulf %441, %417 : vector<7x384xf32>
    %449 = arith.addf %437, %448 : vector<7x384xf32>
    %450 = arith.mulf %441, %421 : vector<7x384xf32>
    %451 = arith.addf %439, %450 : vector<7x384xf32>
    %c4_251 = arith.constant 4 : index
    %c3_252 = arith.constant 3 : index
    %c0_253 = arith.constant 0 : index
    %c0_254 = arith.constant 0 : index
    %452 = vector.load %arg5[%c4_251, %c3_252, %c0_253, %c0_254] : memref<5x7x7x1152xf32, #tpu.memory_space<vmem>>, vector<1x1x7x384xf32>
    %453 = vector.shape_cast %452 : vector<1x1x7x384xf32> to vector<7x384xf32>
    %454 = arith.mulf %453, %405 : vector<7x384xf32>
    %455 = arith.addf %399, %454 : vector<7x384xf32>
    %456 = arith.mulf %453, %409 : vector<7x384xf32>
    %457 = arith.addf %443, %456 : vector<7x384xf32>
    %458 = arith.mulf %453, %413 : vector<7x384xf32>
    %459 = arith.addf %445, %458 : vector<7x384xf32>
    %460 = arith.mulf %453, %417 : vector<7x384xf32>
    %461 = arith.addf %447, %460 : vector<7x384xf32>
    %462 = arith.mulf %453, %421 : vector<7x384xf32>
    %463 = arith.addf %449, %462 : vector<7x384xf32>
    %c4_255 = arith.constant 4 : index
    %c4_256 = arith.constant 4 : index
    %c0_257 = arith.constant 0 : index
    %c0_258 = arith.constant 0 : index
    %464 = vector.load %arg5[%c4_255, %c4_256, %c0_257, %c0_258] : memref<5x7x7x1152xf32, #tpu.memory_space<vmem>>, vector<1x1x7x384xf32>
    %465 = vector.shape_cast %464 : vector<1x1x7x384xf32> to vector<7x384xf32>
    %466 = arith.mulf %465, %405 : vector<7x384xf32>
    %467 = arith.addf %397, %466 : vector<7x384xf32>
    %468 = arith.mulf %465, %409 : vector<7x384xf32>
    %469 = arith.addf %455, %468 : vector<7x384xf32>
    %470 = arith.mulf %465, %413 : vector<7x384xf32>
    %471 = arith.addf %457, %470 : vector<7x384xf32>
    %472 = arith.mulf %465, %417 : vector<7x384xf32>
    %473 = arith.addf %459, %472 : vector<7x384xf32>
    %474 = arith.mulf %465, %421 : vector<7x384xf32>
    %475 = arith.addf %461, %474 : vector<7x384xf32>
    %c4_259 = arith.constant 4 : index
    %c5_260 = arith.constant 5 : index
    %c0_261 = arith.constant 0 : index
    %c0_262 = arith.constant 0 : index
    %476 = vector.load %arg5[%c4_259, %c5_260, %c0_261, %c0_262] : memref<5x7x7x1152xf32, #tpu.memory_space<vmem>>, vector<1x1x7x384xf32>
    %477 = vector.shape_cast %476 : vector<1x1x7x384xf32> to vector<7x384xf32>
    %478 = arith.mulf %477, %409 : vector<7x384xf32>
    %479 = arith.addf %467, %478 : vector<7x384xf32>
    %480 = arith.mulf %477, %413 : vector<7x384xf32>
    %481 = arith.addf %469, %480 : vector<7x384xf32>
    %482 = arith.mulf %477, %417 : vector<7x384xf32>
    %483 = arith.addf %471, %482 : vector<7x384xf32>
    %484 = arith.mulf %477, %421 : vector<7x384xf32>
    %485 = arith.addf %473, %484 : vector<7x384xf32>
    %c4_263 = arith.constant 4 : index
    %c6_264 = arith.constant 6 : index
    %c0_265 = arith.constant 0 : index
    %c0_266 = arith.constant 0 : index
    %486 = vector.load %arg5[%c4_263, %c6_264, %c0_265, %c0_266] : memref<5x7x7x1152xf32, #tpu.memory_space<vmem>>, vector<1x1x7x384xf32>
    %487 = vector.shape_cast %486 : vector<1x1x7x384xf32> to vector<7x384xf32>
    %488 = arith.mulf %487, %413 : vector<7x384xf32>
    %489 = arith.addf %479, %488 : vector<7x384xf32>
    %490 = arith.mulf %487, %417 : vector<7x384xf32>
    %491 = arith.addf %481, %490 : vector<7x384xf32>
    %492 = arith.mulf %487, %421 : vector<7x384xf32>
    %493 = arith.addf %483, %492 : vector<7x384xf32>
    %c0_267 = arith.constant 0 : index
    %c0_268 = arith.constant 0 : index
    %c0_269 = arith.constant 0 : index
    %c0_270 = arith.constant 0 : index
    %494 = vector.load %arg4[%c0_267, %c0_268, %c0_269, %c0_270] : memref<1x7x7x1152xf32, #tpu.memory_space<vmem>>, vector<1x1x7x384xf32>
    %495 = vector.shape_cast %494 : vector<1x1x7x384xf32> to vector<7x384xf32>
    %496 = vector.shape_cast %451 : vector<7x384xf32> to vector<1x1x7x384xf32>
    tpu.vector_store %arg4[%c0_267, %c0_268, %c0_269, %c0_270], %496 {strides = array<i32>} : memref<1x7x7x1152xf32, #tpu.memory_space<vmem>>, vector<1x1x7x384xf32>,
    %c0_271 = arith.constant 0 : index
    %c1_272 = arith.constant 1 : index
    %c0_273 = arith.constant 0 : index
    %c0_274 = arith.constant 0 : index
    %497 = vector.load %arg4[%c0_271, %c1_272, %c0_273, %c0_274] : memref<1x7x7x1152xf32, #tpu.memory_space<vmem>>, vector<1x1x7x384xf32>
    %498 = vector.shape_cast %497 : vector<1x1x7x384xf32> to vector<7x384xf32>
    %499 = vector.shape_cast %463 : vector<7x384xf32> to vector<1x1x7x384xf32>
    tpu.vector_store %arg4[%c0_271, %c1_272, %c0_273, %c0_274], %499 {strides = array<i32>} : memref<1x7x7x1152xf32, #tpu.memory_space<vmem>>, vector<1x1x7x384xf32>,
    %c0_275 = arith.constant 0 : index
    %c2_276 = arith.constant 2 : index
    %c0_277 = arith.constant 0 : index
    %c0_278 = arith.constant 0 : index
    %500 = vector.load %arg4[%c0_275, %c2_276, %c0_277, %c0_278] : memref<1x7x7x1152xf32, #tpu.memory_space<vmem>>, vector<1x1x7x384xf32>
    %501 = vector.shape_cast %500 : vector<1x1x7x384xf32> to vector<7x384xf32>
    %502 = vector.shape_cast %475 : vector<7x384xf32> to vector<1x1x7x384xf32>
    tpu.vector_store %arg4[%c0_275, %c2_276, %c0_277, %c0_278], %502 {strides = array<i32>} : memref<1x7x7x1152xf32, #tpu.memory_space<vmem>>, vector<1x1x7x384xf32>,
    %c0_279 = arith.constant 0 : index
    %c3_280 = arith.constant 3 : index
    %c0_281 = arith.constant 0 : index
    %c0_282 = arith.constant 0 : index
    %503 = vector.load %arg4[%c0_279, %c3_280, %c0_281, %c0_282] : memref<1x7x7x1152xf32, #tpu.memory_space<vmem>>, vector<1x1x7x384xf32>
    %504 = vector.shape_cast %503 : vector<1x1x7x384xf32> to vector<7x384xf32>
    %505 = vector.shape_cast %485 : vector<7x384xf32> to vector<1x1x7x384xf32>
    tpu.vector_store %arg4[%c0_279, %c3_280, %c0_281, %c0_282], %505 {strides = array<i32>} : memref<1x7x7x1152xf32, #tpu.memory_space<vmem>>, vector<1x1x7x384xf32>,
    %c0_283 = arith.constant 0 : index
    %c4_284 = arith.constant 4 : index
    %c0_285 = arith.constant 0 : index
    %c0_286 = arith.constant 0 : index
    %506 = vector.load %arg4[%c0_283, %c4_284, %c0_285, %c0_286] : memref<1x7x7x1152xf32, #tpu.memory_space<vmem>>, vector<1x1x7x384xf32>
    %507 = vector.shape_cast %506 : vector<1x1x7x384xf32> to vector<7x384xf32>
    %508 = vector.shape_cast %493 : vector<7x384xf32> to vector<1x1x7x384xf32>
    tpu.vector_store %arg4[%c0_283, %c4_284, %c0_285, %c0_286], %508 {strides = array<i32>} : memref<1x7x7x1152xf32, #tpu.memory_space<vmem>>, vector<1x1x7x384xf32>,
    %c0_287 = arith.constant 0 : index
    %c5_288 = arith.constant 5 : index
    %c0_289 = arith.constant 0 : index
    %c0_290 = arith.constant 0 : index
    %509 = vector.load %arg4[%c0_287, %c5_288, %c0_289, %c0_290] : memref<1x7x7x1152xf32, #tpu.memory_space<vmem>>, vector<1x1x7x384xf32>
    %510 = vector.shape_cast %509 : vector<1x1x7x384xf32> to vector<7x384xf32>
    %511 = vector.shape_cast %491 : vector<7x384xf32> to vector<1x1x7x384xf32>
    tpu.vector_store %arg4[%c0_287, %c5_288, %c0_289, %c0_290], %511 {strides = array<i32>} : memref<1x7x7x1152xf32, #tpu.memory_space<vmem>>, vector<1x1x7x384xf32>,
    %c0_291 = arith.constant 0 : index
    %c6_292 = arith.constant 6 : index
    %c0_293 = arith.constant 0 : index
    %c0_294 = arith.constant 0 : index
    %512 = vector.load %arg4[%c0_291, %c6_292, %c0_293, %c0_294] : memref<1x7x7x1152xf32, #tpu.memory_space<vmem>>, vector<1x1x7x384xf32>
    %513 = vector.shape_cast %512 : vector<1x1x7x384xf32> to vector<7x384xf32>
    %514 = vector.shape_cast %489 : vector<7x384xf32> to vector<1x1x7x384xf32>
    tpu.vector_store %arg4[%c0_291, %c6_292, %c0_293, %c0_294], %514 {strides = array<i32>} : memref<1x7x7x1152xf32, #tpu.memory_space<vmem>>, vector<1x1x7x384xf32>,
    %c0_295 = arith.constant 0 : index
    %c0_296 = arith.constant 0 : index
    %c384 = arith.constant 384 : index
    %515 = vector.load %arg3[%c0_295, %c0_296, %c384] : memref<5x5x1152xf32, #tpu.memory_space<vmem>>, vector<1x1x384xf32>
    %516 = vector.shape_cast %515 : vector<1x1x384xf32> to vector<384xf32>
    %517 = vector.shape_cast %516 : vector<384xf32> to vector<1x384xf32>
    %518 = vector.broadcast %517 : vector<1x384xf32> to vector<7x384xf32>
    %c1_297 = arith.constant 1 : index
    %c0_298 = arith.constant 0 : index
    %c384_299 = arith.constant 384 : index
    %519 = vector.load %arg3[%c1_297, %c0_298, %c384_299] : memref<5x5x1152xf32, #tpu.memory_space<vmem>>, vector<1x1x384xf32>
    %520 = vector.shape_cast %519 : vector<1x1x384xf32> to vector<384xf32>
    %521 = vector.shape_cast %520 : vector<384xf32> to vector<1x384xf32>
    %522 = vector.broadcast %521 : vector<1x384xf32> to vector<7x384xf32>
    %c2_300 = arith.constant 2 : index
    %c0_301 = arith.constant 0 : index
    %c384_302 = arith.constant 384 : index
    %523 = vector.load %arg3[%c2_300, %c0_301, %c384_302] : memref<5x5x1152xf32, #tpu.memory_space<vmem>>, vector<1x1x384xf32>
    %524 = vector.shape_cast %523 : vector<1x1x384xf32> to vector<384xf32>
    %525 = vector.shape_cast %524 : vector<384xf32> to vector<1x384xf32>
    %526 = vector.broadcast %525 : vector<1x384xf32> to vector<7x384xf32>
    %c3_303 = arith.constant 3 : index
    %c0_304 = arith.constant 0 : index
    %c384_305 = arith.constant 384 : index
    %527 = vector.load %arg3[%c3_303, %c0_304, %c384_305] : memref<5x5x1152xf32, #tpu.memory_space<vmem>>, vector<1x1x384xf32>
    %528 = vector.shape_cast %527 : vector<1x1x384xf32> to vector<384xf32>
    %529 = vector.shape_cast %528 : vector<384xf32> to vector<1x384xf32>
    %530 = vector.broadcast %529 : vector<1x384xf32> to vector<7x384xf32>
    %c4_306 = arith.constant 4 : index
    %c0_307 = arith.constant 0 : index
    %c384_308 = arith.constant 384 : index
    %531 = vector.load %arg3[%c4_306, %c0_307, %c384_308] : memref<5x5x1152xf32, #tpu.memory_space<vmem>>, vector<1x1x384xf32>
    %532 = vector.shape_cast %531 : vector<1x1x384xf32> to vector<384xf32>
    %533 = vector.shape_cast %532 : vector<384xf32> to vector<1x384xf32>
    %534 = vector.broadcast %533 : vector<1x384xf32> to vector<7x384xf32>
    %c0_309 = arith.constant 0 : index
    %c0_310 = arith.constant 0 : index
    %c0_311 = arith.constant 0 : index
    %c384_312 = arith.constant 384 : index
    %535 = vector.load %arg5[%c0_309, %c0_310, %c0_311, %c384_312] : memref<5x7x7x1152xf32, #tpu.memory_space<vmem>>, vector<1x1x7x384xf32>
    %536 = vector.shape_cast %535 : vector<1x1x7x384xf32> to vector<7x384xf32>
    %537 = arith.mulf %536, %518 : vector<7x384xf32>
    %538 = arith.mulf %536, %522 : vector<7x384xf32>
    %539 = arith.mulf %536, %526 : vector<7x384xf32>
    %c0_313 = arith.constant 0 : index
    %c1_314 = arith.constant 1 : index
    %c0_315 = arith.constant 0 : index
    %c384_316 = arith.constant 384 : index
    %540 = vector.load %arg5[%c0_313, %c1_314, %c0_315, %c384_316] : memref<5x7x7x1152xf32, #tpu.memory_space<vmem>>, vector<1x1x7x384xf32>
    %541 = vector.shape_cast %540 : vector<1x1x7x384xf32> to vector<7x384xf32>
    %542 = arith.mulf %541, %518 : vector<7x384xf32>
    %543 = arith.mulf %541, %522 : vector<7x384xf32>
    %544 = arith.addf %537, %543 : vector<7x384xf32>
    %545 = arith.mulf %541, %526 : vector<7x384xf32>
    %546 = arith.addf %538, %545 : vector<7x384xf32>
    %547 = arith.mulf %541, %530 : vector<7x384xf32>
    %548 = arith.addf %539, %547 : vector<7x384xf32>
    %c0_317 = arith.constant 0 : index
    %c2_318 = arith.constant 2 : index
    %c0_319 = arith.constant 0 : index
    %c384_320 = arith.constant 384 : index
    %549 = vector.load %arg5[%c0_317, %c2_318, %c0_319, %c384_320] : memref<5x7x7x1152xf32, #tpu.memory_space<vmem>>, vector<1x1x7x384xf32>
    %550 = vector.shape_cast %549 : vector<1x1x7x384xf32> to vector<7x384xf32>
    %551 = arith.mulf %550, %518 : vector<7x384xf32>
    %552 = arith.mulf %550, %522 : vector<7x384xf32>
    %553 = arith.addf %542, %552 : vector<7x384xf32>
    %554 = arith.mulf %550, %526 : vector<7x384xf32>
    %555 = arith.addf %544, %554 : vector<7x384xf32>
    %556 = arith.mulf %550, %530 : vector<7x384xf32>
    %557 = arith.addf %546, %556 : vector<7x384xf32>
    %558 = arith.mulf %550, %534 : vector<7x384xf32>
    %559 = arith.addf %548, %558 : vector<7x384xf32>
    %c0_321 = arith.constant 0 : index
    %c3_322 = arith.constant 3 : index
    %c0_323 = arith.constant 0 : index
    %c384_324 = arith.constant 384 : index
    %560 = vector.load %arg5[%c0_321, %c3_322, %c0_323, %c384_324] : memref<5x7x7x1152xf32, #tpu.memory_space<vmem>>, vector<1x1x7x384xf32>
    %561 = vector.shape_cast %560 : vector<1x1x7x384xf32> to vector<7x384xf32>
    %562 = arith.mulf %561, %518 : vector<7x384xf32>
    %563 = arith.mulf %561, %522 : vector<7x384xf32>
    %564 = arith.addf %551, %563 : vector<7x384xf32>
    %565 = arith.mulf %561, %526 : vector<7x384xf32>
    %566 = arith.addf %553, %565 : vector<7x384xf32>
    %567 = arith.mulf %561, %530 : vector<7x384xf32>
    %568 = arith.addf %555, %567 : vector<7x384xf32>
    %569 = arith.mulf %561, %534 : vector<7x384xf32>
    %570 = arith.addf %557, %569 : vector<7x384xf32>
    %c0_325 = arith.constant 0 : index
    %c4_326 = arith.constant 4 : index
    %c0_327 = arith.constant 0 : index
    %c384_328 = arith.constant 384 : index
    %571 = vector.load %arg5[%c0_325, %c4_326, %c0_327, %c384_328] : memref<5x7x7x1152xf32, #tpu.memory_space<vmem>>, vector<1x1x7x384xf32>
    %572 = vector.shape_cast %571 : vector<1x1x7x384xf32> to vector<7x384xf32>
    %573 = arith.mulf %572, %518 : vector<7x384xf32>
    %574 = arith.mulf %572, %522 : vector<7x384xf32>
    %575 = arith.addf %562, %574 : vector<7x384xf32>
    %576 = arith.mulf %572, %526 : vector<7x384xf32>
    %577 = arith.addf %564, %576 : vector<7x384xf32>
    %578 = arith.mulf %572, %530 : vector<7x384xf32>
    %579 = arith.addf %566, %578 : vector<7x384xf32>
    %580 = arith.mulf %572, %534 : vector<7x384xf32>
    %581 = arith.addf %568, %580 : vector<7x384xf32>
    %c0_329 = arith.constant 0 : index
    %c5_330 = arith.constant 5 : index
    %c0_331 = arith.constant 0 : index
    %c384_332 = arith.constant 384 : index
    %582 = vector.load %arg5[%c0_329, %c5_330, %c0_331, %c384_332] : memref<5x7x7x1152xf32, #tpu.memory_space<vmem>>, vector<1x1x7x384xf32>
    %583 = vector.shape_cast %582 : vector<1x1x7x384xf32> to vector<7x384xf32>
    %584 = arith.mulf %583, %522 : vector<7x384xf32>
    %585 = arith.addf %573, %584 : vector<7x384xf32>
    %586 = arith.mulf %583, %526 : vector<7x384xf32>
    %587 = arith.addf %575, %586 : vector<7x384xf32>
    %588 = arith.mulf %583, %530 : vector<7x384xf32>
    %589 = arith.addf %577, %588 : vector<7x384xf32>
    %590 = arith.mulf %583, %534 : vector<7x384xf32>
    %591 = arith.addf %579, %590 : vector<7x384xf32>
    %c0_333 = arith.constant 0 : index
    %c6_334 = arith.constant 6 : index
    %c0_335 = arith.constant 0 : index
    %c384_336 = arith.constant 384 : index
    %592 = vector.load %arg5[%c0_333, %c6_334, %c0_335, %c384_336] : memref<5x7x7x1152xf32, #tpu.memory_space<vmem>>, vector<1x1x7x384xf32>
    %593 = vector.shape_cast %592 : vector<1x1x7x384xf32> to vector<7x384xf32>
    %594 = arith.mulf %593, %526 : vector<7x384xf32>
    %595 = arith.addf %585, %594 : vector<7x384xf32>
    %596 = arith.mulf %593, %530 : vector<7x384xf32>
    %597 = arith.addf %587, %596 : vector<7x384xf32>
    %598 = arith.mulf %593, %534 : vector<7x384xf32>
    %599 = arith.addf %589, %598 : vector<7x384xf32>
    %c0_337 = arith.constant 0 : index
    %c1_338 = arith.constant 1 : index
    %c384_339 = arith.constant 384 : index
    %600 = vector.load %arg3[%c0_337, %c1_338, %c384_339] : memref<5x5x1152xf32, #tpu.memory_space<vmem>>, vector<1x1x384xf32>
    %601 = vector.shape_cast %600 : vector<1x1x384xf32> to vector<384xf32>
    %602 = vector.shape_cast %601 : vector<384xf32> to vector<1x384xf32>
    %603 = vector.broadcast %602 : vector<1x384xf32> to vector<7x384xf32>
    %c1_340 = arith.constant 1 : index
    %c1_341 = arith.constant 1 : index
    %c384_342 = arith.constant 384 : index
    %604 = vector.load %arg3[%c1_340, %c1_341, %c384_342] : memref<5x5x1152xf32, #tpu.memory_space<vmem>>, vector<1x1x384xf32>
    %605 = vector.shape_cast %604 : vector<1x1x384xf32> to vector<384xf32>
    %606 = vector.shape_cast %605 : vector<384xf32> to vector<1x384xf32>
    %607 = vector.broadcast %606 : vector<1x384xf32> to vector<7x384xf32>
    %c2_343 = arith.constant 2 : index
    %c1_344 = arith.constant 1 : index
    %c384_345 = arith.constant 384 : index
    %608 = vector.load %arg3[%c2_343, %c1_344, %c384_345] : memref<5x5x1152xf32, #tpu.memory_space<vmem>>, vector<1x1x384xf32>
    %609 = vector.shape_cast %608 : vector<1x1x384xf32> to vector<384xf32>
    %610 = vector.shape_cast %609 : vector<384xf32> to vector<1x384xf32>
    %611 = vector.broadcast %610 : vector<1x384xf32> to vector<7x384xf32>
    %c3_346 = arith.constant 3 : index
    %c1_347 = arith.constant 1 : index
    %c384_348 = arith.constant 384 : index
    %612 = vector.load %arg3[%c3_346, %c1_347, %c384_348] : memref<5x5x1152xf32, #tpu.memory_space<vmem>>, vector<1x1x384xf32>
    %613 = vector.shape_cast %612 : vector<1x1x384xf32> to vector<384xf32>
    %614 = vector.shape_cast %613 : vector<384xf32> to vector<1x384xf32>
    %615 = vector.broadcast %614 : vector<1x384xf32> to vector<7x384xf32>
    %c4_349 = arith.constant 4 : index
    %c1_350 = arith.constant 1 : index
    %c384_351 = arith.constant 384 : index
    %616 = vector.load %arg3[%c4_349, %c1_350, %c384_351] : memref<5x5x1152xf32, #tpu.memory_space<vmem>>, vector<1x1x384xf32>
    %617 = vector.shape_cast %616 : vector<1x1x384xf32> to vector<384xf32>
    %618 = vector.shape_cast %617 : vector<384xf32> to vector<1x384xf32>
    %619 = vector.broadcast %618 : vector<1x384xf32> to vector<7x384xf32>
    %c1_352 = arith.constant 1 : index
    %c0_353 = arith.constant 0 : index
    %c0_354 = arith.constant 0 : index
    %c384_355 = arith.constant 384 : index
    %620 = vector.load %arg5[%c1_352, %c0_353, %c0_354, %c384_355] : memref<5x7x7x1152xf32, #tpu.memory_space<vmem>>, vector<1x1x7x384xf32>
    %621 = vector.shape_cast %620 : vector<1x1x7x384xf32> to vector<7x384xf32>
    %622 = arith.mulf %621, %603 : vector<7x384xf32>
    %623 = arith.addf %581, %622 : vector<7x384xf32>
    %624 = arith.mulf %621, %607 : vector<7x384xf32>
    %625 = arith.addf %570, %624 : vector<7x384xf32>
    %626 = arith.mulf %621, %611 : vector<7x384xf32>
    %627 = arith.addf %559, %626 : vector<7x384xf32>
    %c1_356 = arith.constant 1 : index
    %c1_357 = arith.constant 1 : index
    %c0_358 = arith.constant 0 : index
    %c384_359 = arith.constant 384 : index
    %628 = vector.load %arg5[%c1_356, %c1_357, %c0_358, %c384_359] : memref<5x7x7x1152xf32, #tpu.memory_space<vmem>>, vector<1x1x7x384xf32>
    %629 = vector.shape_cast %628 : vector<1x1x7x384xf32> to vector<7x384xf32>
    %630 = arith.mulf %629, %603 : vector<7x384xf32>
    %631 = arith.addf %591, %630 : vector<7x384xf32>
    %632 = arith.mulf %629, %607 : vector<7x384xf32>
    %633 = arith.addf %623, %632 : vector<7x384xf32>
    %634 = arith.mulf %629, %611 : vector<7x384xf32>
    %635 = arith.addf %625, %634 : vector<7x384xf32>
    %636 = arith.mulf %629, %615 : vector<7x384xf32>
    %637 = arith.addf %627, %636 : vector<7x384xf32>
    %c1_360 = arith.constant 1 : index
    %c2_361 = arith.constant 2 : index
    %c0_362 = arith.constant 0 : index
    %c384_363 = arith.constant 384 : index
    %638 = vector.load %arg5[%c1_360, %c2_361, %c0_362, %c384_363] : memref<5x7x7x1152xf32, #tpu.memory_space<vmem>>, vector<1x1x7x384xf32>
    %639 = vector.shape_cast %638 : vector<1x1x7x384xf32> to vector<7x384xf32>
    %640 = arith.mulf %639, %603 : vector<7x384xf32>
    %641 = arith.addf %599, %640 : vector<7x384xf32>
    %642 = arith.mulf %639, %607 : vector<7x384xf32>
    %643 = arith.addf %631, %642 : vector<7x384xf32>
    %644 = arith.mulf %639, %611 : vector<7x384xf32>
    %645 = arith.addf %633, %644 : vector<7x384xf32>
    %646 = arith.mulf %639, %615 : vector<7x384xf32>
    %647 = arith.addf %635, %646 : vector<7x384xf32>
    %648 = arith.mulf %639, %619 : vector<7x384xf32>
    %649 = arith.addf %637, %648 : vector<7x384xf32>
    %c1_364 = arith.constant 1 : index
    %c3_365 = arith.constant 3 : index
    %c0_366 = arith.constant 0 : index
    %c384_367 = arith.constant 384 : index
    %650 = vector.load %arg5[%c1_364, %c3_365, %c0_366, %c384_367] : memref<5x7x7x1152xf32, #tpu.memory_space<vmem>>, vector<1x1x7x384xf32>
    %651 = vector.shape_cast %650 : vector<1x1x7x384xf32> to vector<7x384xf32>
    %652 = arith.mulf %651, %603 : vector<7x384xf32>
    %653 = arith.addf %597, %652 : vector<7x384xf32>
    %654 = arith.mulf %651, %607 : vector<7x384xf32>
    %655 = arith.addf %641, %654 : vector<7x384xf32>
    %656 = arith.mulf %651, %611 : vector<7x384xf32>
    %657 = arith.addf %643, %656 : vector<7x384xf32>
    %658 = arith.mulf %651, %615 : vector<7x384xf32>
    %659 = arith.addf %645, %658 : vector<7x384xf32>
    %660 = arith.mulf %651, %619 : vector<7x384xf32>
    %661 = arith.addf %647, %660 : vector<7x384xf32>
    %c1_368 = arith.constant 1 : index
    %c4_369 = arith.constant 4 : index
    %c0_370 = arith.constant 0 : index
    %c384_371 = arith.constant 384 : index
    %662 = vector.load %arg5[%c1_368, %c4_369, %c0_370, %c384_371] : memref<5x7x7x1152xf32, #tpu.memory_space<vmem>>, vector<1x1x7x384xf32>
    %663 = vector.shape_cast %662 : vector<1x1x7x384xf32> to vector<7x384xf32>
    %664 = arith.mulf %663, %603 : vector<7x384xf32>
    %665 = arith.addf %595, %664 : vector<7x384xf32>
    %666 = arith.mulf %663, %607 : vector<7x384xf32>
    %667 = arith.addf %653, %666 : vector<7x384xf32>
    %668 = arith.mulf %663, %611 : vector<7x384xf32>
    %669 = arith.addf %655, %668 : vector<7x384xf32>
    %670 = arith.mulf %663, %615 : vector<7x384xf32>
    %671 = arith.addf %657, %670 : vector<7x384xf32>
    %672 = arith.mulf %663, %619 : vector<7x384xf32>
    %673 = arith.addf %659, %672 : vector<7x384xf32>
    %c1_372 = arith.constant 1 : index
    %c5_373 = arith.constant 5 : index
    %c0_374 = arith.constant 0 : index
    %c384_375 = arith.constant 384 : index
    %674 = vector.load %arg5[%c1_372, %c5_373, %c0_374, %c384_375] : memref<5x7x7x1152xf32, #tpu.memory_space<vmem>>, vector<1x1x7x384xf32>
    %675 = vector.shape_cast %674 : vector<1x1x7x384xf32> to vector<7x384xf32>
    %676 = arith.mulf %675, %607 : vector<7x384xf32>
    %677 = arith.addf %665, %676 : vector<7x384xf32>
    %678 = arith.mulf %675, %611 : vector<7x384xf32>
    %679 = arith.addf %667, %678 : vector<7x384xf32>
    %680 = arith.mulf %675, %615 : vector<7x384xf32>
    %681 = arith.addf %669, %680 : vector<7x384xf32>
    %682 = arith.mulf %675, %619 : vector<7x384xf32>
    %683 = arith.addf %671, %682 : vector<7x384xf32>
    %c1_376 = arith.constant 1 : index
    %c6_377 = arith.constant 6 : index
    %c0_378 = arith.constant 0 : index
    %c384_379 = arith.constant 384 : index
    %684 = vector.load %arg5[%c1_376, %c6_377, %c0_378, %c384_379] : memref<5x7x7x1152xf32, #tpu.memory_space<vmem>>, vector<1x1x7x384xf32>
    %685 = vector.shape_cast %684 : vector<1x1x7x384xf32> to vector<7x384xf32>
    %686 = arith.mulf %685, %611 : vector<7x384xf32>
    %687 = arith.addf %677, %686 : vector<7x384xf32>
    %688 = arith.mulf %685, %615 : vector<7x384xf32>
    %689 = arith.addf %679, %688 : vector<7x384xf32>
    %690 = arith.mulf %685, %619 : vector<7x384xf32>
    %691 = arith.addf %681, %690 : vector<7x384xf32>
    %c0_380 = arith.constant 0 : index
    %c2_381 = arith.constant 2 : index
    %c384_382 = arith.constant 384 : index
    %692 = vector.load %arg3[%c0_380, %c2_381, %c384_382] : memref<5x5x1152xf32, #tpu.memory_space<vmem>>, vector<1x1x384xf32>
    %693 = vector.shape_cast %692 : vector<1x1x384xf32> to vector<384xf32>
    %694 = vector.shape_cast %693 : vector<384xf32> to vector<1x384xf32>
    %695 = vector.broadcast %694 : vector<1x384xf32> to vector<7x384xf32>
    %c1_383 = arith.constant 1 : index
    %c2_384 = arith.constant 2 : index
    %c384_385 = arith.constant 384 : index
    %696 = vector.load %arg3[%c1_383, %c2_384, %c384_385] : memref<5x5x1152xf32, #tpu.memory_space<vmem>>, vector<1x1x384xf32>
    %697 = vector.shape_cast %696 : vector<1x1x384xf32> to vector<384xf32>
    %698 = vector.shape_cast %697 : vector<384xf32> to vector<1x384xf32>
    %699 = vector.broadcast %698 : vector<1x384xf32> to vector<7x384xf32>
    %c2_386 = arith.constant 2 : index
    %c2_387 = arith.constant 2 : index
    %c384_388 = arith.constant 384 : index
    %700 = vector.load %arg3[%c2_386, %c2_387, %c384_388] : memref<5x5x1152xf32, #tpu.memory_space<vmem>>, vector<1x1x384xf32>
    %701 = vector.shape_cast %700 : vector<1x1x384xf32> to vector<384xf32>
    %702 = vector.shape_cast %701 : vector<384xf32> to vector<1x384xf32>
    %703 = vector.broadcast %702 : vector<1x384xf32> to vector<7x384xf32>
    %c3_389 = arith.constant 3 : index
    %c2_390 = arith.constant 2 : index
    %c384_391 = arith.constant 384 : index
    %704 = vector.load %arg3[%c3_389, %c2_390, %c384_391] : memref<5x5x1152xf32, #tpu.memory_space<vmem>>, vector<1x1x384xf32>
    %705 = vector.shape_cast %704 : vector<1x1x384xf32> to vector<384xf32>
    %706 = vector.shape_cast %705 : vector<384xf32> to vector<1x384xf32>
    %707 = vector.broadcast %706 : vector<1x384xf32> to vector<7x384xf32>
    %c4_392 = arith.constant 4 : index
    %c2_393 = arith.constant 2 : index
    %c384_394 = arith.constant 384 : index
    %708 = vector.load %arg3[%c4_392, %c2_393, %c384_394] : memref<5x5x1152xf32, #tpu.memory_space<vmem>>, vector<1x1x384xf32>
    %709 = vector.shape_cast %708 : vector<1x1x384xf32> to vector<384xf32>
    %710 = vector.shape_cast %709 : vector<384xf32> to vector<1x384xf32>
    %711 = vector.broadcast %710 : vector<1x384xf32> to vector<7x384xf32>
    %c2_395 = arith.constant 2 : index
    %c0_396 = arith.constant 0 : index
    %c0_397 = arith.constant 0 : index
    %c384_398 = arith.constant 384 : index
    %712 = vector.load %arg5[%c2_395, %c0_396, %c0_397, %c384_398] : memref<5x7x7x1152xf32, #tpu.memory_space<vmem>>, vector<1x1x7x384xf32>
    %713 = vector.shape_cast %712 : vector<1x1x7x384xf32> to vector<7x384xf32>
    %714 = arith.mulf %713, %695 : vector<7x384xf32>
    %715 = arith.addf %673, %714 : vector<7x384xf32>
    %716 = arith.mulf %713, %699 : vector<7x384xf32>
    %717 = arith.addf %661, %716 : vector<7x384xf32>
    %718 = arith.mulf %713, %703 : vector<7x384xf32>
    %719 = arith.addf %649, %718 : vector<7x384xf32>
    %c2_399 = arith.constant 2 : index
    %c1_400 = arith.constant 1 : index
    %c0_401 = arith.constant 0 : index
    %c384_402 = arith.constant 384 : index
    %720 = vector.load %arg5[%c2_399, %c1_400, %c0_401, %c384_402] : memref<5x7x7x1152xf32, #tpu.memory_space<vmem>>, vector<1x1x7x384xf32>
    %721 = vector.shape_cast %720 : vector<1x1x7x384xf32> to vector<7x384xf32>
    %722 = arith.mulf %721, %695 : vector<7x384xf32>
    %723 = arith.addf %683, %722 : vector<7x384xf32>
    %724 = arith.mulf %721, %699 : vector<7x384xf32>
    %725 = arith.addf %715, %724 : vector<7x384xf32>
    %726 = arith.mulf %721, %703 : vector<7x384xf32>
    %727 = arith.addf %717, %726 : vector<7x384xf32>
    %728 = arith.mulf %721, %707 : vector<7x384xf32>
    %729 = arith.addf %719, %728 : vector<7x384xf32>
    %c2_403 = arith.constant 2 : index
    %c2_404 = arith.constant 2 : index
    %c0_405 = arith.constant 0 : index
    %c384_406 = arith.constant 384 : index
    %730 = vector.load %arg5[%c2_403, %c2_404, %c0_405, %c384_406] : memref<5x7x7x1152xf32, #tpu.memory_space<vmem>>, vector<1x1x7x384xf32>
    %731 = vector.shape_cast %730 : vector<1x1x7x384xf32> to vector<7x384xf32>
    %732 = arith.mulf %731, %695 : vector<7x384xf32>
    %733 = arith.addf %691, %732 : vector<7x384xf32>
    %734 = arith.mulf %731, %699 : vector<7x384xf32>
    %735 = arith.addf %723, %734 : vector<7x384xf32>
    %736 = arith.mulf %731, %703 : vector<7x384xf32>
    %737 = arith.addf %725, %736 : vector<7x384xf32>
    %738 = arith.mulf %731, %707 : vector<7x384xf32>
    %739 = arith.addf %727, %738 : vector<7x384xf32>
    %740 = arith.mulf %731, %711 : vector<7x384xf32>
    %741 = arith.addf %729, %740 : vector<7x384xf32>
    %c2_407 = arith.constant 2 : index
    %c3_408 = arith.constant 3 : index
    %c0_409 = arith.constant 0 : index
    %c384_410 = arith.constant 384 : index
    %742 = vector.load %arg5[%c2_407, %c3_408, %c0_409, %c384_410] : memref<5x7x7x1152xf32, #tpu.memory_space<vmem>>, vector<1x1x7x384xf32>
    %743 = vector.shape_cast %742 : vector<1x1x7x384xf32> to vector<7x384xf32>
    %744 = arith.mulf %743, %695 : vector<7x384xf32>
    %745 = arith.addf %689, %744 : vector<7x384xf32>
    %746 = arith.mulf %743, %699 : vector<7x384xf32>
    %747 = arith.addf %733, %746 : vector<7x384xf32>
    %748 = arith.mulf %743, %703 : vector<7x384xf32>
    %749 = arith.addf %735, %748 : vector<7x384xf32>
    %750 = arith.mulf %743, %707 : vector<7x384xf32>
    %751 = arith.addf %737, %750 : vector<7x384xf32>
    %752 = arith.mulf %743, %711 : vector<7x384xf32>
    %753 = arith.addf %739, %752 : vector<7x384xf32>
    %c2_411 = arith.constant 2 : index
    %c4_412 = arith.constant 4 : index
    %c0_413 = arith.constant 0 : index
    %c384_414 = arith.constant 384 : index
    %754 = vector.load %arg5[%c2_411, %c4_412, %c0_413, %c384_414] : memref<5x7x7x1152xf32, #tpu.memory_space<vmem>>, vector<1x1x7x384xf32>
    %755 = vector.shape_cast %754 : vector<1x1x7x384xf32> to vector<7x384xf32>
    %756 = arith.mulf %755, %695 : vector<7x384xf32>
    %757 = arith.addf %687, %756 : vector<7x384xf32>
    %758 = arith.mulf %755, %699 : vector<7x384xf32>
    %759 = arith.addf %745, %758 : vector<7x384xf32>
    %760 = arith.mulf %755, %703 : vector<7x384xf32>
    %761 = arith.addf %747, %760 : vector<7x384xf32>
    %762 = arith.mulf %755, %707 : vector<7x384xf32>
    %763 = arith.addf %749, %762 : vector<7x384xf32>
    %764 = arith.mulf %755, %711 : vector<7x384xf32>
    %765 = arith.addf %751, %764 : vector<7x384xf32>
    %c2_415 = arith.constant 2 : index
    %c5_416 = arith.constant 5 : index
    %c0_417 = arith.constant 0 : index
    %c384_418 = arith.constant 384 : index
    %766 = vector.load %arg5[%c2_415, %c5_416, %c0_417, %c384_418] : memref<5x7x7x1152xf32, #tpu.memory_space<vmem>>, vector<1x1x7x384xf32>
    %767 = vector.shape_cast %766 : vector<1x1x7x384xf32> to vector<7x384xf32>
    %768 = arith.mulf %767, %699 : vector<7x384xf32>
    %769 = arith.addf %757, %768 : vector<7x384xf32>
    %770 = arith.mulf %767, %703 : vector<7x384xf32>
    %771 = arith.addf %759, %770 : vector<7x384xf32>
    %772 = arith.mulf %767, %707 : vector<7x384xf32>
    %773 = arith.addf %761, %772 : vector<7x384xf32>
    %774 = arith.mulf %767, %711 : vector<7x384xf32>
    %775 = arith.addf %763, %774 : vector<7x384xf32>
    %c2_419 = arith.constant 2 : index
    %c6_420 = arith.constant 6 : index
    %c0_421 = arith.constant 0 : index
    %c384_422 = arith.constant 384 : index
    %776 = vector.load %arg5[%c2_419, %c6_420, %c0_421, %c384_422] : memref<5x7x7x1152xf32, #tpu.memory_space<vmem>>, vector<1x1x7x384xf32>
    %777 = vector.shape_cast %776 : vector<1x1x7x384xf32> to vector<7x384xf32>
    %778 = arith.mulf %777, %703 : vector<7x384xf32>
    %779 = arith.addf %769, %778 : vector<7x384xf32>
    %780 = arith.mulf %777, %707 : vector<7x384xf32>
    %781 = arith.addf %771, %780 : vector<7x384xf32>
    %782 = arith.mulf %777, %711 : vector<7x384xf32>
    %783 = arith.addf %773, %782 : vector<7x384xf32>
    %c0_423 = arith.constant 0 : index
    %c3_424 = arith.constant 3 : index
    %c384_425 = arith.constant 384 : index
    %784 = vector.load %arg3[%c0_423, %c3_424, %c384_425] : memref<5x5x1152xf32, #tpu.memory_space<vmem>>, vector<1x1x384xf32>
    %785 = vector.shape_cast %784 : vector<1x1x384xf32> to vector<384xf32>
    %786 = vector.shape_cast %785 : vector<384xf32> to vector<1x384xf32>
    %787 = vector.broadcast %786 : vector<1x384xf32> to vector<7x384xf32>
    %c1_426 = arith.constant 1 : index
    %c3_427 = arith.constant 3 : index
    %c384_428 = arith.constant 384 : index
    %788 = vector.load %arg3[%c1_426, %c3_427, %c384_428] : memref<5x5x1152xf32, #tpu.memory_space<vmem>>, vector<1x1x384xf32>
    %789 = vector.shape_cast %788 : vector<1x1x384xf32> to vector<384xf32>
    %790 = vector.shape_cast %789 : vector<384xf32> to vector<1x384xf32>
    %791 = vector.broadcast %790 : vector<1x384xf32> to vector<7x384xf32>
    %c2_429 = arith.constant 2 : index
    %c3_430 = arith.constant 3 : index
    %c384_431 = arith.constant 384 : index
    %792 = vector.load %arg3[%c2_429, %c3_430, %c384_431] : memref<5x5x1152xf32, #tpu.memory_space<vmem>>, vector<1x1x384xf32>
    %793 = vector.shape_cast %792 : vector<1x1x384xf32> to vector<384xf32>
    %794 = vector.shape_cast %793 : vector<384xf32> to vector<1x384xf32>
    %795 = vector.broadcast %794 : vector<1x384xf32> to vector<7x384xf32>
    %c3_432 = arith.constant 3 : index
    %c3_433 = arith.constant 3 : index
    %c384_434 = arith.constant 384 : index
    %796 = vector.load %arg3[%c3_432, %c3_433, %c384_434] : memref<5x5x1152xf32, #tpu.memory_space<vmem>>, vector<1x1x384xf32>
    %797 = vector.shape_cast %796 : vector<1x1x384xf32> to vector<384xf32>
    %798 = vector.shape_cast %797 : vector<384xf32> to vector<1x384xf32>
    %799 = vector.broadcast %798 : vector<1x384xf32> to vector<7x384xf32>
    %c4_435 = arith.constant 4 : index
    %c3_436 = arith.constant 3 : index
    %c384_437 = arith.constant 384 : index
    %800 = vector.load %arg3[%c4_435, %c3_436, %c384_437] : memref<5x5x1152xf32, #tpu.memory_space<vmem>>, vector<1x1x384xf32>
    %801 = vector.shape_cast %800 : vector<1x1x384xf32> to vector<384xf32>
    %802 = vector.shape_cast %801 : vector<384xf32> to vector<1x384xf32>
    %803 = vector.broadcast %802 : vector<1x384xf32> to vector<7x384xf32>
    %c3_438 = arith.constant 3 : index
    %c0_439 = arith.constant 0 : index
    %c0_440 = arith.constant 0 : index
    %c384_441 = arith.constant 384 : index
    %804 = vector.load %arg5[%c3_438, %c0_439, %c0_440, %c384_441] : memref<5x7x7x1152xf32, #tpu.memory_space<vmem>>, vector<1x1x7x384xf32>
    %805 = vector.shape_cast %804 : vector<1x1x7x384xf32> to vector<7x384xf32>
    %806 = arith.mulf %805, %787 : vector<7x384xf32>
    %807 = arith.addf %765, %806 : vector<7x384xf32>
    %808 = arith.mulf %805, %791 : vector<7x384xf32>
    %809 = arith.addf %753, %808 : vector<7x384xf32>
    %810 = arith.mulf %805, %795 : vector<7x384xf32>
    %811 = arith.addf %741, %810 : vector<7x384xf32>
    %c3_442 = arith.constant 3 : index
    %c1_443 = arith.constant 1 : index
    %c0_444 = arith.constant 0 : index
    %c384_445 = arith.constant 384 : index
    %812 = vector.load %arg5[%c3_442, %c1_443, %c0_444, %c384_445] : memref<5x7x7x1152xf32, #tpu.memory_space<vmem>>, vector<1x1x7x384xf32>
    %813 = vector.shape_cast %812 : vector<1x1x7x384xf32> to vector<7x384xf32>
    %814 = arith.mulf %813, %787 : vector<7x384xf32>
    %815 = arith.addf %775, %814 : vector<7x384xf32>
    %816 = arith.mulf %813, %791 : vector<7x384xf32>
    %817 = arith.addf %807, %816 : vector<7x384xf32>
    %818 = arith.mulf %813, %795 : vector<7x384xf32>
    %819 = arith.addf %809, %818 : vector<7x384xf32>
    %820 = arith.mulf %813, %799 : vector<7x384xf32>
    %821 = arith.addf %811, %820 : vector<7x384xf32>
    %c3_446 = arith.constant 3 : index
    %c2_447 = arith.constant 2 : index
    %c0_448 = arith.constant 0 : index
    %c384_449 = arith.constant 384 : index
    %822 = vector.load %arg5[%c3_446, %c2_447, %c0_448, %c384_449] : memref<5x7x7x1152xf32, #tpu.memory_space<vmem>>, vector<1x1x7x384xf32>
    %823 = vector.shape_cast %822 : vector<1x1x7x384xf32> to vector<7x384xf32>
    %824 = arith.mulf %823, %787 : vector<7x384xf32>
    %825 = arith.addf %783, %824 : vector<7x384xf32>
    %826 = arith.mulf %823, %791 : vector<7x384xf32>
    %827 = arith.addf %815, %826 : vector<7x384xf32>
    %828 = arith.mulf %823, %795 : vector<7x384xf32>
    %829 = arith.addf %817, %828 : vector<7x384xf32>
    %830 = arith.mulf %823, %799 : vector<7x384xf32>
    %831 = arith.addf %819, %830 : vector<7x384xf32>
    %832 = arith.mulf %823, %803 : vector<7x384xf32>
    %833 = arith.addf %821, %832 : vector<7x384xf32>
    %c3_450 = arith.constant 3 : index
    %c3_451 = arith.constant 3 : index
    %c0_452 = arith.constant 0 : index
    %c384_453 = arith.constant 384 : index
    %834 = vector.load %arg5[%c3_450, %c3_451, %c0_452, %c384_453] : memref<5x7x7x1152xf32, #tpu.memory_space<vmem>>, vector<1x1x7x384xf32>
    %835 = vector.shape_cast %834 : vector<1x1x7x384xf32> to vector<7x384xf32>
    %836 = arith.mulf %835, %787 : vector<7x384xf32>
    %837 = arith.addf %781, %836 : vector<7x384xf32>
    %838 = arith.mulf %835, %791 : vector<7x384xf32>
    %839 = arith.addf %825, %838 : vector<7x384xf32>
    %840 = arith.mulf %835, %795 : vector<7x384xf32>
    %841 = arith.addf %827, %840 : vector<7x384xf32>
    %842 = arith.mulf %835, %799 : vector<7x384xf32>
    %843 = arith.addf %829, %842 : vector<7x384xf32>
    %844 = arith.mulf %835, %803 : vector<7x384xf32>
    %845 = arith.addf %831, %844 : vector<7x384xf32>
    %c3_454 = arith.constant 3 : index
    %c4_455 = arith.constant 4 : index
    %c0_456 = arith.constant 0 : index
    %c384_457 = arith.constant 384 : index
    %846 = vector.load %arg5[%c3_454, %c4_455, %c0_456, %c384_457] : memref<5x7x7x1152xf32, #tpu.memory_space<vmem>>, vector<1x1x7x384xf32>
    %847 = vector.shape_cast %846 : vector<1x1x7x384xf32> to vector<7x384xf32>
    %848 = arith.mulf %847, %787 : vector<7x384xf32>
    %849 = arith.addf %779, %848 : vector<7x384xf32>
    %850 = arith.mulf %847, %791 : vector<7x384xf32>
    %851 = arith.addf %837, %850 : vector<7x384xf32>
    %852 = arith.mulf %847, %795 : vector<7x384xf32>
    %853 = arith.addf %839, %852 : vector<7x384xf32>
    %854 = arith.mulf %847, %799 : vector<7x384xf32>
    %855 = arith.addf %841, %854 : vector<7x384xf32>
    %856 = arith.mulf %847, %803 : vector<7x384xf32>
    %857 = arith.addf %843, %856 : vector<7x384xf32>
    %c3_458 = arith.constant 3 : index
    %c5_459 = arith.constant 5 : index
    %c0_460 = arith.constant 0 : index
    %c384_461 = arith.constant 384 : index
    %858 = vector.load %arg5[%c3_458, %c5_459, %c0_460, %c384_461] : memref<5x7x7x1152xf32, #tpu.memory_space<vmem>>, vector<1x1x7x384xf32>
    %859 = vector.shape_cast %858 : vector<1x1x7x384xf32> to vector<7x384xf32>
    %860 = arith.mulf %859, %791 : vector<7x384xf32>
    %861 = arith.addf %849, %860 : vector<7x384xf32>
    %862 = arith.mulf %859, %795 : vector<7x384xf32>
    %863 = arith.addf %851, %862 : vector<7x384xf32>
    %864 = arith.mulf %859, %799 : vector<7x384xf32>
    %865 = arith.addf %853, %864 : vector<7x384xf32>
    %866 = arith.mulf %859, %803 : vector<7x384xf32>
    %867 = arith.addf %855, %866 : vector<7x384xf32>
    %c3_462 = arith.constant 3 : index
    %c6_463 = arith.constant 6 : index
    %c0_464 = arith.constant 0 : index
    %c384_465 = arith.constant 384 : index
    %868 = vector.load %arg5[%c3_462, %c6_463, %c0_464, %c384_465] : memref<5x7x7x1152xf32, #tpu.memory_space<vmem>>, vector<1x1x7x384xf32>
    %869 = vector.shape_cast %868 : vector<1x1x7x384xf32> to vector<7x384xf32>
    %870 = arith.mulf %869, %795 : vector<7x384xf32>
    %871 = arith.addf %861, %870 : vector<7x384xf32>
    %872 = arith.mulf %869, %799 : vector<7x384xf32>
    %873 = arith.addf %863, %872 : vector<7x384xf32>
    %874 = arith.mulf %869, %803 : vector<7x384xf32>
    %875 = arith.addf %865, %874 : vector<7x384xf32>
    %c0_466 = arith.constant 0 : index
    %c4_467 = arith.constant 4 : index
    %c384_468 = arith.constant 384 : index
    %876 = vector.load %arg3[%c0_466, %c4_467, %c384_468] : memref<5x5x1152xf32, #tpu.memory_space<vmem>>, vector<1x1x384xf32>
    %877 = vector.shape_cast %876 : vector<1x1x384xf32> to vector<384xf32>
    %878 = vector.shape_cast %877 : vector<384xf32> to vector<1x384xf32>
    %879 = vector.broadcast %878 : vector<1x384xf32> to vector<7x384xf32>
    %c1_469 = arith.constant 1 : index
    %c4_470 = arith.constant 4 : index
    %c384_471 = arith.constant 384 : index
    %880 = vector.load %arg3[%c1_469, %c4_470, %c384_471] : memref<5x5x1152xf32, #tpu.memory_space<vmem>>, vector<1x1x384xf32>
    %881 = vector.shape_cast %880 : vector<1x1x384xf32> to vector<384xf32>
    %882 = vector.shape_cast %881 : vector<384xf32> to vector<1x384xf32>
    %883 = vector.broadcast %882 : vector<1x384xf32> to vector<7x384xf32>
    %c2_472 = arith.constant 2 : index
    %c4_473 = arith.constant 4 : index
    %c384_474 = arith.constant 384 : index
    %884 = vector.load %arg3[%c2_472, %c4_473, %c384_474] : memref<5x5x1152xf32, #tpu.memory_space<vmem>>, vector<1x1x384xf32>
    %885 = vector.shape_cast %884 : vector<1x1x384xf32> to vector<384xf32>
    %886 = vector.shape_cast %885 : vector<384xf32> to vector<1x384xf32>
    %887 = vector.broadcast %886 : vector<1x384xf32> to vector<7x384xf32>
    %c3_475 = arith.constant 3 : index
    %c4_476 = arith.constant 4 : index
    %c384_477 = arith.constant 384 : index
    %888 = vector.load %arg3[%c3_475, %c4_476, %c384_477] : memref<5x5x1152xf32, #tpu.memory_space<vmem>>, vector<1x1x384xf32>
    %889 = vector.shape_cast %888 : vector<1x1x384xf32> to vector<384xf32>
    %890 = vector.shape_cast %889 : vector<384xf32> to vector<1x384xf32>
    %891 = vector.broadcast %890 : vector<1x384xf32> to vector<7x384xf32>
    %c4_478 = arith.constant 4 : index
    %c4_479 = arith.constant 4 : index
    %c384_480 = arith.constant 384 : index
    %892 = vector.load %arg3[%c4_478, %c4_479, %c384_480] : memref<5x5x1152xf32, #tpu.memory_space<vmem>>, vector<1x1x384xf32>
    %893 = vector.shape_cast %892 : vector<1x1x384xf32> to vector<384xf32>
    %894 = vector.shape_cast %893 : vector<384xf32> to vector<1x384xf32>
    %895 = vector.broadcast %894 : vector<1x384xf32> to vector<7x384xf32>
    %c4_481 = arith.constant 4 : index
    %c0_482 = arith.constant 0 : index
    %c0_483 = arith.constant 0 : index
    %c384_484 = arith.constant 384 : index
    %896 = vector.load %arg5[%c4_481, %c0_482, %c0_483, %c384_484] : memref<5x7x7x1152xf32, #tpu.memory_space<vmem>>, vector<1x1x7x384xf32>
    %897 = vector.shape_cast %896 : vector<1x1x7x384xf32> to vector<7x384xf32>
    %898 = arith.mulf %897, %879 : vector<7x384xf32>
    %899 = arith.addf %857, %898 : vector<7x384xf32>
    %900 = arith.mulf %897, %883 : vector<7x384xf32>
    %901 = arith.addf %845, %900 : vector<7x384xf32>
    %902 = arith.mulf %897, %887 : vector<7x384xf32>
    %903 = arith.addf %833, %902 : vector<7x384xf32>
    %c4_485 = arith.constant 4 : index
    %c1_486 = arith.constant 1 : index
    %c0_487 = arith.constant 0 : index
    %c384_488 = arith.constant 384 : index
    %904 = vector.load %arg5[%c4_485, %c1_486, %c0_487, %c384_488] : memref<5x7x7x1152xf32, #tpu.memory_space<vmem>>, vector<1x1x7x384xf32>
    %905 = vector.shape_cast %904 : vector<1x1x7x384xf32> to vector<7x384xf32>
    %906 = arith.mulf %905, %879 : vector<7x384xf32>
    %907 = arith.addf %867, %906 : vector<7x384xf32>
    %908 = arith.mulf %905, %883 : vector<7x384xf32>
    %909 = arith.addf %899, %908 : vector<7x384xf32>
    %910 = arith.mulf %905, %887 : vector<7x384xf32>
    %911 = arith.addf %901, %910 : vector<7x384xf32>
    %912 = arith.mulf %905, %891 : vector<7x384xf32>
    %913 = arith.addf %903, %912 : vector<7x384xf32>
    %c4_489 = arith.constant 4 : index
    %c2_490 = arith.constant 2 : index
    %c0_491 = arith.constant 0 : index
    %c384_492 = arith.constant 384 : index
    %914 = vector.load %arg5[%c4_489, %c2_490, %c0_491, %c384_492] : memref<5x7x7x1152xf32, #tpu.memory_space<vmem>>, vector<1x1x7x384xf32>
    %915 = vector.shape_cast %914 : vector<1x1x7x384xf32> to vector<7x384xf32>
    %916 = arith.mulf %915, %879 : vector<7x384xf32>
    %917 = arith.addf %875, %916 : vector<7x384xf32>
    %918 = arith.mulf %915, %883 : vector<7x384xf32>
    %919 = arith.addf %907, %918 : vector<7x384xf32>
    %920 = arith.mulf %915, %887 : vector<7x384xf32>
    %921 = arith.addf %909, %920 : vector<7x384xf32>
    %922 = arith.mulf %915, %891 : vector<7x384xf32>
    %923 = arith.addf %911, %922 : vector<7x384xf32>
    %924 = arith.mulf %915, %895 : vector<7x384xf32>
    %925 = arith.addf %913, %924 : vector<7x384xf32>
    %c4_493 = arith.constant 4 : index
    %c3_494 = arith.constant 3 : index
    %c0_495 = arith.constant 0 : index
    %c384_496 = arith.constant 384 : index
    %926 = vector.load %arg5[%c4_493, %c3_494, %c0_495, %c384_496] : memref<5x7x7x1152xf32, #tpu.memory_space<vmem>>, vector<1x1x7x384xf32>
    %927 = vector.shape_cast %926 : vector<1x1x7x384xf32> to vector<7x384xf32>
    %928 = arith.mulf %927, %879 : vector<7x384xf32>
    %929 = arith.addf %873, %928 : vector<7x384xf32>
    %930 = arith.mulf %927, %883 : vector<7x384xf32>
    %931 = arith.addf %917, %930 : vector<7x384xf32>
    %932 = arith.mulf %927, %887 : vector<7x384xf32>
    %933 = arith.addf %919, %932 : vector<7x384xf32>
    %934 = arith.mulf %927, %891 : vector<7x384xf32>
    %935 = arith.addf %921, %934 : vector<7x384xf32>
    %936 = arith.mulf %927, %895 : vector<7x384xf32>
    %937 = arith.addf %923, %936 : vector<7x384xf32>
    %c4_497 = arith.constant 4 : index
    %c4_498 = arith.constant 4 : index
    %c0_499 = arith.constant 0 : index
    %c384_500 = arith.constant 384 : index
    %938 = vector.load %arg5[%c4_497, %c4_498, %c0_499, %c384_500] : memref<5x7x7x1152xf32, #tpu.memory_space<vmem>>, vector<1x1x7x384xf32>
    %939 = vector.shape_cast %938 : vector<1x1x7x384xf32> to vector<7x384xf32>
    %940 = arith.mulf %939, %879 : vector<7x384xf32>
    %941 = arith.addf %871, %940 : vector<7x384xf32>
    %942 = arith.mulf %939, %883 : vector<7x384xf32>
    %943 = arith.addf %929, %942 : vector<7x384xf32>
    %944 = arith.mulf %939, %887 : vector<7x384xf32>
    %945 = arith.addf %931, %944 : vector<7x384xf32>
    %946 = arith.mulf %939, %891 : vector<7x384xf32>
    %947 = arith.addf %933, %946 : vector<7x384xf32>
    %948 = arith.mulf %939, %895 : vector<7x384xf32>
    %949 = arith.addf %935, %948 : vector<7x384xf32>
    %c4_501 = arith.constant 4 : index
    %c5_502 = arith.constant 5 : index
    %c0_503 = arith.constant 0 : index
    %c384_504 = arith.constant 384 : index
    %950 = vector.load %arg5[%c4_501, %c5_502, %c0_503, %c384_504] : memref<5x7x7x1152xf32, #tpu.memory_space<vmem>>, vector<1x1x7x384xf32>
    %951 = vector.shape_cast %950 : vector<1x1x7x384xf32> to vector<7x384xf32>
    %952 = arith.mulf %951, %883 : vector<7x384xf32>
    %953 = arith.addf %941, %952 : vector<7x384xf32>
    %954 = arith.mulf %951, %887 : vector<7x384xf32>
    %955 = arith.addf %943, %954 : vector<7x384xf32>
    %956 = arith.mulf %951, %891 : vector<7x384xf32>
    %957 = arith.addf %945, %956 : vector<7x384xf32>
    %958 = arith.mulf %951, %895 : vector<7x384xf32>
    %959 = arith.addf %947, %958 : vector<7x384xf32>
    %c4_505 = arith.constant 4 : index
    %c6_506 = arith.constant 6 : index
    %c0_507 = arith.constant 0 : index
    %c384_508 = arith.constant 384 : index
    %960 = vector.load %arg5[%c4_505, %c6_506, %c0_507, %c384_508] : memref<5x7x7x1152xf32, #tpu.memory_space<vmem>>, vector<1x1x7x384xf32>
    %961 = vector.shape_cast %960 : vector<1x1x7x384xf32> to vector<7x384xf32>
    %962 = arith.mulf %961, %887 : vector<7x384xf32>
    %963 = arith.addf %953, %962 : vector<7x384xf32>
    %964 = arith.mulf %961, %891 : vector<7x384xf32>
    %965 = arith.addf %955, %964 : vector<7x384xf32>
    %966 = arith.mulf %961, %895 : vector<7x384xf32>
    %967 = arith.addf %957, %966 : vector<7x384xf32>
    %c0_509 = arith.constant 0 : index
    %c0_510 = arith.constant 0 : index
    %c0_511 = arith.constant 0 : index
    %c384_512 = arith.constant 384 : index
    %968 = vector.load %arg4[%c0_509, %c0_510, %c0_511, %c384_512] : memref<1x7x7x1152xf32, #tpu.memory_space<vmem>>, vector<1x1x7x384xf32>
    %969 = vector.shape_cast %968 : vector<1x1x7x384xf32> to vector<7x384xf32>
    %970 = vector.shape_cast %925 : vector<7x384xf32> to vector<1x1x7x384xf32>
    tpu.vector_store %arg4[%c0_509, %c0_510, %c0_511, %c384_512], %970 {strides = array<i32>} : memref<1x7x7x1152xf32, #tpu.memory_space<vmem>>, vector<1x1x7x384xf32>,
    %c0_513 = arith.constant 0 : index
    %c1_514 = arith.constant 1 : index
    %c0_515 = arith.constant 0 : index
    %c384_516 = arith.constant 384 : index
    %971 = vector.load %arg4[%c0_513, %c1_514, %c0_515, %c384_516] : memref<1x7x7x1152xf32, #tpu.memory_space<vmem>>, vector<1x1x7x384xf32>
    %972 = vector.shape_cast %971 : vector<1x1x7x384xf32> to vector<7x384xf32>
    %973 = vector.shape_cast %937 : vector<7x384xf32> to vector<1x1x7x384xf32>
    tpu.vector_store %arg4[%c0_513, %c1_514, %c0_515, %c384_516], %973 {strides = array<i32>} : memref<1x7x7x1152xf32, #tpu.memory_space<vmem>>, vector<1x1x7x384xf32>,
    %c0_517 = arith.constant 0 : index
    %c2_518 = arith.constant 2 : index
    %c0_519 = arith.constant 0 : index
    %c384_520 = arith.constant 384 : index
    %974 = vector.load %arg4[%c0_517, %c2_518, %c0_519, %c384_520] : memref<1x7x7x1152xf32, #tpu.memory_space<vmem>>, vector<1x1x7x384xf32>
    %975 = vector.shape_cast %974 : vector<1x1x7x384xf32> to vector<7x384xf32>
    %976 = vector.shape_cast %949 : vector<7x384xf32> to vector<1x1x7x384xf32>
    tpu.vector_store %arg4[%c0_517, %c2_518, %c0_519, %c384_520], %976 {strides = array<i32>} : memref<1x7x7x1152xf32, #tpu.memory_space<vmem>>, vector<1x1x7x384xf32>,
    %c0_521 = arith.constant 0 : index
    %c3_522 = arith.constant 3 : index
    %c0_523 = arith.constant 0 : index
    %c384_524 = arith.constant 384 : index
    %977 = vector.load %arg4[%c0_521, %c3_522, %c0_523, %c384_524] : memref<1x7x7x1152xf32, #tpu.memory_space<vmem>>, vector<1x1x7x384xf32>
    %978 = vector.shape_cast %977 : vector<1x1x7x384xf32> to vector<7x384xf32>
    %979 = vector.shape_cast %959 : vector<7x384xf32> to vector<1x1x7x384xf32>
    tpu.vector_store %arg4[%c0_521, %c3_522, %c0_523, %c384_524], %979 {strides = array<i32>} : memref<1x7x7x1152xf32, #tpu.memory_space<vmem>>, vector<1x1x7x384xf32>,
    %c0_525 = arith.constant 0 : index
    %c4_526 = arith.constant 4 : index
    %c0_527 = arith.constant 0 : index
    %c384_528 = arith.constant 384 : index
    %980 = vector.load %arg4[%c0_525, %c4_526, %c0_527, %c384_528] : memref<1x7x7x1152xf32, #tpu.memory_space<vmem>>, vector<1x1x7x384xf32>
    %981 = vector.shape_cast %980 : vector<1x1x7x384xf32> to vector<7x384xf32>
    %982 = vector.shape_cast %967 : vector<7x384xf32> to vector<1x1x7x384xf32>
    tpu.vector_store %arg4[%c0_525, %c4_526, %c0_527, %c384_528], %982 {strides = array<i32>} : memref<1x7x7x1152xf32, #tpu.memory_space<vmem>>, vector<1x1x7x384xf32>,
    %c0_529 = arith.constant 0 : index
    %c5_530 = arith.constant 5 : index
    %c0_531 = arith.constant 0 : index
    %c384_532 = arith.constant 384 : index
    %983 = vector.load %arg4[%c0_529, %c5_530, %c0_531, %c384_532] : memref<1x7x7x1152xf32, #tpu.memory_space<vmem>>, vector<1x1x7x384xf32>
    %984 = vector.shape_cast %983 : vector<1x1x7x384xf32> to vector<7x384xf32>
    %985 = vector.shape_cast %965 : vector<7x384xf32> to vector<1x1x7x384xf32>
    tpu.vector_store %arg4[%c0_529, %c5_530, %c0_531, %c384_532], %985 {strides = array<i32>} : memref<1x7x7x1152xf32, #tpu.memory_space<vmem>>, vector<1x1x7x384xf32>,
    %c0_533 = arith.constant 0 : index
    %c6_534 = arith.constant 6 : index
    %c0_535 = arith.constant 0 : index
    %c384_536 = arith.constant 384 : index
    %986 = vector.load %arg4[%c0_533, %c6_534, %c0_535, %c384_536] : memref<1x7x7x1152xf32, #tpu.memory_space<vmem>>, vector<1x1x7x384xf32>
    %987 = vector.shape_cast %986 : vector<1x1x7x384xf32> to vector<7x384xf32>
    %988 = vector.shape_cast %963 : vector<7x384xf32> to vector<1x1x7x384xf32>
    tpu.vector_store %arg4[%c0_533, %c6_534, %c0_535, %c384_536], %988 {strides = array<i32>} : memref<1x7x7x1152xf32, #tpu.memory_space<vmem>>, vector<1x1x7x384xf32>,
    %c0_537 = arith.constant 0 : index
    %c0_538 = arith.constant 0 : index
    %c768 = arith.constant 768 : index
    %989 = vector.load %arg3[%c0_537, %c0_538, %c768] : memref<5x5x1152xf32, #tpu.memory_space<vmem>>, vector<1x1x384xf32>
    %990 = vector.shape_cast %989 : vector<1x1x384xf32> to vector<384xf32>
    %991 = vector.shape_cast %990 : vector<384xf32> to vector<1x384xf32>
    %992 = vector.broadcast %991 : vector<1x384xf32> to vector<7x384xf32>
    %c1_539 = arith.constant 1 : index
    %c0_540 = arith.constant 0 : index
    %c768_541 = arith.constant 768 : index
    %993 = vector.load %arg3[%c1_539, %c0_540, %c768_541] : memref<5x5x1152xf32, #tpu.memory_space<vmem>>, vector<1x1x384xf32>
    %994 = vector.shape_cast %993 : vector<1x1x384xf32> to vector<384xf32>
    %995 = vector.shape_cast %994 : vector<384xf32> to vector<1x384xf32>
    %996 = vector.broadcast %995 : vector<1x384xf32> to vector<7x384xf32>
    %c2_542 = arith.constant 2 : index
    %c0_543 = arith.constant 0 : index
    %c768_544 = arith.constant 768 : index
    %997 = vector.load %arg3[%c2_542, %c0_543, %c768_544] : memref<5x5x1152xf32, #tpu.memory_space<vmem>>, vector<1x1x384xf32>
    %998 = vector.shape_cast %997 : vector<1x1x384xf32> to vector<384xf32>
    %999 = vector.shape_cast %998 : vector<384xf32> to vector<1x384xf32>
    %1000 = vector.broadcast %999 : vector<1x384xf32> to vector<7x384xf32>
    %c3_545 = arith.constant 3 : index
    %c0_546 = arith.constant 0 : index
    %c768_547 = arith.constant 768 : index
    %1001 = vector.load %arg3[%c3_545, %c0_546, %c768_547] : memref<5x5x1152xf32, #tpu.memory_space<vmem>>, vector<1x1x384xf32>
    %1002 = vector.shape_cast %1001 : vector<1x1x384xf32> to vector<384xf32>
    %1003 = vector.shape_cast %1002 : vector<384xf32> to vector<1x384xf32>
    %1004 = vector.broadcast %1003 : vector<1x384xf32> to vector<7x384xf32>
    %c4_548 = arith.constant 4 : index
    %c0_549 = arith.constant 0 : index
    %c768_550 = arith.constant 768 : index
    %1005 = vector.load %arg3[%c4_548, %c0_549, %c768_550] : memref<5x5x1152xf32, #tpu.memory_space<vmem>>, vector<1x1x384xf32>
    %1006 = vector.shape_cast %1005 : vector<1x1x384xf32> to vector<384xf32>
    %1007 = vector.shape_cast %1006 : vector<384xf32> to vector<1x384xf32>
    %1008 = vector.broadcast %1007 : vector<1x384xf32> to vector<7x384xf32>
    %c0_551 = arith.constant 0 : index
    %c0_552 = arith.constant 0 : index
    %c0_553 = arith.constant 0 : index
    %c768_554 = arith.constant 768 : index
    %1009 = vector.load %arg5[%c0_551, %c0_552, %c0_553, %c768_554] : memref<5x7x7x1152xf32, #tpu.memory_space<vmem>>, vector<1x1x7x384xf32>
    %1010 = vector.shape_cast %1009 : vector<1x1x7x384xf32> to vector<7x384xf32>
    %1011 = arith.mulf %1010, %992 : vector<7x384xf32>
    %1012 = arith.mulf %1010, %996 : vector<7x384xf32>
    %1013 = arith.mulf %1010, %1000 : vector<7x384xf32>
    %c0_555 = arith.constant 0 : index
    %c1_556 = arith.constant 1 : index
    %c0_557 = arith.constant 0 : index
    %c768_558 = arith.constant 768 : index
    %1014 = vector.load %arg5[%c0_555, %c1_556, %c0_557, %c768_558] : memref<5x7x7x1152xf32, #tpu.memory_space<vmem>>, vector<1x1x7x384xf32>
    %1015 = vector.shape_cast %1014 : vector<1x1x7x384xf32> to vector<7x384xf32>
    %1016 = arith.mulf %1015, %992 : vector<7x384xf32>
    %1017 = arith.mulf %1015, %996 : vector<7x384xf32>
    %1018 = arith.addf %1011, %1017 : vector<7x384xf32>
    %1019 = arith.mulf %1015, %1000 : vector<7x384xf32>
    %1020 = arith.addf %1012, %1019 : vector<7x384xf32>
    %1021 = arith.mulf %1015, %1004 : vector<7x384xf32>
    %1022 = arith.addf %1013, %1021 : vector<7x384xf32>
    %c0_559 = arith.constant 0 : index
    %c2_560 = arith.constant 2 : index
    %c0_561 = arith.constant 0 : index
    %c768_562 = arith.constant 768 : index
    %1023 = vector.load %arg5[%c0_559, %c2_560, %c0_561, %c768_562] : memref<5x7x7x1152xf32, #tpu.memory_space<vmem>>, vector<1x1x7x384xf32>
    %1024 = vector.shape_cast %1023 : vector<1x1x7x384xf32> to vector<7x384xf32>
    %1025 = arith.mulf %1024, %992 : vector<7x384xf32>
    %1026 = arith.mulf %1024, %996 : vector<7x384xf32>
    %1027 = arith.addf %1016, %1026 : vector<7x384xf32>
    %1028 = arith.mulf %1024, %1000 : vector<7x384xf32>
    %1029 = arith.addf %1018, %1028 : vector<7x384xf32>
    %1030 = arith.mulf %1024, %1004 : vector<7x384xf32>
    %1031 = arith.addf %1020, %1030 : vector<7x384xf32>
    %1032 = arith.mulf %1024, %1008 : vector<7x384xf32>
    %1033 = arith.addf %1022, %1032 : vector<7x384xf32>
    %c0_563 = arith.constant 0 : index
    %c3_564 = arith.constant 3 : index
    %c0_565 = arith.constant 0 : index
    %c768_566 = arith.constant 768 : index
    %1034 = vector.load %arg5[%c0_563, %c3_564, %c0_565, %c768_566] : memref<5x7x7x1152xf32, #tpu.memory_space<vmem>>, vector<1x1x7x384xf32>
    %1035 = vector.shape_cast %1034 : vector<1x1x7x384xf32> to vector<7x384xf32>
    %1036 = arith.mulf %1035, %992 : vector<7x384xf32>
    %1037 = arith.mulf %1035, %996 : vector<7x384xf32>
    %1038 = arith.addf %1025, %1037 : vector<7x384xf32>
    %1039 = arith.mulf %1035, %1000 : vector<7x384xf32>
    %1040 = arith.addf %1027, %1039 : vector<7x384xf32>
    %1041 = arith.mulf %1035, %1004 : vector<7x384xf32>
    %1042 = arith.addf %1029, %1041 : vector<7x384xf32>
    %1043 = arith.mulf %1035, %1008 : vector<7x384xf32>
    %1044 = arith.addf %1031, %1043 : vector<7x384xf32>
    %c0_567 = arith.constant 0 : index
    %c4_568 = arith.constant 4 : index
    %c0_569 = arith.constant 0 : index
    %c768_570 = arith.constant 768 : index
    %1045 = vector.load %arg5[%c0_567, %c4_568, %c0_569, %c768_570] : memref<5x7x7x1152xf32, #tpu.memory_space<vmem>>, vector<1x1x7x384xf32>
    %1046 = vector.shape_cast %1045 : vector<1x1x7x384xf32> to vector<7x384xf32>
    %1047 = arith.mulf %1046, %992 : vector<7x384xf32>
    %1048 = arith.mulf %1046, %996 : vector<7x384xf32>
    %1049 = arith.addf %1036, %1048 : vector<7x384xf32>
    %1050 = arith.mulf %1046, %1000 : vector<7x384xf32>
    %1051 = arith.addf %1038, %1050 : vector<7x384xf32>
    %1052 = arith.mulf %1046, %1004 : vector<7x384xf32>
    %1053 = arith.addf %1040, %1052 : vector<7x384xf32>
    %1054 = arith.mulf %1046, %1008 : vector<7x384xf32>
    %1055 = arith.addf %1042, %1054 : vector<7x384xf32>
    %c0_571 = arith.constant 0 : index
    %c5_572 = arith.constant 5 : index
    %c0_573 = arith.constant 0 : index
    %c768_574 = arith.constant 768 : index
    %1056 = vector.load %arg5[%c0_571, %c5_572, %c0_573, %c768_574] : memref<5x7x7x1152xf32, #tpu.memory_space<vmem>>, vector<1x1x7x384xf32>
    %1057 = vector.shape_cast %1056 : vector<1x1x7x384xf32> to vector<7x384xf32>
    %1058 = arith.mulf %1057, %996 : vector<7x384xf32>
    %1059 = arith.addf %1047, %1058 : vector<7x384xf32>
    %1060 = arith.mulf %1057, %1000 : vector<7x384xf32>
    %1061 = arith.addf %1049, %1060 : vector<7x384xf32>
    %1062 = arith.mulf %1057, %1004 : vector<7x384xf32>
    %1063 = arith.addf %1051, %1062 : vector<7x384xf32>
    %1064 = arith.mulf %1057, %1008 : vector<7x384xf32>
    %1065 = arith.addf %1053, %1064 : vector<7x384xf32>
    %c0_575 = arith.constant 0 : index
    %c6_576 = arith.constant 6 : index
    %c0_577 = arith.constant 0 : index
    %c768_578 = arith.constant 768 : index
    %1066 = vector.load %arg5[%c0_575, %c6_576, %c0_577, %c768_578] : memref<5x7x7x1152xf32, #tpu.memory_space<vmem>>, vector<1x1x7x384xf32>
    %1067 = vector.shape_cast %1066 : vector<1x1x7x384xf32> to vector<7x384xf32>
    %1068 = arith.mulf %1067, %1000 : vector<7x384xf32>
    %1069 = arith.addf %1059, %1068 : vector<7x384xf32>
    %1070 = arith.mulf %1067, %1004 : vector<7x384xf32>
    %1071 = arith.addf %1061, %1070 : vector<7x384xf32>
    %1072 = arith.mulf %1067, %1008 : vector<7x384xf32>
    %1073 = arith.addf %1063, %1072 : vector<7x384xf32>
    %c0_579 = arith.constant 0 : index
    %c1_580 = arith.constant 1 : index
    %c768_581 = arith.constant 768 : index
    %1074 = vector.load %arg3[%c0_579, %c1_580, %c768_581] : memref<5x5x1152xf32, #tpu.memory_space<vmem>>, vector<1x1x384xf32>
    %1075 = vector.shape_cast %1074 : vector<1x1x384xf32> to vector<384xf32>
    %1076 = vector.shape_cast %1075 : vector<384xf32> to vector<1x384xf32>
    %1077 = vector.broadcast %1076 : vector<1x384xf32> to vector<7x384xf32>
    %c1_582 = arith.constant 1 : index
    %c1_583 = arith.constant 1 : index
    %c768_584 = arith.constant 768 : index
    %1078 = vector.load %arg3[%c1_582, %c1_583, %c768_584] : memref<5x5x1152xf32, #tpu.memory_space<vmem>>, vector<1x1x384xf32>
    %1079 = vector.shape_cast %1078 : vector<1x1x384xf32> to vector<384xf32>
    %1080 = vector.shape_cast %1079 : vector<384xf32> to vector<1x384xf32>
    %1081 = vector.broadcast %1080 : vector<1x384xf32> to vector<7x384xf32>
    %c2_585 = arith.constant 2 : index
    %c1_586 = arith.constant 1 : index
    %c768_587 = arith.constant 768 : index
    %1082 = vector.load %arg3[%c2_585, %c1_586, %c768_587] : memref<5x5x1152xf32, #tpu.memory_space<vmem>>, vector<1x1x384xf32>
    %1083 = vector.shape_cast %1082 : vector<1x1x384xf32> to vector<384xf32>
    %1084 = vector.shape_cast %1083 : vector<384xf32> to vector<1x384xf32>
    %1085 = vector.broadcast %1084 : vector<1x384xf32> to vector<7x384xf32>
    %c3_588 = arith.constant 3 : index
    %c1_589 = arith.constant 1 : index
    %c768_590 = arith.constant 768 : index
    %1086 = vector.load %arg3[%c3_588, %c1_589, %c768_590] : memref<5x5x1152xf32, #tpu.memory_space<vmem>>, vector<1x1x384xf32>
    %1087 = vector.shape_cast %1086 : vector<1x1x384xf32> to vector<384xf32>
    %1088 = vector.shape_cast %1087 : vector<384xf32> to vector<1x384xf32>
    %1089 = vector.broadcast %1088 : vector<1x384xf32> to vector<7x384xf32>
    %c4_591 = arith.constant 4 : index
    %c1_592 = arith.constant 1 : index
    %c768_593 = arith.constant 768 : index
    %1090 = vector.load %arg3[%c4_591, %c1_592, %c768_593] : memref<5x5x1152xf32, #tpu.memory_space<vmem>>, vector<1x1x384xf32>
    %1091 = vector.shape_cast %1090 : vector<1x1x384xf32> to vector<384xf32>
    %1092 = vector.shape_cast %1091 : vector<384xf32> to vector<1x384xf32>
    %1093 = vector.broadcast %1092 : vector<1x384xf32> to vector<7x384xf32>
    %c1_594 = arith.constant 1 : index
    %c0_595 = arith.constant 0 : index
    %c0_596 = arith.constant 0 : index
    %c768_597 = arith.constant 768 : index
    %1094 = vector.load %arg5[%c1_594, %c0_595, %c0_596, %c768_597] : memref<5x7x7x1152xf32, #tpu.memory_space<vmem>>, vector<1x1x7x384xf32>
    %1095 = vector.shape_cast %1094 : vector<1x1x7x384xf32> to vector<7x384xf32>
    %1096 = arith.mulf %1095, %1077 : vector<7x384xf32>
    %1097 = arith.addf %1055, %1096 : vector<7x384xf32>
    %1098 = arith.mulf %1095, %1081 : vector<7x384xf32>
    %1099 = arith.addf %1044, %1098 : vector<7x384xf32>
    %1100 = arith.mulf %1095, %1085 : vector<7x384xf32>
    %1101 = arith.addf %1033, %1100 : vector<7x384xf32>
    %c1_598 = arith.constant 1 : index
    %c1_599 = arith.constant 1 : index
    %c0_600 = arith.constant 0 : index
    %c768_601 = arith.constant 768 : index
    %1102 = vector.load %arg5[%c1_598, %c1_599, %c0_600, %c768_601] : memref<5x7x7x1152xf32, #tpu.memory_space<vmem>>, vector<1x1x7x384xf32>
    %1103 = vector.shape_cast %1102 : vector<1x1x7x384xf32> to vector<7x384xf32>
    %1104 = arith.mulf %1103, %1077 : vector<7x384xf32>
    %1105 = arith.addf %1065, %1104 : vector<7x384xf32>
    %1106 = arith.mulf %1103, %1081 : vector<7x384xf32>
    %1107 = arith.addf %1097, %1106 : vector<7x384xf32>
    %1108 = arith.mulf %1103, %1085 : vector<7x384xf32>
    %1109 = arith.addf %1099, %1108 : vector<7x384xf32>
    %1110 = arith.mulf %1103, %1089 : vector<7x384xf32>
    %1111 = arith.addf %1101, %1110 : vector<7x384xf32>
    %c1_602 = arith.constant 1 : index
    %c2_603 = arith.constant 2 : index
    %c0_604 = arith.constant 0 : index
    %c768_605 = arith.constant 768 : index
    %1112 = vector.load %arg5[%c1_602, %c2_603, %c0_604, %c768_605] : memref<5x7x7x1152xf32, #tpu.memory_space<vmem>>, vector<1x1x7x384xf32>
    %1113 = vector.shape_cast %1112 : vector<1x1x7x384xf32> to vector<7x384xf32>
    %1114 = arith.mulf %1113, %1077 : vector<7x384xf32>
    %1115 = arith.addf %1073, %1114 : vector<7x384xf32>
    %1116 = arith.mulf %1113, %1081 : vector<7x384xf32>
    %1117 = arith.addf %1105, %1116 : vector<7x384xf32>
    %1118 = arith.mulf %1113, %1085 : vector<7x384xf32>
    %1119 = arith.addf %1107, %1118 : vector<7x384xf32>
    %1120 = arith.mulf %1113, %1089 : vector<7x384xf32>
    %1121 = arith.addf %1109, %1120 : vector<7x384xf32>
    %1122 = arith.mulf %1113, %1093 : vector<7x384xf32>
    %1123 = arith.addf %1111, %1122 : vector<7x384xf32>
    %c1_606 = arith.constant 1 : index
    %c3_607 = arith.constant 3 : index
    %c0_608 = arith.constant 0 : index
    %c768_609 = arith.constant 768 : index
    %1124 = vector.load %arg5[%c1_606, %c3_607, %c0_608, %c768_609] : memref<5x7x7x1152xf32, #tpu.memory_space<vmem>>, vector<1x1x7x384xf32>
    %1125 = vector.shape_cast %1124 : vector<1x1x7x384xf32> to vector<7x384xf32>
    %1126 = arith.mulf %1125, %1077 : vector<7x384xf32>
    %1127 = arith.addf %1071, %1126 : vector<7x384xf32>
    %1128 = arith.mulf %1125, %1081 : vector<7x384xf32>
    %1129 = arith.addf %1115, %1128 : vector<7x384xf32>
    %1130 = arith.mulf %1125, %1085 : vector<7x384xf32>
    %1131 = arith.addf %1117, %1130 : vector<7x384xf32>
    %1132 = arith.mulf %1125, %1089 : vector<7x384xf32>
    %1133 = arith.addf %1119, %1132 : vector<7x384xf32>
    %1134 = arith.mulf %1125, %1093 : vector<7x384xf32>
    %1135 = arith.addf %1121, %1134 : vector<7x384xf32>
    %c1_610 = arith.constant 1 : index
    %c4_611 = arith.constant 4 : index
    %c0_612 = arith.constant 0 : index
    %c768_613 = arith.constant 768 : index
    %1136 = vector.load %arg5[%c1_610, %c4_611, %c0_612, %c768_613] : memref<5x7x7x1152xf32, #tpu.memory_space<vmem>>, vector<1x1x7x384xf32>
    %1137 = vector.shape_cast %1136 : vector<1x1x7x384xf32> to vector<7x384xf32>
    %1138 = arith.mulf %1137, %1077 : vector<7x384xf32>
    %1139 = arith.addf %1069, %1138 : vector<7x384xf32>
    %1140 = arith.mulf %1137, %1081 : vector<7x384xf32>
    %1141 = arith.addf %1127, %1140 : vector<7x384xf32>
    %1142 = arith.mulf %1137, %1085 : vector<7x384xf32>
    %1143 = arith.addf %1129, %1142 : vector<7x384xf32>
    %1144 = arith.mulf %1137, %1089 : vector<7x384xf32>
    %1145 = arith.addf %1131, %1144 : vector<7x384xf32>
    %1146 = arith.mulf %1137, %1093 : vector<7x384xf32>
    %1147 = arith.addf %1133, %1146 : vector<7x384xf32>
    %c1_614 = arith.constant 1 : index
    %c5_615 = arith.constant 5 : index
    %c0_616 = arith.constant 0 : index
    %c768_617 = arith.constant 768 : index
    %1148 = vector.load %arg5[%c1_614, %c5_615, %c0_616, %c768_617] : memref<5x7x7x1152xf32, #tpu.memory_space<vmem>>, vector<1x1x7x384xf32>
    %1149 = vector.shape_cast %1148 : vector<1x1x7x384xf32> to vector<7x384xf32>
    %1150 = arith.mulf %1149, %1081 : vector<7x384xf32>
    %1151 = arith.addf %1139, %1150 : vector<7x384xf32>
    %1152 = arith.mulf %1149, %1085 : vector<7x384xf32>
    %1153 = arith.addf %1141, %1152 : vector<7x384xf32>
    %1154 = arith.mulf %1149, %1089 : vector<7x384xf32>
    %1155 = arith.addf %1143, %1154 : vector<7x384xf32>
    %1156 = arith.mulf %1149, %1093 : vector<7x384xf32>
    %1157 = arith.addf %1145, %1156 : vector<7x384xf32>
    %c1_618 = arith.constant 1 : index
    %c6_619 = arith.constant 6 : index
    %c0_620 = arith.constant 0 : index
    %c768_621 = arith.constant 768 : index
    %1158 = vector.load %arg5[%c1_618, %c6_619, %c0_620, %c768_621] : memref<5x7x7x1152xf32, #tpu.memory_space<vmem>>, vector<1x1x7x384xf32>
    %1159 = vector.shape_cast %1158 : vector<1x1x7x384xf32> to vector<7x384xf32>
    %1160 = arith.mulf %1159, %1085 : vector<7x384xf32>
    %1161 = arith.addf %1151, %1160 : vector<7x384xf32>
    %1162 = arith.mulf %1159, %1089 : vector<7x384xf32>
    %1163 = arith.addf %1153, %1162 : vector<7x384xf32>
    %1164 = arith.mulf %1159, %1093 : vector<7x384xf32>
    %1165 = arith.addf %1155, %1164 : vector<7x384xf32>
    %c0_622 = arith.constant 0 : index
    %c2_623 = arith.constant 2 : index
    %c768_624 = arith.constant 768 : index
    %1166 = vector.load %arg3[%c0_622, %c2_623, %c768_624] : memref<5x5x1152xf32, #tpu.memory_space<vmem>>, vector<1x1x384xf32>
    %1167 = vector.shape_cast %1166 : vector<1x1x384xf32> to vector<384xf32>
    %1168 = vector.shape_cast %1167 : vector<384xf32> to vector<1x384xf32>
    %1169 = vector.broadcast %1168 : vector<1x384xf32> to vector<7x384xf32>
    %c1_625 = arith.constant 1 : index
    %c2_626 = arith.constant 2 : index
    %c768_627 = arith.constant 768 : index
    %1170 = vector.load %arg3[%c1_625, %c2_626, %c768_627] : memref<5x5x1152xf32, #tpu.memory_space<vmem>>, vector<1x1x384xf32>
    %1171 = vector.shape_cast %1170 : vector<1x1x384xf32> to vector<384xf32>
    %1172 = vector.shape_cast %1171 : vector<384xf32> to vector<1x384xf32>
    %1173 = vector.broadcast %1172 : vector<1x384xf32> to vector<7x384xf32>
    %c2_628 = arith.constant 2 : index
    %c2_629 = arith.constant 2 : index
    %c768_630 = arith.constant 768 : index
    %1174 = vector.load %arg3[%c2_628, %c2_629, %c768_630] : memref<5x5x1152xf32, #tpu.memory_space<vmem>>, vector<1x1x384xf32>
    %1175 = vector.shape_cast %1174 : vector<1x1x384xf32> to vector<384xf32>
    %1176 = vector.shape_cast %1175 : vector<384xf32> to vector<1x384xf32>
    %1177 = vector.broadcast %1176 : vector<1x384xf32> to vector<7x384xf32>
    %c3_631 = arith.constant 3 : index
    %c2_632 = arith.constant 2 : index
    %c768_633 = arith.constant 768 : index
    %1178 = vector.load %arg3[%c3_631, %c2_632, %c768_633] : memref<5x5x1152xf32, #tpu.memory_space<vmem>>, vector<1x1x384xf32>
    %1179 = vector.shape_cast %1178 : vector<1x1x384xf32> to vector<384xf32>
    %1180 = vector.shape_cast %1179 : vector<384xf32> to vector<1x384xf32>
    %1181 = vector.broadcast %1180 : vector<1x384xf32> to vector<7x384xf32>
    %c4_634 = arith.constant 4 : index
    %c2_635 = arith.constant 2 : index
    %c768_636 = arith.constant 768 : index
    %1182 = vector.load %arg3[%c4_634, %c2_635, %c768_636] : memref<5x5x1152xf32, #tpu.memory_space<vmem>>, vector<1x1x384xf32>
    %1183 = vector.shape_cast %1182 : vector<1x1x384xf32> to vector<384xf32>
    %1184 = vector.shape_cast %1183 : vector<384xf32> to vector<1x384xf32>
    %1185 = vector.broadcast %1184 : vector<1x384xf32> to vector<7x384xf32>
    %c2_637 = arith.constant 2 : index
    %c0_638 = arith.constant 0 : index
    %c0_639 = arith.constant 0 : index
    %c768_640 = arith.constant 768 : index
    %1186 = vector.load %arg5[%c2_637, %c0_638, %c0_639, %c768_640] : memref<5x7x7x1152xf32, #tpu.memory_space<vmem>>, vector<1x1x7x384xf32>
    %1187 = vector.shape_cast %1186 : vector<1x1x7x384xf32> to vector<7x384xf32>
    %1188 = arith.mulf %1187, %1169 : vector<7x384xf32>
    %1189 = arith.addf %1147, %1188 : vector<7x384xf32>
    %1190 = arith.mulf %1187, %1173 : vector<7x384xf32>
    %1191 = arith.addf %1135, %1190 : vector<7x384xf32>
    %1192 = arith.mulf %1187, %1177 : vector<7x384xf32>
    %1193 = arith.addf %1123, %1192 : vector<7x384xf32>
    %c2_641 = arith.constant 2 : index
    %c1_642 = arith.constant 1 : index
    %c0_643 = arith.constant 0 : index
    %c768_644 = arith.constant 768 : index
    %1194 = vector.load %arg5[%c2_641, %c1_642, %c0_643, %c768_644] : memref<5x7x7x1152xf32, #tpu.memory_space<vmem>>, vector<1x1x7x384xf32>
    %1195 = vector.shape_cast %1194 : vector<1x1x7x384xf32> to vector<7x384xf32>
    %1196 = arith.mulf %1195, %1169 : vector<7x384xf32>
    %1197 = arith.addf %1157, %1196 : vector<7x384xf32>
    %1198 = arith.mulf %1195, %1173 : vector<7x384xf32>
    %1199 = arith.addf %1189, %1198 : vector<7x384xf32>
    %1200 = arith.mulf %1195, %1177 : vector<7x384xf32>
    %1201 = arith.addf %1191, %1200 : vector<7x384xf32>
    %1202 = arith.mulf %1195, %1181 : vector<7x384xf32>
    %1203 = arith.addf %1193, %1202 : vector<7x384xf32>
    %c2_645 = arith.constant 2 : index
    %c2_646 = arith.constant 2 : index
    %c0_647 = arith.constant 0 : index
    %c768_648 = arith.constant 768 : index
    %1204 = vector.load %arg5[%c2_645, %c2_646, %c0_647, %c768_648] : memref<5x7x7x1152xf32, #tpu.memory_space<vmem>>, vector<1x1x7x384xf32>
    %1205 = vector.shape_cast %1204 : vector<1x1x7x384xf32> to vector<7x384xf32>
    %1206 = arith.mulf %1205, %1169 : vector<7x384xf32>
    %1207 = arith.addf %1165, %1206 : vector<7x384xf32>
    %1208 = arith.mulf %1205, %1173 : vector<7x384xf32>
    %1209 = arith.addf %1197, %1208 : vector<7x384xf32>
    %1210 = arith.mulf %1205, %1177 : vector<7x384xf32>
    %1211 = arith.addf %1199, %1210 : vector<7x384xf32>
    %1212 = arith.mulf %1205, %1181 : vector<7x384xf32>
    %1213 = arith.addf %1201, %1212 : vector<7x384xf32>
    %1214 = arith.mulf %1205, %1185 : vector<7x384xf32>
    %1215 = arith.addf %1203, %1214 : vector<7x384xf32>
    %c2_649 = arith.constant 2 : index
    %c3_650 = arith.constant 3 : index
    %c0_651 = arith.constant 0 : index
    %c768_652 = arith.constant 768 : index
    %1216 = vector.load %arg5[%c2_649, %c3_650, %c0_651, %c768_652] : memref<5x7x7x1152xf32, #tpu.memory_space<vmem>>, vector<1x1x7x384xf32>
    %1217 = vector.shape_cast %1216 : vector<1x1x7x384xf32> to vector<7x384xf32>
    %1218 = arith.mulf %1217, %1169 : vector<7x384xf32>
    %1219 = arith.addf %1163, %1218 : vector<7x384xf32>
    %1220 = arith.mulf %1217, %1173 : vector<7x384xf32>
    %1221 = arith.addf %1207, %1220 : vector<7x384xf32>
    %1222 = arith.mulf %1217, %1177 : vector<7x384xf32>
    %1223 = arith.addf %1209, %1222 : vector<7x384xf32>
    %1224 = arith.mulf %1217, %1181 : vector<7x384xf32>
    %1225 = arith.addf %1211, %1224 : vector<7x384xf32>
    %1226 = arith.mulf %1217, %1185 : vector<7x384xf32>
    %1227 = arith.addf %1213, %1226 : vector<7x384xf32>
    %c2_653 = arith.constant 2 : index
    %c4_654 = arith.constant 4 : index
    %c0_655 = arith.constant 0 : index
    %c768_656 = arith.constant 768 : index
    %1228 = vector.load %arg5[%c2_653, %c4_654, %c0_655, %c768_656] : memref<5x7x7x1152xf32, #tpu.memory_space<vmem>>, vector<1x1x7x384xf32>
    %1229 = vector.shape_cast %1228 : vector<1x1x7x384xf32> to vector<7x384xf32>
    %1230 = arith.mulf %1229, %1169 : vector<7x384xf32>
    %1231 = arith.addf %1161, %1230 : vector<7x384xf32>
    %1232 = arith.mulf %1229, %1173 : vector<7x384xf32>
    %1233 = arith.addf %1219, %1232 : vector<7x384xf32>
    %1234 = arith.mulf %1229, %1177 : vector<7x384xf32>
    %1235 = arith.addf %1221, %1234 : vector<7x384xf32>
    %1236 = arith.mulf %1229, %1181 : vector<7x384xf32>
    %1237 = arith.addf %1223, %1236 : vector<7x384xf32>
    %1238 = arith.mulf %1229, %1185 : vector<7x384xf32>
    %1239 = arith.addf %1225, %1238 : vector<7x384xf32>
    %c2_657 = arith.constant 2 : index
    %c5_658 = arith.constant 5 : index
    %c0_659 = arith.constant 0 : index
    %c768_660 = arith.constant 768 : index
    %1240 = vector.load %arg5[%c2_657, %c5_658, %c0_659, %c768_660] : memref<5x7x7x1152xf32, #tpu.memory_space<vmem>>, vector<1x1x7x384xf32>
    %1241 = vector.shape_cast %1240 : vector<1x1x7x384xf32> to vector<7x384xf32>
    %1242 = arith.mulf %1241, %1173 : vector<7x384xf32>
    %1243 = arith.addf %1231, %1242 : vector<7x384xf32>
    %1244 = arith.mulf %1241, %1177 : vector<7x384xf32>
    %1245 = arith.addf %1233, %1244 : vector<7x384xf32>
    %1246 = arith.mulf %1241, %1181 : vector<7x384xf32>
    %1247 = arith.addf %1235, %1246 : vector<7x384xf32>
    %1248 = arith.mulf %1241, %1185 : vector<7x384xf32>
    %1249 = arith.addf %1237, %1248 : vector<7x384xf32>
    %c2_661 = arith.constant 2 : index
    %c6_662 = arith.constant 6 : index
    %c0_663 = arith.constant 0 : index
    %c768_664 = arith.constant 768 : index
    %1250 = vector.load %arg5[%c2_661, %c6_662, %c0_663, %c768_664] : memref<5x7x7x1152xf32, #tpu.memory_space<vmem>>, vector<1x1x7x384xf32>
    %1251 = vector.shape_cast %1250 : vector<1x1x7x384xf32> to vector<7x384xf32>
    %1252 = arith.mulf %1251, %1177 : vector<7x384xf32>
    %1253 = arith.addf %1243, %1252 : vector<7x384xf32>
    %1254 = arith.mulf %1251, %1181 : vector<7x384xf32>
    %1255 = arith.addf %1245, %1254 : vector<7x384xf32>
    %1256 = arith.mulf %1251, %1185 : vector<7x384xf32>
    %1257 = arith.addf %1247, %1256 : vector<7x384xf32>
    %c0_665 = arith.constant 0 : index
    %c3_666 = arith.constant 3 : index
    %c768_667 = arith.constant 768 : index
    %1258 = vector.load %arg3[%c0_665, %c3_666, %c768_667] : memref<5x5x1152xf32, #tpu.memory_space<vmem>>, vector<1x1x384xf32>
    %1259 = vector.shape_cast %1258 : vector<1x1x384xf32> to vector<384xf32>
    %1260 = vector.shape_cast %1259 : vector<384xf32> to vector<1x384xf32>
    %1261 = vector.broadcast %1260 : vector<1x384xf32> to vector<7x384xf32>
    %c1_668 = arith.constant 1 : index
    %c3_669 = arith.constant 3 : index
    %c768_670 = arith.constant 768 : index
    %1262 = vector.load %arg3[%c1_668, %c3_669, %c768_670] : memref<5x5x1152xf32, #tpu.memory_space<vmem>>, vector<1x1x384xf32>
    %1263 = vector.shape_cast %1262 : vector<1x1x384xf32> to vector<384xf32>
    %1264 = vector.shape_cast %1263 : vector<384xf32> to vector<1x384xf32>
    %1265 = vector.broadcast %1264 : vector<1x384xf32> to vector<7x384xf32>
    %c2_671 = arith.constant 2 : index
    %c3_672 = arith.constant 3 : index
    %c768_673 = arith.constant 768 : index
    %1266 = vector.load %arg3[%c2_671, %c3_672, %c768_673] : memref<5x5x1152xf32, #tpu.memory_space<vmem>>, vector<1x1x384xf32>
    %1267 = vector.shape_cast %1266 : vector<1x1x384xf32> to vector<384xf32>
    %1268 = vector.shape_cast %1267 : vector<384xf32> to vector<1x384xf32>
    %1269 = vector.broadcast %1268 : vector<1x384xf32> to vector<7x384xf32>
    %c3_674 = arith.constant 3 : index
    %c3_675 = arith.constant 3 : index
    %c768_676 = arith.constant 768 : index
    %1270 = vector.load %arg3[%c3_674, %c3_675, %c768_676] : memref<5x5x1152xf32, #tpu.memory_space<vmem>>, vector<1x1x384xf32>
    %1271 = vector.shape_cast %1270 : vector<1x1x384xf32> to vector<384xf32>
    %1272 = vector.shape_cast %1271 : vector<384xf32> to vector<1x384xf32>
    %1273 = vector.broadcast %1272 : vector<1x384xf32> to vector<7x384xf32>
    %c4_677 = arith.constant 4 : index
    %c3_678 = arith.constant 3 : index
    %c768_679 = arith.constant 768 : index
    %1274 = vector.load %arg3[%c4_677, %c3_678, %c768_679] : memref<5x5x1152xf32, #tpu.memory_space<vmem>>, vector<1x1x384xf32>
    %1275 = vector.shape_cast %1274 : vector<1x1x384xf32> to vector<384xf32>
    %1276 = vector.shape_cast %1275 : vector<384xf32> to vector<1x384xf32>
    %1277 = vector.broadcast %1276 : vector<1x384xf32> to vector<7x384xf32>
    %c3_680 = arith.constant 3 : index
    %c0_681 = arith.constant 0 : index
    %c0_682 = arith.constant 0 : index
    %c768_683 = arith.constant 768 : index
    %1278 = vector.load %arg5[%c3_680, %c0_681, %c0_682, %c768_683] : memref<5x7x7x1152xf32, #tpu.memory_space<vmem>>, vector<1x1x7x384xf32>
    %1279 = vector.shape_cast %1278 : vector<1x1x7x384xf32> to vector<7x384xf32>
    %1280 = arith.mulf %1279, %1261 : vector<7x384xf32>
    %1281 = arith.addf %1239, %1280 : vector<7x384xf32>
    %1282 = arith.mulf %1279, %1265 : vector<7x384xf32>
    %1283 = arith.addf %1227, %1282 : vector<7x384xf32>
    %1284 = arith.mulf %1279, %1269 : vector<7x384xf32>
    %1285 = arith.addf %1215, %1284 : vector<7x384xf32>
    %c3_684 = arith.constant 3 : index
    %c1_685 = arith.constant 1 : index
    %c0_686 = arith.constant 0 : index
    %c768_687 = arith.constant 768 : index
    %1286 = vector.load %arg5[%c3_684, %c1_685, %c0_686, %c768_687] : memref<5x7x7x1152xf32, #tpu.memory_space<vmem>>, vector<1x1x7x384xf32>
    %1287 = vector.shape_cast %1286 : vector<1x1x7x384xf32> to vector<7x384xf32>
    %1288 = arith.mulf %1287, %1261 : vector<7x384xf32>
    %1289 = arith.addf %1249, %1288 : vector<7x384xf32>
    %1290 = arith.mulf %1287, %1265 : vector<7x384xf32>
    %1291 = arith.addf %1281, %1290 : vector<7x384xf32>
    %1292 = arith.mulf %1287, %1269 : vector<7x384xf32>
    %1293 = arith.addf %1283, %1292 : vector<7x384xf32>
    %1294 = arith.mulf %1287, %1273 : vector<7x384xf32>
    %1295 = arith.addf %1285, %1294 : vector<7x384xf32>
    %c3_688 = arith.constant 3 : index
    %c2_689 = arith.constant 2 : index
    %c0_690 = arith.constant 0 : index
    %c768_691 = arith.constant 768 : index
    %1296 = vector.load %arg5[%c3_688, %c2_689, %c0_690, %c768_691] : memref<5x7x7x1152xf32, #tpu.memory_space<vmem>>, vector<1x1x7x384xf32>
    %1297 = vector.shape_cast %1296 : vector<1x1x7x384xf32> to vector<7x384xf32>
    %1298 = arith.mulf %1297, %1261 : vector<7x384xf32>
    %1299 = arith.addf %1257, %1298 : vector<7x384xf32>
    %1300 = arith.mulf %1297, %1265 : vector<7x384xf32>
    %1301 = arith.addf %1289, %1300 : vector<7x384xf32>
    %1302 = arith.mulf %1297, %1269 : vector<7x384xf32>
    %1303 = arith.addf %1291, %1302 : vector<7x384xf32>
    %1304 = arith.mulf %1297, %1273 : vector<7x384xf32>
    %1305 = arith.addf %1293, %1304 : vector<7x384xf32>
    %1306 = arith.mulf %1297, %1277 : vector<7x384xf32>
    %1307 = arith.addf %1295, %1306 : vector<7x384xf32>
    %c3_692 = arith.constant 3 : index
    %c3_693 = arith.constant 3 : index
    %c0_694 = arith.constant 0 : index
    %c768_695 = arith.constant 768 : index
    %1308 = vector.load %arg5[%c3_692, %c3_693, %c0_694, %c768_695] : memref<5x7x7x1152xf32, #tpu.memory_space<vmem>>, vector<1x1x7x384xf32>
    %1309 = vector.shape_cast %1308 : vector<1x1x7x384xf32> to vector<7x384xf32>
    %1310 = arith.mulf %1309, %1261 : vector<7x384xf32>
    %1311 = arith.addf %1255, %1310 : vector<7x384xf32>
    %1312 = arith.mulf %1309, %1265 : vector<7x384xf32>
    %1313 = arith.addf %1299, %1312 : vector<7x384xf32>
    %1314 = arith.mulf %1309, %1269 : vector<7x384xf32>
    %1315 = arith.addf %1301, %1314 : vector<7x384xf32>
    %1316 = arith.mulf %1309, %1273 : vector<7x384xf32>
    %1317 = arith.addf %1303, %1316 : vector<7x384xf32>
    %1318 = arith.mulf %1309, %1277 : vector<7x384xf32>
    %1319 = arith.addf %1305, %1318 : vector<7x384xf32>
    %c3_696 = arith.constant 3 : index
    %c4_697 = arith.constant 4 : index
    %c0_698 = arith.constant 0 : index
    %c768_699 = arith.constant 768 : index
    %1320 = vector.load %arg5[%c3_696, %c4_697, %c0_698, %c768_699] : memref<5x7x7x1152xf32, #tpu.memory_space<vmem>>, vector<1x1x7x384xf32>
    %1321 = vector.shape_cast %1320 : vector<1x1x7x384xf32> to vector<7x384xf32>
    %1322 = arith.mulf %1321, %1261 : vector<7x384xf32>
    %1323 = arith.addf %1253, %1322 : vector<7x384xf32>
    %1324 = arith.mulf %1321, %1265 : vector<7x384xf32>
    %1325 = arith.addf %1311, %1324 : vector<7x384xf32>
    %1326 = arith.mulf %1321, %1269 : vector<7x384xf32>
    %1327 = arith.addf %1313, %1326 : vector<7x384xf32>
    %1328 = arith.mulf %1321, %1273 : vector<7x384xf32>
    %1329 = arith.addf %1315, %1328 : vector<7x384xf32>
    %1330 = arith.mulf %1321, %1277 : vector<7x384xf32>
    %1331 = arith.addf %1317, %1330 : vector<7x384xf32>
    %c3_700 = arith.constant 3 : index
    %c5_701 = arith.constant 5 : index
    %c0_702 = arith.constant 0 : index
    %c768_703 = arith.constant 768 : index
    %1332 = vector.load %arg5[%c3_700, %c5_701, %c0_702, %c768_703] : memref<5x7x7x1152xf32, #tpu.memory_space<vmem>>, vector<1x1x7x384xf32>
    %1333 = vector.shape_cast %1332 : vector<1x1x7x384xf32> to vector<7x384xf32>
    %1334 = arith.mulf %1333, %1265 : vector<7x384xf32>
    %1335 = arith.addf %1323, %1334 : vector<7x384xf32>
    %1336 = arith.mulf %1333, %1269 : vector<7x384xf32>
    %1337 = arith.addf %1325, %1336 : vector<7x384xf32>
    %1338 = arith.mulf %1333, %1273 : vector<7x384xf32>
    %1339 = arith.addf %1327, %1338 : vector<7x384xf32>
    %1340 = arith.mulf %1333, %1277 : vector<7x384xf32>
    %1341 = arith.addf %1329, %1340 : vector<7x384xf32>
    %c3_704 = arith.constant 3 : index
    %c6_705 = arith.constant 6 : index
    %c0_706 = arith.constant 0 : index
    %c768_707 = arith.constant 768 : index
    %1342 = vector.load %arg5[%c3_704, %c6_705, %c0_706, %c768_707] : memref<5x7x7x1152xf32, #tpu.memory_space<vmem>>, vector<1x1x7x384xf32>
    %1343 = vector.shape_cast %1342 : vector<1x1x7x384xf32> to vector<7x384xf32>
    %1344 = arith.mulf %1343, %1269 : vector<7x384xf32>
    %1345 = arith.addf %1335, %1344 : vector<7x384xf32>
    %1346 = arith.mulf %1343, %1273 : vector<7x384xf32>
    %1347 = arith.addf %1337, %1346 : vector<7x384xf32>
    %1348 = arith.mulf %1343, %1277 : vector<7x384xf32>
    %1349 = arith.addf %1339, %1348 : vector<7x384xf32>
    %c0_708 = arith.constant 0 : index
    %c4_709 = arith.constant 4 : index
    %c768_710 = arith.constant 768 : index
    %1350 = vector.load %arg3[%c0_708, %c4_709, %c768_710] : memref<5x5x1152xf32, #tpu.memory_space<vmem>>, vector<1x1x384xf32>
    %1351 = vector.shape_cast %1350 : vector<1x1x384xf32> to vector<384xf32>
    %1352 = vector.shape_cast %1351 : vector<384xf32> to vector<1x384xf32>
    %1353 = vector.broadcast %1352 : vector<1x384xf32> to vector<7x384xf32>
    %c1_711 = arith.constant 1 : index
    %c4_712 = arith.constant 4 : index
    %c768_713 = arith.constant 768 : index
    %1354 = vector.load %arg3[%c1_711, %c4_712, %c768_713] : memref<5x5x1152xf32, #tpu.memory_space<vmem>>, vector<1x1x384xf32>
    %1355 = vector.shape_cast %1354 : vector<1x1x384xf32> to vector<384xf32>
    %1356 = vector.shape_cast %1355 : vector<384xf32> to vector<1x384xf32>
    %1357 = vector.broadcast %1356 : vector<1x384xf32> to vector<7x384xf32>
    %c2_714 = arith.constant 2 : index
    %c4_715 = arith.constant 4 : index
    %c768_716 = arith.constant 768 : index
    %1358 = vector.load %arg3[%c2_714, %c4_715, %c768_716] : memref<5x5x1152xf32, #tpu.memory_space<vmem>>, vector<1x1x384xf32>
    %1359 = vector.shape_cast %1358 : vector<1x1x384xf32> to vector<384xf32>
    %1360 = vector.shape_cast %1359 : vector<384xf32> to vector<1x384xf32>
    %1361 = vector.broadcast %1360 : vector<1x384xf32> to vector<7x384xf32>
    %c3_717 = arith.constant 3 : index
    %c4_718 = arith.constant 4 : index
    %c768_719 = arith.constant 768 : index
    %1362 = vector.load %arg3[%c3_717, %c4_718, %c768_719] : memref<5x5x1152xf32, #tpu.memory_space<vmem>>, vector<1x1x384xf32>
    %1363 = vector.shape_cast %1362 : vector<1x1x384xf32> to vector<384xf32>
    %1364 = vector.shape_cast %1363 : vector<384xf32> to vector<1x384xf32>
    %1365 = vector.broadcast %1364 : vector<1x384xf32> to vector<7x384xf32>
    %c4_720 = arith.constant 4 : index
    %c4_721 = arith.constant 4 : index
    %c768_722 = arith.constant 768 : index
    %1366 = vector.load %arg3[%c4_720, %c4_721, %c768_722] : memref<5x5x1152xf32, #tpu.memory_space<vmem>>, vector<1x1x384xf32>
    %1367 = vector.shape_cast %1366 : vector<1x1x384xf32> to vector<384xf32>
    %1368 = vector.shape_cast %1367 : vector<384xf32> to vector<1x384xf32>
    %1369 = vector.broadcast %1368 : vector<1x384xf32> to vector<7x384xf32>
    %c4_723 = arith.constant 4 : index
    %c0_724 = arith.constant 0 : index
    %c0_725 = arith.constant 0 : index
    %c768_726 = arith.constant 768 : index
    %1370 = vector.load %arg5[%c4_723, %c0_724, %c0_725, %c768_726] : memref<5x7x7x1152xf32, #tpu.memory_space<vmem>>, vector<1x1x7x384xf32>
    %1371 = vector.shape_cast %1370 : vector<1x1x7x384xf32> to vector<7x384xf32>
    %1372 = arith.mulf %1371, %1353 : vector<7x384xf32>
    %1373 = arith.addf %1331, %1372 : vector<7x384xf32>
    %1374 = arith.mulf %1371, %1357 : vector<7x384xf32>
    %1375 = arith.addf %1319, %1374 : vector<7x384xf32>
    %1376 = arith.mulf %1371, %1361 : vector<7x384xf32>
    %1377 = arith.addf %1307, %1376 : vector<7x384xf32>
    %c4_727 = arith.constant 4 : index
    %c1_728 = arith.constant 1 : index
    %c0_729 = arith.constant 0 : index
    %c768_730 = arith.constant 768 : index
    %1378 = vector.load %arg5[%c4_727, %c1_728, %c0_729, %c768_730] : memref<5x7x7x1152xf32, #tpu.memory_space<vmem>>, vector<1x1x7x384xf32>
    %1379 = vector.shape_cast %1378 : vector<1x1x7x384xf32> to vector<7x384xf32>
    %1380 = arith.mulf %1379, %1353 : vector<7x384xf32>
    %1381 = arith.addf %1341, %1380 : vector<7x384xf32>
    %1382 = arith.mulf %1379, %1357 : vector<7x384xf32>
    %1383 = arith.addf %1373, %1382 : vector<7x384xf32>
    %1384 = arith.mulf %1379, %1361 : vector<7x384xf32>
    %1385 = arith.addf %1375, %1384 : vector<7x384xf32>
    %1386 = arith.mulf %1379, %1365 : vector<7x384xf32>
    %1387 = arith.addf %1377, %1386 : vector<7x384xf32>
    %c4_731 = arith.constant 4 : index
    %c2_732 = arith.constant 2 : index
    %c0_733 = arith.constant 0 : index
    %c768_734 = arith.constant 768 : index
    %1388 = vector.load %arg5[%c4_731, %c2_732, %c0_733, %c768_734] : memref<5x7x7x1152xf32, #tpu.memory_space<vmem>>, vector<1x1x7x384xf32>
    %1389 = vector.shape_cast %1388 : vector<1x1x7x384xf32> to vector<7x384xf32>
    %1390 = arith.mulf %1389, %1353 : vector<7x384xf32>
    %1391 = arith.addf %1349, %1390 : vector<7x384xf32>
    %1392 = arith.mulf %1389, %1357 : vector<7x384xf32>
    %1393 = arith.addf %1381, %1392 : vector<7x384xf32>
    %1394 = arith.mulf %1389, %1361 : vector<7x384xf32>
    %1395 = arith.addf %1383, %1394 : vector<7x384xf32>
    %1396 = arith.mulf %1389, %1365 : vector<7x384xf32>
    %1397 = arith.addf %1385, %1396 : vector<7x384xf32>
    %1398 = arith.mulf %1389, %1369 : vector<7x384xf32>
    %1399 = arith.addf %1387, %1398 : vector<7x384xf32>
    %c4_735 = arith.constant 4 : index
    %c3_736 = arith.constant 3 : index
    %c0_737 = arith.constant 0 : index
    %c768_738 = arith.constant 768 : index
    %1400 = vector.load %arg5[%c4_735, %c3_736, %c0_737, %c768_738] : memref<5x7x7x1152xf32, #tpu.memory_space<vmem>>, vector<1x1x7x384xf32>
    %1401 = vector.shape_cast %1400 : vector<1x1x7x384xf32> to vector<7x384xf32>
    %1402 = arith.mulf %1401, %1353 : vector<7x384xf32>
    %1403 = arith.addf %1347, %1402 : vector<7x384xf32>
    %1404 = arith.mulf %1401, %1357 : vector<7x384xf32>
    %1405 = arith.addf %1391, %1404 : vector<7x384xf32>
    %1406 = arith.mulf %1401, %1361 : vector<7x384xf32>
    %1407 = arith.addf %1393, %1406 : vector<7x384xf32>
    %1408 = arith.mulf %1401, %1365 : vector<7x384xf32>
    %1409 = arith.addf %1395, %1408 : vector<7x384xf32>
    %1410 = arith.mulf %1401, %1369 : vector<7x384xf32>
    %1411 = arith.addf %1397, %1410 : vector<7x384xf32>
    %c4_739 = arith.constant 4 : index
    %c4_740 = arith.constant 4 : index
    %c0_741 = arith.constant 0 : index
    %c768_742 = arith.constant 768 : index
    %1412 = vector.load %arg5[%c4_739, %c4_740, %c0_741, %c768_742] : memref<5x7x7x1152xf32, #tpu.memory_space<vmem>>, vector<1x1x7x384xf32>
    %1413 = vector.shape_cast %1412 : vector<1x1x7x384xf32> to vector<7x384xf32>
    %1414 = arith.mulf %1413, %1353 : vector<7x384xf32>
    %1415 = arith.addf %1345, %1414 : vector<7x384xf32>
    %1416 = arith.mulf %1413, %1357 : vector<7x384xf32>
    %1417 = arith.addf %1403, %1416 : vector<7x384xf32>
    %1418 = arith.mulf %1413, %1361 : vector<7x384xf32>
    %1419 = arith.addf %1405, %1418 : vector<7x384xf32>
    %1420 = arith.mulf %1413, %1365 : vector<7x384xf32>
    %1421 = arith.addf %1407, %1420 : vector<7x384xf32>
    %1422 = arith.mulf %1413, %1369 : vector<7x384xf32>
    %1423 = arith.addf %1409, %1422 : vector<7x384xf32>
    %c4_743 = arith.constant 4 : index
    %c5_744 = arith.constant 5 : index
    %c0_745 = arith.constant 0 : index
    %c768_746 = arith.constant 768 : index
    %1424 = vector.load %arg5[%c4_743, %c5_744, %c0_745, %c768_746] : memref<5x7x7x1152xf32, #tpu.memory_space<vmem>>, vector<1x1x7x384xf32>
    %1425 = vector.shape_cast %1424 : vector<1x1x7x384xf32> to vector<7x384xf32>
    %1426 = arith.mulf %1425, %1357 : vector<7x384xf32>
    %1427 = arith.addf %1415, %1426 : vector<7x384xf32>
    %1428 = arith.mulf %1425, %1361 : vector<7x384xf32>
    %1429 = arith.addf %1417, %1428 : vector<7x384xf32>
    %1430 = arith.mulf %1425, %1365 : vector<7x384xf32>
    %1431 = arith.addf %1419, %1430 : vector<7x384xf32>
    %1432 = arith.mulf %1425, %1369 : vector<7x384xf32>
    %1433 = arith.addf %1421, %1432 : vector<7x384xf32>
    %c4_747 = arith.constant 4 : index
    %c6_748 = arith.constant 6 : index
    %c0_749 = arith.constant 0 : index
    %c768_750 = arith.constant 768 : index
    %1434 = vector.load %arg5[%c4_747, %c6_748, %c0_749, %c768_750] : memref<5x7x7x1152xf32, #tpu.memory_space<vmem>>, vector<1x1x7x384xf32>
    %1435 = vector.shape_cast %1434 : vector<1x1x7x384xf32> to vector<7x384xf32>
    %1436 = arith.mulf %1435, %1361 : vector<7x384xf32>
    %1437 = arith.addf %1427, %1436 : vector<7x384xf32>
    %1438 = arith.mulf %1435, %1365 : vector<7x384xf32>
    %1439 = arith.addf %1429, %1438 : vector<7x384xf32>
    %1440 = arith.mulf %1435, %1369 : vector<7x384xf32>
    %1441 = arith.addf %1431, %1440 : vector<7x384xf32>
    %c0_751 = arith.constant 0 : index
    %c0_752 = arith.constant 0 : index
    %c0_753 = arith.constant 0 : index
    %c768_754 = arith.constant 768 : index
    %1442 = vector.load %arg4[%c0_751, %c0_752, %c0_753, %c768_754] : memref<1x7x7x1152xf32, #tpu.memory_space<vmem>>, vector<1x1x7x384xf32>
    %1443 = vector.shape_cast %1442 : vector<1x1x7x384xf32> to vector<7x384xf32>
    %1444 = vector.shape_cast %1399 : vector<7x384xf32> to vector<1x1x7x384xf32>
    tpu.vector_store %arg4[%c0_751, %c0_752, %c0_753, %c768_754], %1444 {strides = array<i32>} : memref<1x7x7x1152xf32, #tpu.memory_space<vmem>>, vector<1x1x7x384xf32>,
    %c0_755 = arith.constant 0 : index
    %c1_756 = arith.constant 1 : index
    %c0_757 = arith.constant 0 : index
    %c768_758 = arith.constant 768 : index
    %1445 = vector.load %arg4[%c0_755, %c1_756, %c0_757, %c768_758] : memref<1x7x7x1152xf32, #tpu.memory_space<vmem>>, vector<1x1x7x384xf32>
    %1446 = vector.shape_cast %1445 : vector<1x1x7x384xf32> to vector<7x384xf32>
    %1447 = vector.shape_cast %1411 : vector<7x384xf32> to vector<1x1x7x384xf32>
    tpu.vector_store %arg4[%c0_755, %c1_756, %c0_757, %c768_758], %1447 {strides = array<i32>} : memref<1x7x7x1152xf32, #tpu.memory_space<vmem>>, vector<1x1x7x384xf32>,
    %c0_759 = arith.constant 0 : index
    %c2_760 = arith.constant 2 : index
    %c0_761 = arith.constant 0 : index
    %c768_762 = arith.constant 768 : index
    %1448 = vector.load %arg4[%c0_759, %c2_760, %c0_761, %c768_762] : memref<1x7x7x1152xf32, #tpu.memory_space<vmem>>, vector<1x1x7x384xf32>
    %1449 = vector.shape_cast %1448 : vector<1x1x7x384xf32> to vector<7x384xf32>
    %1450 = vector.shape_cast %1423 : vector<7x384xf32> to vector<1x1x7x384xf32>
    tpu.vector_store %arg4[%c0_759, %c2_760, %c0_761, %c768_762], %1450 {strides = array<i32>} : memref<1x7x7x1152xf32, #tpu.memory_space<vmem>>, vector<1x1x7x384xf32>,
    %c0_763 = arith.constant 0 : index
    %c3_764 = arith.constant 3 : index
    %c0_765 = arith.constant 0 : index
    %c768_766 = arith.constant 768 : index
    %1451 = vector.load %arg4[%c0_763, %c3_764, %c0_765, %c768_766] : memref<1x7x7x1152xf32, #tpu.memory_space<vmem>>, vector<1x1x7x384xf32>
    %1452 = vector.shape_cast %1451 : vector<1x1x7x384xf32> to vector<7x384xf32>
    %1453 = vector.shape_cast %1433 : vector<7x384xf32> to vector<1x1x7x384xf32>
    tpu.vector_store %arg4[%c0_763, %c3_764, %c0_765, %c768_766], %1453 {strides = array<i32>} : memref<1x7x7x1152xf32, #tpu.memory_space<vmem>>, vector<1x1x7x384xf32>,
    %c0_767 = arith.constant 0 : index
    %c4_768 = arith.constant 4 : index
    %c0_769 = arith.constant 0 : index
    %c768_770 = arith.constant 768 : index
    %1454 = vector.load %arg4[%c0_767, %c4_768, %c0_769, %c768_770] : memref<1x7x7x1152xf32, #tpu.memory_space<vmem>>, vector<1x1x7x384xf32>
    %1455 = vector.shape_cast %1454 : vector<1x1x7x384xf32> to vector<7x384xf32>
    %1456 = vector.shape_cast %1441 : vector<7x384xf32> to vector<1x1x7x384xf32>
    tpu.vector_store %arg4[%c0_767, %c4_768, %c0_769, %c768_770], %1456 {strides = array<i32>} : memref<1x7x7x1152xf32, #tpu.memory_space<vmem>>, vector<1x1x7x384xf32>,
    %c0_771 = arith.constant 0 : index
    %c5_772 = arith.constant 5 : index
    %c0_773 = arith.constant 0 : index
    %c768_774 = arith.constant 768 : index
    %1457 = vector.load %arg4[%c0_771, %c5_772, %c0_773, %c768_774] : memref<1x7x7x1152xf32, #tpu.memory_space<vmem>>, vector<1x1x7x384xf32>
    %1458 = vector.shape_cast %1457 : vector<1x1x7x384xf32> to vector<7x384xf32>
    %1459 = vector.shape_cast %1439 : vector<7x384xf32> to vector<1x1x7x384xf32>
    tpu.vector_store %arg4[%c0_771, %c5_772, %c0_773, %c768_774], %1459 {strides = array<i32>} : memref<1x7x7x1152xf32, #tpu.memory_space<vmem>>, vector<1x1x7x384xf32>,
    %c0_775 = arith.constant 0 : index
    %c6_776 = arith.constant 6 : index
    %c0_777 = arith.constant 0 : index
    %c768_778 = arith.constant 768 : index
    %1460 = vector.load %arg4[%c0_775, %c6_776, %c0_777, %c768_778] : memref<1x7x7x1152xf32, #tpu.memory_space<vmem>>, vector<1x1x7x384xf32>
    %1461 = vector.shape_cast %1460 : vector<1x1x7x384xf32> to vector<7x384xf32>
    %1462 = vector.shape_cast %1437 : vector<7x384xf32> to vector<1x1x7x384xf32>
    tpu.vector_store %arg4[%c0_775, %c6_776, %c0_777, %c768_778], %1462 {strides = array<i32>} : memref<1x7x7x1152xf32, #tpu.memory_space<vmem>>, vector<1x1x7x384xf32>,
    return
  }
  func.func @transform_0(%arg0: i32, %arg1: i32) -> (i32, i32, i32, i32) {
    %c0_i32 = arith.constant 0 : i32
    %c0_i32_0 = arith.constant 0 : i32
    %c0_i32_1 = arith.constant 0 : i32
    return %arg1, %c0_i32, %c0_i32_0, %arg0 : i32, i32, i32, i32
  }
  func.func @transform_1(%arg0: i32, %arg1: i32) -> (i32, i32, i32) {
    %c0_i32 = arith.constant 0 : i32
    %c0_i32_0 = arith.constant 0 : i32
    %c0_i32_1 = arith.constant 0 : i32
    return %c0_i32, %c0_i32_0, %arg0 : i32, i32, i32
  }
  func.func @transform_2(%arg0: i32, %arg1: i32) -> (i32, i32, i32, i32) {
    %c0_i32 = arith.constant 0 : i32
    %c0_i32_0 = arith.constant 0 : i32
    %c0_i32_1 = arith.constant 0 : i32
    return %arg1, %c0_i32, %c0_i32_0, %arg0 : i32, i32, i32, i32
  }
}

</mosaic_0001>

<llo_original>
// kernel: depthwise_conv2d.2
$region0: #{depthwise_conv2d.2}
  #allocation0 [shape = 'u32[]', space=smem, size = 0x4, offset = 0x4, fixed_abs, tag = 'smem constant byte address 0x4 - core index']
  #allocation1 [shape = 'u32[144,128]{1,0:T(1,128)}', space=vmem, size = 0x12000, scoped, tag = 'internal scratch']
  #allocation2 [shape = 'f32[5,7,7,1152]{3,2,1,0:T(8,128)}', space=vmem, size = 0x13b000, scoped, tag = 'scratch operand']
  %s0 = inlined_call_operand.vmem [shape: f32[1,2304,7,7], index: 0, kind: input, shape index: {}]
  %s1 = inlined_call_operand.vmem [shape: f32[2304,1,5,5], index: 1, kind: input, shape index: {}]
  %s2 = inlined_call_operand.vmem [shape: f32[1,7,7,2304], index: 2, kind: output, shape index: {}]
  %s3 = sld [smem:[#allocation0]]
  $region60: #{depthwise_conv2d.2} parent=0
    _
  %s5 = ssub.s32 1, %s3
  %s6 = scalar_select 0, %s5, %s3
  $region1: #{depthwise_conv2d.2} parent=0
    #allocation3 [shape = 'u8[516096]{0}', space=vmem, size = 0x7e000, scoped, tag = 'output window, operand 0']
    loop: start=0, step=1, limit=4
    $region2: #{depthwise_conv2d.2} parent=1 // loop_pre_header
      _
    $region3: #{depthwise_conv2d.2} parent=1 // loop_header
      %s8 = sphi 0, %s12
      %p9 = scmp.ge.s32.totalorder %s8, 4
      %s15 = sphi 0, %s27
      %s16 = sphi 0, %s23
      %s17 = sphi 0, %s15
      %s18 = sphi 0, %s16
      %s19 = sphi 0, %s17
      %s20 = sphi 0, %s18
      %s32 = sphi 0, %s34
      %s35 = sphi 0, %s32
      %s36 = sphi 0, %s35
      %s52 = sphi 0, %s36
      %s58 = sphi 0, %s60
      %s61 = sphi 0, %s58
      %s62 = sphi 0, %s61
      %s78 = sphi 0, %s62
      %s86 = sphi 0, %s88
      %s89 = sphi 0, %s86
      %s90 = sphi 0, %s89
      %s106 = sphi 0, %s90
    $region4: #{depthwise_conv2d.2} parent=1 // loop_header_branch
      %11 = sbr.rel (%p9) target = $region8
    $region5: #{depthwise_conv2d.2} parent=1 // loop_body
      %s13 = ssub.s32 %s8, 1
      %s14 = ssub.s32 %s8, 2
      %s21 = sadd.s32 1, %s16
      %p22 = scmp.ge.s32.totalorder %s21, 1
      %s23 = scalar_select %p22, 0, %s21
      %s24 = sadd.s32 1, %s15
      %s25 = scalar_select %p22, %s24, %s15
      %p26 = scmp.ge.s32.totalorder %s25, 2
      %s27 = scalar_select %p26, 0, %s25
      %s28 = ssub.s32 %s16, %s23
      %s29 = ssub.s32 %s15, %s27
      %s30 = sor.u32 %s28, %s29
      %p31 = scmp.eq.s32.totalorder %s30, 0
      %s33 = sadd.s32 %s32, 1
      %s34 = scalar_select %p31, %s32, %s33
      %p37 = pneg %p31
      %p38 = scmp.eq.s32.totalorder %s8, 1
      %p39 = por %p37, %p38
      %p40 = scmp.ne.s32.totalorder %s32, %s35
      %p41 = scmp.eq.s32.totalorder %s8, 0
      %p42 = por %p40, %p41
      %p43 = scmp.ne.s32.totalorder %s32, %s35
      %p44 = scmp.eq.s32.totalorder %s13, 1
      %p45 = por %p43, %p44
      %p46 = scmp.ne.s32.totalorder %s35, %s36
      %p47 = scmp.eq.s32.totalorder %s13, 0
      %p48 = por %p46, %p47
      %p49 = scmp.ne.s32.totalorder %s35, %s36
      %p50 = scmp.eq.s32.totalorder %s14, 1
      %p51 = por %p49, %p50
      %p53 = scmp.ne.s32.totalorder %s36, %s52
      %p54 = scmp.eq.s32.totalorder %s14, 0
      %p55 = por %p53, %p54
      %s56 = ssub.s32 %s15, %s27
      %p57 = scmp.eq.s32.totalorder %s56, 0
      %s59 = sadd.s32 %s58, 1
      %s60 = scalar_select %p57, %s58, %s59
      %p63 = pneg %p57
      %p64 = scmp.eq.s32.totalorder %s8, 1
      %p65 = por %p63, %p64
      %p66 = scmp.ne.s32.totalorder %s58, %s61
      %p67 = scmp.eq.s32.totalorder %s8, 0
      %p68 = por %p66, %p67
      %p69 = scmp.ne.s32.totalorder %s58, %s61
      %p70 = scmp.eq.s32.totalorder %s13, 1
      %p71 = por %p69, %p70
      %p72 = scmp.ne.s32.totalorder %s61, %s62
      %p73 = scmp.eq.s32.totalorder %s13, 0
      %p74 = por %p72, %p73
      %p75 = scmp.ne.s32.totalorder %s61, %s62
      %p76 = scmp.eq.s32.totalorder %s14, 1
      %p77 = por %p75, %p76
      %p79 = scmp.ne.s32.totalorder %s62, %s78
      %p80 = scmp.eq.s32.totalorder %s14, 0
      %p81 = por %p79, %p80
      %s82 = ssub.s32 %s16, %s23
      %s83 = ssub.s32 %s15, %s27
      %s84 = sor.u32 %s82, %s83
      %p85 = scmp.eq.s32.totalorder %s84, 0
      %s87 = sadd.s32 %s86, 1
      %s88 = scalar_select %p85, %s86, %s87
      %p91 = pneg %p85
      %p92 = scmp.eq.s32.totalorder %s8, 1
      %p93 = por %p91, %p92
      %p94 = scmp.ne.s32.totalorder %s86, %s89
      %p95 = scmp.eq.s32.totalorder %s8, 0
      %p96 = por %p94, %p95
      %p97 = scmp.ne.s32.totalorder %s86, %s89
      %p98 = scmp.eq.s32.totalorder %s13, 1
      %p99 = por %p97, %p98
      %p100 = scmp.ne.s32.totalorder %s89, %s90
      %p101 = scmp.eq.s32.totalorder %s13, 0
      %p102 = por %p100, %p101
      %p103 = scmp.ne.s32.totalorder %s89, %s90
      %p104 = scmp.eq.s32.totalorder %s14, 1
      %p105 = por %p103, %p104
      %p107 = scmp.ne.s32.totalorder %s90, %s106
      %p108 = scmp.eq.s32.totalorder %s14, 0
      %p109 = por %p107, %p108
      %p110 = scmp.le.s32.totalorder 1, %s8
      %p111 = scmp.lt.s32.totalorder %s8, 3
      %p112 = pnand %p110, %p111
      %p113 = pneg %p112
      // Predicated region
      $region9: #{depthwise_conv2d.2} parent=5 // pred_check
        _
      $region10: #{depthwise_conv2d.2} parent=5 // pred_check_branch
        %115 = sbr.rel (%p112) target = $region12
      $region11: #{depthwise_conv2d.2} parent=5 // pred_region
        %s116 = ssub.s32 %s8, 1
      $region12: #{depthwise_conv2d.2} parent=5 // pred_fallthru
        _
      %p117 = scmp.lt.s32.totalorder %s8, 2
      // Predicated region
      $region13: #{depthwise_conv2d.2} parent=5 // pred_check
        %p118 = pneg %p117
      $region14: #{depthwise_conv2d.2} parent=5 // pred_check_branch
        %120 = sbr.rel (%p118) target = $region16
      $region15: #{depthwise_conv2d.2} parent=5 // pred_region
        // Predicated region
        $region17: #{depthwise_conv2d.2} parent=15 // pred_check
          %p121 = pneg %p42
        $region18: #{depthwise_conv2d.2} parent=15 // pred_check_branch
          %123 = sbr.rel (%p121) target = $region20
        $region19: #{depthwise_conv2d.2} parent=15 // pred_region
          %s124 = smul.u32 9, %s15
          %p125 = scmp.lt.s32.totalorder %s16, 0
          %s126 = scalar_select %p125, %s16, 0
          %p127 = scmp.lt.s32.totalorder %s124, 17
          %s128 = scalar_select %p127, %s124, 17
          %s129 = smul.addr %s126, 126
          %s130 = sadd.s32 %s128, %s129
          %s131 = smul.addr %s130, 8
          %s132 = scalar_lea.vmem %s0, %s131
          %s133 = smul.u32 9, %s15
        $region20: #{depthwise_conv2d.2} parent=15 // pred_fallthru
          _
        // Predicated region
        $region21: #{depthwise_conv2d.2} parent=15 // pred_check
          %p134 = pneg %p68
        $region22: #{depthwise_conv2d.2} parent=15 // pred_check_branch
          %136 = sbr.rel (%p134) target = $region24
        $region23: #{depthwise_conv2d.2} parent=15 // pred_region
          %s137 = smul.u32 9, %s15
          %p138 = scmp.lt.s32.totalorder %s137, 17
          %s139 = scalar_select %p138, %s137, 17
          %s140 = smul.addr %s139, 8
          %s141 = scalar_lea.vmem %s1, %s140
          %s142 = smul.u32 9, %s15
        $region24: #{depthwise_conv2d.2} parent=15 // pred_fallthru
          _
      $region16: #{depthwise_conv2d.2} parent=5 // pred_fallthru
        _
      %p143 = scmp.le.s32.totalorder 1, %s8
      %p144 = scmp.lt.s32.totalorder %s8, 3
      %p145 = pnand %p143, %p144
      %p146 = pneg %p145
      // Predicated region
      $region25: #{depthwise_conv2d.2} parent=5 // pred_check
        _
      $region26: #{depthwise_conv2d.2} parent=5 // pred_check_branch
        %148 = sbr.rel (%p145) target = $region28
      $region27: #{depthwise_conv2d.2} parent=5 // pred_region
        #allocation4 [shape = 'u8[258048]{0}', space=vmem, size = 0x3f000, dematerialized = true, scoped, tag = 'FusionAdapter Buffer %fusion.1 = f32[1,7,7,2304]{3,2,1,0:T(8,128)} fusion(%param_0.3), kind=kLoop, calls=%fused_computation.1.clone, metadata={op_name="jit(depthwise_conv2d)/transpose" stack_frame_id=7}']
        #allocation5 [shape = 'u8[184320]{0}', space=vmem, size = 0x2d000, dematerialized = true, scoped, tag = 'FusionAdapter Buffer %fusion.2 = f32[5,5,2304]{2,1,0:T(8,128)} fusion(%param_1.2), kind=kLoop, calls=%fused_computation.2.clone, metadata={op_name="jit(depthwise_conv2d)/transpose" stack_frame_id=9}']
        %s149 = ssub.s32 %s8, 1
        %s150 = smul.u32 9, %s17
        %p151 = scmp.lt.s32.totalorder %s18, 0
        %s152 = scalar_select %p151, %s18, 0
        %p153 = scmp.lt.s32.totalorder %s150, 17
        %s154 = scalar_select %p153, %s150, 17
        %s155 = smul.addr %s152, 126
        %s156 = sadd.s32 %s154, %s155
        %s157 = smul.addr %s156, 8
        %s158 = scalar_lea.vmem %s0, %s157
        %p159 = pneg %p48
        %p160 = pneg %p45
        %s161 = smul.u32 9, %s17
        %p162 = scmp.lt.s32.totalorder %s161, 17
        %s163 = scalar_select %p162, %s161, 17
        %s164 = smul.addr %s163, 8
        %s165 = scalar_lea.vmem %s1, %s164
        %p166 = pneg %p74
        %p167 = pneg %p71
        %p168 = pneg %p102
        %p169 = pneg %p99
        %s170 = sand.u32 %s89, 1
        %s171 = sand.u32 %s89, 1
        %s172 = smul.addr %s171, 504
        %s173 = scalar_lea.vmem [#allocation3], %s172
        %s174 = smul.u32 9, %s17
        %p175 = scmp.lt.s32.totalorder %s18, 0
        %s176 = scalar_select %p175, %s18, 0
        %p177 = scmp.lt.s32.totalorder %s174, 17
        %s178 = scalar_select %p177, %s174, 17
        %s179 = smul.addr %s176, 126
        %s180 = sadd.s32 %s178, %s179
        %s181 = smul.addr %s180, 8
        %s182 = scalar_lea.vmem %s0, %s181
        %s183 = smul.u32 9, %s17
        %s184 = smul.u32 9, %s17
        %p185 = scmp.lt.s32.totalorder %s184, 17
        %s186 = scalar_select %p185, %s184, 17
        %s187 = smul.addr %s186, 8
        %s188 = scalar_lea.vmem %s1, %s187
        %s189 = smul.u32 9, %s17
        %s190 = smul.u32 9, %s17
        %v191 = vld [vmem:[%s182] sm:$0x7f]
        %193 = vst [vmem:[#allocation4] sm:$0xff] %v191
        %s194 = scalar_lea.vmem %s182, 8
        %v195 = vld [vmem:[%s194] sm:$0x7f]
        %s196 = scalar_lea.vmem [#allocation4], 8
        %198 = vst [vmem:[%s196] sm:$0xff] %v195
        %s199 = scalar_lea.vmem %s182, 16
        %v200 = vld [vmem:[%s199] sm:$0x7f]
        %s201 = scalar_lea.vmem [#allocation4], 16
        %203 = vst [vmem:[%s201] sm:$0xff] %v200
        %s204 = scalar_lea.vmem %s182, 24
        %v205 = vld [vmem:[%s204] sm:$0x7f]
        %s206 = scalar_lea.vmem [#allocation4], 24
        %208 = vst [vmem:[%s206] sm:$0xff] %v205
        %s209 = scalar_lea.vmem %s182, 32
        %v210 = vld [vmem:[%s209] sm:$0x7f]
        %s211 = scalar_lea.vmem [#allocation4], 32
        %213 = vst [vmem:[%s211] sm:$0xff] %v210
        %s214 = scalar_lea.vmem %s182, 40
        %v215 = vld [vmem:[%s214] sm:$0x7f]
        %s216 = scalar_lea.vmem [#allocation4], 40
        %218 = vst [vmem:[%s216] sm:$0xff] %v215
        %s219 = scalar_lea.vmem %s182, 48
        %v220 = vld [vmem:[%s219] sm:$0x7f]
        %s221 = scalar_lea.vmem [#allocation4], 48
        %223 = vst [vmem:[%s221] sm:$0xff] %v220
        %s224 = scalar_lea.vmem %s182, 56
        %v225 = vld [vmem:[%s224] sm:$0x7f]
        %s226 = scalar_lea.vmem [#allocation4], 56
        %228 = vst [vmem:[%s226] sm:$0xff] %v225
        %s229 = scalar_lea.vmem %s182, 64
        %v230 = vld [vmem:[%s229] sm:$0x7f]
        %s231 = scalar_lea.vmem [#allocation4], 64
        %233 = vst [vmem:[%s231] sm:$0xff] %v230
        %s234 = scalar_lea.vmem %s182, 144
        %v235 = vld [vmem:[%s234] sm:$0x7f]
        %s236 = scalar_lea.vmem [#allocation4], 72
        %238 = vst [vmem:[%s236] sm:$0xff] %v235
        %s239 = scalar_lea.vmem %s182, 152
        %v240 = vld [vmem:[%s239] sm:$0x7f]
        %s241 = scalar_lea.vmem [#allocation4], 80
        %243 = vst [vmem:[%s241] sm:$0xff] %v240
        %s244 = scalar_lea.vmem %s182, 160
        %v245 = vld [vmem:[%s244] sm:$0x7f]
        %s246 = scalar_lea.vmem [#allocation4], 88
        %248 = vst [vmem:[%s246] sm:$0xff] %v245
        %s249 = scalar_lea.vmem %s182, 168
        %v250 = vld [vmem:[%s249] sm:$0x7f]
        %s251 = scalar_lea.vmem [#allocation4], 96
        %253 = vst [vmem:[%s251] sm:$0xff] %v250
        %s254 = scalar_lea.vmem %s182, 176
        %v255 = vld [vmem:[%s254] sm:$0x7f]
        %s256 = scalar_lea.vmem [#allocation4], 104
        %258 = vst [vmem:[%s256] sm:$0xff] %v255
        %s259 = scalar_lea.vmem %s182, 184
        %v260 = vld [vmem:[%s259] sm:$0x7f]
        %s261 = scalar_lea.vmem [#allocation4], 112
        %263 = vst [vmem:[%s261] sm:$0xff] %v260
        %s264 = scalar_lea.vmem %s182, 192
        %v265 = vld [vmem:[%s264] sm:$0x7f]
        %s266 = scalar_lea.vmem [#allocation4], 120
        %268 = vst [vmem:[%s266] sm:$0xff] %v265
        %s269 = scalar_lea.vmem %s182, 200
        %v270 = vld [vmem:[%s269] sm:$0x7f]
        %s271 = scalar_lea.vmem [#allocation4], 128
        %273 = vst [vmem:[%s271] sm:$0xff] %v270
        %s274 = scalar_lea.vmem %s182, 208
        %v275 = vld [vmem:[%s274] sm:$0x7f]
        %s276 = scalar_lea.vmem [#allocation4], 136
        %278 = vst [vmem:[%s276] sm:$0xff] %v275
        %s279 = scalar_lea.vmem %s182, 288
        %v280 = vld [vmem:[%s279] sm:$0x7f]
        %s281 = scalar_lea.vmem [#allocation4], 144
        %283 = vst [vmem:[%s281] sm:$0xff] %v280
        %s284 = scalar_lea.vmem %s182, 296
        %v285 = vld [vmem:[%s284] sm:$0x7f]
        %s286 = scalar_lea.vmem [#allocation4], 152
        %288 = vst [vmem:[%s286] sm:$0xff] %v285
        %s289 = scalar_lea.vmem %s182, 304
        %v290 = vld [vmem:[%s289] sm:$0x7f]
        %s291 = scalar_lea.vmem [#allocation4], 160
        %293 = vst [vmem:[%s291] sm:$0xff] %v290
        %s294 = scalar_lea.vmem %s182, 312
        %v295 = vld [vmem:[%s294] sm:$0x7f]
        %s296 = scalar_lea.vmem [#allocation4], 168
        %298 = vst [vmem:[%s296] sm:$0xff] %v295
        %s299 = scalar_lea.vmem %s182, 320
        %v300 = vld [vmem:[%s299] sm:$0x7f]
        %s301 = scalar_lea.vmem [#allocation4], 176
        %303 = vst [vmem:[%s301] sm:$0xff] %v300
        %s304 = scalar_lea.vmem %s182, 328
        %v305 = vld [vmem:[%s304] sm:$0x7f]
        %s306 = scalar_lea.vmem [#allocation4], 184
        %308 = vst [vmem:[%s306] sm:$0xff] %v305
        %s309 = scalar_lea.vmem %s182, 336
        %v310 = vld [vmem:[%s309] sm:$0x7f]
        %s311 = scalar_lea.vmem [#allocation4], 192
        %313 = vst [vmem:[%s311] sm:$0xff] %v310
        %s314 = scalar_lea.vmem %s182, 344
        %v315 = vld [vmem:[%s314] sm:$0x7f]
        %s316 = scalar_lea.vmem [#allocation4], 200
        %318 = vst [vmem:[%s316] sm:$0xff] %v315
        %s319 = scalar_lea.vmem %s182, 352
        %v320 = vld [vmem:[%s319] sm:$0x7f]
        %s321 = scalar_lea.vmem [#allocation4], 208
        %323 = vst [vmem:[%s321] sm:$0xff] %v320
        %s324 = scalar_lea.vmem %s182, 432
        %v325 = vld [vmem:[%s324] sm:$0x7f]
        %s326 = scalar_lea.vmem [#allocation4], 216
        %328 = vst [vmem:[%s326] sm:$0xff] %v325
        %s329 = scalar_lea.vmem %s182, 440
        %v330 = vld [vmem:[%s329] sm:$0x7f]
        %s331 = scalar_lea.vmem [#allocation4], 224
        %333 = vst [vmem:[%s331] sm:$0xff] %v330
        %s334 = scalar_lea.vmem %s182, 448
        %v335 = vld [vmem:[%s334] sm:$0x7f]
        %s336 = scalar_lea.vmem [#allocation4], 232
        %338 = vst [vmem:[%s336] sm:$0xff] %v335
        %s339 = scalar_lea.vmem %s182, 456
        %v340 = vld [vmem:[%s339] sm:$0x7f]
        %s341 = scalar_lea.vmem [#allocation4], 240
        %343 = vst [vmem:[%s341] sm:$0xff] %v340
        %s344 = scalar_lea.vmem %s182, 464
        %v345 = vld [vmem:[%s344] sm:$0x7f]
        %s346 = scalar_lea.vmem [#allocation4], 248
        %348 = vst [vmem:[%s346] sm:$0xff] %v345
        %s349 = scalar_lea.vmem %s182, 472
        %v350 = vld [vmem:[%s349] sm:$0x7f]
        %s351 = scalar_lea.vmem [#allocation4], 256
        %353 = vst [vmem:[%s351] sm:$0xff] %v350
        %s354 = scalar_lea.vmem %s182, 480
        %v355 = vld [vmem:[%s354] sm:$0x7f]
        %s356 = scalar_lea.vmem [#allocation4], 264
        %358 = vst [vmem:[%s356] sm:$0xff] %v355
        %s359 = scalar_lea.vmem %s182, 488
        %v360 = vld [vmem:[%s359] sm:$0x7f]
        %s361 = scalar_lea.vmem [#allocation4], 272
        %363 = vst [vmem:[%s361] sm:$0xff] %v360
        %s364 = scalar_lea.vmem %s182, 496
        %v365 = vld [vmem:[%s364] sm:$0x7f]
        %s366 = scalar_lea.vmem [#allocation4], 280
        %368 = vst [vmem:[%s366] sm:$0xff] %v365
        %s369 = scalar_lea.vmem %s182, 576
        %v370 = vld [vmem:[%s369] sm:$0x7f]
        %s371 = scalar_lea.vmem [#allocation4], 288
        %373 = vst [vmem:[%s371] sm:$0xff] %v370
        %s374 = scalar_lea.vmem %s182, 584
        %v375 = vld [vmem:[%s374] sm:$0x7f]
        %s376 = scalar_lea.vmem [#allocation4], 296
        %378 = vst [vmem:[%s376] sm:$0xff] %v375
        %s379 = scalar_lea.vmem %s182, 592
        %v380 = vld [vmem:[%s379] sm:$0x7f]
        %s381 = scalar_lea.vmem [#allocation4], 304
        %383 = vst [vmem:[%s381] sm:$0xff] %v380
        %s384 = scalar_lea.vmem %s182, 600
        %v385 = vld [vmem:[%s384] sm:$0x7f]
        %s386 = scalar_lea.vmem [#allocation4], 312
        %388 = vst [vmem:[%s386] sm:$0xff] %v385
        %s389 = scalar_lea.vmem %s182, 608
        %v390 = vld [vmem:[%s389] sm:$0x7f]
        %s391 = scalar_lea.vmem [#allocation4], 320
        %393 = vst [vmem:[%s391] sm:$0xff] %v390
        %s394 = scalar_lea.vmem %s182, 616
        %v395 = vld [vmem:[%s394] sm:$0x7f]
        %s396 = scalar_lea.vmem [#allocation4], 328
        %398 = vst [vmem:[%s396] sm:$0xff] %v395
        %s399 = scalar_lea.vmem %s182, 624
        %v400 = vld [vmem:[%s399] sm:$0x7f]
        %s401 = scalar_lea.vmem [#allocation4], 336
        %403 = vst [vmem:[%s401] sm:$0xff] %v400
        %s404 = scalar_lea.vmem %s182, 632
        %v405 = vld [vmem:[%s404] sm:$0x7f]
        %s406 = scalar_lea.vmem [#allocation4], 344
        %408 = vst [vmem:[%s406] sm:$0xff] %v405
        %s409 = scalar_lea.vmem %s182, 640
        %v410 = vld [vmem:[%s409] sm:$0x7f]
        %s411 = scalar_lea.vmem [#allocation4], 352
        %413 = vst [vmem:[%s411] sm:$0xff] %v410
        %s414 = scalar_lea.vmem %s182, 720
        %v415 = vld [vmem:[%s414] sm:$0x7f]
        %s416 = scalar_lea.vmem [#allocation4], 360
        %418 = vst [vmem:[%s416] sm:$0xff] %v415
        %s419 = scalar_lea.vmem %s182, 728
        %v420 = vld [vmem:[%s419] sm:$0x7f]
        %s421 = scalar_lea.vmem [#allocation4], 368
        %423 = vst [vmem:[%s421] sm:$0xff] %v420
        %s424 = scalar_lea.vmem %s182, 736
        %v425 = vld [vmem:[%s424] sm:$0x7f]
        %s426 = scalar_lea.vmem [#allocation4], 376
        %428 = vst [vmem:[%s426] sm:$0xff] %v425
        %s429 = scalar_lea.vmem %s182, 744
        %v430 = vld [vmem:[%s429] sm:$0x7f]
        %s431 = scalar_lea.vmem [#allocation4], 384
        %433 = vst [vmem:[%s431] sm:$0xff] %v430
        %s434 = scalar_lea.vmem %s182, 752
        %v435 = vld [vmem:[%s434] sm:$0x7f]
        %s436 = scalar_lea.vmem [#allocation4], 392
        %438 = vst [vmem:[%s436] sm:$0xff] %v435
        %s439 = scalar_lea.vmem %s182, 760
        %v440 = vld [vmem:[%s439] sm:$0x7f]
        %s441 = scalar_lea.vmem [#allocation4], 400
        %443 = vst [vmem:[%s441] sm:$0xff] %v440
        %s444 = scalar_lea.vmem %s182, 768
        %v445 = vld [vmem:[%s444] sm:$0x7f]
        %s446 = scalar_lea.vmem [#allocation4], 408
        %448 = vst [vmem:[%s446] sm:$0xff] %v445
        %s449 = scalar_lea.vmem %s182, 776
        %v450 = vld [vmem:[%s449] sm:$0x7f]
        %s451 = scalar_lea.vmem [#allocation4], 416
        %453 = vst [vmem:[%s451] sm:$0xff] %v450
        %s454 = scalar_lea.vmem %s182, 784
        %v455 = vld [vmem:[%s454] sm:$0x7f]
        %s456 = scalar_lea.vmem [#allocation4], 424
        %458 = vst [vmem:[%s456] sm:$0xff] %v455
        %s459 = scalar_lea.vmem %s182, 864
        %v460 = vld [vmem:[%s459] sm:$0x7f]
        %s461 = scalar_lea.vmem [#allocation4], 432
        %463 = vst [vmem:[%s461] sm:$0xff] %v460
        %s464 = scalar_lea.vmem %s182, 872
        %v465 = vld [vmem:[%s464] sm:$0x7f]
        %s466 = scalar_lea.vmem [#allocation4], 440
        %468 = vst [vmem:[%s466] sm:$0xff] %v465
        %s469 = scalar_lea.vmem %s182, 880
        %v470 = vld [vmem:[%s469] sm:$0x7f]
        %s471 = scalar_lea.vmem [#allocation4], 448
        %473 = vst [vmem:[%s471] sm:$0xff] %v470
        %s474 = scalar_lea.vmem %s182, 888
        %v475 = vld [vmem:[%s474] sm:$0x7f]
        %s476 = scalar_lea.vmem [#allocation4], 456
        %478 = vst [vmem:[%s476] sm:$0xff] %v475
        %s479 = scalar_lea.vmem %s182, 896
        %v480 = vld [vmem:[%s479] sm:$0x7f]
        %s481 = scalar_lea.vmem [#allocation4], 464
        %483 = vst [vmem:[%s481] sm:$0xff] %v480
        %s484 = scalar_lea.vmem %s182, 904
        %v485 = vld [vmem:[%s484] sm:$0x7f]
        %s486 = scalar_lea.vmem [#allocation4], 472
        %488 = vst [vmem:[%s486] sm:$0xff] %v485
        %s489 = scalar_lea.vmem %s182, 912
        %v490 = vld [vmem:[%s489] sm:$0x7f]
        %s491 = scalar_lea.vmem [#allocation4], 480
        %493 = vst [vmem:[%s491] sm:$0xff] %v490
        %s494 = scalar_lea.vmem %s182, 920
        %v495 = vld [vmem:[%s494] sm:$0x7f]
        %s496 = scalar_lea.vmem [#allocation4], 488
        %498 = vst [vmem:[%s496] sm:$0xff] %v495
        %s499 = scalar_lea.vmem %s182, 928
        %v500 = vld [vmem:[%s499] sm:$0x7f]
        %s501 = scalar_lea.vmem [#allocation4], 496
        %503 = vst [vmem:[%s501] sm:$0xff] %v500
        %v504 = vld [vmem:[%s188] sm:$0x1f]
        %506 = vst [vmem:[#allocation5] sm:$0xff] %v504
        %s507 = scalar_lea.vmem %s188, 8
        %v508 = vld [vmem:[%s507] sm:$0x1f]
        %s509 = scalar_lea.vmem [#allocation5], 8
        %511 = vst [vmem:[%s509] sm:$0xff] %v508
        %s512 = scalar_lea.vmem %s188, 16
        %v513 = vld [vmem:[%s512] sm:$0x1f]
        %s514 = scalar_lea.vmem [#allocation5], 16
        %516 = vst [vmem:[%s514] sm:$0xff] %v513
        %s517 = scalar_lea.vmem %s188, 24
        %v518 = vld [vmem:[%s517] sm:$0x1f]
        %s519 = scalar_lea.vmem [#allocation5], 24
        %521 = vst [vmem:[%s519] sm:$0xff] %v518
        %s522 = scalar_lea.vmem %s188, 32
        %v523 = vld [vmem:[%s522] sm:$0x1f]
        %s524 = scalar_lea.vmem [#allocation5], 32
        %526 = vst [vmem:[%s524] sm:$0xff] %v523
        %s527 = scalar_lea.vmem %s188, 40
        %v528 = vld [vmem:[%s527] sm:$0x1f]
        %s529 = scalar_lea.vmem [#allocation5], 40
        %531 = vst [vmem:[%s529] sm:$0xff] %v528
        %s532 = scalar_lea.vmem %s188, 48
        %v533 = vld [vmem:[%s532] sm:$0x1f]
        %s534 = scalar_lea.vmem [#allocation5], 48
        %536 = vst [vmem:[%s534] sm:$0xff] %v533
        %s537 = scalar_lea.vmem %s188, 56
        %v538 = vld [vmem:[%s537] sm:$0x1f]
        %s539 = scalar_lea.vmem [#allocation5], 56
        %541 = vst [vmem:[%s539] sm:$0xff] %v538
        %s542 = scalar_lea.vmem %s188, 64
        %v543 = vld [vmem:[%s542] sm:$0x1f]
        %s544 = scalar_lea.vmem [#allocation5], 64
        %546 = vst [vmem:[%s544] sm:$0xff] %v543
        %s547 = scalar_lea.vmem %s188, 144
        %v548 = vld [vmem:[%s547] sm:$0x1f]
        %s549 = scalar_lea.vmem [#allocation5], 72
        %551 = vst [vmem:[%s549] sm:$0xff] %v548
        %s552 = scalar_lea.vmem %s188, 152
        %v553 = vld [vmem:[%s552] sm:$0x1f]
        %s554 = scalar_lea.vmem [#allocation5], 80
        %556 = vst [vmem:[%s554] sm:$0xff] %v553
        %s557 = scalar_lea.vmem %s188, 160
        %v558 = vld [vmem:[%s557] sm:$0x1f]
        %s559 = scalar_lea.vmem [#allocation5], 88
        %561 = vst [vmem:[%s559] sm:$0xff] %v558
        %s562 = scalar_lea.vmem %s188, 168
        %v563 = vld [vmem:[%s562] sm:$0x1f]
        %s564 = scalar_lea.vmem [#allocation5], 96
        %566 = vst [vmem:[%s564] sm:$0xff] %v563
        %s567 = scalar_lea.vmem %s188, 176
        %v568 = vld [vmem:[%s567] sm:$0x1f]
        %s569 = scalar_lea.vmem [#allocation5], 104
        %571 = vst [vmem:[%s569] sm:$0xff] %v568
        %s572 = scalar_lea.vmem %s188, 184
        %v573 = vld [vmem:[%s572] sm:$0x1f]
        %s574 = scalar_lea.vmem [#allocation5], 112
        %576 = vst [vmem:[%s574] sm:$0xff] %v573
        %s577 = scalar_lea.vmem %s188, 192
        %v578 = vld [vmem:[%s577] sm:$0x1f]
        %s579 = scalar_lea.vmem [#allocation5], 120
        %581 = vst [vmem:[%s579] sm:$0xff] %v578
        %s582 = scalar_lea.vmem %s188, 200
        %v583 = vld [vmem:[%s582] sm:$0x1f]
        %s584 = scalar_lea.vmem [#allocation5], 128
        %586 = vst [vmem:[%s584] sm:$0xff] %v583
        %s587 = scalar_lea.vmem %s188, 208
        %v588 = vld [vmem:[%s587] sm:$0x1f]
        %s589 = scalar_lea.vmem [#allocation5], 136
        %591 = vst [vmem:[%s589] sm:$0xff] %v588
        %s592 = scalar_lea.vmem %s188, 288
        %v593 = vld [vmem:[%s592] sm:$0x1f]
        %s594 = scalar_lea.vmem [#allocation5], 144
        %596 = vst [vmem:[%s594] sm:$0xff] %v593
        %s597 = scalar_lea.vmem %s188, 296
        %v598 = vld [vmem:[%s597] sm:$0x1f]
        %s599 = scalar_lea.vmem [#allocation5], 152
        %601 = vst [vmem:[%s599] sm:$0xff] %v598
        %s602 = scalar_lea.vmem %s188, 304
        %v603 = vld [vmem:[%s602] sm:$0x1f]
        %s604 = scalar_lea.vmem [#allocation5], 160
        %606 = vst [vmem:[%s604] sm:$0xff] %v603
        %s607 = scalar_lea.vmem %s188, 312
        %v608 = vld [vmem:[%s607] sm:$0x1f]
        %s609 = scalar_lea.vmem [#allocation5], 168
        %611 = vst [vmem:[%s609] sm:$0xff] %v608
        %s612 = scalar_lea.vmem %s188, 320
        %v613 = vld [vmem:[%s612] sm:$0x1f]
        %s614 = scalar_lea.vmem [#allocation5], 176
        %616 = vst [vmem:[%s614] sm:$0xff] %v613
        %s617 = scalar_lea.vmem %s188, 328
        %v618 = vld [vmem:[%s617] sm:$0x1f]
        %s619 = scalar_lea.vmem [#allocation5], 184
        %621 = vst [vmem:[%s619] sm:$0xff] %v618
        %s622 = scalar_lea.vmem %s188, 336
        %v623 = vld [vmem:[%s622] sm:$0x1f]
        %s624 = scalar_lea.vmem [#allocation5], 192
        %626 = vst [vmem:[%s624] sm:$0xff] %v623
        %s627 = scalar_lea.vmem %s188, 344
        %v628 = vld [vmem:[%s627] sm:$0x1f]
        %s629 = scalar_lea.vmem [#allocation5], 200
        %631 = vst [vmem:[%s629] sm:$0xff] %v628
        %s632 = scalar_lea.vmem %s188, 352
        %v633 = vld [vmem:[%s632] sm:$0x1f]
        %s634 = scalar_lea.vmem [#allocation5], 208
        %636 = vst [vmem:[%s634] sm:$0xff] %v633
        %s637 = scalar_lea.vmem %s188, 432
        %v638 = vld [vmem:[%s637] sm:$0x1f]
        %s639 = scalar_lea.vmem [#allocation5], 216
        %641 = vst [vmem:[%s639] sm:$0xff] %v638
        %s642 = scalar_lea.vmem %s188, 440
        %v643 = vld [vmem:[%s642] sm:$0x1f]
        %s644 = scalar_lea.vmem [#allocation5], 224
        %646 = vst [vmem:[%s644] sm:$0xff] %v643
        %s647 = scalar_lea.vmem %s188, 448
        %v648 = vld [vmem:[%s647] sm:$0x1f]
        %s649 = scalar_lea.vmem [#allocation5], 232
        %651 = vst [vmem:[%s649] sm:$0xff] %v648
        %s652 = scalar_lea.vmem %s188, 456
        %v653 = vld [vmem:[%s652] sm:$0x1f]
        %s654 = scalar_lea.vmem [#allocation5], 240
        %656 = vst [vmem:[%s654] sm:$0xff] %v653
        %s657 = scalar_lea.vmem %s188, 464
        %v658 = vld [vmem:[%s657] sm:$0x1f]
        %s659 = scalar_lea.vmem [#allocation5], 248
        %661 = vst [vmem:[%s659] sm:$0xff] %v658
        %s662 = scalar_lea.vmem %s188, 472
        %v663 = vld [vmem:[%s662] sm:$0x1f]
        %s664 = scalar_lea.vmem [#allocation5], 256
        %666 = vst [vmem:[%s664] sm:$0xff] %v663
        %s667 = scalar_lea.vmem %s188, 480
        %v668 = vld [vmem:[%s667] sm:$0x1f]
        %s669 = scalar_lea.vmem [#allocation5], 264
        %671 = vst [vmem:[%s669] sm:$0xff] %v668
        %s672 = scalar_lea.vmem %s188, 488
        %v673 = vld [vmem:[%s672] sm:$0x1f]
        %s674 = scalar_lea.vmem [#allocation5], 272
        %676 = vst [vmem:[%s674] sm:$0xff] %v673
        %s677 = scalar_lea.vmem %s188, 496
        %v678 = vld [vmem:[%s677] sm:$0x1f]
        %s679 = scalar_lea.vmem [#allocation5], 280
        %681 = vst [vmem:[%s679] sm:$0xff] %v678
        %s682 = scalar_lea.vmem %s188, 576
        %v683 = vld [vmem:[%s682] sm:$0x1f]
        %s684 = scalar_lea.vmem [#allocation5], 288
        %686 = vst [vmem:[%s684] sm:$0xff] %v683
        %s687 = scalar_lea.vmem %s188, 584
        %v688 = vld [vmem:[%s687] sm:$0x1f]
        %s689 = scalar_lea.vmem [#allocation5], 296
        %691 = vst [vmem:[%s689] sm:$0xff] %v688
        %s692 = scalar_lea.vmem %s188, 592
        %v693 = vld [vmem:[%s692] sm:$0x1f]
        %s694 = scalar_lea.vmem [#allocation5], 304
        %696 = vst [vmem:[%s694] sm:$0xff] %v693
        %s697 = scalar_lea.vmem %s188, 600
        %v698 = vld [vmem:[%s697] sm:$0x1f]
        %s699 = scalar_lea.vmem [#allocation5], 312
        %701 = vst [vmem:[%s699] sm:$0xff] %v698
        %s702 = scalar_lea.vmem %s188, 608
        %v703 = vld [vmem:[%s702] sm:$0x1f]
        %s704 = scalar_lea.vmem [#allocation5], 320
        %706 = vst [vmem:[%s704] sm:$0xff] %v703
        %s707 = scalar_lea.vmem %s188, 616
        %v708 = vld [vmem:[%s707] sm:$0x1f]
        %s709 = scalar_lea.vmem [#allocation5], 328
        %711 = vst [vmem:[%s709] sm:$0xff] %v708
        %s712 = scalar_lea.vmem %s188, 624
        %v713 = vld [vmem:[%s712] sm:$0x1f]
        %s714 = scalar_lea.vmem [#allocation5], 336
        %716 = vst [vmem:[%s714] sm:$0xff] %v713
        %s717 = scalar_lea.vmem %s188, 632
        %v718 = vld [vmem:[%s717] sm:$0x1f]
        %s719 = scalar_lea.vmem [#allocation5], 344
        %721 = vst [vmem:[%s719] sm:$0xff] %v718
        %s722 = scalar_lea.vmem %s188, 640
        %v723 = vld [vmem:[%s722] sm:$0x1f]
        %s724 = scalar_lea.vmem [#allocation5], 352
        %726 = vst [vmem:[%s724] sm:$0xff] %v723
        %727 = vst [vmem:[#allocation2] sm:$0x3] 0.0
        %728 = vst [vmem:[#allocation2 + $0x8] sm:$0x3] 0.0
        %729 = vst [vmem:[#allocation2 + $0x10] sm:$0x3] 0.0
        %730 = vst [vmem:[#allocation2 + $0x18] sm:$0x3] 0.0
        %731 = vst [vmem:[#allocation2 + $0x20] sm:$0x3] 0.0
        %732 = vst [vmem:[#allocation2 + $0x28] sm:$0x3] 0.0
        %733 = vst [vmem:[#allocation2 + $0x30] sm:$0x3] 0.0
        %734 = vst [vmem:[#allocation2 + $0x38] sm:$0x3] 0.0
        %735 = vst [vmem:[#allocation2 + $0x40] sm:$0x3] 0.0
        %736 = vst [vmem:[#allocation2 + $0x48] sm:$0x3] 0.0
        %737 = vst [vmem:[#allocation2 + $0x50] sm:$0x3] 0.0
        %738 = vst [vmem:[#allocation2 + $0x58] sm:$0x3] 0.0
        %739 = vst [vmem:[#allocation2 + $0x60] sm:$0x3] 0.0
        %740 = vst [vmem:[#allocation2 + $0x68] sm:$0x3] 0.0
        %741 = vst [vmem:[#allocation2 + $0x70] sm:$0x3] 0.0
        %742 = vst [vmem:[#allocation2 + $0x78] sm:$0x3] 0.0
        %743 = vst [vmem:[#allocation2 + $0x80] sm:$0x3] 0.0
        %744 = vst [vmem:[#allocation2 + $0x88] sm:$0x3] 0.0
        %745 = vst [vmem:[#allocation2 + $0x90] sm:$0x3] 0.0
        %746 = vst [vmem:[#allocation2 + $0x98] sm:$0x3] 0.0
        %747 = vst [vmem:[#allocation2 + $0xa0] sm:$0x3] 0.0
        %748 = vst [vmem:[#allocation2 + $0xa8] sm:$0x3] 0.0
        %749 = vst [vmem:[#allocation2 + $0xb0] sm:$0x3] 0.0
        %750 = vst [vmem:[#allocation2 + $0xb8] sm:$0x3] 0.0
        %751 = vst [vmem:[#allocation2 + $0xc0] sm:$0x3] 0.0
        %752 = vst [vmem:[#allocation2 + $0xc8] sm:$0x3] 0.0
        %753 = vst [vmem:[#allocation2 + $0xd0] sm:$0x3] 0.0
        %754 = vst [vmem:[#allocation2 + $0xd8] sm:$0x3] 0.0
        %755 = vst [vmem:[#allocation2 + $0xe0] sm:$0x3] 0.0
        %756 = vst [vmem:[#allocation2 + $0xe8] sm:$0x3] 0.0
        %757 = vst [vmem:[#allocation2 + $0xf0] sm:$0x3] 0.0
        %758 = vst [vmem:[#allocation2 + $0xf8] sm:$0x3] 0.0
        %759 = vst [vmem:[#allocation2 + $0x100] sm:$0x3] 0.0
        %760 = vst [vmem:[#allocation2 + $0x108] sm:$0x3] 0.0
        %761 = vst [vmem:[#allocation2 + $0x110] sm:$0x3] 0.0
        %762 = vst [vmem:[#allocation2 + $0x118] sm:$0x3] 0.0
        %763 = vst [vmem:[#allocation2 + $0x120] sm:$0x3] 0.0
        %764 = vst [vmem:[#allocation2 + $0x128] sm:$0x3] 0.0
        %765 = vst [vmem:[#allocation2 + $0x130] sm:$0x3] 0.0
        %766 = vst [vmem:[#allocation2 + $0x138] sm:$0x3] 0.0
        %767 = vst [vmem:[#allocation2 + $0x140] sm:$0x3] 0.0
        %768 = vst [vmem:[#allocation2 + $0x148] sm:$0x3] 0.0
        %769 = vst [vmem:[#allocation2 + $0x150] sm:$0x3] 0.0
        %770 = vst [vmem:[#allocation2 + $0x158] sm:$0x3] 0.0
        %771 = vst [vmem:[#allocation2 + $0x160] sm:$0x3] 0.0
        %772 = vst [vmem:[#allocation2 + $0x168] sm:$0x3] 0.0
        %773 = vst [vmem:[#allocation2 + $0x170] sm:$0x3] 0.0
        %774 = vst [vmem:[#allocation2 + $0x178] sm:$0x3] 0.0
        %775 = vst [vmem:[#allocation2 + $0x180] sm:$0x3] 0.0
        %776 = vst [vmem:[#allocation2 + $0x188] sm:$0x3] 0.0
        %777 = vst [vmem:[#allocation2 + $0x190] sm:$0x3] 0.0
        %778 = vst [vmem:[#allocation2 + $0x198] sm:$0x3] 0.0
        %779 = vst [vmem:[#allocation2 + $0x1a0] sm:$0x3] 0.0
        %780 = vst [vmem:[#allocation2 + $0x1a8] sm:$0x3] 0.0
        %781 = vst [vmem:[#allocation2 + $0x1b0] sm:$0x3] 0.0
        %782 = vst [vmem:[#allocation2 + $0x1b8] sm:$0x3] 0.0
        %783 = vst [vmem:[#allocation2 + $0x1c0] sm:$0x3] 0.0
        %784 = vst [vmem:[#allocation2 + $0x1c8] sm:$0x3] 0.0
        %785 = vst [vmem:[#allocation2 + $0x1d0] sm:$0x3] 0.0
        %786 = vst [vmem:[#allocation2 + $0x1d8] sm:$0x3] 0.0
        %787 = vst [vmem:[#allocation2 + $0x1e0] sm:$0x3] 0.0
        %788 = vst [vmem:[#allocation2 + $0x1e8] sm:$0x3] 0.0
        %789 = vst [vmem:[#allocation2 + $0x1f0] sm:$0x3] 0.0
        %v790 = vld [vmem:[#allocation4] sm:$0x1f]
        %v791 = vld [vmem:[#allocation4 + $0x8] sm:$0x1f]
        %v792 = vld [vmem:[#allocation4 + $0x10] sm:$0x1f]
        %v793 = vld [vmem:[#allocation4 + $0x18] sm:$0x1f]
        %v794 = vld [vmem:[#allocation4 + $0x20] sm:$0x1f]
        %v795 = vld [vmem:[#allocation4 + $0x28] sm:$0x1f]
        %v796 = vld [vmem:[#allocation4 + $0x30] sm:$0x1f]
        %v797 = vld [vmem:[#allocation4 + $0x38] sm:$0x1f]
        %v798 = vld [vmem:[#allocation4 + $0x40] sm:$0x1f]
        %v799 = vld [vmem:[#allocation4 + $0x48] sm:$0x1f]
        %v800 = vld [vmem:[#allocation4 + $0x50] sm:$0x1f]
        %v801 = vld [vmem:[#allocation4 + $0x58] sm:$0x1f]
        %v802 = vld [vmem:[#allocation4 + $0x60] sm:$0x1f]
        %v803 = vld [vmem:[#allocation4 + $0x68] sm:$0x1f]
        %v804 = vld [vmem:[#allocation4 + $0x70] sm:$0x1f]
        %v805 = vld [vmem:[#allocation4 + $0x78] sm:$0x1f]
        %v806 = vld [vmem:[#allocation4 + $0x80] sm:$0x1f]
        %v807 = vld [vmem:[#allocation4 + $0x88] sm:$0x1f]
        %v808 = vld [vmem:[#allocation4 + $0x90] sm:$0x1f]
        %v809 = vld [vmem:[#allocation4 + $0x98] sm:$0x1f]
        %v810 = vld [vmem:[#allocation4 + $0xa0] sm:$0x1f]
        %v811 = vld [vmem:[#allocation4 + $0xa8] sm:$0x1f]
        %v812 = vld [vmem:[#allocation4 + $0xb0] sm:$0x1f]
        %v813 = vld [vmem:[#allocation4 + $0xb8] sm:$0x1f]
        %v814 = vld [vmem:[#allocation4 + $0xc0] sm:$0x1f]
        %v815 = vld [vmem:[#allocation4 + $0xc8] sm:$0x1f]
        %v816 = vld [vmem:[#allocation4 + $0xd0] sm:$0x1f]
        %v817 = vld [vmem:[#allocation4 + $0xd8] sm:$0x1f]
        %v818 = vld [vmem:[#allocation4 + $0xe0] sm:$0x1f]
        %v819 = vld [vmem:[#allocation4 + $0xe8] sm:$0x1f]
        %v820 = vld [vmem:[#allocation4 + $0xf0] sm:$0x1f]
        %v821 = vld [vmem:[#allocation4 + $0xf8] sm:$0x1f]
        %v822 = vld [vmem:[#allocation4 + $0x100] sm:$0x1f]
        %v823 = vld [vmem:[#allocation4 + $0x108] sm:$0x1f]
        %v824 = vld [vmem:[#allocation4 + $0x110] sm:$0x1f]
        %v825 = vld [vmem:[#allocation4 + $0x118] sm:$0x1f]
        %v826 = vld [vmem:[#allocation4 + $0x120] sm:$0x1f]
        %v827 = vld [vmem:[#allocation4 + $0x128] sm:$0x1f]
        %v828 = vld [vmem:[#allocation4 + $0x130] sm:$0x1f]
        %v829 = vld [vmem:[#allocation4 + $0x138] sm:$0x1f]
        %v830 = vld [vmem:[#allocation4 + $0x140] sm:$0x1f]
        %v831 = vld [vmem:[#allocation4 + $0x148] sm:$0x1f]
        %v832 = vld [vmem:[#allocation4 + $0x150] sm:$0x1f]
        %v833 = vld [vmem:[#allocation4 + $0x158] sm:$0x1f]
        %v834 = vld [vmem:[#allocation4 + $0x160] sm:$0x1f]
        %v835 = vld [vmem:[#allocation4 + $0x168] sm:$0x1f]
        %v836 = vld [vmem:[#allocation4 + $0x170] sm:$0x1f]
        %v837 = vld [vmem:[#allocation4 + $0x178] sm:$0x1f]
        %v838 = vld [vmem:[#allocation4 + $0x180] sm:$0x1f]
        %v839 = vld [vmem:[#allocation4 + $0x188] sm:$0x1f]
        %v840 = vld [vmem:[#allocation4 + $0x190] sm:$0x1f]
        %v841 = vld [vmem:[#allocation4 + $0x198] sm:$0x1f]
        %v842 = vld [vmem:[#allocation4 + $0x1a0] sm:$0x1f]
        %v843 = vld [vmem:[#allocation4 + $0x1a8] sm:$0x1f]
        %v844 = vld [vmem:[#allocation4 + $0x1b0] sm:$0x1f]
        %v845 = vld [vmem:[#allocation4 + $0x1b8] sm:$0x1f]
        %v846 = vld [vmem:[#allocation4 + $0x1c0] sm:$0x1f]
        %v847 = vld [vmem:[#allocation4 + $0x1c8] sm:$0x1f]
        %v848 = vld [vmem:[#allocation4 + $0x1d0] sm:$0x1f]
        %v849 = vld [vmem:[#allocation4 + $0x1d8] sm:$0x1f]
        %v850 = vld [vmem:[#allocation4 + $0x1e0] sm:$0x1f]
        %v851 = vld [vmem:[#allocation4 + $0x1e8] sm:$0x1f]
        %v852 = vld [vmem:[#allocation4 + $0x1f0] sm:$0x1f]
        %v916 = vrot.slane %v790, 6
        %v917 = vrot.slane %v791, 6
        %v918 = vrot.slane %v792, 6
        %v919 = vrot.slane %v793, 6
        %v920 = vrot.slane %v794, 6
        %v921 = vrot.slane %v795, 6
        %v922 = vrot.slane %v796, 6
        %v923 = vrot.slane %v797, 6
        %v924 = vrot.slane %v798, 6
        %v925 = vrot.slane %v799, 6
        %v926 = vrot.slane %v800, 6
        %v927 = vrot.slane %v801, 6
        %v928 = vrot.slane %v802, 6
        %v929 = vrot.slane %v803, 6
        %v930 = vrot.slane %v804, 6
        %v931 = vrot.slane %v805, 6
        %v932 = vrot.slane %v806, 6
        %v933 = vrot.slane %v807, 6
        %v934 = vrot.slane %v808, 6
        %v935 = vrot.slane %v809, 6
        %v936 = vrot.slane %v810, 6
        %v937 = vrot.slane %v811, 6
        %v938 = vrot.slane %v812, 6
        %v939 = vrot.slane %v813, 6
        %v940 = vrot.slane %v814, 6
        %v941 = vrot.slane %v815, 6
        %v942 = vrot.slane %v816, 6
        %v943 = vrot.slane %v817, 6
        %v944 = vrot.slane %v818, 6
        %v945 = vrot.slane %v819, 6
        %v946 = vrot.slane %v820, 6
        %v947 = vrot.slane %v821, 6
        %v948 = vrot.slane %v822, 6
        %v949 = vrot.slane %v823, 6
        %v950 = vrot.slane %v824, 6
        %v951 = vrot.slane %v825, 6
        %v952 = vrot.slane %v826, 6
        %v953 = vrot.slane %v827, 6
        %v954 = vrot.slane %v828, 6
        %v955 = vrot.slane %v829, 6
        %v956 = vrot.slane %v830, 6
        %v957 = vrot.slane %v831, 6
        %v958 = vrot.slane %v832, 6
        %v959 = vrot.slane %v833, 6
        %v960 = vrot.slane %v834, 6
        %v961 = vrot.slane %v835, 6
        %v962 = vrot.slane %v836, 6
        %v963 = vrot.slane %v837, 6
        %v964 = vrot.slane %v838, 6
        %v965 = vrot.slane %v839, 6
        %v966 = vrot.slane %v840, 6
        %v967 = vrot.slane %v841, 6
        %v968 = vrot.slane %v842, 6
        %v969 = vrot.slane %v843, 6
        %v970 = vrot.slane %v844, 6
        %v971 = vrot.slane %v845, 6
        %v972 = vrot.slane %v846, 6
        %v973 = vrot.slane %v847, 6
        %v974 = vrot.slane %v848, 6
        %v975 = vrot.slane %v849, 6
        %v976 = vrot.slane %v850, 6
        %v977 = vrot.slane %v851, 6
        %v978 = vrot.slane %v852, 6
        %1042 = vst [vmem:[#allocation2] sm:$0x7c] %v916
        %1043 = vst [vmem:[#allocation2 + $0x8] sm:$0x7c] %v917
        %1044 = vst [vmem:[#allocation2 + $0x10] sm:$0x7c] %v918
        %1045 = vst [vmem:[#allocation2 + $0x18] sm:$0x7c] %v919
        %1046 = vst [vmem:[#allocation2 + $0x20] sm:$0x7c] %v920
        %1047 = vst [vmem:[#allocation2 + $0x28] sm:$0x7c] %v921
        %1048 = vst [vmem:[#allocation2 + $0x30] sm:$0x7c] %v922
        %1049 = vst [vmem:[#allocation2 + $0x38] sm:$0x7c] %v923
        %1050 = vst [vmem:[#allocation2 + $0x40] sm:$0x7c] %v924
        %1051 = vst [vmem:[#allocation2 + $0x48] sm:$0x7c] %v925
        %1052 = vst [vmem:[#allocation2 + $0x50] sm:$0x7c] %v926
        %1053 = vst [vmem:[#allocation2 + $0x58] sm:$0x7c] %v927
        %1054 = vst [vmem:[#allocation2 + $0x60] sm:$0x7c] %v928
        %1055 = vst [vmem:[#allocation2 + $0x68] sm:$0x7c] %v929
        %1056 = vst [vmem:[#allocation2 + $0x70] sm:$0x7c] %v930
        %1057 = vst [vmem:[#allocation2 + $0x78] sm:$0x7c] %v931
        %1058 = vst [vmem:[#allocation2 + $0x80] sm:$0x7c] %v932
        %1059 = vst [vmem:[#allocation2 + $0x88] sm:$0x7c] %v933
        %1060 = vst [vmem:[#allocation2 + $0x90] sm:$0x7c] %v934
        %1061 = vst [vmem:[#allocation2 + $0x98] sm:$0x7c] %v935
        %1062 = vst [vmem:[#allocation2 + $0xa0] sm:$0x7c] %v936
        %1063 = vst [vmem:[#allocation2 + $0xa8] sm:$0x7c] %v937
        %1064 = vst [vmem:[#allocation2 + $0xb0] sm:$0x7c] %v938
        %1065 = vst [vmem:[#allocation2 + $0xb8] sm:$0x7c] %v939
        %1066 = vst [vmem:[#allocation2 + $0xc0] sm:$0x7c] %v940
        %1067 = vst [vmem:[#allocation2 + $0xc8] sm:$0x7c] %v941
        %1068 = vst [vmem:[#allocation2 + $0xd0] sm:$0x7c] %v942
        %1069 = vst [vmem:[#allocation2 + $0xd8] sm:$0x7c] %v943
        %1070 = vst [vmem:[#allocation2 + $0xe0] sm:$0x7c] %v944
        %1071 = vst [vmem:[#allocation2 + $0xe8] sm:$0x7c] %v945
        %1072 = vst [vmem:[#allocation2 + $0xf0] sm:$0x7c] %v946
        %1073 = vst [vmem:[#allocation2 + $0xf8] sm:$0x7c] %v947
        %1074 = vst [vmem:[#allocation2 + $0x100] sm:$0x7c] %v948
        %1075 = vst [vmem:[#allocation2 + $0x108] sm:$0x7c] %v949
        %1076 = vst [vmem:[#allocation2 + $0x110] sm:$0x7c] %v950
        %1077 = vst [vmem:[#allocation2 + $0x118] sm:$0x7c] %v951
        %1078 = vst [vmem:[#allocation2 + $0x120] sm:$0x7c] %v952
        %1079 = vst [vmem:[#allocation2 + $0x128] sm:$0x7c] %v953
        %1080 = vst [vmem:[#allocation2 + $0x130] sm:$0x7c] %v954
        %1081 = vst [vmem:[#allocation2 + $0x138] sm:$0x7c] %v955
        %1082 = vst [vmem:[#allocation2 + $0x140] sm:$0x7c] %v956
        %1083 = vst [vmem:[#allocation2 + $0x148] sm:$0x7c] %v957
        %1084 = vst [vmem:[#allocation2 + $0x150] sm:$0x7c] %v958
        %1085 = vst [vmem:[#allocation2 + $0x158] sm:$0x7c] %v959
        %1086 = vst [vmem:[#allocation2 + $0x160] sm:$0x7c] %v960
        %1087 = vst [vmem:[#allocation2 + $0x168] sm:$0x7c] %v961
        %1088 = vst [vmem:[#allocation2 + $0x170] sm:$0x7c] %v962
        %1089 = vst [vmem:[#allocation2 + $0x178] sm:$0x7c] %v963
        %1090 = vst [vmem:[#allocation2 + $0x180] sm:$0x7c] %v964
        %1091 = vst [vmem:[#allocation2 + $0x188] sm:$0x7c] %v965
        %1092 = vst [vmem:[#allocation2 + $0x190] sm:$0x7c] %v966
        %1093 = vst [vmem:[#allocation2 + $0x198] sm:$0x7c] %v967
        %1094 = vst [vmem:[#allocation2 + $0x1a0] sm:$0x7c] %v968
        %1095 = vst [vmem:[#allocation2 + $0x1a8] sm:$0x7c] %v969
        %1096 = vst [vmem:[#allocation2 + $0x1b0] sm:$0x7c] %v970
        %1097 = vst [vmem:[#allocation2 + $0x1b8] sm:$0x7c] %v971
        %1098 = vst [vmem:[#allocation2 + $0x1c0] sm:$0x7c] %v972
        %1099 = vst [vmem:[#allocation2 + $0x1c8] sm:$0x7c] %v973
        %1100 = vst [vmem:[#allocation2 + $0x1d0] sm:$0x7c] %v974
        %1101 = vst [vmem:[#allocation2 + $0x1d8] sm:$0x7c] %v975
        %1102 = vst [vmem:[#allocation2 + $0x1e0] sm:$0x7c] %v976
        %1103 = vst [vmem:[#allocation2 + $0x1e8] sm:$0x7c] %v977
        %1104 = vst [vmem:[#allocation2 + $0x1f0] sm:$0x7c] %v978
        %s1105 = scalar_lea.vmem [#allocation2], 504
        %1106 = vst [vmem:[%s1105] ss:$8 sm:$0xf] 0.0
        %1107 = vst [vmem:[%s1105] ss:$8 sm:$0xf0] 0.0
        %v1108 = vlaneseq
        %vm1109 = vcmp.ge.s32.totalorder %v1108, 0
        %vm1110 = vcmp.lt.s32.totalorder %v1108, 128
        %vm1111 = vmand %vm1109, %vm1110
        %s1112 = scalar_lea.vmem %s1105, 64 [#allocation2]
        %1113 = vst.msk [vmem:[%s1112] ss:$8 sm:$0x1] %vm1111, 0.0
        %1114 = vst.msk [vmem:[%s1112] ss:$8 sm:$0x0] %vm1111, 0.0
        %s1115 = scalar_lea.vmem %s1105, 72 [#allocation2]
        %1116 = vst [vmem:[%s1115] ss:$8 sm:$0xf] 0.0
        %1117 = vst [vmem:[%s1115] ss:$8 sm:$0xf0] 0.0
        %s1118 = scalar_lea.vmem %s1105, 136 [#allocation2]
        %1119 = vst.msk [vmem:[%s1118] ss:$8 sm:$0x1] %vm1111, 0.0
        %1120 = vst.msk [vmem:[%s1118] ss:$8 sm:$0x0] %vm1111, 0.0
        %s1121 = scalar_lea.vmem %s1105, 144 [#allocation2]
        %1122 = vst [vmem:[%s1121] ss:$8 sm:$0xf] 0.0
        %1123 = vst [vmem:[%s1121] ss:$8 sm:$0xf0] 0.0
        %s1124 = scalar_lea.vmem %s1105, 208 [#allocation2]
        %1125 = vst.msk [vmem:[%s1124] ss:$8 sm:$0x1] %vm1111, 0.0
        %1126 = vst.msk [vmem:[%s1124] ss:$8 sm:$0x0] %vm1111, 0.0
        %s1127 = scalar_lea.vmem %s1105, 216 [#allocation2]
        %1128 = vst [vmem:[%s1127] ss:$8 sm:$0xf] 0.0
        %1129 = vst [vmem:[%s1127] ss:$8 sm:$0xf0] 0.0
        %s1130 = scalar_lea.vmem %s1105, 280 [#allocation2]
        %1131 = vst.msk [vmem:[%s1130] ss:$8 sm:$0x1] %vm1111, 0.0
        %1132 = vst.msk [vmem:[%s1130] ss:$8 sm:$0x0] %vm1111, 0.0
        %s1133 = scalar_lea.vmem %s1105, 288 [#allocation2]
        %1134 = vst [vmem:[%s1133] ss:$8 sm:$0xf] 0.0
        %1135 = vst [vmem:[%s1133] ss:$8 sm:$0xf0] 0.0
        %s1136 = scalar_lea.vmem %s1105, 352 [#allocation2]
        %1137 = vst.msk [vmem:[%s1136] ss:$8 sm:$0x1] %vm1111, 0.0
        %1138 = vst.msk [vmem:[%s1136] ss:$8 sm:$0x0] %vm1111, 0.0
        %s1139 = scalar_lea.vmem %s1105, 360 [#allocation2]
        %1140 = vst [vmem:[%s1139] ss:$8 sm:$0xf] 0.0
        %1141 = vst [vmem:[%s1139] ss:$8 sm:$0xf0] 0.0
        %s1142 = scalar_lea.vmem %s1105, 424 [#allocation2]
        %1143 = vst.msk [vmem:[%s1142] ss:$8 sm:$0x1] %vm1111, 0.0
        %1144 = vst.msk [vmem:[%s1142] ss:$8 sm:$0x0] %vm1111, 0.0
        %s1145 = scalar_lea.vmem %s1105, 432 [#allocation2]
        %1146 = vst [vmem:[%s1145] ss:$8 sm:$0xf] 0.0
        %1147 = vst [vmem:[%s1145] ss:$8 sm:$0xf0] 0.0
        %s1148 = scalar_lea.vmem %s1105, 496 [#allocation2]
        %1149 = vst.msk [vmem:[%s1148] ss:$8 sm:$0x1] %vm1111, 0.0
        %1150 = vst.msk [vmem:[%s1148] ss:$8 sm:$0x0] %vm1111, 0.0
        %v1151 = vld [vmem:[#allocation4] sm:$0x3f]
        %v1152 = vld [vmem:[#allocation4 + $0x8] sm:$0x3f]
        %v1153 = vld [vmem:[#allocation4 + $0x10] sm:$0x3f]
        %v1154 = vld [vmem:[#allocation4 + $0x18] sm:$0x3f]
        %v1155 = vld [vmem:[#allocation4 + $0x20] sm:$0x3f]
        %v1156 = vld [vmem:[#allocation4 + $0x28] sm:$0x3f]
        %v1157 = vld [vmem:[#allocation4 + $0x30] sm:$0x3f]
        %v1158 = vld [vmem:[#allocation4 + $0x38] sm:$0x3f]
        %v1159 = vld [vmem:[#allocation4 + $0x40] sm:$0x3f]
        %v1160 = vld [vmem:[#allocation4 + $0x48] sm:$0x3f]
        %v1161 = vld [vmem:[#allocation4 + $0x50] sm:$0x3f]
        %v1162 = vld [vmem:[#allocation4 + $0x58] sm:$0x3f]
        %v1163 = vld [vmem:[#allocation4 + $0x60] sm:$0x3f]
        %v1164 = vld [vmem:[#allocation4 + $0x68] sm:$0x3f]
        %v1165 = vld [vmem:[#allocation4 + $0x70] sm:$0x3f]
        %v1166 = vld [vmem:[#allocation4 + $0x78] sm:$0x3f]
        %v1167 = vld [vmem:[#allocation4 + $0x80] sm:$0x3f]
        %v1168 = vld [vmem:[#allocation4 + $0x88] sm:$0x3f]
        %v1169 = vld [vmem:[#allocation4 + $0x90] sm:$0x3f]
        %v1170 = vld [vmem:[#allocation4 + $0x98] sm:$0x3f]
        %v1171 = vld [vmem:[#allocation4 + $0xa0] sm:$0x3f]
        %v1172 = vld [vmem:[#allocation4 + $0xa8] sm:$0x3f]
        %v1173 = vld [vmem:[#allocation4 + $0xb0] sm:$0x3f]
        %v1174 = vld [vmem:[#allocation4 + $0xb8] sm:$0x3f]
        %v1175 = vld [vmem:[#allocation4 + $0xc0] sm:$0x3f]
        %v1176 = vld [vmem:[#allocation4 + $0xc8] sm:$0x3f]
        %v1177 = vld [vmem:[#allocation4 + $0xd0] sm:$0x3f]
        %v1178 = vld [vmem:[#allocation4 + $0xd8] sm:$0x3f]
        %v1179 = vld [vmem:[#allocation4 + $0xe0] sm:$0x3f]
        %v1180 = vld [vmem:[#allocation4 + $0xe8] sm:$0x3f]
        %v1181 = vld [vmem:[#allocation4 + $0xf0] sm:$0x3f]
        %v1182 = vld [vmem:[#allocation4 + $0xf8] sm:$0x3f]
        %v1183 = vld [vmem:[#allocation4 + $0x100] sm:$0x3f]
        %v1184 = vld [vmem:[#allocation4 + $0x108] sm:$0x3f]
        %v1185 = vld [vmem:[#allocation4 + $0x110] sm:$0x3f]
        %v1186 = vld [vmem:[#allocation4 + $0x118] sm:$0x3f]
        %v1187 = vld [vmem:[#allocation4 + $0x120] sm:$0x3f]
        %v1188 = vld [vmem:[#allocation4 + $0x128] sm:$0x3f]
        %v1189 = vld [vmem:[#allocation4 + $0x130] sm:$0x3f]
        %v1190 = vld [vmem:[#allocation4 + $0x138] sm:$0x3f]
        %v1191 = vld [vmem:[#allocation4 + $0x140] sm:$0x3f]
        %v1192 = vld [vmem:[#allocation4 + $0x148] sm:$0x3f]
        %v1193 = vld [vmem:[#allocation4 + $0x150] sm:$0x3f]
        %v1194 = vld [vmem:[#allocation4 + $0x158] sm:$0x3f]
        %v1195 = vld [vmem:[#allocation4 + $0x160] sm:$0x3f]
        %v1196 = vld [vmem:[#allocation4 + $0x168] sm:$0x3f]
        %v1197 = vld [vmem:[#allocation4 + $0x170] sm:$0x3f]
        %v1198 = vld [vmem:[#allocation4 + $0x178] sm:$0x3f]
        %v1199 = vld [vmem:[#allocation4 + $0x180] sm:$0x3f]
        %v1200 = vld [vmem:[#allocation4 + $0x188] sm:$0x3f]
        %v1201 = vld [vmem:[#allocation4 + $0x190] sm:$0x3f]
        %v1202 = vld [vmem:[#allocation4 + $0x198] sm:$0x3f]
        %v1203 = vld [vmem:[#allocation4 + $0x1a0] sm:$0x3f]
        %v1204 = vld [vmem:[#allocation4 + $0x1a8] sm:$0x3f]
        %v1205 = vld [vmem:[#allocation4 + $0x1b0] sm:$0x3f]
        %v1206 = vld [vmem:[#allocation4 + $0x1b8] sm:$0x3f]
        %v1207 = vld [vmem:[#allocation4 + $0x1c0] sm:$0x3f]
        %v1208 = vld [vmem:[#allocation4 + $0x1c8] sm:$0x3f]
        %v1209 = vld [vmem:[#allocation4 + $0x1d0] sm:$0x3f]
        %v1210 = vld [vmem:[#allocation4 + $0x1d8] sm:$0x3f]
        %v1211 = vld [vmem:[#allocation4 + $0x1e0] sm:$0x3f]
        %v1212 = vld [vmem:[#allocation4 + $0x1e8] sm:$0x3f]
        %v1213 = vld [vmem:[#allocation4 + $0x1f0] sm:$0x3f]
        %v1277 = vrot.slane %v1151, 7
        %v1278 = vrot.slane %v1152, 7
        %v1279 = vrot.slane %v1153, 7
        %v1280 = vrot.slane %v1154, 7
        %v1281 = vrot.slane %v1155, 7
        %v1282 = vrot.slane %v1156, 7
        %v1283 = vrot.slane %v1157, 7
        %v1284 = vrot.slane %v1158, 7
        %v1285 = vrot.slane %v1159, 7
        %v1286 = vrot.slane %v1160, 7
        %v1287 = vrot.slane %v1161, 7
        %v1288 = vrot.slane %v1162, 7
        %v1289 = vrot.slane %v1163, 7
        %v1290 = vrot.slane %v1164, 7
        %v1291 = vrot.slane %v1165, 7
        %v1292 = vrot.slane %v1166, 7
        %v1293 = vrot.slane %v1167, 7
        %v1294 = vrot.slane %v1168, 7
        %v1295 = vrot.slane %v1169, 7
        %v1296 = vrot.slane %v1170, 7
        %v1297 = vrot.slane %v1171, 7
        %v1298 = vrot.slane %v1172, 7
        %v1299 = vrot.slane %v1173, 7
        %v1300 = vrot.slane %v1174, 7
        %v1301 = vrot.slane %v1175, 7
        %v1302 = vrot.slane %v1176, 7
        %v1303 = vrot.slane %v1177, 7
        %v1304 = vrot.slane %v1178, 7
        %v1305 = vrot.slane %v1179, 7
        %v1306 = vrot.slane %v1180, 7
        %v1307 = vrot.slane %v1181, 7
        %v1308 = vrot.slane %v1182, 7
        %v1309 = vrot.slane %v1183, 7
        %v1310 = vrot.slane %v1184, 7
        %v1311 = vrot.slane %v1185, 7
        %v1312 = vrot.slane %v1186, 7
        %v1313 = vrot.slane %v1187, 7
        %v1314 = vrot.slane %v1188, 7
        %v1315 = vrot.slane %v1189, 7
        %v1316 = vrot.slane %v1190, 7
        %v1317 = vrot.slane %v1191, 7
        %v1318 = vrot.slane %v1192, 7
        %v1319 = vrot.slane %v1193, 7
        %v1320 = vrot.slane %v1194, 7
        %v1321 = vrot.slane %v1195, 7
        %v1322 = vrot.slane %v1196, 7
        %v1323 = vrot.slane %v1197, 7
        %v1324 = vrot.slane %v1198, 7
        %v1325 = vrot.slane %v1199, 7
        %v1326 = vrot.slane %v1200, 7
        %v1327 = vrot.slane %v1201, 7
        %v1328 = vrot.slane %v1202, 7
        %v1329 = vrot.slane %v1203, 7
        %v1330 = vrot.slane %v1204, 7
        %v1331 = vrot.slane %v1205, 7
        %v1332 = vrot.slane %v1206, 7
        %v1333 = vrot.slane %v1207, 7
        %v1334 = vrot.slane %v1208, 7
        %v1335 = vrot.slane %v1209, 7
        %v1336 = vrot.slane %v1210, 7
        %v1337 = vrot.slane %v1211, 7
        %v1338 = vrot.slane %v1212, 7
        %v1339 = vrot.slane %v1213, 7
        %1403 = vst [vmem:[%s1105] sm:$0x7e] %v1277
        %1404 = vst [vmem:[%s1105 + $0x8] sm:$0x7e] %v1278
        %1405 = vst [vmem:[%s1105 + $0x10] sm:$0x7e] %v1279
        %1406 = vst [vmem:[%s1105 + $0x18] sm:$0x7e] %v1280
        %1407 = vst [vmem:[%s1105 + $0x20] sm:$0x7e] %v1281
        %1408 = vst [vmem:[%s1105 + $0x28] sm:$0x7e] %v1282
        %1409 = vst [vmem:[%s1105 + $0x30] sm:$0x7e] %v1283
        %1410 = vst [vmem:[%s1105 + $0x38] sm:$0x7e] %v1284
        %1411 = vst [vmem:[%s1105 + $0x40] sm:$0x7e] %v1285
        %1412 = vst [vmem:[%s1105 + $0x48] sm:$0x7e] %v1286
        %1413 = vst [vmem:[%s1105 + $0x50] sm:$0x7e] %v1287
        %1414 = vst [vmem:[%s1105 + $0x58] sm:$0x7e] %v1288
        %1415 = vst [vmem:[%s1105 + $0x60] sm:$0x7e] %v1289
        %1416 = vst [vmem:[%s1105 + $0x68] sm:$0x7e] %v1290
        %1417 = vst [vmem:[%s1105 + $0x70] sm:$0x7e] %v1291
        %1418 = vst [vmem:[%s1105 + $0x78] sm:$0x7e] %v1292
        %1419 = vst [vmem:[%s1105 + $0x80] sm:$0x7e] %v1293
        %1420 = vst [vmem:[%s1105 + $0x88] sm:$0x7e] %v1294
        %1421 = vst [vmem:[%s1105 + $0x90] sm:$0x7e] %v1295
        %1422 = vst [vmem:[%s1105 + $0x98] sm:$0x7e] %v1296
        %1423 = vst [vmem:[%s1105 + $0xa0] sm:$0x7e] %v1297
        %1424 = vst [vmem:[%s1105 + $0xa8] sm:$0x7e] %v1298
        %1425 = vst [vmem:[%s1105 + $0xb0] sm:$0x7e] %v1299
        %1426 = vst [vmem:[%s1105 + $0xb8] sm:$0x7e] %v1300
        %1427 = vst [vmem:[%s1105 + $0xc0] sm:$0x7e] %v1301
        %1428 = vst [vmem:[%s1105 + $0xc8] sm:$0x7e] %v1302
        %1429 = vst [vmem:[%s1105 + $0xd0] sm:$0x7e] %v1303
        %1430 = vst [vmem:[%s1105 + $0xd8] sm:$0x7e] %v1304
        %1431 = vst [vmem:[%s1105 + $0xe0] sm:$0x7e] %v1305
        %1432 = vst [vmem:[%s1105 + $0xe8] sm:$0x7e] %v1306
        %1433 = vst [vmem:[%s1105 + $0xf0] sm:$0x7e] %v1307
        %1434 = vst [vmem:[%s1105 + $0xf8] sm:$0x7e] %v1308
        %1435 = vst [vmem:[%s1105 + $0x100] sm:$0x7e] %v1309
        %1436 = vst [vmem:[%s1105 + $0x108] sm:$0x7e] %v1310
        %1437 = vst [vmem:[%s1105 + $0x110] sm:$0x7e] %v1311
        %1438 = vst [vmem:[%s1105 + $0x118] sm:$0x7e] %v1312
        %1439 = vst [vmem:[%s1105 + $0x120] sm:$0x7e] %v1313
        %1440 = vst [vmem:[%s1105 + $0x128] sm:$0x7e] %v1314
        %1441 = vst [vmem:[%s1105 + $0x130] sm:$0x7e] %v1315
        %1442 = vst [vmem:[%s1105 + $0x138] sm:$0x7e] %v1316
        %1443 = vst [vmem:[%s1105 + $0x140] sm:$0x7e] %v1317
        %1444 = vst [vmem:[%s1105 + $0x148] sm:$0x7e] %v1318
        %1445 = vst [vmem:[%s1105 + $0x150] sm:$0x7e] %v1319
        %1446 = vst [vmem:[%s1105 + $0x158] sm:$0x7e] %v1320
        %1447 = vst [vmem:[%s1105 + $0x160] sm:$0x7e] %v1321
        %1448 = vst [vmem:[%s1105 + $0x168] sm:$0x7e] %v1322
        %1449 = vst [vmem:[%s1105 + $0x170] sm:$0x7e] %v1323
        %1450 = vst [vmem:[%s1105 + $0x178] sm:$0x7e] %v1324
        %1451 = vst [vmem:[%s1105 + $0x180] sm:$0x7e] %v1325
        %1452 = vst [vmem:[%s1105 + $0x188] sm:$0x7e] %v1326
        %1453 = vst [vmem:[%s1105 + $0x190] sm:$0x7e] %v1327
        %1454 = vst [vmem:[%s1105 + $0x198] sm:$0x7e] %v1328
        %1455 = vst [vmem:[%s1105 + $0x1a0] sm:$0x7e] %v1329
        %1456 = vst [vmem:[%s1105 + $0x1a8] sm:$0x7e] %v1330
        %1457 = vst [vmem:[%s1105 + $0x1b0] sm:$0x7e] %v1331
        %1458 = vst [vmem:[%s1105 + $0x1b8] sm:$0x7e] %v1332
        %1459 = vst [vmem:[%s1105 + $0x1c0] sm:$0x7e] %v1333
        %1460 = vst [vmem:[%s1105 + $0x1c8] sm:$0x7e] %v1334
        %1461 = vst [vmem:[%s1105 + $0x1d0] sm:$0x7e] %v1335
        %1462 = vst [vmem:[%s1105 + $0x1d8] sm:$0x7e] %v1336
        %1463 = vst [vmem:[%s1105 + $0x1e0] sm:$0x7e] %v1337
        %1464 = vst [vmem:[%s1105 + $0x1e8] sm:$0x7e] %v1338
        %1465 = vst [vmem:[%s1105 + $0x1f0] sm:$0x7e] %v1339
        %v1466 = vld [vmem:[#allocation4] sm:$0x7f]
        %v1467 = vld [vmem:[#allocation4 + $0x8] sm:$0x7f]
        %v1468 = vld [vmem:[#allocation4 + $0x10] sm:$0x7f]
        %v1469 = vld [vmem:[#allocation4 + $0x18] sm:$0x7f]
        %v1470 = vld [vmem:[#allocation4 + $0x20] sm:$0x7f]
        %v1471 = vld [vmem:[#allocation4 + $0x28] sm:$0x7f]
        %v1472 = vld [vmem:[#allocation4 + $0x30] sm:$0x7f]
        %v1473 = vld [vmem:[#allocation4 + $0x38] sm:$0x7f]
        %v1474 = vld [vmem:[#allocation4 + $0x40] sm:$0x7f]
        %v1475 = vld [vmem:[#allocation4 + $0x48] sm:$0x7f]
        %v1476 = vld [vmem:[#allocation4 + $0x50] sm:$0x7f]
        %v1477 = vld [vmem:[#allocation4 + $0x58] sm:$0x7f]
        %v1478 = vld [vmem:[#allocation4 + $0x60] sm:$0x7f]
        %v1479 = vld [vmem:[#allocation4 + $0x68] sm:$0x7f]
        %v1480 = vld [vmem:[#allocation4 + $0x70] sm:$0x7f]
        %v1481 = vld [vmem:[#allocation4 + $0x78] sm:$0x7f]
        %v1482 = vld [vmem:[#allocation4 + $0x80] sm:$0x7f]
        %v1483 = vld [vmem:[#allocation4 + $0x88] sm:$0x7f]
        %v1484 = vld [vmem:[#allocation4 + $0x90] sm:$0x7f]
        %v1485 = vld [vmem:[#allocation4 + $0x98] sm:$0x7f]
        %v1486 = vld [vmem:[#allocation4 + $0xa0] sm:$0x7f]
        %v1487 = vld [vmem:[#allocation4 + $0xa8] sm:$0x7f]
        %v1488 = vld [vmem:[#allocation4 + $0xb0] sm:$0x7f]
        %v1489 = vld [vmem:[#allocation4 + $0xb8] sm:$0x7f]
        %v1490 = vld [vmem:[#allocation4 + $0xc0] sm:$0x7f]
        %v1491 = vld [vmem:[#allocation4 + $0xc8] sm:$0x7f]
        %v1492 = vld [vmem:[#allocation4 + $0xd0] sm:$0x7f]
        %v1493 = vld [vmem:[#allocation4 + $0xd8] sm:$0x7f]
        %v1494 = vld [vmem:[#allocation4 + $0xe0] sm:$0x7f]
        %v1495 = vld [vmem:[#allocation4 + $0xe8] sm:$0x7f]
        %v1496 = vld [vmem:[#allocation4 + $0xf0] sm:$0x7f]
        %v1497 = vld [vmem:[#allocation4 + $0xf8] sm:$0x7f]
        %v1498 = vld [vmem:[#allocation4 + $0x100] sm:$0x7f]
        %v1499 = vld [vmem:[#allocation4 + $0x108] sm:$0x7f]
        %v1500 = vld [vmem:[#allocation4 + $0x110] sm:$0x7f]
        %v1501 = vld [vmem:[#allocation4 + $0x118] sm:$0x7f]
        %v1502 = vld [vmem:[#allocation4 + $0x120] sm:$0x7f]
        %v1503 = vld [vmem:[#allocation4 + $0x128] sm:$0x7f]
        %v1504 = vld [vmem:[#allocation4 + $0x130] sm:$0x7f]
        %v1505 = vld [vmem:[#allocation4 + $0x138] sm:$0x7f]
        %v1506 = vld [vmem:[#allocation4 + $0x140] sm:$0x7f]
        %v1507 = vld [vmem:[#allocation4 + $0x148] sm:$0x7f]
        %v1508 = vld [vmem:[#allocation4 + $0x150] sm:$0x7f]
        %v1509 = vld [vmem:[#allocation4 + $0x158] sm:$0x7f]
        %v1510 = vld [vmem:[#allocation4 + $0x160] sm:$0x7f]
        %v1511 = vld [vmem:[#allocation4 + $0x168] sm:$0x7f]
        %v1512 = vld [vmem:[#allocation4 + $0x170] sm:$0x7f]
        %v1513 = vld [vmem:[#allocation4 + $0x178] sm:$0x7f]
        %v1514 = vld [vmem:[#allocation4 + $0x180] sm:$0x7f]
        %v1515 = vld [vmem:[#allocation4 + $0x188] sm:$0x7f]
        %v1516 = vld [vmem:[#allocation4 + $0x190] sm:$0x7f]
        %v1517 = vld [vmem:[#allocation4 + $0x198] sm:$0x7f]
        %v1518 = vld [vmem:[#allocation4 + $0x1a0] sm:$0x7f]
        %v1519 = vld [vmem:[#allocation4 + $0x1a8] sm:$0x7f]
        %v1520 = vld [vmem:[#allocation4 + $0x1b0] sm:$0x7f]
        %v1521 = vld [vmem:[#allocation4 + $0x1b8] sm:$0x7f]
        %v1522 = vld [vmem:[#allocation4 + $0x1c0] sm:$0x7f]
        %v1523 = vld [vmem:[#allocation4 + $0x1c8] sm:$0x7f]
        %v1524 = vld [vmem:[#allocation4 + $0x1d0] sm:$0x7f]
        %v1525 = vld [vmem:[#allocation4 + $0x1d8] sm:$0x7f]
        %v1526 = vld [vmem:[#allocation4 + $0x1e0] sm:$0x7f]
        %v1527 = vld [vmem:[#allocation4 + $0x1e8] sm:$0x7f]
        %v1528 = vld [vmem:[#allocation4 + $0x1f0] sm:$0x7f]
        %s1529 = scalar_lea.vmem [#allocation2], 1008
        %1530 = vst [vmem:[%s1529] sm:$0x7f] %v1466
        %1531 = vst [vmem:[%s1529 + $0x8] sm:$0x7f] %v1467
        %1532 = vst [vmem:[%s1529 + $0x10] sm:$0x7f] %v1468
        %1533 = vst [vmem:[%s1529 + $0x18] sm:$0x7f] %v1469
        %1534 = vst [vmem:[%s1529 + $0x20] sm:$0x7f] %v1470
        %1535 = vst [vmem:[%s1529 + $0x28] sm:$0x7f] %v1471
        %1536 = vst [vmem:[%s1529 + $0x30] sm:$0x7f] %v1472
        %1537 = vst [vmem:[%s1529 + $0x38] sm:$0x7f] %v1473
        %1538 = vst [vmem:[%s1529 + $0x40] sm:$0x7f] %v1474
        %1539 = vst [vmem:[%s1529 + $0x48] sm:$0x7f] %v1475
        %1540 = vst [vmem:[%s1529 + $0x50] sm:$0x7f] %v1476
        %1541 = vst [vmem:[%s1529 + $0x58] sm:$0x7f] %v1477
        %1542 = vst [vmem:[%s1529 + $0x60] sm:$0x7f] %v1478
        %1543 = vst [vmem:[%s1529 + $0x68] sm:$0x7f] %v1479
        %1544 = vst [vmem:[%s1529 + $0x70] sm:$0x7f] %v1480
        %1545 = vst [vmem:[%s1529 + $0x78] sm:$0x7f] %v1481
        %1546 = vst [vmem:[%s1529 + $0x80] sm:$0x7f] %v1482
        %1547 = vst [vmem:[%s1529 + $0x88] sm:$0x7f] %v1483
        %1548 = vst [vmem:[%s1529 + $0x90] sm:$0x7f] %v1484
        %1549 = vst [vmem:[%s1529 + $0x98] sm:$0x7f] %v1485
        %1550 = vst [vmem:[%s1529 + $0xa0] sm:$0x7f] %v1486
        %1551 = vst [vmem:[%s1529 + $0xa8] sm:$0x7f] %v1487
        %1552 = vst [vmem:[%s1529 + $0xb0] sm:$0x7f] %v1488
        %1553 = vst [vmem:[%s1529 + $0xb8] sm:$0x7f] %v1489
        %1554 = vst [vmem:[%s1529 + $0xc0] sm:$0x7f] %v1490
        %1555 = vst [vmem:[%s1529 + $0xc8] sm:$0x7f] %v1491
        %1556 = vst [vmem:[%s1529 + $0xd0] sm:$0x7f] %v1492
        %1557 = vst [vmem:[%s1529 + $0xd8] sm:$0x7f] %v1493
        %1558 = vst [vmem:[%s1529 + $0xe0] sm:$0x7f] %v1494
        %1559 = vst [vmem:[%s1529 + $0xe8] sm:$0x7f] %v1495
        %1560 = vst [vmem:[%s1529 + $0xf0] sm:$0x7f] %v1496
        %1561 = vst [vmem:[%s1529 + $0xf8] sm:$0x7f] %v1497
        %1562 = vst [vmem:[%s1529 + $0x100] sm:$0x7f] %v1498
        %1563 = vst [vmem:[%s1529 + $0x108] sm:$0x7f] %v1499
        %1564 = vst [vmem:[%s1529 + $0x110] sm:$0x7f] %v1500
        %1565 = vst [vmem:[%s1529 + $0x118] sm:$0x7f] %v1501
        %1566 = vst [vmem:[%s1529 + $0x120] sm:$0x7f] %v1502
        %1567 = vst [vmem:[%s1529 + $0x128] sm:$0x7f] %v1503
        %1568 = vst [vmem:[%s1529 + $0x130] sm:$0x7f] %v1504
        %1569 = vst [vmem:[%s1529 + $0x138] sm:$0x7f] %v1505
        %1570 = vst [vmem:[%s1529 + $0x140] sm:$0x7f] %v1506
        %1571 = vst [vmem:[%s1529 + $0x148] sm:$0x7f] %v1507
        %1572 = vst [vmem:[%s1529 + $0x150] sm:$0x7f] %v1508
        %1573 = vst [vmem:[%s1529 + $0x158] sm:$0x7f] %v1509
        %1574 = vst [vmem:[%s1529 + $0x160] sm:$0x7f] %v1510
        %1575 = vst [vmem:[%s1529 + $0x168] sm:$0x7f] %v1511
        %1576 = vst [vmem:[%s1529 + $0x170] sm:$0x7f] %v1512
        %1577 = vst [vmem:[%s1529 + $0x178] sm:$0x7f] %v1513
        %1578 = vst [vmem:[%s1529 + $0x180] sm:$0x7f] %v1514
        %1579 = vst [vmem:[%s1529 + $0x188] sm:$0x7f] %v1515
        %1580 = vst [vmem:[%s1529 + $0x190] sm:$0x7f] %v1516
        %1581 = vst [vmem:[%s1529 + $0x198] sm:$0x7f] %v1517
        %1582 = vst [vmem:[%s1529 + $0x1a0] sm:$0x7f] %v1518
        %1583 = vst [vmem:[%s1529 + $0x1a8] sm:$0x7f] %v1519
        %1584 = vst [vmem:[%s1529 + $0x1b0] sm:$0x7f] %v1520
        %1585 = vst [vmem:[%s1529 + $0x1b8] sm:$0x7f] %v1521
        %1586 = vst [vmem:[%s1529 + $0x1c0] sm:$0x7f] %v1522
        %1587 = vst [vmem:[%s1529 + $0x1c8] sm:$0x7f] %v1523
        %1588 = vst [vmem:[%s1529 + $0x1d0] sm:$0x7f] %v1524
        %1589 = vst [vmem:[%s1529 + $0x1d8] sm:$0x7f] %v1525
        %1590 = vst [vmem:[%s1529 + $0x1e0] sm:$0x7f] %v1526
        %1591 = vst [vmem:[%s1529 + $0x1e8] sm:$0x7f] %v1527
        %1592 = vst [vmem:[%s1529 + $0x1f0] sm:$0x7f] %v1528
        %s1593 = scalar_lea.vmem [#allocation2], 1512
        %s1594 = scalar_lea.vmem %s1593, 6 [#allocation2]
        %1595 = vst [vmem:[%s1594] ss:$8 sm:$0xf] 0.0
        %1596 = vst [vmem:[%s1594] ss:$8 sm:$0xf0] 0.0
        %s1597 = scalar_lea.vmem %s1593, 70 [#allocation2]
        %1598 = vst.msk [vmem:[%s1597] ss:$8 sm:$0x1] %vm1111, 0.0
        %1599 = vst.msk [vmem:[%s1597] ss:$8 sm:$0x0] %vm1111, 0.0
        %s1600 = scalar_lea.vmem %s1593, 78 [#allocation2]
        %1601 = vst [vmem:[%s1600] ss:$8 sm:$0xf] 0.0
        %1602 = vst [vmem:[%s1600] ss:$8 sm:$0xf0] 0.0
        %s1603 = scalar_lea.vmem %s1593, 142 [#allocation2]
        %1604 = vst.msk [vmem:[%s1603] ss:$8 sm:$0x1] %vm1111, 0.0
        %1605 = vst.msk [vmem:[%s1603] ss:$8 sm:$0x0] %vm1111, 0.0
        %s1606 = scalar_lea.vmem %s1593, 150 [#allocation2]
        %1607 = vst [vmem:[%s1606] ss:$8 sm:$0xf] 0.0
        %1608 = vst [vmem:[%s1606] ss:$8 sm:$0xf0] 0.0
        %s1609 = scalar_lea.vmem %s1593, 214 [#allocation2]
        %1610 = vst.msk [vmem:[%s1609] ss:$8 sm:$0x1] %vm1111, 0.0
        %1611 = vst.msk [vmem:[%s1609] ss:$8 sm:$0x0] %vm1111, 0.0
        %s1612 = scalar_lea.vmem %s1593, 222 [#allocation2]
        %1613 = vst [vmem:[%s1612] ss:$8 sm:$0xf] 0.0
        %1614 = vst [vmem:[%s1612] ss:$8 sm:$0xf0] 0.0
        %s1615 = scalar_lea.vmem %s1593, 286 [#allocation2]
        %1616 = vst.msk [vmem:[%s1615] ss:$8 sm:$0x1] %vm1111, 0.0
        %1617 = vst.msk [vmem:[%s1615] ss:$8 sm:$0x0] %vm1111, 0.0
        %s1618 = scalar_lea.vmem %s1593, 294 [#allocation2]
        %1619 = vst [vmem:[%s1618] ss:$8 sm:$0xf] 0.0
        %1620 = vst [vmem:[%s1618] ss:$8 sm:$0xf0] 0.0
        %s1621 = scalar_lea.vmem %s1593, 358 [#allocation2]
        %1622 = vst.msk [vmem:[%s1621] ss:$8 sm:$0x1] %vm1111, 0.0
        %1623 = vst.msk [vmem:[%s1621] ss:$8 sm:$0x0] %vm1111, 0.0
        %s1624 = scalar_lea.vmem %s1593, 366 [#allocation2]
        %1625 = vst [vmem:[%s1624] ss:$8 sm:$0xf] 0.0
        %1626 = vst [vmem:[%s1624] ss:$8 sm:$0xf0] 0.0
        %s1627 = scalar_lea.vmem %s1593, 430 [#allocation2]
        %1628 = vst.msk [vmem:[%s1627] ss:$8 sm:$0x1] %vm1111, 0.0
        %1629 = vst.msk [vmem:[%s1627] ss:$8 sm:$0x0] %vm1111, 0.0
        %s1630 = scalar_lea.vmem %s1593, 438 [#allocation2]
        %1631 = vst [vmem:[%s1630] ss:$8 sm:$0xf] 0.0
        %1632 = vst [vmem:[%s1630] ss:$8 sm:$0xf0] 0.0
        %s1633 = scalar_lea.vmem %s1593, 502 [#allocation2]
        %1634 = vst.msk [vmem:[%s1633] ss:$8 sm:$0x1] %vm1111, 0.0
        %1635 = vst.msk [vmem:[%s1633] ss:$8 sm:$0x0] %vm1111, 0.0
        %v1636 = vld [vmem:[#allocation4] sm:$0x7e]
        %v1637 = vld [vmem:[#allocation4 + $0x8] sm:$0x7e]
        %v1638 = vld [vmem:[#allocation4 + $0x10] sm:$0x7e]
        %v1639 = vld [vmem:[#allocation4 + $0x18] sm:$0x7e]
        %v1640 = vld [vmem:[#allocation4 + $0x20] sm:$0x7e]
        %v1641 = vld [vmem:[#allocation4 + $0x28] sm:$0x7e]
        %v1642 = vld [vmem:[#allocation4 + $0x30] sm:$0x7e]
        %v1643 = vld [vmem:[#allocation4 + $0x38] sm:$0x7e]
        %v1644 = vld [vmem:[#allocation4 + $0x40] sm:$0x7e]
        %v1645 = vld [vmem:[#allocation4 + $0x48] sm:$0x7e]
        %v1646 = vld [vmem:[#allocation4 + $0x50] sm:$0x7e]
        %v1647 = vld [vmem:[#allocation4 + $0x58] sm:$0x7e]
        %v1648 = vld [vmem:[#allocation4 + $0x60] sm:$0x7e]
        %v1649 = vld [vmem:[#allocation4 + $0x68] sm:$0x7e]
        %v1650 = vld [vmem:[#allocation4 + $0x70] sm:$0x7e]
        %v1651 = vld [vmem:[#allocation4 + $0x78] sm:$0x7e]
        %v1652 = vld [vmem:[#allocation4 + $0x80] sm:$0x7e]
        %v1653 = vld [vmem:[#allocation4 + $0x88] sm:$0x7e]
        %v1654 = vld [vmem:[#allocation4 + $0x90] sm:$0x7e]
        %v1655 = vld [vmem:[#allocation4 + $0x98] sm:$0x7e]
        %v1656 = vld [vmem:[#allocation4 + $0xa0] sm:$0x7e]
        %v1657 = vld [vmem:[#allocation4 + $0xa8] sm:$0x7e]
        %v1658 = vld [vmem:[#allocation4 + $0xb0] sm:$0x7e]
        %v1659 = vld [vmem:[#allocation4 + $0xb8] sm:$0x7e]
        %v1660 = vld [vmem:[#allocation4 + $0xc0] sm:$0x7e]
        %v1661 = vld [vmem:[#allocation4 + $0xc8] sm:$0x7e]
        %v1662 = vld [vmem:[#allocation4 + $0xd0] sm:$0x7e]
        %v1663 = vld [vmem:[#allocation4 + $0xd8] sm:$0x7e]
        %v1664 = vld [vmem:[#allocation4 + $0xe0] sm:$0x7e]
        %v1665 = vld [vmem:[#allocation4 + $0xe8] sm:$0x7e]
        %v1666 = vld [vmem:[#allocation4 + $0xf0] sm:$0x7e]
        %v1667 = vld [vmem:[#allocation4 + $0xf8] sm:$0x7e]
        %v1668 = vld [vmem:[#allocation4 + $0x100] sm:$0x7e]
        %v1669 = vld [vmem:[#allocation4 + $0x108] sm:$0x7e]
        %v1670 = vld [vmem:[#allocation4 + $0x110] sm:$0x7e]
        %v1671 = vld [vmem:[#allocation4 + $0x118] sm:$0x7e]
        %v1672 = vld [vmem:[#allocation4 + $0x120] sm:$0x7e]
        %v1673 = vld [vmem:[#allocation4 + $0x128] sm:$0x7e]
        %v1674 = vld [vmem:[#allocation4 + $0x130] sm:$0x7e]
        %v1675 = vld [vmem:[#allocation4 + $0x138] sm:$0x7e]
        %v1676 = vld [vmem:[#allocation4 + $0x140] sm:$0x7e]
        %v1677 = vld [vmem:[#allocation4 + $0x148] sm:$0x7e]
        %v1678 = vld [vmem:[#allocation4 + $0x150] sm:$0x7e]
        %v1679 = vld [vmem:[#allocation4 + $0x158] sm:$0x7e]
        %v1680 = vld [vmem:[#allocation4 + $0x160] sm:$0x7e]
        %v1681 = vld [vmem:[#allocation4 + $0x168] sm:$0x7e]
        %v1682 = vld [vmem:[#allocation4 + $0x170] sm:$0x7e]
        %v1683 = vld [vmem:[#allocation4 + $0x178] sm:$0x7e]
        %v1684 = vld [vmem:[#allocation4 + $0x180] sm:$0x7e]
        %v1685 = vld [vmem:[#allocation4 + $0x188] sm:$0x7e]
        %v1686 = vld [vmem:[#allocation4 + $0x190] sm:$0x7e]
        %v1687 = vld [vmem:[#allocation4 + $0x198] sm:$0x7e]
        %v1688 = vld [vmem:[#allocation4 + $0x1a0] sm:$0x7e]
        %v1689 = vld [vmem:[#allocation4 + $0x1a8] sm:$0x7e]
        %v1690 = vld [vmem:[#allocation4 + $0x1b0] sm:$0x7e]
        %v1691 = vld [vmem:[#allocation4 + $0x1b8] sm:$0x7e]
        %v1692 = vld [vmem:[#allocation4 + $0x1c0] sm:$0x7e]
        %v1693 = vld [vmem:[#allocation4 + $0x1c8] sm:$0x7e]
        %v1694 = vld [vmem:[#allocation4 + $0x1d0] sm:$0x7e]
        %v1695 = vld [vmem:[#allocation4 + $0x1d8] sm:$0x7e]
        %v1696 = vld [vmem:[#allocation4 + $0x1e0] sm:$0x7e]
        %v1697 = vld [vmem:[#allocation4 + $0x1e8] sm:$0x7e]
        %v1698 = vld [vmem:[#allocation4 + $0x1f0] sm:$0x7e]
        %v1762 = vrot.slane %v1636, 1
        %v1763 = vrot.slane %v1637, 1
        %v1764 = vrot.slane %v1638, 1
        %v1765 = vrot.slane %v1639, 1
        %v1766 = vrot.slane %v1640, 1
        %v1767 = vrot.slane %v1641, 1
        %v1768 = vrot.slane %v1642, 1
        %v1769 = vrot.slane %v1643, 1
        %v1770 = vrot.slane %v1644, 1
        %v1771 = vrot.slane %v1645, 1
        %v1772 = vrot.slane %v1646, 1
        %v1773 = vrot.slane %v1647, 1
        %v1774 = vrot.slane %v1648, 1
        %v1775 = vrot.slane %v1649, 1
        %v1776 = vrot.slane %v1650, 1
        %v1777 = vrot.slane %v1651, 1
        %v1778 = vrot.slane %v1652, 1
        %v1779 = vrot.slane %v1653, 1
        %v1780 = vrot.slane %v1654, 1
        %v1781 = vrot.slane %v1655, 1
        %v1782 = vrot.slane %v1656, 1
        %v1783 = vrot.slane %v1657, 1
        %v1784 = vrot.slane %v1658, 1
        %v1785 = vrot.slane %v1659, 1
        %v1786 = vrot.slane %v1660, 1
        %v1787 = vrot.slane %v1661, 1
        %v1788 = vrot.slane %v1662, 1
        %v1789 = vrot.slane %v1663, 1
        %v1790 = vrot.slane %v1664, 1
        %v1791 = vrot.slane %v1665, 1
        %v1792 = vrot.slane %v1666, 1
        %v1793 = vrot.slane %v1667, 1
        %v1794 = vrot.slane %v1668, 1
        %v1795 = vrot.slane %v1669, 1
        %v1796 = vrot.slane %v1670, 1
        %v1797 = vrot.slane %v1671, 1
        %v1798 = vrot.slane %v1672, 1
        %v1799 = vrot.slane %v1673, 1
        %v1800 = vrot.slane %v1674, 1
        %v1801 = vrot.slane %v1675, 1
        %v1802 = vrot.slane %v1676, 1
        %v1803 = vrot.slane %v1677, 1
        %v1804 = vrot.slane %v1678, 1
        %v1805 = vrot.slane %v1679, 1
        %v1806 = vrot.slane %v1680, 1
        %v1807 = vrot.slane %v1681, 1
        %v1808 = vrot.slane %v1682, 1
        %v1809 = vrot.slane %v1683, 1
        %v1810 = vrot.slane %v1684, 1
        %v1811 = vrot.slane %v1685, 1
        %v1812 = vrot.slane %v1686, 1
        %v1813 = vrot.slane %v1687, 1
        %v1814 = vrot.slane %v1688, 1
        %v1815 = vrot.slane %v1689, 1
        %v1816 = vrot.slane %v1690, 1
        %v1817 = vrot.slane %v1691, 1
        %v1818 = vrot.slane %v1692, 1
        %v1819 = vrot.slane %v1693, 1
        %v1820 = vrot.slane %v1694, 1
        %v1821 = vrot.slane %v1695, 1
        %v1822 = vrot.slane %v1696, 1
        %v1823 = vrot.slane %v1697, 1
        %v1824 = vrot.slane %v1698, 1
        %1888 = vst [vmem:[%s1593] sm:$0x3f] %v1762
        %1889 = vst [vmem:[%s1593 + $0x8] sm:$0x3f] %v1763
        %1890 = vst [vmem:[%s1593 + $0x10] sm:$0x3f] %v1764
        %1891 = vst [vmem:[%s1593 + $0x18] sm:$0x3f] %v1765
        %1892 = vst [vmem:[%s1593 + $0x20] sm:$0x3f] %v1766
        %1893 = vst [vmem:[%s1593 + $0x28] sm:$0x3f] %v1767
        %1894 = vst [vmem:[%s1593 + $0x30] sm:$0x3f] %v1768
        %1895 = vst [vmem:[%s1593 + $0x38] sm:$0x3f] %v1769
        %1896 = vst [vmem:[%s1593 + $0x40] sm:$0x3f] %v1770
        %1897 = vst [vmem:[%s1593 + $0x48] sm:$0x3f] %v1771
        %1898 = vst [vmem:[%s1593 + $0x50] sm:$0x3f] %v1772
        %1899 = vst [vmem:[%s1593 + $0x58] sm:$0x3f] %v1773
        %1900 = vst [vmem:[%s1593 + $0x60] sm:$0x3f] %v1774
        %1901 = vst [vmem:[%s1593 + $0x68] sm:$0x3f] %v1775
        %1902 = vst [vmem:[%s1593 + $0x70] sm:$0x3f] %v1776
        %1903 = vst [vmem:[%s1593 + $0x78] sm:$0x3f] %v1777
        %1904 = vst [vmem:[%s1593 + $0x80] sm:$0x3f] %v1778
        %1905 = vst [vmem:[%s1593 + $0x88] sm:$0x3f] %v1779
        %1906 = vst [vmem:[%s1593 + $0x90] sm:$0x3f] %v1780
        %1907 = vst [vmem:[%s1593 + $0x98] sm:$0x3f] %v1781
        %1908 = vst [vmem:[%s1593 + $0xa0] sm:$0x3f] %v1782
        %1909 = vst [vmem:[%s1593 + $0xa8] sm:$0x3f] %v1783
        %1910 = vst [vmem:[%s1593 + $0xb0] sm:$0x3f] %v1784
        %1911 = vst [vmem:[%s1593 + $0xb8] sm:$0x3f] %v1785
        %1912 = vst [vmem:[%s1593 + $0xc0] sm:$0x3f] %v1786
        %1913 = vst [vmem:[%s1593 + $0xc8] sm:$0x3f] %v1787
        %1914 = vst [vmem:[%s1593 + $0xd0] sm:$0x3f] %v1788
        %1915 = vst [vmem:[%s1593 + $0xd8] sm:$0x3f] %v1789
        %1916 = vst [vmem:[%s1593 + $0xe0] sm:$0x3f] %v1790
        %1917 = vst [vmem:[%s1593 + $0xe8] sm:$0x3f] %v1791
        %1918 = vst [vmem:[%s1593 + $0xf0] sm:$0x3f] %v1792
        %1919 = vst [vmem:[%s1593 + $0xf8] sm:$0x3f] %v1793
        %1920 = vst [vmem:[%s1593 + $0x100] sm:$0x3f] %v1794
        %1921 = vst [vmem:[%s1593 + $0x108] sm:$0x3f] %v1795
        %1922 = vst [vmem:[%s1593 + $0x110] sm:$0x3f] %v1796
        %1923 = vst [vmem:[%s1593 + $0x118] sm:$0x3f] %v1797
        %1924 = vst [vmem:[%s1593 + $0x120] sm:$0x3f] %v1798
        %1925 = vst [vmem:[%s1593 + $0x128] sm:$0x3f] %v1799
        %1926 = vst [vmem:[%s1593 + $0x130] sm:$0x3f] %v1800
        %1927 = vst [vmem:[%s1593 + $0x138] sm:$0x3f] %v1801
        %1928 = vst [vmem:[%s1593 + $0x140] sm:$0x3f] %v1802
        %1929 = vst [vmem:[%s1593 + $0x148] sm:$0x3f] %v1803
        %1930 = vst [vmem:[%s1593 + $0x150] sm:$0x3f] %v1804
        %1931 = vst [vmem:[%s1593 + $0x158] sm:$0x3f] %v1805
        %1932 = vst [vmem:[%s1593 + $0x160] sm:$0x3f] %v1806
        %1933 = vst [vmem:[%s1593 + $0x168] sm:$0x3f] %v1807
        %1934 = vst [vmem:[%s1593 + $0x170] sm:$0x3f] %v1808
        %1935 = vst [vmem:[%s1593 + $0x178] sm:$0x3f] %v1809
        %1936 = vst [vmem:[%s1593 + $0x180] sm:$0x3f] %v1810
        %1937 = vst [vmem:[%s1593 + $0x188] sm:$0x3f] %v1811
        %1938 = vst [vmem:[%s1593 + $0x190] sm:$0x3f] %v1812
        %1939 = vst [vmem:[%s1593 + $0x198] sm:$0x3f] %v1813
        %1940 = vst [vmem:[%s1593 + $0x1a0] sm:$0x3f] %v1814
        %1941 = vst [vmem:[%s1593 + $0x1a8] sm:$0x3f] %v1815
        %1942 = vst [vmem:[%s1593 + $0x1b0] sm:$0x3f] %v1816
        %1943 = vst [vmem:[%s1593 + $0x1b8] sm:$0x3f] %v1817
        %1944 = vst [vmem:[%s1593 + $0x1c0] sm:$0x3f] %v1818
        %1945 = vst [vmem:[%s1593 + $0x1c8] sm:$0x3f] %v1819
        %1946 = vst [vmem:[%s1593 + $0x1d0] sm:$0x3f] %v1820
        %1947 = vst [vmem:[%s1593 + $0x1d8] sm:$0x3f] %v1821
        %1948 = vst [vmem:[%s1593 + $0x1e0] sm:$0x3f] %v1822
        %1949 = vst [vmem:[%s1593 + $0x1e8] sm:$0x3f] %v1823
        %1950 = vst [vmem:[%s1593 + $0x1f0] sm:$0x3f] %v1824
        %s1951 = scalar_lea.vmem [#allocation2], 2016
        %1952 = vst [vmem:[%s1951] sm:$0x60] 0.0
        %1953 = vst [vmem:[%s1951 + $0x8] sm:$0x60] 0.0
        %1954 = vst [vmem:[%s1951 + $0x10] sm:$0x60] 0.0
        %1955 = vst [vmem:[%s1951 + $0x18] sm:$0x60] 0.0
        %1956 = vst [vmem:[%s1951 + $0x20] sm:$0x60] 0.0
        %1957 = vst [vmem:[%s1951 + $0x28] sm:$0x60] 0.0
        %1958 = vst [vmem:[%s1951 + $0x30] sm:$0x60] 0.0
        %1959 = vst [vmem:[%s1951 + $0x38] sm:$0x60] 0.0
        %1960 = vst [vmem:[%s1951 + $0x40] sm:$0x60] 0.0
        %1961 = vst [vmem:[%s1951 + $0x48] sm:$0x60] 0.0
        %1962 = vst [vmem:[%s1951 + $0x50] sm:$0x60] 0.0
        %1963 = vst [vmem:[%s1951 + $0x58] sm:$0x60] 0.0
        %1964 = vst [vmem:[%s1951 + $0x60] sm:$0x60] 0.0
        %1965 = vst [vmem:[%s1951 + $0x68] sm:$0x60] 0.0
        %1966 = vst [vmem:[%s1951 + $0x70] sm:$0x60] 0.0
        %1967 = vst [vmem:[%s1951 + $0x78] sm:$0x60] 0.0
        %1968 = vst [vmem:[%s1951 + $0x80] sm:$0x60] 0.0
        %1969 = vst [vmem:[%s1951 + $0x88] sm:$0x60] 0.0
        %1970 = vst [vmem:[%s1951 + $0x90] sm:$0x60] 0.0
        %1971 = vst [vmem:[%s1951 + $0x98] sm:$0x60] 0.0
        %1972 = vst [vmem:[%s1951 + $0xa0] sm:$0x60] 0.0
        %1973 = vst [vmem:[%s1951 + $0xa8] sm:$0x60] 0.0
        %1974 = vst [vmem:[%s1951 + $0xb0] sm:$0x60] 0.0
        %1975 = vst [vmem:[%s1951 + $0xb8] sm:$0x60] 0.0
        %1976 = vst [vmem:[%s1951 + $0xc0] sm:$0x60] 0.0
        %1977 = vst [vmem:[%s1951 + $0xc8] sm:$0x60] 0.0
        %1978 = vst [vmem:[%s1951 + $0xd0] sm:$0x60] 0.0
        %1979 = vst [vmem:[%s1951 + $0xd8] sm:$0x60] 0.0
        %1980 = vst [vmem:[%s1951 + $0xe0] sm:$0x60] 0.0
        %1981 = vst [vmem:[%s1951 + $0xe8] sm:$0x60] 0.0
        %1982 = vst [vmem:[%s1951 + $0xf0] sm:$0x60] 0.0
        %1983 = vst [vmem:[%s1951 + $0xf8] sm:$0x60] 0.0
        %1984 = vst [vmem:[%s1951 + $0x100] sm:$0x60] 0.0
        %1985 = vst [vmem:[%s1951 + $0x108] sm:$0x60] 0.0
        %1986 = vst [vmem:[%s1951 + $0x110] sm:$0x60] 0.0
        %1987 = vst [vmem:[%s1951 + $0x118] sm:$0x60] 0.0
        %1988 = vst [vmem:[%s1951 + $0x120] sm:$0x60] 0.0
        %1989 = vst [vmem:[%s1951 + $0x128] sm:$0x60] 0.0
        %1990 = vst [vmem:[%s1951 + $0x130] sm:$0x60] 0.0
        %1991 = vst [vmem:[%s1951 + $0x138] sm:$0x60] 0.0
        %1992 = vst [vmem:[%s1951 + $0x140] sm:$0x60] 0.0
        %1993 = vst [vmem:[%s1951 + $0x148] sm:$0x60] 0.0
        %1994 = vst [vmem:[%s1951 + $0x150] sm:$0x60] 0.0
        %1995 = vst [vmem:[%s1951 + $0x158] sm:$0x60] 0.0
        %1996 = vst [vmem:[%s1951 + $0x160] sm:$0x60] 0.0
        %1997 = vst [vmem:[%s1951 + $0x168] sm:$0x60] 0.0
        %1998 = vst [vmem:[%s1951 + $0x170] sm:$0x60] 0.0
        %1999 = vst [vmem:[%s1951 + $0x178] sm:$0x60] 0.0
        %2000 = vst [vmem:[%s1951 + $0x180] sm:$0x60] 0.0
        %2001 = vst [vmem:[%s1951 + $0x188] sm:$0x60] 0.0
        %2002 = vst [vmem:[%s1951 + $0x190] sm:$0x60] 0.0
        %2003 = vst [vmem:[%s1951 + $0x198] sm:$0x60] 0.0
        %2004 = vst [vmem:[%s1951 + $0x1a0] sm:$0x60] 0.0
        %2005 = vst [vmem:[%s1951 + $0x1a8] sm:$0x60] 0.0
        %2006 = vst [vmem:[%s1951 + $0x1b0] sm:$0x60] 0.0
        %2007 = vst [vmem:[%s1951 + $0x1b8] sm:$0x60] 0.0
        %2008 = vst [vmem:[%s1951 + $0x1c0] sm:$0x60] 0.0
        %2009 = vst [vmem:[%s1951 + $0x1c8] sm:$0x60] 0.0
        %2010 = vst [vmem:[%s1951 + $0x1d0] sm:$0x60] 0.0
        %2011 = vst [vmem:[%s1951 + $0x1d8] sm:$0x60] 0.0
        %2012 = vst [vmem:[%s1951 + $0x1e0] sm:$0x60] 0.0
        %2013 = vst [vmem:[%s1951 + $0x1e8] sm:$0x60] 0.0
        %2014 = vst [vmem:[%s1951 + $0x1f0] sm:$0x60] 0.0
        %v2015 = vld [vmem:[#allocation4] sm:$0x7c]
        %v2016 = vld [vmem:[#allocation4 + $0x8] sm:$0x7c]
        %v2017 = vld [vmem:[#allocation4 + $0x10] sm:$0x7c]
        %v2018 = vld [vmem:[#allocation4 + $0x18] sm:$0x7c]
        %v2019 = vld [vmem:[#allocation4 + $0x20] sm:$0x7c]
        %v2020 = vld [vmem:[#allocation4 + $0x28] sm:$0x7c]
        %v2021 = vld [vmem:[#allocation4 + $0x30] sm:$0x7c]
        %v2022 = vld [vmem:[#allocation4 + $0x38] sm:$0x7c]
        %v2023 = vld [vmem:[#allocation4 + $0x40] sm:$0x7c]
        %v2024 = vld [vmem:[#allocation4 + $0x48] sm:$0x7c]
        %v2025 = vld [vmem:[#allocation4 + $0x50] sm:$0x7c]
        %v2026 = vld [vmem:[#allocation4 + $0x58] sm:$0x7c]
        %v2027 = vld [vmem:[#allocation4 + $0x60] sm:$0x7c]
        %v2028 = vld [vmem:[#allocation4 + $0x68] sm:$0x7c]
        %v2029 = vld [vmem:[#allocation4 + $0x70] sm:$0x7c]
        %v2030 = vld [vmem:[#allocation4 + $0x78] sm:$0x7c]
        %v2031 = vld [vmem:[#allocation4 + $0x80] sm:$0x7c]
        %v2032 = vld [vmem:[#allocation4 + $0x88] sm:$0x7c]
        %v2033 = vld [vmem:[#allocation4 + $0x90] sm:$0x7c]
        %v2034 = vld [vmem:[#allocation4 + $0x98] sm:$0x7c]
        %v2035 = vld [vmem:[#allocation4 + $0xa0] sm:$0x7c]
        %v2036 = vld [vmem:[#allocation4 + $0xa8] sm:$0x7c]
        %v2037 = vld [vmem:[#allocation4 + $0xb0] sm:$0x7c]
        %v2038 = vld [vmem:[#allocation4 + $0xb8] sm:$0x7c]
        %v2039 = vld [vmem:[#allocation4 + $0xc0] sm:$0x7c]
        %v2040 = vld [vmem:[#allocation4 + $0xc8] sm:$0x7c]
        %v2041 = vld [vmem:[#allocation4 + $0xd0] sm:$0x7c]
        %v2042 = vld [vmem:[#allocation4 + $0xd8] sm:$0x7c]
        %v2043 = vld [vmem:[#allocation4 + $0xe0] sm:$0x7c]
        %v2044 = vld [vmem:[#allocation4 + $0xe8] sm:$0x7c]
        %v2045 = vld [vmem:[#allocation4 + $0xf0] sm:$0x7c]
        %v2046 = vld [vmem:[#allocation4 + $0xf8] sm:$0x7c]
        %v2047 = vld [vmem:[#allocation4 + $0x100] sm:$0x7c]
        %v2048 = vld [vmem:[#allocation4 + $0x108] sm:$0x7c]
        %v2049 = vld [vmem:[#allocation4 + $0x110] sm:$0x7c]
        %v2050 = vld [vmem:[#allocation4 + $0x118] sm:$0x7c]
        %v2051 = vld [vmem:[#allocation4 + $0x120] sm:$0x7c]
        %v2052 = vld [vmem:[#allocation4 + $0x128] sm:$0x7c]
        %v2053 = vld [vmem:[#allocation4 + $0x130] sm:$0x7c]
        %v2054 = vld [vmem:[#allocation4 + $0x138] sm:$0x7c]
        %v2055 = vld [vmem:[#allocation4 + $0x140] sm:$0x7c]
        %v2056 = vld [vmem:[#allocation4 + $0x148] sm:$0x7c]
        %v2057 = vld [vmem:[#allocation4 + $0x150] sm:$0x7c]
        %v2058 = vld [vmem:[#allocation4 + $0x158] sm:$0x7c]
        %v2059 = vld [vmem:[#allocation4 + $0x160] sm:$0x7c]
        %v2060 = vld [vmem:[#allocation4 + $0x168] sm:$0x7c]
        %v2061 = vld [vmem:[#allocation4 + $0x170] sm:$0x7c]
        %v2062 = vld [vmem:[#allocation4 + $0x178] sm:$0x7c]
        %v2063 = vld [vmem:[#allocation4 + $0x180] sm:$0x7c]
        %v2064 = vld [vmem:[#allocation4 + $0x188] sm:$0x7c]
        %v2065 = vld [vmem:[#allocation4 + $0x190] sm:$0x7c]
        %v2066 = vld [vmem:[#allocation4 + $0x198] sm:$0x7c]
        %v2067 = vld [vmem:[#allocation4 + $0x1a0] sm:$0x7c]
        %v2068 = vld [vmem:[#allocation4 + $0x1a8] sm:$0x7c]
        %v2069 = vld [vmem:[#allocation4 + $0x1b0] sm:$0x7c]
        %v2070 = vld [vmem:[#allocation4 + $0x1b8] sm:$0x7c]
        %v2071 = vld [vmem:[#allocation4 + $0x1c0] sm:$0x7c]
        %v2072 = vld [vmem:[#allocation4 + $0x1c8] sm:$0x7c]
        %v2073 = vld [vmem:[#allocation4 + $0x1d0] sm:$0x7c]
        %v2074 = vld [vmem:[#allocation4 + $0x1d8] sm:$0x7c]
        %v2075 = vld [vmem:[#allocation4 + $0x1e0] sm:$0x7c]
        %v2076 = vld [vmem:[#allocation4 + $0x1e8] sm:$0x7c]
        %v2077 = vld [vmem:[#allocation4 + $0x1f0] sm:$0x7c]
        %v2141 = vrot.slane %v2015, 2
        %v2142 = vrot.slane %v2016, 2
        %v2143 = vrot.slane %v2017, 2
        %v2144 = vrot.slane %v2018, 2
        %v2145 = vrot.slane %v2019, 2
        %v2146 = vrot.slane %v2020, 2
        %v2147 = vrot.slane %v2021, 2
        %v2148 = vrot.slane %v2022, 2
        %v2149 = vrot.slane %v2023, 2
        %v2150 = vrot.slane %v2024, 2
        %v2151 = vrot.slane %v2025, 2
        %v2152 = vrot.slane %v2026, 2
        %v2153 = vrot.slane %v2027, 2
        %v2154 = vrot.slane %v2028, 2
        %v2155 = vrot.slane %v2029, 2
        %v2156 = vrot.slane %v2030, 2
        %v2157 = vrot.slane %v2031, 2
        %v2158 = vrot.slane %v2032, 2
        %v2159 = vrot.slane %v2033, 2
        %v2160 = vrot.slane %v2034, 2
        %v2161 = vrot.slane %v2035, 2
        %v2162 = vrot.slane %v2036, 2
        %v2163 = vrot.slane %v2037, 2
        %v2164 = vrot.slane %v2038, 2
        %v2165 = vrot.slane %v2039, 2
        %v2166 = vrot.slane %v2040, 2
        %v2167 = vrot.slane %v2041, 2
        %v2168 = vrot.slane %v2042, 2
        %v2169 = vrot.slane %v2043, 2
        %v2170 = vrot.slane %v2044, 2
        %v2171 = vrot.slane %v2045, 2
        %v2172 = vrot.slane %v2046, 2
        %v2173 = vrot.slane %v2047, 2
        %v2174 = vrot.slane %v2048, 2
        %v2175 = vrot.slane %v2049, 2
        %v2176 = vrot.slane %v2050, 2
        %v2177 = vrot.slane %v2051, 2
        %v2178 = vrot.slane %v2052, 2
        %v2179 = vrot.slane %v2053, 2
        %v2180 = vrot.slane %v2054, 2
        %v2181 = vrot.slane %v2055, 2
        %v2182 = vrot.slane %v2056, 2
        %v2183 = vrot.slane %v2057, 2
        %v2184 = vrot.slane %v2058, 2
        %v2185 = vrot.slane %v2059, 2
        %v2186 = vrot.slane %v2060, 2
        %v2187 = vrot.slane %v2061, 2
        %v2188 = vrot.slane %v2062, 2
        %v2189 = vrot.slane %v2063, 2
        %v2190 = vrot.slane %v2064, 2
        %v2191 = vrot.slane %v2065, 2
        %v2192 = vrot.slane %v2066, 2
        %v2193 = vrot.slane %v2067, 2
        %v2194 = vrot.slane %v2068, 2
        %v2195 = vrot.slane %v2069, 2
        %v2196 = vrot.slane %v2070, 2
        %v2197 = vrot.slane %v2071, 2
        %v2198 = vrot.slane %v2072, 2
        %v2199 = vrot.slane %v2073, 2
        %v2200 = vrot.slane %v2074, 2
        %v2201 = vrot.slane %v2075, 2
        %v2202 = vrot.slane %v2076, 2
        %v2203 = vrot.slane %v2077, 2
        %2267 = vst [vmem:[%s1951] sm:$0x1f] %v2141
        %2268 = vst [vmem:[%s1951 + $0x8] sm:$0x1f] %v2142
        %2269 = vst [vmem:[%s1951 + $0x10] sm:$0x1f] %v2143
        %2270 = vst [vmem:[%s1951 + $0x18] sm:$0x1f] %v2144
        %2271 = vst [vmem:[%s1951 + $0x20] sm:$0x1f] %v2145
        %2272 = vst [vmem:[%s1951 + $0x28] sm:$0x1f] %v2146
        %2273 = vst [vmem:[%s1951 + $0x30] sm:$0x1f] %v2147
        %2274 = vst [vmem:[%s1951 + $0x38] sm:$0x1f] %v2148
        %2275 = vst [vmem:[%s1951 + $0x40] sm:$0x1f] %v2149
        %2276 = vst [vmem:[%s1951 + $0x48] sm:$0x1f] %v2150
        %2277 = vst [vmem:[%s1951 + $0x50] sm:$0x1f] %v2151
        %2278 = vst [vmem:[%s1951 + $0x58] sm:$0x1f] %v2152
        %2279 = vst [vmem:[%s1951 + $0x60] sm:$0x1f] %v2153
        %2280 = vst [vmem:[%s1951 + $0x68] sm:$0x1f] %v2154
        %2281 = vst [vmem:[%s1951 + $0x70] sm:$0x1f] %v2155
        %2282 = vst [vmem:[%s1951 + $0x78] sm:$0x1f] %v2156
        %2283 = vst [vmem:[%s1951 + $0x80] sm:$0x1f] %v2157
        %2284 = vst [vmem:[%s1951 + $0x88] sm:$0x1f] %v2158
        %2285 = vst [vmem:[%s1951 + $0x90] sm:$0x1f] %v2159
        %2286 = vst [vmem:[%s1951 + $0x98] sm:$0x1f] %v2160
        %2287 = vst [vmem:[%s1951 + $0xa0] sm:$0x1f] %v2161
        %2288 = vst [vmem:[%s1951 + $0xa8] sm:$0x1f] %v2162
        %2289 = vst [vmem:[%s1951 + $0xb0] sm:$0x1f] %v2163
        %2290 = vst [vmem:[%s1951 + $0xb8] sm:$0x1f] %v2164
        %2291 = vst [vmem:[%s1951 + $0xc0] sm:$0x1f] %v2165
        %2292 = vst [vmem:[%s1951 + $0xc8] sm:$0x1f] %v2166
        %2293 = vst [vmem:[%s1951 + $0xd0] sm:$0x1f] %v2167
        %2294 = vst [vmem:[%s1951 + $0xd8] sm:$0x1f] %v2168
        %2295 = vst [vmem:[%s1951 + $0xe0] sm:$0x1f] %v2169
        %2296 = vst [vmem:[%s1951 + $0xe8] sm:$0x1f] %v2170
        %2297 = vst [vmem:[%s1951 + $0xf0] sm:$0x1f] %v2171
        %2298 = vst [vmem:[%s1951 + $0xf8] sm:$0x1f] %v2172
        %2299 = vst [vmem:[%s1951 + $0x100] sm:$0x1f] %v2173
        %2300 = vst [vmem:[%s1951 + $0x108] sm:$0x1f] %v2174
        %2301 = vst [vmem:[%s1951 + $0x110] sm:$0x1f] %v2175
        %2302 = vst [vmem:[%s1951 + $0x118] sm:$0x1f] %v2176
        %2303 = vst [vmem:[%s1951 + $0x120] sm:$0x1f] %v2177
        %2304 = vst [vmem:[%s1951 + $0x128] sm:$0x1f] %v2178
        %2305 = vst [vmem:[%s1951 + $0x130] sm:$0x1f] %v2179
        %2306 = vst [vmem:[%s1951 + $0x138] sm:$0x1f] %v2180
        %2307 = vst [vmem:[%s1951 + $0x140] sm:$0x1f] %v2181
        %2308 = vst [vmem:[%s1951 + $0x148] sm:$0x1f] %v2182
        %2309 = vst [vmem:[%s1951 + $0x150] sm:$0x1f] %v2183
        %2310 = vst [vmem:[%s1951 + $0x158] sm:$0x1f] %v2184
        %2311 = vst [vmem:[%s1951 + $0x160] sm:$0x1f] %v2185
        %2312 = vst [vmem:[%s1951 + $0x168] sm:$0x1f] %v2186
        %2313 = vst [vmem:[%s1951 + $0x170] sm:$0x1f] %v2187
        %2314 = vst [vmem:[%s1951 + $0x178] sm:$0x1f] %v2188
        %2315 = vst [vmem:[%s1951 + $0x180] sm:$0x1f] %v2189
        %2316 = vst [vmem:[%s1951 + $0x188] sm:$0x1f] %v2190
        %2317 = vst [vmem:[%s1951 + $0x190] sm:$0x1f] %v2191
        %2318 = vst [vmem:[%s1951 + $0x198] sm:$0x1f] %v2192
        %2319 = vst [vmem:[%s1951 + $0x1a0] sm:$0x1f] %v2193
        %2320 = vst [vmem:[%s1951 + $0x1a8] sm:$0x1f] %v2194
        %2321 = vst [vmem:[%s1951 + $0x1b0] sm:$0x1f] %v2195
        %2322 = vst [vmem:[%s1951 + $0x1b8] sm:$0x1f] %v2196
        %2323 = vst [vmem:[%s1951 + $0x1c0] sm:$0x1f] %v2197
        %2324 = vst [vmem:[%s1951 + $0x1c8] sm:$0x1f] %v2198
        %2325 = vst [vmem:[%s1951 + $0x1d0] sm:$0x1f] %v2199
        %2326 = vst [vmem:[%s1951 + $0x1d8] sm:$0x1f] %v2200
        %2327 = vst [vmem:[%s1951 + $0x1e0] sm:$0x1f] %v2201
        %2328 = vst [vmem:[%s1951 + $0x1e8] sm:$0x1f] %v2202
        %2329 = vst [vmem:[%s1951 + $0x1f0] sm:$0x1f] %v2203
        %v2330 = vld [vmem:[#allocation5] ss:$8 sm:$0x7]
        %v2332 = vlaneseq
        %v2333 = vshrl.u32 %v2332, 7
        %v2334 = vsub.s32 0, %v2333
        %v2335 = vrot.slane %v2330, %v2334
        %v2336 = vlaneseq
        %v2337 = vshrl.u32 %v2336, 7
        %v2338 = vsub.s32 1, %v2337
        %v2339 = vrot.slane %v2330, %v2338
        %v2340 = vlaneseq
        %v2341 = vshrl.u32 %v2340, 7
        %v2342 = vsub.s32 2, %v2341
        %v2343 = vrot.slane %v2330, %v2342
        %s2347 = scalar_lea.vmem [#allocation5], 72
        %v2348 = vld [vmem:[%s2347] ss:$8 sm:$0x7]
        %v2350 = vlaneseq
        %v2351 = vshrl.u32 %v2350, 7
        %v2352 = vsub.s32 0, %v2351
        %v2353 = vrot.slane %v2348, %v2352
        %v2354 = vlaneseq
        %v2355 = vshrl.u32 %v2354, 7
        %v2356 = vsub.s32 1, %v2355
        %v2357 = vrot.slane %v2348, %v2356
        %v2358 = vlaneseq
        %v2359 = vshrl.u32 %v2358, 7
        %v2360 = vsub.s32 2, %v2359
        %v2361 = vrot.slane %v2348, %v2360
        %s2365 = scalar_lea.vmem [#allocation5], 144
        %v2366 = vld [vmem:[%s2365] ss:$8 sm:$0x7]
        %v2368 = vlaneseq
        %v2369 = vshrl.u32 %v2368, 7
        %v2370 = vsub.s32 0, %v2369
        %v2371 = vrot.slane %v2366, %v2370
        %v2372 = vlaneseq
        %v2373 = vshrl.u32 %v2372, 7
        %v2374 = vsub.s32 1, %v2373
        %v2375 = vrot.slane %v2366, %v2374
        %v2376 = vlaneseq
        %v2377 = vshrl.u32 %v2376, 7
        %v2378 = vsub.s32 2, %v2377
        %v2379 = vrot.slane %v2366, %v2378
        %s2383 = scalar_lea.vmem [#allocation5], 216
        %v2384 = vld [vmem:[%s2383] ss:$8 sm:$0x7]
        %v2386 = vlaneseq
        %v2387 = vshrl.u32 %v2386, 7
        %v2388 = vsub.s32 0, %v2387
        %v2389 = vrot.slane %v2384, %v2388
        %v2390 = vlaneseq
        %v2391 = vshrl.u32 %v2390, 7
        %v2392 = vsub.s32 1, %v2391
        %v2393 = vrot.slane %v2384, %v2392
        %v2394 = vlaneseq
        %v2395 = vshrl.u32 %v2394, 7
        %v2396 = vsub.s32 2, %v2395
        %v2397 = vrot.slane %v2384, %v2396
        %s2401 = scalar_lea.vmem [#allocation5], 288
        %v2402 = vld [vmem:[%s2401] ss:$8 sm:$0x7]
        %v2404 = vlaneseq
        %v2405 = vshrl.u32 %v2404, 7
        %v2406 = vsub.s32 0, %v2405
        %v2407 = vrot.slane %v2402, %v2406
        %v2408 = vlaneseq
        %v2409 = vshrl.u32 %v2408, 7
        %v2410 = vsub.s32 1, %v2409
        %v2411 = vrot.slane %v2402, %v2410
        %v2412 = vlaneseq
        %v2413 = vshrl.u32 %v2412, 7
        %v2414 = vsub.s32 2, %v2413
        %v2415 = vrot.slane %v2402, %v2414
        %v2419 = vld [vmem:[#allocation2] sm:$0x7f]
        %v2420 = vld [vmem:[#allocation2 + $0x8] sm:$0x7f]
        %v2421 = vld [vmem:[#allocation2 + $0x10] sm:$0x7f]
        %v2422 = vmul.f32 %v2419, %v2335
        %v2423 = vmul.f32 %v2420, %v2339
        %v2424 = vmul.f32 %v2421, %v2343
        %v2425 = vmul.f32 %v2419, %v2353
        %v2426 = vmul.f32 %v2420, %v2357
        %v2427 = vmul.f32 %v2421, %v2361
        %v2428 = vmul.f32 %v2419, %v2371
        %v2429 = vmul.f32 %v2420, %v2375
        %v2430 = vmul.f32 %v2421, %v2379
        %s2431 = scalar_lea.vmem [#allocation2], 72
        %v2432 = vld [vmem:[%s2431] sm:$0x7f]
        %v2433 = vld [vmem:[%s2431 + $0x8] sm:$0x7f]
        %v2434 = vld [vmem:[%s2431 + $0x10] sm:$0x7f]
        %v2435 = vmul.f32 %v2432, %v2335
        %v2436 = vmul.f32 %v2433, %v2339
        %v2437 = vmul.f32 %v2434, %v2343
        %v2438 = vmul.f32 %v2432, %v2353
        %v2439 = vmul.f32 %v2433, %v2357
        %v2440 = vmul.f32 %v2434, %v2361
        %v2441 = vadd.f32 %v2422, %v2438
        %v2442 = vadd.f32 %v2423, %v2439
        %v2443 = vadd.f32 %v2424, %v2440
        %v2444 = vmul.f32 %v2432, %v2371
        %v2445 = vmul.f32 %v2433, %v2375
        %v2446 = vmul.f32 %v2434, %v2379
        %v2447 = vadd.f32 %v2425, %v2444
        %v2448 = vadd.f32 %v2426, %v2445
        %v2449 = vadd.f32 %v2427, %v2446
        %v2450 = vmul.f32 %v2432, %v2389
        %v2451 = vmul.f32 %v2433, %v2393
        %v2452 = vmul.f32 %v2434, %v2397
        %v2453 = vadd.f32 %v2428, %v2450
        %v2454 = vadd.f32 %v2429, %v2451
        %v2455 = vadd.f32 %v2430, %v2452
        %s2456 = scalar_lea.vmem [#allocation2], 144
        %v2457 = vld [vmem:[%s2456] sm:$0x7f]
        %v2458 = vld [vmem:[%s2456 + $0x8] sm:$0x7f]
        %v2459 = vld [vmem:[%s2456 + $0x10] sm:$0x7f]
        %v2460 = vmul.f32 %v2457, %v2335
        %v2461 = vmul.f32 %v2458, %v2339
        %v2462 = vmul.f32 %v2459, %v2343
        %v2463 = vmul.f32 %v2457, %v2353
        %v2464 = vmul.f32 %v2458, %v2357
        %v2465 = vmul.f32 %v2459, %v2361
        %v2466 = vadd.f32 %v2435, %v2463
        %v2467 = vadd.f32 %v2436, %v2464
        %v2468 = vadd.f32 %v2437, %v2465
        %v2469 = vmul.f32 %v2457, %v2371
        %v2470 = vmul.f32 %v2458, %v2375
        %v2471 = vmul.f32 %v2459, %v2379
        %v2472 = vadd.f32 %v2441, %v2469
        %v2473 = vadd.f32 %v2442, %v2470
        %v2474 = vadd.f32 %v2443, %v2471
        %v2475 = vmul.f32 %v2457, %v2389
        %v2476 = vmul.f32 %v2458, %v2393
        %v2477 = vmul.f32 %v2459, %v2397
        %v2478 = vadd.f32 %v2447, %v2475
        %v2479 = vadd.f32 %v2448, %v2476
        %v2480 = vadd.f32 %v2449, %v2477
        %v2481 = vmul.f32 %v2457, %v2407
        %v2482 = vmul.f32 %v2458, %v2411
        %v2483 = vmul.f32 %v2459, %v2415
        %v2484 = vadd.f32 %v2453, %v2481
        %v2485 = vadd.f32 %v2454, %v2482
        %v2486 = vadd.f32 %v2455, %v2483
        %s2487 = scalar_lea.vmem [#allocation2], 216
        %v2488 = vld [vmem:[%s2487] sm:$0x7f]
        %v2489 = vld [vmem:[%s2487 + $0x8] sm:$0x7f]
        %v2490 = vld [vmem:[%s2487 + $0x10] sm:$0x7f]
        %v2491 = vmul.f32 %v2488, %v2335
        %v2492 = vmul.f32 %v2489, %v2339
        %v2493 = vmul.f32 %v2490, %v2343
        %v2494 = vmul.f32 %v2488, %v2353
        %v2495 = vmul.f32 %v2489, %v2357
        %v2496 = vmul.f32 %v2490, %v2361
        %v2497 = vadd.f32 %v2460, %v2494
        %v2498 = vadd.f32 %v2461, %v2495
        %v2499 = vadd.f32 %v2462, %v2496
        %v2500 = vmul.f32 %v2488, %v2371
        %v2501 = vmul.f32 %v2489, %v2375
        %v2502 = vmul.f32 %v2490, %v2379
        %v2503 = vadd.f32 %v2466, %v2500
        %v2504 = vadd.f32 %v2467, %v2501
        %v2505 = vadd.f32 %v2468, %v2502
        %v2506 = vmul.f32 %v2488, %v2389
        %v2507 = vmul.f32 %v2489, %v2393
        %v2508 = vmul.f32 %v2490, %v2397
        %v2509 = vadd.f32 %v2472, %v2506
        %v2510 = vadd.f32 %v2473, %v2507
        %v2511 = vadd.f32 %v2474, %v2508
        %v2512 = vmul.f32 %v2488, %v2407
        %v2513 = vmul.f32 %v2489, %v2411
        %v2514 = vmul.f32 %v2490, %v2415
        %v2515 = vadd.f32 %v2478, %v2512
        %v2516 = vadd.f32 %v2479, %v2513
        %v2517 = vadd.f32 %v2480, %v2514
        %s2518 = scalar_lea.vmem [#allocation2], 288
        %v2519 = vld [vmem:[%s2518] sm:$0x7f]
        %v2520 = vld [vmem:[%s2518 + $0x8] sm:$0x7f]
        %v2521 = vld [vmem:[%s2518 + $0x10] sm:$0x7f]
        %v2522 = vmul.f32 %v2519, %v2335
        %v2523 = vmul.f32 %v2520, %v2339
        %v2524 = vmul.f32 %v2521, %v2343
        %v2525 = vmul.f32 %v2519, %v2353
        %v2526 = vmul.f32 %v2520, %v2357
        %v2527 = vmul.f32 %v2521, %v2361
        %v2528 = vadd.f32 %v2491, %v2525
        %v2529 = vadd.f32 %v2492, %v2526
        %v2530 = vadd.f32 %v2493, %v2527
        %v2531 = vmul.f32 %v2519, %v2371
        %v2532 = vmul.f32 %v2520, %v2375
        %v2533 = vmul.f32 %v2521, %v2379
        %v2534 = vadd.f32 %v2497, %v2531
        %v2535 = vadd.f32 %v2498, %v2532
        %v2536 = vadd.f32 %v2499, %v2533
        %v2537 = vmul.f32 %v2519, %v2389
        %v2538 = vmul.f32 %v2520, %v2393
        %v2539 = vmul.f32 %v2521, %v2397
        %v2540 = vadd.f32 %v2503, %v2537
        %v2541 = vadd.f32 %v2504, %v2538
        %v2542 = vadd.f32 %v2505, %v2539
        %v2543 = vmul.f32 %v2519, %v2407
        %v2544 = vmul.f32 %v2520, %v2411
        %v2545 = vmul.f32 %v2521, %v2415
        %v2546 = vadd.f32 %v2509, %v2543
        %v2547 = vadd.f32 %v2510, %v2544
        %v2548 = vadd.f32 %v2511, %v2545
        %s2549 = scalar_lea.vmem [#allocation2], 360
        %v2550 = vld [vmem:[%s2549] sm:$0x7f]
        %v2551 = vld [vmem:[%s2549 + $0x8] sm:$0x7f]
        %v2552 = vld [vmem:[%s2549 + $0x10] sm:$0x7f]
        %v2553 = vmul.f32 %v2550, %v2353
        %v2554 = vmul.f32 %v2551, %v2357
        %v2555 = vmul.f32 %v2552, %v2361
        %v2556 = vadd.f32 %v2522, %v2553
        %v2557 = vadd.f32 %v2523, %v2554
        %v2558 = vadd.f32 %v2524, %v2555
        %v2559 = vmul.f32 %v2550, %v2371
        %v2560 = vmul.f32 %v2551, %v2375
        %v2561 = vmul.f32 %v2552, %v2379
        %v2562 = vadd.f32 %v2528, %v2559
        %v2563 = vadd.f32 %v2529, %v2560
        %v2564 = vadd.f32 %v2530, %v2561
        %v2565 = vmul.f32 %v2550, %v2389
        %v2566 = vmul.f32 %v2551, %v2393
        %v2567 = vmul.f32 %v2552, %v2397
        %v2568 = vadd.f32 %v2534, %v2565
        %v2569 = vadd.f32 %v2535, %v2566
        %v2570 = vadd.f32 %v2536, %v2567
        %v2571 = vmul.f32 %v2550, %v2407
        %v2572 = vmul.f32 %v2551, %v2411
        %v2573 = vmul.f32 %v2552, %v2415
        %v2574 = vadd.f32 %v2540, %v2571
        %v2575 = vadd.f32 %v2541, %v2572
        %v2576 = vadd.f32 %v2542, %v2573
        %s2577 = scalar_lea.vmem [#allocation2], 432
        %v2578 = vld [vmem:[%s2577] sm:$0x7f]
        %v2579 = vld [vmem:[%s2577 + $0x8] sm:$0x7f]
        %v2580 = vld [vmem:[%s2577 + $0x10] sm:$0x7f]
        %v2581 = vmul.f32 %v2578, %v2371
        %v2582 = vmul.f32 %v2579, %v2375
        %v2583 = vmul.f32 %v2580, %v2379
        %v2584 = vadd.f32 %v2556, %v2581
        %v2585 = vadd.f32 %v2557, %v2582
        %v2586 = vadd.f32 %v2558, %v2583
        %v2587 = vmul.f32 %v2578, %v2389
        %v2588 = vmul.f32 %v2579, %v2393
        %v2589 = vmul.f32 %v2580, %v2397
        %v2590 = vadd.f32 %v2562, %v2587
        %v2591 = vadd.f32 %v2563, %v2588
        %v2592 = vadd.f32 %v2564, %v2589
        %v2593 = vmul.f32 %v2578, %v2407
        %v2594 = vmul.f32 %v2579, %v2411
        %v2595 = vmul.f32 %v2580, %v2415
        %v2596 = vadd.f32 %v2568, %v2593
        %v2597 = vadd.f32 %v2569, %v2594
        %v2598 = vadd.f32 %v2570, %v2595
        %s2599 = scalar_lea.vmem [#allocation5], 1
        %v2600 = vld [vmem:[%s2599] ss:$8 sm:$0x7]
        %v2602 = vlaneseq
        %v2603 = vshrl.u32 %v2602, 7
        %v2604 = vsub.s32 0, %v2603
        %v2605 = vrot.slane %v2600, %v2604
        %v2606 = vlaneseq
        %v2607 = vshrl.u32 %v2606, 7
        %v2608 = vsub.s32 1, %v2607
        %v2609 = vrot.slane %v2600, %v2608
        %v2610 = vlaneseq
        %v2611 = vshrl.u32 %v2610, 7
        %v2612 = vsub.s32 2, %v2611
        %v2613 = vrot.slane %v2600, %v2612
        %s2617 = scalar_lea.vmem %s2347, 1 [#allocation5]
        %v2618 = vld [vmem:[%s2617] ss:$8 sm:$0x7]
        %v2620 = vlaneseq
        %v2621 = vshrl.u32 %v2620, 7
        %v2622 = vsub.s32 0, %v2621
        %v2623 = vrot.slane %v2618, %v2622
        %v2624 = vlaneseq
        %v2625 = vshrl.u32 %v2624, 7
        %v2626 = vsub.s32 1, %v2625
        %v2627 = vrot.slane %v2618, %v2626
        %v2628 = vlaneseq
        %v2629 = vshrl.u32 %v2628, 7
        %v2630 = vsub.s32 2, %v2629
        %v2631 = vrot.slane %v2618, %v2630
        %s2635 = scalar_lea.vmem %s2365, 1 [#allocation5]
        %v2636 = vld [vmem:[%s2635] ss:$8 sm:$0x7]
        %v2638 = vlaneseq
        %v2639 = vshrl.u32 %v2638, 7
        %v2640 = vsub.s32 0, %v2639
        %v2641 = vrot.slane %v2636, %v2640
        %v2642 = vlaneseq
        %v2643 = vshrl.u32 %v2642, 7
        %v2644 = vsub.s32 1, %v2643
        %v2645 = vrot.slane %v2636, %v2644
        %v2646 = vlaneseq
        %v2647 = vshrl.u32 %v2646, 7
        %v2648 = vsub.s32 2, %v2647
        %v2649 = vrot.slane %v2636, %v2648
        %s2653 = scalar_lea.vmem %s2383, 1 [#allocation5]
        %v2654 = vld [vmem:[%s2653] ss:$8 sm:$0x7]
        %v2656 = vlaneseq
        %v2657 = vshrl.u32 %v2656, 7
        %v2658 = vsub.s32 0, %v2657
        %v2659 = vrot.slane %v2654, %v2658
        %v2660 = vlaneseq
        %v2661 = vshrl.u32 %v2660, 7
        %v2662 = vsub.s32 1, %v2661
        %v2663 = vrot.slane %v2654, %v2662
        %v2664 = vlaneseq
        %v2665 = vshrl.u32 %v2664, 7
        %v2666 = vsub.s32 2, %v2665
        %v2667 = vrot.slane %v2654, %v2666
        %s2671 = scalar_lea.vmem %s2401, 1 [#allocation5]
        %v2672 = vld [vmem:[%s2671] ss:$8 sm:$0x7]
        %v2674 = vlaneseq
        %v2675 = vshrl.u32 %v2674, 7
        %v2676 = vsub.s32 0, %v2675
        %v2677 = vrot.slane %v2672, %v2676
        %v2678 = vlaneseq
        %v2679 = vshrl.u32 %v2678, 7
        %v2680 = vsub.s32 1, %v2679
        %v2681 = vrot.slane %v2672, %v2680
        %v2682 = vlaneseq
        %v2683 = vshrl.u32 %v2682, 7
        %v2684 = vsub.s32 2, %v2683
        %v2685 = vrot.slane %v2672, %v2684
        %v2689 = vld [vmem:[%s1105] sm:$0x7f]
        %v2690 = vld [vmem:[%s1105 + $0x8] sm:$0x7f]
        %v2691 = vld [vmem:[%s1105 + $0x10] sm:$0x7f]
        %v2692 = vmul.f32 %v2689, %v2605
        %v2693 = vmul.f32 %v2690, %v2609
        %v2694 = vmul.f32 %v2691, %v2613
        %v2695 = vadd.f32 %v2546, %v2692
        %v2696 = vadd.f32 %v2547, %v2693
        %v2697 = vadd.f32 %v2548, %v2694
        %v2698 = vmul.f32 %v2689, %v2623
        %v2699 = vmul.f32 %v2690, %v2627
        %v2700 = vmul.f32 %v2691, %v2631
        %v2701 = vadd.f32 %v2515, %v2698
        %v2702 = vadd.f32 %v2516, %v2699
        %v2703 = vadd.f32 %v2517, %v2700
        %v2704 = vmul.f32 %v2689, %v2641
        %v2705 = vmul.f32 %v2690, %v2645
        %v2706 = vmul.f32 %v2691, %v2649
        %v2707 = vadd.f32 %v2484, %v2704
        %v2708 = vadd.f32 %v2485, %v2705
        %v2709 = vadd.f32 %v2486, %v2706
        %s2710 = scalar_lea.vmem [#allocation2], 576
        %v2711 = vld [vmem:[%s2710] sm:$0x7f]
        %v2712 = vld [vmem:[%s2710 + $0x8] sm:$0x7f]
        %v2713 = vld [vmem:[%s2710 + $0x10] sm:$0x7f]
        %v2714 = vmul.f32 %v2711, %v2605
        %v2715 = vmul.f32 %v2712, %v2609
        %v2716 = vmul.f32 %v2713, %v2613
        %v2717 = vadd.f32 %v2574, %v2714
        %v2718 = vadd.f32 %v2575, %v2715
        %v2719 = vadd.f32 %v2576, %v2716
        %v2720 = vmul.f32 %v2711, %v2623
        %v2721 = vmul.f32 %v2712, %v2627
        %v2722 = vmul.f32 %v2713, %v2631
        %v2723 = vadd.f32 %v2695, %v2720
        %v2724 = vadd.f32 %v2696, %v2721
        %v2725 = vadd.f32 %v2697, %v2722
        %v2726 = vmul.f32 %v2711, %v2641
        %v2727 = vmul.f32 %v2712, %v2645
        %v2728 = vmul.f32 %v2713, %v2649
        %v2729 = vadd.f32 %v2701, %v2726
        %v2730 = vadd.f32 %v2702, %v2727
        %v2731 = vadd.f32 %v2703, %v2728
        %v2732 = vmul.f32 %v2711, %v2659
        %v2733 = vmul.f32 %v2712, %v2663
        %v2734 = vmul.f32 %v2713, %v2667
        %v2735 = vadd.f32 %v2707, %v2732
        %v2736 = vadd.f32 %v2708, %v2733
        %v2737 = vadd.f32 %v2709, %v2734
        %s2738 = scalar_lea.vmem [#allocation2], 648
        %v2739 = vld [vmem:[%s2738] sm:$0x7f]
        %v2740 = vld [vmem:[%s2738 + $0x8] sm:$0x7f]
        %v2741 = vld [vmem:[%s2738 + $0x10] sm:$0x7f]
        %v2742 = vmul.f32 %v2739, %v2605
        %v2743 = vmul.f32 %v2740, %v2609
        %v2744 = vmul.f32 %v2741, %v2613
        %v2745 = vadd.f32 %v2596, %v2742
        %v2746 = vadd.f32 %v2597, %v2743
        %v2747 = vadd.f32 %v2598, %v2744
        %v2748 = vmul.f32 %v2739, %v2623
        %v2749 = vmul.f32 %v2740, %v2627
        %v2750 = vmul.f32 %v2741, %v2631
        %v2751 = vadd.f32 %v2717, %v2748
        %v2752 = vadd.f32 %v2718, %v2749
        %v2753 = vadd.f32 %v2719, %v2750
        %v2754 = vmul.f32 %v2739, %v2641
        %v2755 = vmul.f32 %v2740, %v2645
        %v2756 = vmul.f32 %v2741, %v2649
        %v2757 = vadd.f32 %v2723, %v2754
        %v2758 = vadd.f32 %v2724, %v2755
        %v2759 = vadd.f32 %v2725, %v2756
        %v2760 = vmul.f32 %v2739, %v2659
        %v2761 = vmul.f32 %v2740, %v2663
        %v2762 = vmul.f32 %v2741, %v2667
        %v2763 = vadd.f32 %v2729, %v2760
        %v2764 = vadd.f32 %v2730, %v2761
        %v2765 = vadd.f32 %v2731, %v2762
        %v2766 = vmul.f32 %v2739, %v2677
        %v2767 = vmul.f32 %v2740, %v2681
        %v2768 = vmul.f32 %v2741, %v2685
        %v2769 = vadd.f32 %v2735, %v2766
        %v2770 = vadd.f32 %v2736, %v2767
        %v2771 = vadd.f32 %v2737, %v2768
        %s2772 = scalar_lea.vmem [#allocation2], 720
        %v2773 = vld [vmem:[%s2772] sm:$0x7f]
        %v2774 = vld [vmem:[%s2772 + $0x8] sm:$0x7f]
        %v2775 = vld [vmem:[%s2772 + $0x10] sm:$0x7f]
        %v2776 = vmul.f32 %v2773, %v2605
        %v2777 = vmul.f32 %v2774, %v2609
        %v2778 = vmul.f32 %v2775, %v2613
        %v2779 = vadd.f32 %v2590, %v2776
        %v2780 = vadd.f32 %v2591, %v2777
        %v2781 = vadd.f32 %v2592, %v2778
        %v2782 = vmul.f32 %v2773, %v2623
        %v2783 = vmul.f32 %v2774, %v2627
        %v2784 = vmul.f32 %v2775, %v2631
        %v2785 = vadd.f32 %v2745, %v2782
        %v2786 = vadd.f32 %v2746, %v2783
        %v2787 = vadd.f32 %v2747, %v2784
        %v2788 = vmul.f32 %v2773, %v2641
        %v2789 = vmul.f32 %v2774, %v2645
        %v2790 = vmul.f32 %v2775, %v2649
        %v2791 = vadd.f32 %v2751, %v2788
        %v2792 = vadd.f32 %v2752, %v2789
        %v2793 = vadd.f32 %v2753, %v2790
        %v2794 = vmul.f32 %v2773, %v2659
        %v2795 = vmul.f32 %v2774, %v2663
        %v2796 = vmul.f32 %v2775, %v2667
        %v2797 = vadd.f32 %v2757, %v2794
        %v2798 = vadd.f32 %v2758, %v2795
        %v2799 = vadd.f32 %v2759, %v2796
        %v2800 = vmul.f32 %v2773, %v2677
        %v2801 = vmul.f32 %v2774, %v2681
        %v2802 = vmul.f32 %v2775, %v2685
        %v2803 = vadd.f32 %v2763, %v2800
        %v2804 = vadd.f32 %v2764, %v2801
        %v2805 = vadd.f32 %v2765, %v2802
        %s2806 = scalar_lea.vmem [#allocation2], 792
        %v2807 = vld [vmem:[%s2806] sm:$0x7f]
        %v2808 = vld [vmem:[%s2806 + $0x8] sm:$0x7f]
        %v2809 = vld [vmem:[%s2806 + $0x10] sm:$0x7f]
        %v2810 = vmul.f32 %v2807, %v2605
        %v2811 = vmul.f32 %v2808, %v2609
        %v2812 = vmul.f32 %v2809, %v2613
        %v2813 = vadd.f32 %v2584, %v2810
        %v2814 = vadd.f32 %v2585, %v2811
        %v2815 = vadd.f32 %v2586, %v2812
        %v2816 = vmul.f32 %v2807, %v2623
        %v2817 = vmul.f32 %v2808, %v2627
        %v2818 = vmul.f32 %v2809, %v2631
        %v2819 = vadd.f32 %v2779, %v2816
        %v2820 = vadd.f32 %v2780, %v2817
        %v2821 = vadd.f32 %v2781, %v2818
        %v2822 = vmul.f32 %v2807, %v2641
        %v2823 = vmul.f32 %v2808, %v2645
        %v2824 = vmul.f32 %v2809, %v2649
        %v2825 = vadd.f32 %v2785, %v2822
        %v2826 = vadd.f32 %v2786, %v2823
        %v2827 = vadd.f32 %v2787, %v2824
        %v2828 = vmul.f32 %v2807, %v2659
        %v2829 = vmul.f32 %v2808, %v2663
        %v2830 = vmul.f32 %v2809, %v2667
        %v2831 = vadd.f32 %v2791, %v2828
        %v2832 = vadd.f32 %v2792, %v2829
        %v2833 = vadd.f32 %v2793, %v2830
        %v2834 = vmul.f32 %v2807, %v2677
        %v2835 = vmul.f32 %v2808, %v2681
        %v2836 = vmul.f32 %v2809, %v2685
        %v2837 = vadd.f32 %v2797, %v2834
        %v2838 = vadd.f32 %v2798, %v2835
        %v2839 = vadd.f32 %v2799, %v2836
        %s2840 = scalar_lea.vmem [#allocation2], 864
        %v2841 = vld [vmem:[%s2840] sm:$0x7f]
        %v2842 = vld [vmem:[%s2840 + $0x8] sm:$0x7f]
        %v2843 = vld [vmem:[%s2840 + $0x10] sm:$0x7f]
        %v2844 = vmul.f32 %v2841, %v2623
        %v2845 = vmul.f32 %v2842, %v2627
        %v2846 = vmul.f32 %v2843, %v2631
        %v2847 = vadd.f32 %v2813, %v2844
        %v2848 = vadd.f32 %v2814, %v2845
        %v2849 = vadd.f32 %v2815, %v2846
        %v2850 = vmul.f32 %v2841, %v2641
        %v2851 = vmul.f32 %v2842, %v2645
        %v2852 = vmul.f32 %v2843, %v2649
        %v2853 = vadd.f32 %v2819, %v2850
        %v2854 = vadd.f32 %v2820, %v2851
        %v2855 = vadd.f32 %v2821, %v2852
        %v2856 = vmul.f32 %v2841, %v2659
        %v2857 = vmul.f32 %v2842, %v2663
        %v2858 = vmul.f32 %v2843, %v2667
        %v2859 = vadd.f32 %v2825, %v2856
        %v2860 = vadd.f32 %v2826, %v2857
        %v2861 = vadd.f32 %v2827, %v2858
        %v2862 = vmul.f32 %v2841, %v2677
        %v2863 = vmul.f32 %v2842, %v2681
        %v2864 = vmul.f32 %v2843, %v2685
        %v2865 = vadd.f32 %v2831, %v2862
        %v2866 = vadd.f32 %v2832, %v2863
        %v2867 = vadd.f32 %v2833, %v2864
        %s2868 = scalar_lea.vmem [#allocation2], 936
        %v2869 = vld [vmem:[%s2868] sm:$0x7f]
        %v2870 = vld [vmem:[%s2868 + $0x8] sm:$0x7f]
        %v2871 = vld [vmem:[%s2868 + $0x10] sm:$0x7f]
        %v2872 = vmul.f32 %v2869, %v2641
        %v2873 = vmul.f32 %v2870, %v2645
        %v2874 = vmul.f32 %v2871, %v2649
        %v2875 = vadd.f32 %v2847, %v2872
        %v2876 = vadd.f32 %v2848, %v2873
        %v2877 = vadd.f32 %v2849, %v2874
        %v2878 = vmul.f32 %v2869, %v2659
        %v2879 = vmul.f32 %v2870, %v2663
        %v2880 = vmul.f32 %v2871, %v2667
        %v2881 = vadd.f32 %v2853, %v2878
        %v2882 = vadd.f32 %v2854, %v2879
        %v2883 = vadd.f32 %v2855, %v2880
        %v2884 = vmul.f32 %v2869, %v2677
        %v2885 = vmul.f32 %v2870, %v2681
        %v2886 = vmul.f32 %v2871, %v2685
        %v2887 = vadd.f32 %v2859, %v2884
        %v2888 = vadd.f32 %v2860, %v2885
        %v2889 = vadd.f32 %v2861, %v2886
        %s2890 = scalar_lea.vmem [#allocation5], 2
        %v2891 = vld [vmem:[%s2890] ss:$8 sm:$0x7]
        %v2893 = vlaneseq
        %v2894 = vshrl.u32 %v2893, 7
        %v2895 = vsub.s32 0, %v2894
        %v2896 = vrot.slane %v2891, %v2895
        %v2897 = vlaneseq
        %v2898 = vshrl.u32 %v2897, 7
        %v2899 = vsub.s32 1, %v2898
        %v2900 = vrot.slane %v2891, %v2899
        %v2901 = vlaneseq
        %v2902 = vshrl.u32 %v2901, 7
        %v2903 = vsub.s32 2, %v2902
        %v2904 = vrot.slane %v2891, %v2903
        %s2908 = scalar_lea.vmem %s2347, 2 [#allocation5]
        %v2909 = vld [vmem:[%s2908] ss:$8 sm:$0x7]
        %v2911 = vlaneseq
        %v2912 = vshrl.u32 %v2911, 7
        %v2913 = vsub.s32 0, %v2912
        %v2914 = vrot.slane %v2909, %v2913
        %v2915 = vlaneseq
        %v2916 = vshrl.u32 %v2915, 7
        %v2917 = vsub.s32 1, %v2916
        %v2918 = vrot.slane %v2909, %v2917
        %v2919 = vlaneseq
        %v2920 = vshrl.u32 %v2919, 7
        %v2921 = vsub.s32 2, %v2920
        %v2922 = vrot.slane %v2909, %v2921
        %s2926 = scalar_lea.vmem %s2365, 2 [#allocation5]
        %v2927 = vld [vmem:[%s2926] ss:$8 sm:$0x7]
        %v2929 = vlaneseq
        %v2930 = vshrl.u32 %v2929, 7
        %v2931 = vsub.s32 0, %v2930
        %v2932 = vrot.slane %v2927, %v2931
        %v2933 = vlaneseq
        %v2934 = vshrl.u32 %v2933, 7
        %v2935 = vsub.s32 1, %v2934
        %v2936 = vrot.slane %v2927, %v2935
        %v2937 = vlaneseq
        %v2938 = vshrl.u32 %v2937, 7
        %v2939 = vsub.s32 2, %v2938
        %v2940 = vrot.slane %v2927, %v2939
        %s2944 = scalar_lea.vmem %s2383, 2 [#allocation5]
        %v2945 = vld [vmem:[%s2944] ss:$8 sm:$0x7]
        %v2947 = vlaneseq
        %v2948 = vshrl.u32 %v2947, 7
        %v2949 = vsub.s32 0, %v2948
        %v2950 = vrot.slane %v2945, %v2949
        %v2951 = vlaneseq
        %v2952 = vshrl.u32 %v2951, 7
        %v2953 = vsub.s32 1, %v2952
        %v2954 = vrot.slane %v2945, %v2953
        %v2955 = vlaneseq
        %v2956 = vshrl.u32 %v2955, 7
        %v2957 = vsub.s32 2, %v2956
        %v2958 = vrot.slane %v2945, %v2957
        %s2962 = scalar_lea.vmem %s2401, 2 [#allocation5]
        %v2963 = vld [vmem:[%s2962] ss:$8 sm:$0x7]
        %v2965 = vlaneseq
        %v2966 = vshrl.u32 %v2965, 7
        %v2967 = vsub.s32 0, %v2966
        %v2968 = vrot.slane %v2963, %v2967
        %v2969 = vlaneseq
        %v2970 = vshrl.u32 %v2969, 7
        %v2971 = vsub.s32 1, %v2970
        %v2972 = vrot.slane %v2963, %v2971
        %v2973 = vlaneseq
        %v2974 = vshrl.u32 %v2973, 7
        %v2975 = vsub.s32 2, %v2974
        %v2976 = vrot.slane %v2963, %v2975
        %v2980 = vld [vmem:[%s1529] sm:$0x7f]
        %v2981 = vld [vmem:[%s1529 + $0x8] sm:$0x7f]
        %v2982 = vld [vmem:[%s1529 + $0x10] sm:$0x7f]
        %v2983 = vmul.f32 %v2980, %v2896
        %v2984 = vmul.f32 %v2981, %v2900
        %v2985 = vmul.f32 %v2982, %v2904
        %v2986 = vadd.f32 %v2837, %v2983
        %v2987 = vadd.f32 %v2838, %v2984
        %v2988 = vadd.f32 %v2839, %v2985
        %v2989 = vmul.f32 %v2980, %v2914
        %v2990 = vmul.f32 %v2981, %v2918
        %v2991 = vmul.f32 %v2982, %v2922
        %v2992 = vadd.f32 %v2803, %v2989
        %v2993 = vadd.f32 %v2804, %v2990
        %v2994 = vadd.f32 %v2805, %v2991
        %v2995 = vmul.f32 %v2980, %v2932
        %v2996 = vmul.f32 %v2981, %v2936
        %v2997 = vmul.f32 %v2982, %v2940
        %v2998 = vadd.f32 %v2769, %v2995
        %v2999 = vadd.f32 %v2770, %v2996
        %v3000 = vadd.f32 %v2771, %v2997
        %s3001 = scalar_lea.vmem [#allocation2], 1080
        %v3002 = vld [vmem:[%s3001] sm:$0x7f]
        %v3003 = vld [vmem:[%s3001 + $0x8] sm:$0x7f]
        %v3004 = vld [vmem:[%s3001 + $0x10] sm:$0x7f]
        %v3005 = vmul.f32 %v3002, %v2896
        %v3006 = vmul.f32 %v3003, %v2900
        %v3007 = vmul.f32 %v3004, %v2904
        %v3008 = vadd.f32 %v2865, %v3005
        %v3009 = vadd.f32 %v2866, %v3006
        %v3010 = vadd.f32 %v2867, %v3007
        %v3011 = vmul.f32 %v3002, %v2914
        %v3012 = vmul.f32 %v3003, %v2918
        %v3013 = vmul.f32 %v3004, %v2922
        %v3014 = vadd.f32 %v2986, %v3011
        %v3015 = vadd.f32 %v2987, %v3012
        %v3016 = vadd.f32 %v2988, %v3013
        %v3017 = vmul.f32 %v3002, %v2932
        %v3018 = vmul.f32 %v3003, %v2936
        %v3019 = vmul.f32 %v3004, %v2940
        %v3020 = vadd.f32 %v2992, %v3017
        %v3021 = vadd.f32 %v2993, %v3018
        %v3022 = vadd.f32 %v2994, %v3019
        %v3023 = vmul.f32 %v3002, %v2950
        %v3024 = vmul.f32 %v3003, %v2954
        %v3025 = vmul.f32 %v3004, %v2958
        %v3026 = vadd.f32 %v2998, %v3023
        %v3027 = vadd.f32 %v2999, %v3024
        %v3028 = vadd.f32 %v3000, %v3025
        %s3029 = scalar_lea.vmem [#allocation2], 1152
        %v3030 = vld [vmem:[%s3029] sm:$0x7f]
        %v3031 = vld [vmem:[%s3029 + $0x8] sm:$0x7f]
        %v3032 = vld [vmem:[%s3029 + $0x10] sm:$0x7f]
        %v3033 = vmul.f32 %v3030, %v2896
        %v3034 = vmul.f32 %v3031, %v2900
        %v3035 = vmul.f32 %v3032, %v2904
        %v3036 = vadd.f32 %v2887, %v3033
        %v3037 = vadd.f32 %v2888, %v3034
        %v3038 = vadd.f32 %v2889, %v3035
        %v3039 = vmul.f32 %v3030, %v2914
        %v3040 = vmul.f32 %v3031, %v2918
        %v3041 = vmul.f32 %v3032, %v2922
        %v3042 = vadd.f32 %v3008, %v3039
        %v3043 = vadd.f32 %v3009, %v3040
        %v3044 = vadd.f32 %v3010, %v3041
        %v3045 = vmul.f32 %v3030, %v2932
        %v3046 = vmul.f32 %v3031, %v2936
        %v3047 = vmul.f32 %v3032, %v2940
        %v3048 = vadd.f32 %v3014, %v3045
        %v3049 = vadd.f32 %v3015, %v3046
        %v3050 = vadd.f32 %v3016, %v3047
        %v3051 = vmul.f32 %v3030, %v2950
        %v3052 = vmul.f32 %v3031, %v2954
        %v3053 = vmul.f32 %v3032, %v2958
        %v3054 = vadd.f32 %v3020, %v3051
        %v3055 = vadd.f32 %v3021, %v3052
        %v3056 = vadd.f32 %v3022, %v3053
        %v3057 = vmul.f32 %v3030, %v2968
        %v3058 = vmul.f32 %v3031, %v2972
        %v3059 = vmul.f32 %v3032, %v2976
        %v3060 = vadd.f32 %v3026, %v3057
        %v3061 = vadd.f32 %v3027, %v3058
        %v3062 = vadd.f32 %v3028, %v3059
        %s3063 = scalar_lea.vmem [#allocation2], 1224
        %v3064 = vld [vmem:[%s3063] sm:$0x7f]
        %v3065 = vld [vmem:[%s3063 + $0x8] sm:$0x7f]
        %v3066 = vld [vmem:[%s3063 + $0x10] sm:$0x7f]
        %v3067 = vmul.f32 %v3064, %v2896
        %v3068 = vmul.f32 %v3065, %v2900
        %v3069 = vmul.f32 %v3066, %v2904
        %v3070 = vadd.f32 %v2881, %v3067
        %v3071 = vadd.f32 %v2882, %v3068
        %v3072 = vadd.f32 %v2883, %v3069
        %v3073 = vmul.f32 %v3064, %v2914
        %v3074 = vmul.f32 %v3065, %v2918
        %v3075 = vmul.f32 %v3066, %v2922
        %v3076 = vadd.f32 %v3036, %v3073
        %v3077 = vadd.f32 %v3037, %v3074
        %v3078 = vadd.f32 %v3038, %v3075
        %v3079 = vmul.f32 %v3064, %v2932
        %v3080 = vmul.f32 %v3065, %v2936
        %v3081 = vmul.f32 %v3066, %v2940
        %v3082 = vadd.f32 %v3042, %v3079
        %v3083 = vadd.f32 %v3043, %v3080
        %v3084 = vadd.f32 %v3044, %v3081
        %v3085 = vmul.f32 %v3064, %v2950
        %v3086 = vmul.f32 %v3065, %v2954
        %v3087 = vmul.f32 %v3066, %v2958
        %v3088 = vadd.f32 %v3048, %v3085
        %v3089 = vadd.f32 %v3049, %v3086
        %v3090 = vadd.f32 %v3050, %v3087
        %v3091 = vmul.f32 %v3064, %v2968
        %v3092 = vmul.f32 %v3065, %v2972
        %v3093 = vmul.f32 %v3066, %v2976
        %v3094 = vadd.f32 %v3054, %v3091
        %v3095 = vadd.f32 %v3055, %v3092
        %v3096 = vadd.f32 %v3056, %v3093
        %s3097 = scalar_lea.vmem [#allocation2], 1296
        %v3098 = vld [vmem:[%s3097] sm:$0x7f]
        %v3099 = vld [vmem:[%s3097 + $0x8] sm:$0x7f]
        %v3100 = vld [vmem:[%s3097 + $0x10] sm:$0x7f]
        %v3101 = vmul.f32 %v3098, %v2896
        %v3102 = vmul.f32 %v3099, %v2900
        %v3103 = vmul.f32 %v3100, %v2904
        %v3104 = vadd.f32 %v2875, %v3101
        %v3105 = vadd.f32 %v2876, %v3102
        %v3106 = vadd.f32 %v2877, %v3103
        %v3107 = vmul.f32 %v3098, %v2914
        %v3108 = vmul.f32 %v3099, %v2918
        %v3109 = vmul.f32 %v3100, %v2922
        %v3110 = vadd.f32 %v3070, %v3107
        %v3111 = vadd.f32 %v3071, %v3108
        %v3112 = vadd.f32 %v3072, %v3109
        %v3113 = vmul.f32 %v3098, %v2932
        %v3114 = vmul.f32 %v3099, %v2936
        %v3115 = vmul.f32 %v3100, %v2940
        %v3116 = vadd.f32 %v3076, %v3113
        %v3117 = vadd.f32 %v3077, %v3114
        %v3118 = vadd.f32 %v3078, %v3115
        %v3119 = vmul.f32 %v3098, %v2950
        %v3120 = vmul.f32 %v3099, %v2954
        %v3121 = vmul.f32 %v3100, %v2958
        %v3122 = vadd.f32 %v3082, %v3119
        %v3123 = vadd.f32 %v3083, %v3120
        %v3124 = vadd.f32 %v3084, %v3121
        %v3125 = vmul.f32 %v3098, %v2968
        %v3126 = vmul.f32 %v3099, %v2972
        %v3127 = vmul.f32 %v3100, %v2976
        %v3128 = vadd.f32 %v3088, %v3125
        %v3129 = vadd.f32 %v3089, %v3126
        %v3130 = vadd.f32 %v3090, %v3127
        %s3131 = scalar_lea.vmem [#allocation2], 1368
        %v3132 = vld [vmem:[%s3131] sm:$0x7f]
        %v3133 = vld [vmem:[%s3131 + $0x8] sm:$0x7f]
        %v3134 = vld [vmem:[%s3131 + $0x10] sm:$0x7f]
        %v3135 = vmul.f32 %v3132, %v2914
        %v3136 = vmul.f32 %v3133, %v2918
        %v3137 = vmul.f32 %v3134, %v2922
        %v3138 = vadd.f32 %v3104, %v3135
        %v3139 = vadd.f32 %v3105, %v3136
        %v3140 = vadd.f32 %v3106, %v3137
        %v3141 = vmul.f32 %v3132, %v2932
        %v3142 = vmul.f32 %v3133, %v2936
        %v3143 = vmul.f32 %v3134, %v2940
        %v3144 = vadd.f32 %v3110, %v3141
        %v3145 = vadd.f32 %v3111, %v3142
        %v3146 = vadd.f32 %v3112, %v3143
        %v3147 = vmul.f32 %v3132, %v2950
        %v3148 = vmul.f32 %v3133, %v2954
        %v3149 = vmul.f32 %v3134, %v2958
        %v3150 = vadd.f32 %v3116, %v3147
        %v3151 = vadd.f32 %v3117, %v3148
        %v3152 = vadd.f32 %v3118, %v3149
        %v3153 = vmul.f32 %v3132, %v2968
        %v3154 = vmul.f32 %v3133, %v2972
        %v3155 = vmul.f32 %v3134, %v2976
        %v3156 = vadd.f32 %v3122, %v3153
        %v3157 = vadd.f32 %v3123, %v3154
        %v3158 = vadd.f32 %v3124, %v3155
        %s3159 = scalar_lea.vmem [#allocation2], 1440
        %v3160 = vld [vmem:[%s3159] sm:$0x7f]
        %v3161 = vld [vmem:[%s3159 + $0x8] sm:$0x7f]
        %v3162 = vld [vmem:[%s3159 + $0x10] sm:$0x7f]
        %v3163 = vmul.f32 %v3160, %v2932
        %v3164 = vmul.f32 %v3161, %v2936
        %v3165 = vmul.f32 %v3162, %v2940
        %v3166 = vadd.f32 %v3138, %v3163
        %v3167 = vadd.f32 %v3139, %v3164
        %v3168 = vadd.f32 %v3140, %v3165
        %v3169 = vmul.f32 %v3160, %v2950
        %v3170 = vmul.f32 %v3161, %v2954
        %v3171 = vmul.f32 %v3162, %v2958
        %v3172 = vadd.f32 %v3144, %v3169
        %v3173 = vadd.f32 %v3145, %v3170
        %v3174 = vadd.f32 %v3146, %v3171
        %v3175 = vmul.f32 %v3160, %v2968
        %v3176 = vmul.f32 %v3161, %v2972
        %v3177 = vmul.f32 %v3162, %v2976
        %v3178 = vadd.f32 %v3150, %v3175
        %v3179 = vadd.f32 %v3151, %v3176
        %v3180 = vadd.f32 %v3152, %v3177
        %s3181 = scalar_lea.vmem [#allocation5], 3
        %v3182 = vld [vmem:[%s3181] ss:$8 sm:$0x7]
        %v3184 = vlaneseq
        %v3185 = vshrl.u32 %v3184, 7
        %v3186 = vsub.s32 0, %v3185
        %v3187 = vrot.slane %v3182, %v3186
        %v3188 = vlaneseq
        %v3189 = vshrl.u32 %v3188, 7
        %v3190 = vsub.s32 1, %v3189
        %v3191 = vrot.slane %v3182, %v3190
        %v3192 = vlaneseq
        %v3193 = vshrl.u32 %v3192, 7
        %v3194 = vsub.s32 2, %v3193
        %v3195 = vrot.slane %v3182, %v3194
        %s3199 = scalar_lea.vmem %s2347, 3 [#allocation5]
        %v3200 = vld [vmem:[%s3199] ss:$8 sm:$0x7]
        %v3202 = vlaneseq
        %v3203 = vshrl.u32 %v3202, 7
        %v3204 = vsub.s32 0, %v3203
        %v3205 = vrot.slane %v3200, %v3204
        %v3206 = vlaneseq
        %v3207 = vshrl.u32 %v3206, 7
        %v3208 = vsub.s32 1, %v3207
        %v3209 = vrot.slane %v3200, %v3208
        %v3210 = vlaneseq
        %v3211 = vshrl.u32 %v3210, 7
        %v3212 = vsub.s32 2, %v3211
        %v3213 = vrot.slane %v3200, %v3212
        %s3217 = scalar_lea.vmem %s2365, 3 [#allocation5]
        %v3218 = vld [vmem:[%s3217] ss:$8 sm:$0x7]
        %v3220 = vlaneseq
        %v3221 = vshrl.u32 %v3220, 7
        %v3222 = vsub.s32 0, %v3221
        %v3223 = vrot.slane %v3218, %v3222
        %v3224 = vlaneseq
        %v3225 = vshrl.u32 %v3224, 7
        %v3226 = vsub.s32 1, %v3225
        %v3227 = vrot.slane %v3218, %v3226
        %v3228 = vlaneseq
        %v3229 = vshrl.u32 %v3228, 7
        %v3230 = vsub.s32 2, %v3229
        %v3231 = vrot.slane %v3218, %v3230
        %s3235 = scalar_lea.vmem %s2383, 3 [#allocation5]
        %v3236 = vld [vmem:[%s3235] ss:$8 sm:$0x7]
        %v3238 = vlaneseq
        %v3239 = vshrl.u32 %v3238, 7
        %v3240 = vsub.s32 0, %v3239
        %v3241 = vrot.slane %v3236, %v3240
        %v3242 = vlaneseq
        %v3243 = vshrl.u32 %v3242, 7
        %v3244 = vsub.s32 1, %v3243
        %v3245 = vrot.slane %v3236, %v3244
        %v3246 = vlaneseq
        %v3247 = vshrl.u32 %v3246, 7
        %v3248 = vsub.s32 2, %v3247
        %v3249 = vrot.slane %v3236, %v3248
        %s3253 = scalar_lea.vmem %s2401, 3 [#allocation5]
        %v3254 = vld [vmem:[%s3253] ss:$8 sm:$0x7]
        %v3256 = vlaneseq
        %v3257 = vshrl.u32 %v3256, 7
        %v3258 = vsub.s32 0, %v3257
        %v3259 = vrot.slane %v3254, %v3258
        %v3260 = vlaneseq
        %v3261 = vshrl.u32 %v3260, 7
        %v3262 = vsub.s32 1, %v3261
        %v3263 = vrot.slane %v3254, %v3262
        %v3264 = vlaneseq
        %v3265 = vshrl.u32 %v3264, 7
        %v3266 = vsub.s32 2, %v3265
        %v3267 = vrot.slane %v3254, %v3266
        %v3271 = vld [vmem:[%s1593] sm:$0x7f]
        %v3272 = vld [vmem:[%s1593 + $0x8] sm:$0x7f]
        %v3273 = vld [vmem:[%s1593 + $0x10] sm:$0x7f]
        %v3274 = vmul.f32 %v3271, %v3187
        %v3275 = vmul.f32 %v3272, %v3191
        %v3276 = vmul.f32 %v3273, %v3195
        %v3277 = vadd.f32 %v3128, %v3274
        %v3278 = vadd.f32 %v3129, %v3275
        %v3279 = vadd.f32 %v3130, %v3276
        %v3280 = vmul.f32 %v3271, %v3205
        %v3281 = vmul.f32 %v3272, %v3209
        %v3282 = vmul.f32 %v3273, %v3213
        %v3283 = vadd.f32 %v3094, %v3280
        %v3284 = vadd.f32 %v3095, %v3281
        %v3285 = vadd.f32 %v3096, %v3282
        %v3286 = vmul.f32 %v3271, %v3223
        %v3287 = vmul.f32 %v3272, %v3227
        %v3288 = vmul.f32 %v3273, %v3231
        %v3289 = vadd.f32 %v3060, %v3286
        %v3290 = vadd.f32 %v3061, %v3287
        %v3291 = vadd.f32 %v3062, %v3288
        %s3292 = scalar_lea.vmem [#allocation2], 1584
        %v3293 = vld [vmem:[%s3292] sm:$0x7f]
        %v3294 = vld [vmem:[%s3292 + $0x8] sm:$0x7f]
        %v3295 = vld [vmem:[%s3292 + $0x10] sm:$0x7f]
        %v3296 = vmul.f32 %v3293, %v3187
        %v3297 = vmul.f32 %v3294, %v3191
        %v3298 = vmul.f32 %v3295, %v3195
        %v3299 = vadd.f32 %v3156, %v3296
        %v3300 = vadd.f32 %v3157, %v3297
        %v3301 = vadd.f32 %v3158, %v3298
        %v3302 = vmul.f32 %v3293, %v3205
        %v3303 = vmul.f32 %v3294, %v3209
        %v3304 = vmul.f32 %v3295, %v3213
        %v3305 = vadd.f32 %v3277, %v3302
        %v3306 = vadd.f32 %v3278, %v3303
        %v3307 = vadd.f32 %v3279, %v3304
        %v3308 = vmul.f32 %v3293, %v3223
        %v3309 = vmul.f32 %v3294, %v3227
        %v3310 = vmul.f32 %v3295, %v3231
        %v3311 = vadd.f32 %v3283, %v3308
        %v3312 = vadd.f32 %v3284, %v3309
        %v3313 = vadd.f32 %v3285, %v3310
        %v3314 = vmul.f32 %v3293, %v3241
        %v3315 = vmul.f32 %v3294, %v3245
        %v3316 = vmul.f32 %v3295, %v3249
        %v3317 = vadd.f32 %v3289, %v3314
        %v3318 = vadd.f32 %v3290, %v3315
        %v3319 = vadd.f32 %v3291, %v3316
        %s3320 = scalar_lea.vmem [#allocation2], 1656
        %v3321 = vld [vmem:[%s3320] sm:$0x7f]
        %v3322 = vld [vmem:[%s3320 + $0x8] sm:$0x7f]
        %v3323 = vld [vmem:[%s3320 + $0x10] sm:$0x7f]
        %v3324 = vmul.f32 %v3321, %v3187
        %v3325 = vmul.f32 %v3322, %v3191
        %v3326 = vmul.f32 %v3323, %v3195
        %v3327 = vadd.f32 %v3178, %v3324
        %v3328 = vadd.f32 %v3179, %v3325
        %v3329 = vadd.f32 %v3180, %v3326
        %v3330 = vmul.f32 %v3321, %v3205
        %v3331 = vmul.f32 %v3322, %v3209
        %v3332 = vmul.f32 %v3323, %v3213
        %v3333 = vadd.f32 %v3299, %v3330
        %v3334 = vadd.f32 %v3300, %v3331
        %v3335 = vadd.f32 %v3301, %v3332
        %v3336 = vmul.f32 %v3321, %v3223
        %v3337 = vmul.f32 %v3322, %v3227
        %v3338 = vmul.f32 %v3323, %v3231
        %v3339 = vadd.f32 %v3305, %v3336
        %v3340 = vadd.f32 %v3306, %v3337
        %v3341 = vadd.f32 %v3307, %v3338
        %v3342 = vmul.f32 %v3321, %v3241
        %v3343 = vmul.f32 %v3322, %v3245
        %v3344 = vmul.f32 %v3323, %v3249
        %v3345 = vadd.f32 %v3311, %v3342
        %v3346 = vadd.f32 %v3312, %v3343
        %v3347 = vadd.f32 %v3313, %v3344
        %v3348 = vmul.f32 %v3321, %v3259
        %v3349 = vmul.f32 %v3322, %v3263
        %v3350 = vmul.f32 %v3323, %v3267
        %v3351 = vadd.f32 %v3317, %v3348
        %v3352 = vadd.f32 %v3318, %v3349
        %v3353 = vadd.f32 %v3319, %v3350
        %s3354 = scalar_lea.vmem [#allocation2], 1728
        %v3355 = vld [vmem:[%s3354] sm:$0x7f]
        %v3356 = vld [vmem:[%s3354 + $0x8] sm:$0x7f]
        %v3357 = vld [vmem:[%s3354 + $0x10] sm:$0x7f]
        %v3358 = vmul.f32 %v3355, %v3187
        %v3359 = vmul.f32 %v3356, %v3191
        %v3360 = vmul.f32 %v3357, %v3195
        %v3361 = vadd.f32 %v3172, %v3358
        %v3362 = vadd.f32 %v3173, %v3359
        %v3363 = vadd.f32 %v3174, %v3360
        %v3364 = vmul.f32 %v3355, %v3205
        %v3365 = vmul.f32 %v3356, %v3209
        %v3366 = vmul.f32 %v3357, %v3213
        %v3367 = vadd.f32 %v3327, %v3364
        %v3368 = vadd.f32 %v3328, %v3365
        %v3369 = vadd.f32 %v3329, %v3366
        %v3370 = vmul.f32 %v3355, %v3223
        %v3371 = vmul.f32 %v3356, %v3227
        %v3372 = vmul.f32 %v3357, %v3231
        %v3373 = vadd.f32 %v3333, %v3370
        %v3374 = vadd.f32 %v3334, %v3371
        %v3375 = vadd.f32 %v3335, %v3372
        %v3376 = vmul.f32 %v3355, %v3241
        %v3377 = vmul.f32 %v3356, %v3245
        %v3378 = vmul.f32 %v3357, %v3249
        %v3379 = vadd.f32 %v3339, %v3376
        %v3380 = vadd.f32 %v3340, %v3377
        %v3381 = vadd.f32 %v3341, %v3378
        %v3382 = vmul.f32 %v3355, %v3259
        %v3383 = vmul.f32 %v3356, %v3263
        %v3384 = vmul.f32 %v3357, %v3267
        %v3385 = vadd.f32 %v3345, %v3382
        %v3386 = vadd.f32 %v3346, %v3383
        %v3387 = vadd.f32 %v3347, %v3384
        %s3388 = scalar_lea.vmem [#allocation2], 1800
        %v3389 = vld [vmem:[%s3388] sm:$0x7f]
        %v3390 = vld [vmem:[%s3388 + $0x8] sm:$0x7f]
        %v3391 = vld [vmem:[%s3388 + $0x10] sm:$0x7f]
        %v3392 = vmul.f32 %v3389, %v3187
        %v3393 = vmul.f32 %v3390, %v3191
        %v3394 = vmul.f32 %v3391, %v3195
        %v3395 = vadd.f32 %v3166, %v3392
        %v3396 = vadd.f32 %v3167, %v3393
        %v3397 = vadd.f32 %v3168, %v3394
        %v3398 = vmul.f32 %v3389, %v3205
        %v3399 = vmul.f32 %v3390, %v3209
        %v3400 = vmul.f32 %v3391, %v3213
        %v3401 = vadd.f32 %v3361, %v3398
        %v3402 = vadd.f32 %v3362, %v3399
        %v3403 = vadd.f32 %v3363, %v3400
        %v3404 = vmul.f32 %v3389, %v3223
        %v3405 = vmul.f32 %v3390, %v3227
        %v3406 = vmul.f32 %v3391, %v3231
        %v3407 = vadd.f32 %v3367, %v3404
        %v3408 = vadd.f32 %v3368, %v3405
        %v3409 = vadd.f32 %v3369, %v3406
        %v3410 = vmul.f32 %v3389, %v3241
        %v3411 = vmul.f32 %v3390, %v3245
        %v3412 = vmul.f32 %v3391, %v3249
        %v3413 = vadd.f32 %v3373, %v3410
        %v3414 = vadd.f32 %v3374, %v3411
        %v3415 = vadd.f32 %v3375, %v3412
        %v3416 = vmul.f32 %v3389, %v3259
        %v3417 = vmul.f32 %v3390, %v3263
        %v3418 = vmul.f32 %v3391, %v3267
        %v3419 = vadd.f32 %v3379, %v3416
        %v3420 = vadd.f32 %v3380, %v3417
        %v3421 = vadd.f32 %v3381, %v3418
        %s3422 = scalar_lea.vmem [#allocation2], 1872
        %v3423 = vld [vmem:[%s3422] sm:$0x7f]
        %v3424 = vld [vmem:[%s3422 + $0x8] sm:$0x7f]
        %v3425 = vld [vmem:[%s3422 + $0x10] sm:$0x7f]
        %v3426 = vmul.f32 %v3423, %v3205
        %v3427 = vmul.f32 %v3424, %v3209
        %v3428 = vmul.f32 %v3425, %v3213
        %v3429 = vadd.f32 %v3395, %v3426
        %v3430 = vadd.f32 %v3396, %v3427
        %v3431 = vadd.f32 %v3397, %v3428
        %v3432 = vmul.f32 %v3423, %v3223
        %v3433 = vmul.f32 %v3424, %v3227
        %v3434 = vmul.f32 %v3425, %v3231
        %v3435 = vadd.f32 %v3401, %v3432
        %v3436 = vadd.f32 %v3402, %v3433
        %v3437 = vadd.f32 %v3403, %v3434
        %v3438 = vmul.f32 %v3423, %v3241
        %v3439 = vmul.f32 %v3424, %v3245
        %v3440 = vmul.f32 %v3425, %v3249
        %v3441 = vadd.f32 %v3407, %v3438
        %v3442 = vadd.f32 %v3408, %v3439
        %v3443 = vadd.f32 %v3409, %v3440
        %v3444 = vmul.f32 %v3423, %v3259
        %v3445 = vmul.f32 %v3424, %v3263
        %v3446 = vmul.f32 %v3425, %v3267
        %v3447 = vadd.f32 %v3413, %v3444
        %v3448 = vadd.f32 %v3414, %v3445
        %v3449 = vadd.f32 %v3415, %v3446
        %s3450 = scalar_lea.vmem [#allocation2], 1944
        %v3451 = vld [vmem:[%s3450] sm:$0x7f]
        %v3452 = vld [vmem:[%s3450 + $0x8] sm:$0x7f]
        %v3453 = vld [vmem:[%s3450 + $0x10] sm:$0x7f]
        %v3454 = vmul.f32 %v3451, %v3223
        %v3455 = vmul.f32 %v3452, %v3227
        %v3456 = vmul.f32 %v3453, %v3231
        %v3457 = vadd.f32 %v3429, %v3454
        %v3458 = vadd.f32 %v3430, %v3455
        %v3459 = vadd.f32 %v3431, %v3456
        %v3460 = vmul.f32 %v3451, %v3241
        %v3461 = vmul.f32 %v3452, %v3245
        %v3462 = vmul.f32 %v3453, %v3249
        %v3463 = vadd.f32 %v3435, %v3460
        %v3464 = vadd.f32 %v3436, %v3461
        %v3465 = vadd.f32 %v3437, %v3462
        %v3466 = vmul.f32 %v3451, %v3259
        %v3467 = vmul.f32 %v3452, %v3263
        %v3468 = vmul.f32 %v3453, %v3267
        %v3469 = vadd.f32 %v3441, %v3466
        %v3470 = vadd.f32 %v3442, %v3467
        %v3471 = vadd.f32 %v3443, %v3468
        %s3472 = scalar_lea.vmem [#allocation5], 4
        %v3473 = vld [vmem:[%s3472] ss:$8 sm:$0x7]
        %v3475 = vlaneseq
        %v3476 = vshrl.u32 %v3475, 7
        %v3477 = vsub.s32 0, %v3476
        %v3478 = vrot.slane %v3473, %v3477
        %v3479 = vlaneseq
        %v3480 = vshrl.u32 %v3479, 7
        %v3481 = vsub.s32 1, %v3480
        %v3482 = vrot.slane %v3473, %v3481
        %v3483 = vlaneseq
        %v3484 = vshrl.u32 %v3483, 7
        %v3485 = vsub.s32 2, %v3484
        %v3486 = vrot.slane %v3473, %v3485
        %s3490 = scalar_lea.vmem %s2347, 4 [#allocation5]
        %v3491 = vld [vmem:[%s3490] ss:$8 sm:$0x7]
        %v3493 = vlaneseq
        %v3494 = vshrl.u32 %v3493, 7
        %v3495 = vsub.s32 0, %v3494
        %v3496 = vrot.slane %v3491, %v3495
        %v3497 = vlaneseq
        %v3498 = vshrl.u32 %v3497, 7
        %v3499 = vsub.s32 1, %v3498
        %v3500 = vrot.slane %v3491, %v3499
        %v3501 = vlaneseq
        %v3502 = vshrl.u32 %v3501, 7
        %v3503 = vsub.s32 2, %v3502
        %v3504 = vrot.slane %v3491, %v3503
        %s3508 = scalar_lea.vmem %s2365, 4 [#allocation5]
        %v3509 = vld [vmem:[%s3508] ss:$8 sm:$0x7]
        %v3511 = vlaneseq
        %v3512 = vshrl.u32 %v3511, 7
        %v3513 = vsub.s32 0, %v3512
        %v3514 = vrot.slane %v3509, %v3513
        %v3515 = vlaneseq
        %v3516 = vshrl.u32 %v3515, 7
        %v3517 = vsub.s32 1, %v3516
        %v3518 = vrot.slane %v3509, %v3517
        %v3519 = vlaneseq
        %v3520 = vshrl.u32 %v3519, 7
        %v3521 = vsub.s32 2, %v3520
        %v3522 = vrot.slane %v3509, %v3521
        %s3526 = scalar_lea.vmem %s2383, 4 [#allocation5]
        %v3527 = vld [vmem:[%s3526] ss:$8 sm:$0x7]
        %v3529 = vlaneseq
        %v3530 = vshrl.u32 %v3529, 7
        %v3531 = vsub.s32 0, %v3530
        %v3532 = vrot.slane %v3527, %v3531
        %v3533 = vlaneseq
        %v3534 = vshrl.u32 %v3533, 7
        %v3535 = vsub.s32 1, %v3534
        %v3536 = vrot.slane %v3527, %v3535
        %v3537 = vlaneseq
        %v3538 = vshrl.u32 %v3537, 7
        %v3539 = vsub.s32 2, %v3538
        %v3540 = vrot.slane %v3527, %v3539
        %s3544 = scalar_lea.vmem %s2401, 4 [#allocation5]
        %v3545 = vld [vmem:[%s3544] ss:$8 sm:$0x7]
        %v3547 = vlaneseq
        %v3548 = vshrl.u32 %v3547, 7
        %v3549 = vsub.s32 0, %v3548
        %v3550 = vrot.slane %v3545, %v3549
        %v3551 = vlaneseq
        %v3552 = vshrl.u32 %v3551, 7
        %v3553 = vsub.s32 1, %v3552
        %v3554 = vrot.slane %v3545, %v3553
        %v3555 = vlaneseq
        %v3556 = vshrl.u32 %v3555, 7
        %v3557 = vsub.s32 2, %v3556
        %v3558 = vrot.slane %v3545, %v3557
        %v3562 = vld [vmem:[%s1951] sm:$0x7f]
        %v3563 = vld [vmem:[%s1951 + $0x8] sm:$0x7f]
        %v3564 = vld [vmem:[%s1951 + $0x10] sm:$0x7f]
        %v3565 = vmul.f32 %v3562, %v3478
        %v3566 = vmul.f32 %v3563, %v3482
        %v3567 = vmul.f32 %v3564, %v3486
        %v3568 = vadd.f32 %v3419, %v3565
        %v3569 = vadd.f32 %v3420, %v3566
        %v3570 = vadd.f32 %v3421, %v3567
        %v3571 = vmul.f32 %v3562, %v3496
        %v3572 = vmul.f32 %v3563, %v3500
        %v3573 = vmul.f32 %v3564, %v3504
        %v3574 = vadd.f32 %v3385, %v3571
        %v3575 = vadd.f32 %v3386, %v3572
        %v3576 = vadd.f32 %v3387, %v3573
        %v3577 = vmul.f32 %v3562, %v3514
        %v3578 = vmul.f32 %v3563, %v3518
        %v3579 = vmul.f32 %v3564, %v3522
        %v3580 = vadd.f32 %v3351, %v3577
        %v3581 = vadd.f32 %v3352, %v3578
        %v3582 = vadd.f32 %v3353, %v3579
        %s3583 = scalar_lea.vmem [#allocation2], 2088
        %v3584 = vld [vmem:[%s3583] sm:$0x7f]
        %v3585 = vld [vmem:[%s3583 + $0x8] sm:$0x7f]
        %v3586 = vld [vmem:[%s3583 + $0x10] sm:$0x7f]
        %v3587 = vmul.f32 %v3584, %v3478
        %v3588 = vmul.f32 %v3585, %v3482
        %v3589 = vmul.f32 %v3586, %v3486
        %v3590 = vadd.f32 %v3447, %v3587
        %v3591 = vadd.f32 %v3448, %v3588
        %v3592 = vadd.f32 %v3449, %v3589
        %v3593 = vmul.f32 %v3584, %v3496
        %v3594 = vmul.f32 %v3585, %v3500
        %v3595 = vmul.f32 %v3586, %v3504
        %v3596 = vadd.f32 %v3568, %v3593
        %v3597 = vadd.f32 %v3569, %v3594
        %v3598 = vadd.f32 %v3570, %v3595
        %v3599 = vmul.f32 %v3584, %v3514
        %v3600 = vmul.f32 %v3585, %v3518
        %v3601 = vmul.f32 %v3586, %v3522
        %v3602 = vadd.f32 %v3574, %v3599
        %v3603 = vadd.f32 %v3575, %v3600
        %v3604 = vadd.f32 %v3576, %v3601
        %v3605 = vmul.f32 %v3584, %v3532
        %v3606 = vmul.f32 %v3585, %v3536
        %v3607 = vmul.f32 %v3586, %v3540
        %v3608 = vadd.f32 %v3580, %v3605
        %v3609 = vadd.f32 %v3581, %v3606
        %v3610 = vadd.f32 %v3582, %v3607
        %s3611 = scalar_lea.vmem [#allocation2], 2160
        %v3612 = vld [vmem:[%s3611] sm:$0x7f]
        %v3613 = vld [vmem:[%s3611 + $0x8] sm:$0x7f]
        %v3614 = vld [vmem:[%s3611 + $0x10] sm:$0x7f]
        %v3615 = vmul.f32 %v3612, %v3478
        %v3616 = vmul.f32 %v3613, %v3482
        %v3617 = vmul.f32 %v3614, %v3486
        %v3618 = vadd.f32 %v3469, %v3615
        %v3619 = vadd.f32 %v3470, %v3616
        %v3620 = vadd.f32 %v3471, %v3617
        %v3621 = vmul.f32 %v3612, %v3496
        %v3622 = vmul.f32 %v3613, %v3500
        %v3623 = vmul.f32 %v3614, %v3504
        %v3624 = vadd.f32 %v3590, %v3621
        %v3625 = vadd.f32 %v3591, %v3622
        %v3626 = vadd.f32 %v3592, %v3623
        %v3627 = vmul.f32 %v3612, %v3514
        %v3628 = vmul.f32 %v3613, %v3518
        %v3629 = vmul.f32 %v3614, %v3522
        %v3630 = vadd.f32 %v3596, %v3627
        %v3631 = vadd.f32 %v3597, %v3628
        %v3632 = vadd.f32 %v3598, %v3629
        %v3633 = vmul.f32 %v3612, %v3532
        %v3634 = vmul.f32 %v3613, %v3536
        %v3635 = vmul.f32 %v3614, %v3540
        %v3636 = vadd.f32 %v3602, %v3633
        %v3637 = vadd.f32 %v3603, %v3634
        %v3638 = vadd.f32 %v3604, %v3635
        %v3639 = vmul.f32 %v3612, %v3550
        %v3640 = vmul.f32 %v3613, %v3554
        %v3641 = vmul.f32 %v3614, %v3558
        %v3642 = vadd.f32 %v3608, %v3639
        %v3643 = vadd.f32 %v3609, %v3640
        %v3644 = vadd.f32 %v3610, %v3641
        %s3645 = scalar_lea.vmem [#allocation2], 2232
        %v3646 = vld [vmem:[%s3645] sm:$0x7f]
        %v3647 = vld [vmem:[%s3645 + $0x8] sm:$0x7f]
        %v3648 = vld [vmem:[%s3645 + $0x10] sm:$0x7f]
        %v3649 = vmul.f32 %v3646, %v3478
        %v3650 = vmul.f32 %v3647, %v3482
        %v3651 = vmul.f32 %v3648, %v3486
        %v3652 = vadd.f32 %v3463, %v3649
        %v3653 = vadd.f32 %v3464, %v3650
        %v3654 = vadd.f32 %v3465, %v3651
        %v3655 = vmul.f32 %v3646, %v3496
        %v3656 = vmul.f32 %v3647, %v3500
        %v3657 = vmul.f32 %v3648, %v3504
        %v3658 = vadd.f32 %v3618, %v3655
        %v3659 = vadd.f32 %v3619, %v3656
        %v3660 = vadd.f32 %v3620, %v3657
        %v3661 = vmul.f32 %v3646, %v3514
        %v3662 = vmul.f32 %v3647, %v3518
        %v3663 = vmul.f32 %v3648, %v3522
        %v3664 = vadd.f32 %v3624, %v3661
        %v3665 = vadd.f32 %v3625, %v3662
        %v3666 = vadd.f32 %v3626, %v3663
        %v3667 = vmul.f32 %v3646, %v3532
        %v3668 = vmul.f32 %v3647, %v3536
        %v3669 = vmul.f32 %v3648, %v3540
        %v3670 = vadd.f32 %v3630, %v3667
        %v3671 = vadd.f32 %v3631, %v3668
        %v3672 = vadd.f32 %v3632, %v3669
        %v3673 = vmul.f32 %v3646, %v3550
        %v3674 = vmul.f32 %v3647, %v3554
        %v3675 = vmul.f32 %v3648, %v3558
        %v3676 = vadd.f32 %v3636, %v3673
        %v3677 = vadd.f32 %v3637, %v3674
        %v3678 = vadd.f32 %v3638, %v3675
        %s3679 = scalar_lea.vmem [#allocation2], 2304
        %v3680 = vld [vmem:[%s3679] sm:$0x7f]
        %v3681 = vld [vmem:[%s3679 + $0x8] sm:$0x7f]
        %v3682 = vld [vmem:[%s3679 + $0x10] sm:$0x7f]
        %v3683 = vmul.f32 %v3680, %v3478
        %v3684 = vmul.f32 %v3681, %v3482
        %v3685 = vmul.f32 %v3682, %v3486
        %v3686 = vadd.f32 %v3457, %v3683
        %v3687 = vadd.f32 %v3458, %v3684
        %v3688 = vadd.f32 %v3459, %v3685
        %v3689 = vmul.f32 %v3680, %v3496
        %v3690 = vmul.f32 %v3681, %v3500
        %v3691 = vmul.f32 %v3682, %v3504
        %v3692 = vadd.f32 %v3652, %v3689
        %v3693 = vadd.f32 %v3653, %v3690
        %v3694 = vadd.f32 %v3654, %v3691
        %v3695 = vmul.f32 %v3680, %v3514
        %v3696 = vmul.f32 %v3681, %v3518
        %v3697 = vmul.f32 %v3682, %v3522
        %v3698 = vadd.f32 %v3658, %v3695
        %v3699 = vadd.f32 %v3659, %v3696
        %v3700 = vadd.f32 %v3660, %v3697
        %v3701 = vmul.f32 %v3680, %v3532
        %v3702 = vmul.f32 %v3681, %v3536
        %v3703 = vmul.f32 %v3682, %v3540
        %v3704 = vadd.f32 %v3664, %v3701
        %v3705 = vadd.f32 %v3665, %v3702
        %v3706 = vadd.f32 %v3666, %v3703
        %v3707 = vmul.f32 %v3680, %v3550
        %v3708 = vmul.f32 %v3681, %v3554
        %v3709 = vmul.f32 %v3682, %v3558
        %v3710 = vadd.f32 %v3670, %v3707
        %v3711 = vadd.f32 %v3671, %v3708
        %v3712 = vadd.f32 %v3672, %v3709
        %s3713 = scalar_lea.vmem [#allocation2], 2376
        %v3714 = vld [vmem:[%s3713] sm:$0x7f]
        %v3715 = vld [vmem:[%s3713 + $0x8] sm:$0x7f]
        %v3716 = vld [vmem:[%s3713 + $0x10] sm:$0x7f]
        %v3717 = vmul.f32 %v3714, %v3496
        %v3718 = vmul.f32 %v3715, %v3500
        %v3719 = vmul.f32 %v3716, %v3504
        %v3720 = vadd.f32 %v3686, %v3717
        %v3721 = vadd.f32 %v3687, %v3718
        %v3722 = vadd.f32 %v3688, %v3719
        %v3723 = vmul.f32 %v3714, %v3514
        %v3724 = vmul.f32 %v3715, %v3518
        %v3725 = vmul.f32 %v3716, %v3522
        %v3726 = vadd.f32 %v3692, %v3723
        %v3727 = vadd.f32 %v3693, %v3724
        %v3728 = vadd.f32 %v3694, %v3725
        %v3729 = vmul.f32 %v3714, %v3532
        %v3730 = vmul.f32 %v3715, %v3536
        %v3731 = vmul.f32 %v3716, %v3540
        %v3732 = vadd.f32 %v3698, %v3729
        %v3733 = vadd.f32 %v3699, %v3730
        %v3734 = vadd.f32 %v3700, %v3731
        %v3735 = vmul.f32 %v3714, %v3550
        %v3736 = vmul.f32 %v3715, %v3554
        %v3737 = vmul.f32 %v3716, %v3558
        %v3738 = vadd.f32 %v3704, %v3735
        %v3739 = vadd.f32 %v3705, %v3736
        %v3740 = vadd.f32 %v3706, %v3737
        %s3741 = scalar_lea.vmem [#allocation2], 2448
        %v3742 = vld [vmem:[%s3741] sm:$0x7f]
        %v3743 = vld [vmem:[%s3741 + $0x8] sm:$0x7f]
        %v3744 = vld [vmem:[%s3741 + $0x10] sm:$0x7f]
        %v3745 = vmul.f32 %v3742, %v3514
        %v3746 = vmul.f32 %v3743, %v3518
        %v3747 = vmul.f32 %v3744, %v3522
        %v3748 = vadd.f32 %v3720, %v3745
        %v3749 = vadd.f32 %v3721, %v3746
        %v3750 = vadd.f32 %v3722, %v3747
        %v3751 = vmul.f32 %v3742, %v3532
        %v3752 = vmul.f32 %v3743, %v3536
        %v3753 = vmul.f32 %v3744, %v3540
        %v3754 = vadd.f32 %v3726, %v3751
        %v3755 = vadd.f32 %v3727, %v3752
        %v3756 = vadd.f32 %v3728, %v3753
        %v3757 = vmul.f32 %v3742, %v3550
        %v3758 = vmul.f32 %v3743, %v3554
        %v3759 = vmul.f32 %v3744, %v3558
        %v3760 = vadd.f32 %v3732, %v3757
        %v3761 = vadd.f32 %v3733, %v3758
        %v3762 = vadd.f32 %v3734, %v3759
        %3763 = vst [vmem:[%s173] sm:$0x7f] %v3642
        %3764 = vst [vmem:[%s173 + $0x8] sm:$0x7f] %v3643
        %3765 = vst [vmem:[%s173 + $0x10] sm:$0x7f] %v3644
        %s3766 = scalar_lea.vmem %s173, 72 [#allocation3]
        %3767 = vst [vmem:[%s3766] sm:$0x7f] %v3676
        %3768 = vst [vmem:[%s3766 + $0x8] sm:$0x7f] %v3677
        %3769 = vst [vmem:[%s3766 + $0x10] sm:$0x7f] %v3678
        %s3770 = scalar_lea.vmem %s173, 144 [#allocation3]
        %3771 = vst [vmem:[%s3770] sm:$0x7f] %v3710
        %3772 = vst [vmem:[%s3770 + $0x8] sm:$0x7f] %v3711
        %3773 = vst [vmem:[%s3770 + $0x10] sm:$0x7f] %v3712
        %s3774 = scalar_lea.vmem %s173, 216 [#allocation3]
        %3775 = vst [vmem:[%s3774] sm:$0x7f] %v3738
        %3776 = vst [vmem:[%s3774 + $0x8] sm:$0x7f] %v3739
        %3777 = vst [vmem:[%s3774 + $0x10] sm:$0x7f] %v3740
        %s3778 = scalar_lea.vmem %s173, 288 [#allocation3]
        %3779 = vst [vmem:[%s3778] sm:$0x7f] %v3760
        %3780 = vst [vmem:[%s3778 + $0x8] sm:$0x7f] %v3761
        %3781 = vst [vmem:[%s3778 + $0x10] sm:$0x7f] %v3762
        %s3782 = scalar_lea.vmem %s173, 360 [#allocation3]
        %3783 = vst [vmem:[%s3782] sm:$0x7f] %v3754
        %3784 = vst [vmem:[%s3782 + $0x8] sm:$0x7f] %v3755
        %3785 = vst [vmem:[%s3782 + $0x10] sm:$0x7f] %v3756
        %s3786 = scalar_lea.vmem %s173, 432 [#allocation3]
        %3787 = vst [vmem:[%s3786] sm:$0x7f] %v3748
        %3788 = vst [vmem:[%s3786 + $0x8] sm:$0x7f] %v3749
        %3789 = vst [vmem:[%s3786 + $0x10] sm:$0x7f] %v3750
        %s3790 = scalar_lea.vmem [#allocation5], 24
        %v3791 = vld [vmem:[%s3790] ss:$8 sm:$0x7]
        %v3793 = vlaneseq
        %v3794 = vshrl.u32 %v3793, 7
        %v3795 = vsub.s32 0, %v3794
        %v3796 = vrot.slane %v3791, %v3795
        %v3797 = vlaneseq
        %v3798 = vshrl.u32 %v3797, 7
        %v3799 = vsub.s32 1, %v3798
        %v3800 = vrot.slane %v3791, %v3799
        %v3801 = vlaneseq
        %v3802 = vshrl.u32 %v3801, 7
        %v3803 = vsub.s32 2, %v3802
        %v3804 = vrot.slane %v3791, %v3803
        %s3808 = scalar_lea.vmem %s2347, 24 [#allocation5]
        %v3809 = vld [vmem:[%s3808] ss:$8 sm:$0x7]
        %v3811 = vlaneseq
        %v3812 = vshrl.u32 %v3811, 7
        %v3813 = vsub.s32 0, %v3812
        %v3814 = vrot.slane %v3809, %v3813
        %v3815 = vlaneseq
        %v3816 = vshrl.u32 %v3815, 7
        %v3817 = vsub.s32 1, %v3816
        %v3818 = vrot.slane %v3809, %v3817
        %v3819 = vlaneseq
        %v3820 = vshrl.u32 %v3819, 7
        %v3821 = vsub.s32 2, %v3820
        %v3822 = vrot.slane %v3809, %v3821
        %s3826 = scalar_lea.vmem %s2365, 24 [#allocation5]
        %v3827 = vld [vmem:[%s3826] ss:$8 sm:$0x7]
        %v3829 = vlaneseq
        %v3830 = vshrl.u32 %v3829, 7
        %v3831 = vsub.s32 0, %v3830
        %v3832 = vrot.slane %v3827, %v3831
        %v3833 = vlaneseq
        %v3834 = vshrl.u32 %v3833, 7
        %v3835 = vsub.s32 1, %v3834
        %v3836 = vrot.slane %v3827, %v3835
        %v3837 = vlaneseq
        %v3838 = vshrl.u32 %v3837, 7
        %v3839 = vsub.s32 2, %v3838
        %v3840 = vrot.slane %v3827, %v3839
        %s3844 = scalar_lea.vmem %s2383, 24 [#allocation5]
        %v3845 = vld [vmem:[%s3844] ss:$8 sm:$0x7]
        %v3847 = vlaneseq
        %v3848 = vshrl.u32 %v3847, 7
        %v3849 = vsub.s32 0, %v3848
        %v3850 = vrot.slane %v3845, %v3849
        %v3851 = vlaneseq
        %v3852 = vshrl.u32 %v3851, 7
        %v3853 = vsub.s32 1, %v3852
        %v3854 = vrot.slane %v3845, %v3853
        %v3855 = vlaneseq
        %v3856 = vshrl.u32 %v3855, 7
        %v3857 = vsub.s32 2, %v3856
        %v3858 = vrot.slane %v3845, %v3857
        %s3862 = scalar_lea.vmem %s2401, 24 [#allocation5]
        %v3863 = vld [vmem:[%s3862] ss:$8 sm:$0x7]
        %v3865 = vlaneseq
        %v3866 = vshrl.u32 %v3865, 7
        %v3867 = vsub.s32 0, %v3866
        %v3868 = vrot.slane %v3863, %v3867
        %v3869 = vlaneseq
        %v3870 = vshrl.u32 %v3869, 7
        %v3871 = vsub.s32 1, %v3870
        %v3872 = vrot.slane %v3863, %v3871
        %v3873 = vlaneseq
        %v3874 = vshrl.u32 %v3873, 7
        %v3875 = vsub.s32 2, %v3874
        %v3876 = vrot.slane %v3863, %v3875
        %v3880 = vld [vmem:[#allocation2 + $0x18] sm:$0x7f]
        %v3881 = vld [vmem:[#allocation2 + $0x20] sm:$0x7f]
        %v3882 = vld [vmem:[#allocation2 + $0x28] sm:$0x7f]
        %v3883 = vmul.f32 %v3880, %v3796
        %v3884 = vmul.f32 %v3881, %v3800
        %v3885 = vmul.f32 %v3882, %v3804
        %v3886 = vmul.f32 %v3880, %v3814
        %v3887 = vmul.f32 %v3881, %v3818
        %v3888 = vmul.f32 %v3882, %v3822
        %v3889 = vmul.f32 %v3880, %v3832
        %v3890 = vmul.f32 %v3881, %v3836
        %v3891 = vmul.f32 %v3882, %v3840
        %v3892 = vld [vmem:[%s2431 + $0x18] sm:$0x7f]
        %v3893 = vld [vmem:[%s2431 + $0x20] sm:$0x7f]
        %v3894 = vld [vmem:[%s2431 + $0x28] sm:$0x7f]
        %v3895 = vmul.f32 %v3892, %v3796
        %v3896 = vmul.f32 %v3893, %v3800
        %v3897 = vmul.f32 %v3894, %v3804
        %v3898 = vmul.f32 %v3892, %v3814
        %v3899 = vmul.f32 %v3893, %v3818
        %v3900 = vmul.f32 %v3894, %v3822
        %v3901 = vadd.f32 %v3883, %v3898
        %v3902 = vadd.f32 %v3884, %v3899
        %v3903 = vadd.f32 %v3885, %v3900
        %v3904 = vmul.f32 %v3892, %v3832
        %v3905 = vmul.f32 %v3893, %v3836
        %v3906 = vmul.f32 %v3894, %v3840
        %v3907 = vadd.f32 %v3886, %v3904
        %v3908 = vadd.f32 %v3887, %v3905
        %v3909 = vadd.f32 %v3888, %v3906
        %v3910 = vmul.f32 %v3892, %v3850
        %v3911 = vmul.f32 %v3893, %v3854
        %v3912 = vmul.f32 %v3894, %v3858
        %v3913 = vadd.f32 %v3889, %v3910
        %v3914 = vadd.f32 %v3890, %v3911
        %v3915 = vadd.f32 %v3891, %v3912
        %v3916 = vld [vmem:[%s2456 + $0x18] sm:$0x7f]
        %v3917 = vld [vmem:[%s2456 + $0x20] sm:$0x7f]
        %v3918 = vld [vmem:[%s2456 + $0x28] sm:$0x7f]
        %v3919 = vmul.f32 %v3916, %v3796
        %v3920 = vmul.f32 %v3917, %v3800
        %v3921 = vmul.f32 %v3918, %v3804
        %v3922 = vmul.f32 %v3916, %v3814
        %v3923 = vmul.f32 %v3917, %v3818
        %v3924 = vmul.f32 %v3918, %v3822
        %v3925 = vadd.f32 %v3895, %v3922
        %v3926 = vadd.f32 %v3896, %v3923
        %v3927 = vadd.f32 %v3897, %v3924
        %v3928 = vmul.f32 %v3916, %v3832
        %v3929 = vmul.f32 %v3917, %v3836
        %v3930 = vmul.f32 %v3918, %v3840
        %v3931 = vadd.f32 %v3901, %v3928
        %v3932 = vadd.f32 %v3902, %v3929
        %v3933 = vadd.f32 %v3903, %v3930
        %v3934 = vmul.f32 %v3916, %v3850
        %v3935 = vmul.f32 %v3917, %v3854
        %v3936 = vmul.f32 %v3918, %v3858
        %v3937 = vadd.f32 %v3907, %v3934
        %v3938 = vadd.f32 %v3908, %v3935
        %v3939 = vadd.f32 %v3909, %v3936
        %v3940 = vmul.f32 %v3916, %v3868
        %v3941 = vmul.f32 %v3917, %v3872
        %v3942 = vmul.f32 %v3918, %v3876
        %v3943 = vadd.f32 %v3913, %v3940
        %v3944 = vadd.f32 %v3914, %v3941
        %v3945 = vadd.f32 %v3915, %v3942
        %v3946 = vld [vmem:[%s2487 + $0x18] sm:$0x7f]
        %v3947 = vld [vmem:[%s2487 + $0x20] sm:$0x7f]
        %v3948 = vld [vmem:[%s2487 + $0x28] sm:$0x7f]
        %v3949 = vmul.f32 %v3946, %v3796
        %v3950 = vmul.f32 %v3947, %v3800
        %v3951 = vmul.f32 %v3948, %v3804
        %v3952 = vmul.f32 %v3946, %v3814
        %v3953 = vmul.f32 %v3947, %v3818
        %v3954 = vmul.f32 %v3948, %v3822
        %v3955 = vadd.f32 %v3919, %v3952
        %v3956 = vadd.f32 %v3920, %v3953
        %v3957 = vadd.f32 %v3921, %v3954
        %v3958 = vmul.f32 %v3946, %v3832
        %v3959 = vmul.f32 %v3947, %v3836
        %v3960 = vmul.f32 %v3948, %v3840
        %v3961 = vadd.f32 %v3925, %v3958
        %v3962 = vadd.f32 %v3926, %v3959
        %v3963 = vadd.f32 %v3927, %v3960
        %v3964 = vmul.f32 %v3946, %v3850
        %v3965 = vmul.f32 %v3947, %v3854
        %v3966 = vmul.f32 %v3948, %v3858
        %v3967 = vadd.f32 %v3931, %v3964
        %v3968 = vadd.f32 %v3932, %v3965
        %v3969 = vadd.f32 %v3933, %v3966
        %v3970 = vmul.f32 %v3946, %v3868
        %v3971 = vmul.f32 %v3947, %v3872
        %v3972 = vmul.f32 %v3948, %v3876
        %v3973 = vadd.f32 %v3937, %v3970
        %v3974 = vadd.f32 %v3938, %v3971
        %v3975 = vadd.f32 %v3939, %v3972
        %v3976 = vld [vmem:[%s2518 + $0x18] sm:$0x7f]
        %v3977 = vld [vmem:[%s2518 + $0x20] sm:$0x7f]
        %v3978 = vld [vmem:[%s2518 + $0x28] sm:$0x7f]
        %v3979 = vmul.f32 %v3976, %v3796
        %v3980 = vmul.f32 %v3977, %v3800
        %v3981 = vmul.f32 %v3978, %v3804
        %v3982 = vmul.f32 %v3976, %v3814
        %v3983 = vmul.f32 %v3977, %v3818
        %v3984 = vmul.f32 %v3978, %v3822
        %v3985 = vadd.f32 %v3949, %v3982
        %v3986 = vadd.f32 %v3950, %v3983
        %v3987 = vadd.f32 %v3951, %v3984
        %v3988 = vmul.f32 %v3976, %v3832
        %v3989 = vmul.f32 %v3977, %v3836
        %v3990 = vmul.f32 %v3978, %v3840
        %v3991 = vadd.f32 %v3955, %v3988
        %v3992 = vadd.f32 %v3956, %v3989
        %v3993 = vadd.f32 %v3957, %v3990
        %v3994 = vmul.f32 %v3976, %v3850
        %v3995 = vmul.f32 %v3977, %v3854
        %v3996 = vmul.f32 %v3978, %v3858
        %v3997 = vadd.f32 %v3961, %v3994
        %v3998 = vadd.f32 %v3962, %v3995
        %v3999 = vadd.f32 %v3963, %v3996
        %v4000 = vmul.f32 %v3976, %v3868
        %v4001 = vmul.f32 %v3977, %v3872
        %v4002 = vmul.f32 %v3978, %v3876
        %v4003 = vadd.f32 %v3967, %v4000
        %v4004 = vadd.f32 %v3968, %v4001
        %v4005 = vadd.f32 %v3969, %v4002
        %v4006 = vld [vmem:[%s2549 + $0x18] sm:$0x7f]
        %v4007 = vld [vmem:[%s2549 + $0x20] sm:$0x7f]
        %v4008 = vld [vmem:[%s2549 + $0x28] sm:$0x7f]
        %v4009 = vmul.f32 %v4006, %v3814
        %v4010 = vmul.f32 %v4007, %v3818
        %v4011 = vmul.f32 %v4008, %v3822
        %v4012 = vadd.f32 %v3979, %v4009
        %v4013 = vadd.f32 %v3980, %v4010
        %v4014 = vadd.f32 %v3981, %v4011
        %v4015 = vmul.f32 %v4006, %v3832
        %v4016 = vmul.f32 %v4007, %v3836
        %v4017 = vmul.f32 %v4008, %v3840
        %v4018 = vadd.f32 %v3985, %v4015
        %v4019 = vadd.f32 %v3986, %v4016
        %v4020 = vadd.f32 %v3987, %v4017
        %v4021 = vmul.f32 %v4006, %v3850
        %v4022 = vmul.f32 %v4007, %v3854
        %v4023 = vmul.f32 %v4008, %v3858
        %v4024 = vadd.f32 %v3991, %v4021
        %v4025 = vadd.f32 %v3992, %v4022
        %v4026 = vadd.f32 %v3993, %v4023
        %v4027 = vmul.f32 %v4006, %v3868
        %v4028 = vmul.f32 %v4007, %v3872
        %v4029 = vmul.f32 %v4008, %v3876
        %v4030 = vadd.f32 %v3997, %v4027
        %v4031 = vadd.f32 %v3998, %v4028
        %v4032 = vadd.f32 %v3999, %v4029
        %v4033 = vld [vmem:[%s2577 + $0x18] sm:$0x7f]
        %v4034 = vld [vmem:[%s2577 + $0x20] sm:$0x7f]
        %v4035 = vld [vmem:[%s2577 + $0x28] sm:$0x7f]
        %v4036 = vmul.f32 %v4033, %v3832
        %v4037 = vmul.f32 %v4034, %v3836
        %v4038 = vmul.f32 %v4035, %v3840
        %v4039 = vadd.f32 %v4012, %v4036
        %v4040 = vadd.f32 %v4013, %v4037
        %v4041 = vadd.f32 %v4014, %v4038
        %v4042 = vmul.f32 %v4033, %v3850
        %v4043 = vmul.f32 %v4034, %v3854
        %v4044 = vmul.f32 %v4035, %v3858
        %v4045 = vadd.f32 %v4018, %v4042
        %v4046 = vadd.f32 %v4019, %v4043
        %v4047 = vadd.f32 %v4020, %v4044
        %v4048 = vmul.f32 %v4033, %v3868
        %v4049 = vmul.f32 %v4034, %v3872
        %v4050 = vmul.f32 %v4035, %v3876
        %v4051 = vadd.f32 %v4024, %v4048
        %v4052 = vadd.f32 %v4025, %v4049
        %v4053 = vadd.f32 %v4026, %v4050
        %s4054 = scalar_lea.vmem [#allocation5], 25
        %v4055 = vld [vmem:[%s4054] ss:$8 sm:$0x7]
        %v4057 = vlaneseq
        %v4058 = vshrl.u32 %v4057, 7
        %v4059 = vsub.s32 0, %v4058
        %v4060 = vrot.slane %v4055, %v4059
        %v4061 = vlaneseq
        %v4062 = vshrl.u32 %v4061, 7
        %v4063 = vsub.s32 1, %v4062
        %v4064 = vrot.slane %v4055, %v4063
        %v4065 = vlaneseq
        %v4066 = vshrl.u32 %v4065, 7
        %v4067 = vsub.s32 2, %v4066
        %v4068 = vrot.slane %v4055, %v4067
        %s4072 = scalar_lea.vmem %s2347, 25 [#allocation5]
        %v4073 = vld [vmem:[%s4072] ss:$8 sm:$0x7]
        %v4075 = vlaneseq
        %v4076 = vshrl.u32 %v4075, 7
        %v4077 = vsub.s32 0, %v4076
        %v4078 = vrot.slane %v4073, %v4077
        %v4079 = vlaneseq
        %v4080 = vshrl.u32 %v4079, 7
        %v4081 = vsub.s32 1, %v4080
        %v4082 = vrot.slane %v4073, %v4081
        %v4083 = vlaneseq
        %v4084 = vshrl.u32 %v4083, 7
        %v4085 = vsub.s32 2, %v4084
        %v4086 = vrot.slane %v4073, %v4085
        %s4090 = scalar_lea.vmem %s2365, 25 [#allocation5]
        %v4091 = vld [vmem:[%s4090] ss:$8 sm:$0x7]
        %v4093 = vlaneseq
        %v4094 = vshrl.u32 %v4093, 7
        %v4095 = vsub.s32 0, %v4094
        %v4096 = vrot.slane %v4091, %v4095
        %v4097 = vlaneseq
        %v4098 = vshrl.u32 %v4097, 7
        %v4099 = vsub.s32 1, %v4098
        %v4100 = vrot.slane %v4091, %v4099
        %v4101 = vlaneseq
        %v4102 = vshrl.u32 %v4101, 7
        %v4103 = vsub.s32 2, %v4102
        %v4104 = vrot.slane %v4091, %v4103
        %s4108 = scalar_lea.vmem %s2383, 25 [#allocation5]
        %v4109 = vld [vmem:[%s4108] ss:$8 sm:$0x7]
        %v4111 = vlaneseq
        %v4112 = vshrl.u32 %v4111, 7
        %v4113 = vsub.s32 0, %v4112
        %v4114 = vrot.slane %v4109, %v4113
        %v4115 = vlaneseq
        %v4116 = vshrl.u32 %v4115, 7
        %v4117 = vsub.s32 1, %v4116
        %v4118 = vrot.slane %v4109, %v4117
        %v4119 = vlaneseq
        %v4120 = vshrl.u32 %v4119, 7
        %v4121 = vsub.s32 2, %v4120
        %v4122 = vrot.slane %v4109, %v4121
        %s4126 = scalar_lea.vmem %s2401, 25 [#allocation5]
        %v4127 = vld [vmem:[%s4126] ss:$8 sm:$0x7]
        %v4129 = vlaneseq
        %v4130 = vshrl.u32 %v4129, 7
        %v4131 = vsub.s32 0, %v4130
        %v4132 = vrot.slane %v4127, %v4131
        %v4133 = vlaneseq
        %v4134 = vshrl.u32 %v4133, 7
        %v4135 = vsub.s32 1, %v4134
        %v4136 = vrot.slane %v4127, %v4135
        %v4137 = vlaneseq
        %v4138 = vshrl.u32 %v4137, 7
        %v4139 = vsub.s32 2, %v4138
        %v4140 = vrot.slane %v4127, %v4139
        %v4144 = vld [vmem:[%s1105 + $0x18] sm:$0x7f]
        %v4145 = vld [vmem:[%s1105 + $0x20] sm:$0x7f]
        %v4146 = vld [vmem:[%s1105 + $0x28] sm:$0x7f]
        %v4147 = vmul.f32 %v4144, %v4060
        %v4148 = vmul.f32 %v4145, %v4064
        %v4149 = vmul.f32 %v4146, %v4068
        %v4150 = vadd.f32 %v4003, %v4147
        %v4151 = vadd.f32 %v4004, %v4148
        %v4152 = vadd.f32 %v4005, %v4149
        %v4153 = vmul.f32 %v4144, %v4078
        %v4154 = vmul.f32 %v4145, %v4082
        %v4155 = vmul.f32 %v4146, %v4086
        %v4156 = vadd.f32 %v3973, %v4153
        %v4157 = vadd.f32 %v3974, %v4154
        %v4158 = vadd.f32 %v3975, %v4155
        %v4159 = vmul.f32 %v4144, %v4096
        %v4160 = vmul.f32 %v4145, %v4100
        %v4161 = vmul.f32 %v4146, %v4104
        %v4162 = vadd.f32 %v3943, %v4159
        %v4163 = vadd.f32 %v3944, %v4160
        %v4164 = vadd.f32 %v3945, %v4161
        %v4165 = vld [vmem:[%s2710 + $0x18] sm:$0x7f]
        %v4166 = vld [vmem:[%s2710 + $0x20] sm:$0x7f]
        %v4167 = vld [vmem:[%s2710 + $0x28] sm:$0x7f]
        %v4168 = vmul.f32 %v4165, %v4060
        %v4169 = vmul.f32 %v4166, %v4064
        %v4170 = vmul.f32 %v4167, %v4068
        %v4171 = vadd.f32 %v4030, %v4168
        %v4172 = vadd.f32 %v4031, %v4169
        %v4173 = vadd.f32 %v4032, %v4170
        %v4174 = vmul.f32 %v4165, %v4078
        %v4175 = vmul.f32 %v4166, %v4082
        %v4176 = vmul.f32 %v4167, %v4086
        %v4177 = vadd.f32 %v4150, %v4174
        %v4178 = vadd.f32 %v4151, %v4175
        %v4179 = vadd.f32 %v4152, %v4176
        %v4180 = vmul.f32 %v4165, %v4096
        %v4181 = vmul.f32 %v4166, %v4100
        %v4182 = vmul.f32 %v4167, %v4104
        %v4183 = vadd.f32 %v4156, %v4180
        %v4184 = vadd.f32 %v4157, %v4181
        %v4185 = vadd.f32 %v4158, %v4182
        %v4186 = vmul.f32 %v4165, %v4114
        %v4187 = vmul.f32 %v4166, %v4118
        %v4188 = vmul.f32 %v4167, %v4122
        %v4189 = vadd.f32 %v4162, %v4186
        %v4190 = vadd.f32 %v4163, %v4187
        %v4191 = vadd.f32 %v4164, %v4188
        %v4192 = vld [vmem:[%s2738 + $0x18] sm:$0x7f]
        %v4193 = vld [vmem:[%s2738 + $0x20] sm:$0x7f]
        %v4194 = vld [vmem:[%s2738 + $0x28] sm:$0x7f]
        %v4195 = vmul.f32 %v4192, %v4060
        %v4196 = vmul.f32 %v4193, %v4064
        %v4197 = vmul.f32 %v4194, %v4068
        %v4198 = vadd.f32 %v4051, %v4195
        %v4199 = vadd.f32 %v4052, %v4196
        %v4200 = vadd.f32 %v4053, %v4197
        %v4201 = vmul.f32 %v4192, %v4078
        %v4202 = vmul.f32 %v4193, %v4082
        %v4203 = vmul.f32 %v4194, %v4086
        %v4204 = vadd.f32 %v4171, %v4201
        %v4205 = vadd.f32 %v4172, %v4202
        %v4206 = vadd.f32 %v4173, %v4203
        %v4207 = vmul.f32 %v4192, %v4096
        %v4208 = vmul.f32 %v4193, %v4100
        %v4209 = vmul.f32 %v4194, %v4104
        %v4210 = vadd.f32 %v4177, %v4207
        %v4211 = vadd.f32 %v4178, %v4208
        %v4212 = vadd.f32 %v4179, %v4209
        %v4213 = vmul.f32 %v4192, %v4114
        %v4214 = vmul.f32 %v4193, %v4118
        %v4215 = vmul.f32 %v4194, %v4122
        %v4216 = vadd.f32 %v4183, %v4213
        %v4217 = vadd.f32 %v4184, %v4214
        %v4218 = vadd.f32 %v4185, %v4215
        %v4219 = vmul.f32 %v4192, %v4132
        %v4220 = vmul.f32 %v4193, %v4136
        %v4221 = vmul.f32 %v4194, %v4140
        %v4222 = vadd.f32 %v4189, %v4219
        %v4223 = vadd.f32 %v4190, %v4220
        %v4224 = vadd.f32 %v4191, %v4221
        %v4225 = vld [vmem:[%s2772 + $0x18] sm:$0x7f]
        %v4226 = vld [vmem:[%s2772 + $0x20] sm:$0x7f]
        %v4227 = vld [vmem:[%s2772 + $0x28] sm:$0x7f]
        %v4228 = vmul.f32 %v4225, %v4060
        %v4229 = vmul.f32 %v4226, %v4064
        %v4230 = vmul.f32 %v4227, %v4068
        %v4231 = vadd.f32 %v4045, %v4228
        %v4232 = vadd.f32 %v4046, %v4229
        %v4233 = vadd.f32 %v4047, %v4230
        %v4234 = vmul.f32 %v4225, %v4078
        %v4235 = vmul.f32 %v4226, %v4082
        %v4236 = vmul.f32 %v4227, %v4086
        %v4237 = vadd.f32 %v4198, %v4234
        %v4238 = vadd.f32 %v4199, %v4235
        %v4239 = vadd.f32 %v4200, %v4236
        %v4240 = vmul.f32 %v4225, %v4096
        %v4241 = vmul.f32 %v4226, %v4100
        %v4242 = vmul.f32 %v4227, %v4104
        %v4243 = vadd.f32 %v4204, %v4240
        %v4244 = vadd.f32 %v4205, %v4241
        %v4245 = vadd.f32 %v4206, %v4242
        %v4246 = vmul.f32 %v4225, %v4114
        %v4247 = vmul.f32 %v4226, %v4118
        %v4248 = vmul.f32 %v4227, %v4122
        %v4249 = vadd.f32 %v4210, %v4246
        %v4250 = vadd.f32 %v4211, %v4247
        %v4251 = vadd.f32 %v4212, %v4248
        %v4252 = vmul.f32 %v4225, %v4132
        %v4253 = vmul.f32 %v4226, %v4136
        %v4254 = vmul.f32 %v4227, %v4140
        %v4255 = vadd.f32 %v4216, %v4252
        %v4256 = vadd.f32 %v4217, %v4253
        %v4257 = vadd.f32 %v4218, %v4254
        %v4258 = vld [vmem:[%s2806 + $0x18] sm:$0x7f]
        %v4259 = vld [vmem:[%s2806 + $0x20] sm:$0x7f]
        %v4260 = vld [vmem:[%s2806 + $0x28] sm:$0x7f]
        %v4261 = vmul.f32 %v4258, %v4060
        %v4262 = vmul.f32 %v4259, %v4064
        %v4263 = vmul.f32 %v4260, %v4068
        %v4264 = vadd.f32 %v4039, %v4261
        %v4265 = vadd.f32 %v4040, %v4262
        %v4266 = vadd.f32 %v4041, %v4263
        %v4267 = vmul.f32 %v4258, %v4078
        %v4268 = vmul.f32 %v4259, %v4082
        %v4269 = vmul.f32 %v4260, %v4086
        %v4270 = vadd.f32 %v4231, %v4267
        %v4271 = vadd.f32 %v4232, %v4268
        %v4272 = vadd.f32 %v4233, %v4269
        %v4273 = vmul.f32 %v4258, %v4096
        %v4274 = vmul.f32 %v4259, %v4100
        %v4275 = vmul.f32 %v4260, %v4104
        %v4276 = vadd.f32 %v4237, %v4273
        %v4277 = vadd.f32 %v4238, %v4274
        %v4278 = vadd.f32 %v4239, %v4275
        %v4279 = vmul.f32 %v4258, %v4114
        %v4280 = vmul.f32 %v4259, %v4118
        %v4281 = vmul.f32 %v4260, %v4122
        %v4282 = vadd.f32 %v4243, %v4279
        %v4283 = vadd.f32 %v4244, %v4280
        %v4284 = vadd.f32 %v4245, %v4281
        %v4285 = vmul.f32 %v4258, %v4132
        %v4286 = vmul.f32 %v4259, %v4136
        %v4287 = vmul.f32 %v4260, %v4140
        %v4288 = vadd.f32 %v4249, %v4285
        %v4289 = vadd.f32 %v4250, %v4286
        %v4290 = vadd.f32 %v4251, %v4287
        %v4291 = vld [vmem:[%s2840 + $0x18] sm:$0x7f]
        %v4292 = vld [vmem:[%s2840 + $0x20] sm:$0x7f]
        %v4293 = vld [vmem:[%s2840 + $0x28] sm:$0x7f]
        %v4294 = vmul.f32 %v4291, %v4078
        %v4295 = vmul.f32 %v4292, %v4082
        %v4296 = vmul.f32 %v4293, %v4086
        %v4297 = vadd.f32 %v4264, %v4294
        %v4298 = vadd.f32 %v4265, %v4295
        %v4299 = vadd.f32 %v4266, %v4296
        %v4300 = vmul.f32 %v4291, %v4096
        %v4301 = vmul.f32 %v4292, %v4100
        %v4302 = vmul.f32 %v4293, %v4104
        %v4303 = vadd.f32 %v4270, %v4300
        %v4304 = vadd.f32 %v4271, %v4301
        %v4305 = vadd.f32 %v4272, %v4302
        %v4306 = vmul.f32 %v4291, %v4114
        %v4307 = vmul.f32 %v4292, %v4118
        %v4308 = vmul.f32 %v4293, %v4122
        %v4309 = vadd.f32 %v4276, %v4306
        %v4310 = vadd.f32 %v4277, %v4307
        %v4311 = vadd.f32 %v4278, %v4308
        %v4312 = vmul.f32 %v4291, %v4132
        %v4313 = vmul.f32 %v4292, %v4136
        %v4314 = vmul.f32 %v4293, %v4140
        %v4315 = vadd.f32 %v4282, %v4312
        %v4316 = vadd.f32 %v4283, %v4313
        %v4317 = vadd.f32 %v4284, %v4314
        %v4318 = vld [vmem:[%s2868 + $0x18] sm:$0x7f]
        %v4319 = vld [vmem:[%s2868 + $0x20] sm:$0x7f]
        %v4320 = vld [vmem:[%s2868 + $0x28] sm:$0x7f]
        %v4321 = vmul.f32 %v4318, %v4096
        %v4322 = vmul.f32 %v4319, %v4100
        %v4323 = vmul.f32 %v4320, %v4104
        %v4324 = vadd.f32 %v4297, %v4321
        %v4325 = vadd.f32 %v4298, %v4322
        %v4326 = vadd.f32 %v4299, %v4323
        %v4327 = vmul.f32 %v4318, %v4114
        %v4328 = vmul.f32 %v4319, %v4118
        %v4329 = vmul.f32 %v4320, %v4122
        %v4330 = vadd.f32 %v4303, %v4327
        %v4331 = vadd.f32 %v4304, %v4328
        %v4332 = vadd.f32 %v4305, %v4329
        %v4333 = vmul.f32 %v4318, %v4132
        %v4334 = vmul.f32 %v4319, %v4136
        %v4335 = vmul.f32 %v4320, %v4140
        %v4336 = vadd.f32 %v4309, %v4333
        %v4337 = vadd.f32 %v4310, %v4334
        %v4338 = vadd.f32 %v4311, %v4335
        %s4339 = scalar_lea.vmem [#allocation5], 26
        %v4340 = vld [vmem:[%s4339] ss:$8 sm:$0x7]
        %v4342 = vlaneseq
        %v4343 = vshrl.u32 %v4342, 7
        %v4344 = vsub.s32 0, %v4343
        %v4345 = vrot.slane %v4340, %v4344
        %v4346 = vlaneseq
        %v4347 = vshrl.u32 %v4346, 7
        %v4348 = vsub.s32 1, %v4347
        %v4349 = vrot.slane %v4340, %v4348
        %v4350 = vlaneseq
        %v4351 = vshrl.u32 %v4350, 7
        %v4352 = vsub.s32 2, %v4351
        %v4353 = vrot.slane %v4340, %v4352
        %s4357 = scalar_lea.vmem %s2347, 26 [#allocation5]
        %v4358 = vld [vmem:[%s4357] ss:$8 sm:$0x7]
        %v4360 = vlaneseq
        %v4361 = vshrl.u32 %v4360, 7
        %v4362 = vsub.s32 0, %v4361
        %v4363 = vrot.slane %v4358, %v4362
        %v4364 = vlaneseq
        %v4365 = vshrl.u32 %v4364, 7
        %v4366 = vsub.s32 1, %v4365
        %v4367 = vrot.slane %v4358, %v4366
        %v4368 = vlaneseq
        %v4369 = vshrl.u32 %v4368, 7
        %v4370 = vsub.s32 2, %v4369
        %v4371 = vrot.slane %v4358, %v4370
        %s4375 = scalar_lea.vmem %s2365, 26 [#allocation5]
        %v4376 = vld [vmem:[%s4375] ss:$8 sm:$0x7]
        %v4378 = vlaneseq
        %v4379 = vshrl.u32 %v4378, 7
        %v4380 = vsub.s32 0, %v4379
        %v4381 = vrot.slane %v4376, %v4380
        %v4382 = vlaneseq
        %v4383 = vshrl.u32 %v4382, 7
        %v4384 = vsub.s32 1, %v4383
        %v4385 = vrot.slane %v4376, %v4384
        %v4386 = vlaneseq
        %v4387 = vshrl.u32 %v4386, 7
        %v4388 = vsub.s32 2, %v4387
        %v4389 = vrot.slane %v4376, %v4388
        %s4393 = scalar_lea.vmem %s2383, 26 [#allocation5]
        %v4394 = vld [vmem:[%s4393] ss:$8 sm:$0x7]
        %v4396 = vlaneseq
        %v4397 = vshrl.u32 %v4396, 7
        %v4398 = vsub.s32 0, %v4397
        %v4399 = vrot.slane %v4394, %v4398
        %v4400 = vlaneseq
        %v4401 = vshrl.u32 %v4400, 7
        %v4402 = vsub.s32 1, %v4401
        %v4403 = vrot.slane %v4394, %v4402
        %v4404 = vlaneseq
        %v4405 = vshrl.u32 %v4404, 7
        %v4406 = vsub.s32 2, %v4405
        %v4407 = vrot.slane %v4394, %v4406
        %s4411 = scalar_lea.vmem %s2401, 26 [#allocation5]
        %v4412 = vld [vmem:[%s4411] ss:$8 sm:$0x7]
        %v4414 = vlaneseq
        %v4415 = vshrl.u32 %v4414, 7
        %v4416 = vsub.s32 0, %v4415
        %v4417 = vrot.slane %v4412, %v4416
        %v4418 = vlaneseq
        %v4419 = vshrl.u32 %v4418, 7
        %v4420 = vsub.s32 1, %v4419
        %v4421 = vrot.slane %v4412, %v4420
        %v4422 = vlaneseq
        %v4423 = vshrl.u32 %v4422, 7
        %v4424 = vsub.s32 2, %v4423
        %v4425 = vrot.slane %v4412, %v4424
        %v4429 = vld [vmem:[%s1529 + $0x18] sm:$0x7f]
        %v4430 = vld [vmem:[%s1529 + $0x20] sm:$0x7f]
        %v4431 = vld [vmem:[%s1529 + $0x28] sm:$0x7f]
        %v4432 = vmul.f32 %v4429, %v4345
        %v4433 = vmul.f32 %v4430, %v4349
        %v4434 = vmul.f32 %v4431, %v4353
        %v4435 = vadd.f32 %v4288, %v4432
        %v4436 = vadd.f32 %v4289, %v4433
        %v4437 = vadd.f32 %v4290, %v4434
        %v4438 = vmul.f32 %v4429, %v4363
        %v4439 = vmul.f32 %v4430, %v4367
        %v4440 = vmul.f32 %v4431, %v4371
        %v4441 = vadd.f32 %v4255, %v4438
        %v4442 = vadd.f32 %v4256, %v4439
        %v4443 = vadd.f32 %v4257, %v4440
        %v4444 = vmul.f32 %v4429, %v4381
        %v4445 = vmul.f32 %v4430, %v4385
        %v4446 = vmul.f32 %v4431, %v4389
        %v4447 = vadd.f32 %v4222, %v4444
        %v4448 = vadd.f32 %v4223, %v4445
        %v4449 = vadd.f32 %v4224, %v4446
        %v4450 = vld [vmem:[%s3001 + $0x18] sm:$0x7f]
        %v4451 = vld [vmem:[%s3001 + $0x20] sm:$0x7f]
        %v4452 = vld [vmem:[%s3001 + $0x28] sm:$0x7f]
        %v4453 = vmul.f32 %v4450, %v4345
        %v4454 = vmul.f32 %v4451, %v4349
        %v4455 = vmul.f32 %v4452, %v4353
        %v4456 = vadd.f32 %v4315, %v4453
        %v4457 = vadd.f32 %v4316, %v4454
        %v4458 = vadd.f32 %v4317, %v4455
        %v4459 = vmul.f32 %v4450, %v4363
        %v4460 = vmul.f32 %v4451, %v4367
        %v4461 = vmul.f32 %v4452, %v4371
        %v4462 = vadd.f32 %v4435, %v4459
        %v4463 = vadd.f32 %v4436, %v4460
        %v4464 = vadd.f32 %v4437, %v4461
        %v4465 = vmul.f32 %v4450, %v4381
        %v4466 = vmul.f32 %v4451, %v4385
        %v4467 = vmul.f32 %v4452, %v4389
        %v4468 = vadd.f32 %v4441, %v4465
        %v4469 = vadd.f32 %v4442, %v4466
        %v4470 = vadd.f32 %v4443, %v4467
        %v4471 = vmul.f32 %v4450, %v4399
        %v4472 = vmul.f32 %v4451, %v4403
        %v4473 = vmul.f32 %v4452, %v4407
        %v4474 = vadd.f32 %v4447, %v4471
        %v4475 = vadd.f32 %v4448, %v4472
        %v4476 = vadd.f32 %v4449, %v4473
        %v4477 = vld [vmem:[%s3029 + $0x18] sm:$0x7f]
        %v4478 = vld [vmem:[%s3029 + $0x20] sm:$0x7f]
        %v4479 = vld [vmem:[%s3029 + $0x28] sm:$0x7f]
        %v4480 = vmul.f32 %v4477, %v4345
        %v4481 = vmul.f32 %v4478, %v4349
        %v4482 = vmul.f32 %v4479, %v4353
        %v4483 = vadd.f32 %v4336, %v4480
        %v4484 = vadd.f32 %v4337, %v4481
        %v4485 = vadd.f32 %v4338, %v4482
        %v4486 = vmul.f32 %v4477, %v4363
        %v4487 = vmul.f32 %v4478, %v4367
        %v4488 = vmul.f32 %v4479, %v4371
        %v4489 = vadd.f32 %v4456, %v4486
        %v4490 = vadd.f32 %v4457, %v4487
        %v4491 = vadd.f32 %v4458, %v4488
        %v4492 = vmul.f32 %v4477, %v4381
        %v4493 = vmul.f32 %v4478, %v4385
        %v4494 = vmul.f32 %v4479, %v4389
        %v4495 = vadd.f32 %v4462, %v4492
        %v4496 = vadd.f32 %v4463, %v4493
        %v4497 = vadd.f32 %v4464, %v4494
        %v4498 = vmul.f32 %v4477, %v4399
        %v4499 = vmul.f32 %v4478, %v4403
        %v4500 = vmul.f32 %v4479, %v4407
        %v4501 = vadd.f32 %v4468, %v4498
        %v4502 = vadd.f32 %v4469, %v4499
        %v4503 = vadd.f32 %v4470, %v4500
        %v4504 = vmul.f32 %v4477, %v4417
        %v4505 = vmul.f32 %v4478, %v4421
        %v4506 = vmul.f32 %v4479, %v4425
        %v4507 = vadd.f32 %v4474, %v4504
        %v4508 = vadd.f32 %v4475, %v4505
        %v4509 = vadd.f32 %v4476, %v4506
        %v4510 = vld [vmem:[%s3063 + $0x18] sm:$0x7f]
        %v4511 = vld [vmem:[%s3063 + $0x20] sm:$0x7f]
        %v4512 = vld [vmem:[%s3063 + $0x28] sm:$0x7f]
        %v4513 = vmul.f32 %v4510, %v4345
        %v4514 = vmul.f32 %v4511, %v4349
        %v4515 = vmul.f32 %v4512, %v4353
        %v4516 = vadd.f32 %v4330, %v4513
        %v4517 = vadd.f32 %v4331, %v4514
        %v4518 = vadd.f32 %v4332, %v4515
        %v4519 = vmul.f32 %v4510, %v4363
        %v4520 = vmul.f32 %v4511, %v4367
        %v4521 = vmul.f32 %v4512, %v4371
        %v4522 = vadd.f32 %v4483, %v4519
        %v4523 = vadd.f32 %v4484, %v4520
        %v4524 = vadd.f32 %v4485, %v4521
        %v4525 = vmul.f32 %v4510, %v4381
        %v4526 = vmul.f32 %v4511, %v4385
        %v4527 = vmul.f32 %v4512, %v4389
        %v4528 = vadd.f32 %v4489, %v4525
        %v4529 = vadd.f32 %v4490, %v4526
        %v4530 = vadd.f32 %v4491, %v4527
        %v4531 = vmul.f32 %v4510, %v4399
        %v4532 = vmul.f32 %v4511, %v4403
        %v4533 = vmul.f32 %v4512, %v4407
        %v4534 = vadd.f32 %v4495, %v4531
        %v4535 = vadd.f32 %v4496, %v4532
        %v4536 = vadd.f32 %v4497, %v4533
        %v4537 = vmul.f32 %v4510, %v4417
        %v4538 = vmul.f32 %v4511, %v4421
        %v4539 = vmul.f32 %v4512, %v4425
        %v4540 = vadd.f32 %v4501, %v4537
        %v4541 = vadd.f32 %v4502, %v4538
        %v4542 = vadd.f32 %v4503, %v4539
        %v4543 = vld [vmem:[%s3097 + $0x18] sm:$0x7f]
        %v4544 = vld [vmem:[%s3097 + $0x20] sm:$0x7f]
        %v4545 = vld [vmem:[%s3097 + $0x28] sm:$0x7f]
        %v4546 = vmul.f32 %v4543, %v4345
        %v4547 = vmul.f32 %v4544, %v4349
        %v4548 = vmul.f32 %v4545, %v4353
        %v4549 = vadd.f32 %v4324, %v4546
        %v4550 = vadd.f32 %v4325, %v4547
        %v4551 = vadd.f32 %v4326, %v4548
        %v4552 = vmul.f32 %v4543, %v4363
        %v4553 = vmul.f32 %v4544, %v4367
        %v4554 = vmul.f32 %v4545, %v4371
        %v4555 = vadd.f32 %v4516, %v4552
        %v4556 = vadd.f32 %v4517, %v4553
        %v4557 = vadd.f32 %v4518, %v4554
        %v4558 = vmul.f32 %v4543, %v4381
        %v4559 = vmul.f32 %v4544, %v4385
        %v4560 = vmul.f32 %v4545, %v4389
        %v4561 = vadd.f32 %v4522, %v4558
        %v4562 = vadd.f32 %v4523, %v4559
        %v4563 = vadd.f32 %v4524, %v4560
        %v4564 = vmul.f32 %v4543, %v4399
        %v4565 = vmul.f32 %v4544, %v4403
        %v4566 = vmul.f32 %v4545, %v4407
        %v4567 = vadd.f32 %v4528, %v4564
        %v4568 = vadd.f32 %v4529, %v4565
        %v4569 = vadd.f32 %v4530, %v4566
        %v4570 = vmul.f32 %v4543, %v4417
        %v4571 = vmul.f32 %v4544, %v4421
        %v4572 = vmul.f32 %v4545, %v4425
        %v4573 = vadd.f32 %v4534, %v4570
        %v4574 = vadd.f32 %v4535, %v4571
        %v4575 = vadd.f32 %v4536, %v4572
        %v4576 = vld [vmem:[%s3131 + $0x18] sm:$0x7f]
        %v4577 = vld [vmem:[%s3131 + $0x20] sm:$0x7f]
        %v4578 = vld [vmem:[%s3131 + $0x28] sm:$0x7f]
        %v4579 = vmul.f32 %v4576, %v4363
        %v4580 = vmul.f32 %v4577, %v4367
        %v4581 = vmul.f32 %v4578, %v4371
        %v4582 = vadd.f32 %v4549, %v4579
        %v4583 = vadd.f32 %v4550, %v4580
        %v4584 = vadd.f32 %v4551, %v4581
        %v4585 = vmul.f32 %v4576, %v4381
        %v4586 = vmul.f32 %v4577, %v4385
        %v4587 = vmul.f32 %v4578, %v4389
        %v4588 = vadd.f32 %v4555, %v4585
        %v4589 = vadd.f32 %v4556, %v4586
        %v4590 = vadd.f32 %v4557, %v4587
        %v4591 = vmul.f32 %v4576, %v4399
        %v4592 = vmul.f32 %v4577, %v4403
        %v4593 = vmul.f32 %v4578, %v4407
        %v4594 = vadd.f32 %v4561, %v4591
        %v4595 = vadd.f32 %v4562, %v4592
        %v4596 = vadd.f32 %v4563, %v4593
        %v4597 = vmul.f32 %v4576, %v4417
        %v4598 = vmul.f32 %v4577, %v4421
        %v4599 = vmul.f32 %v4578, %v4425
        %v4600 = vadd.f32 %v4567, %v4597
        %v4601 = vadd.f32 %v4568, %v4598
        %v4602 = vadd.f32 %v4569, %v4599
        %v4603 = vld [vmem:[%s3159 + $0x18] sm:$0x7f]
        %v4604 = vld [vmem:[%s3159 + $0x20] sm:$0x7f]
        %v4605 = vld [vmem:[%s3159 + $0x28] sm:$0x7f]
        %v4606 = vmul.f32 %v4603, %v4381
        %v4607 = vmul.f32 %v4604, %v4385
        %v4608 = vmul.f32 %v4605, %v4389
        %v4609 = vadd.f32 %v4582, %v4606
        %v4610 = vadd.f32 %v4583, %v4607
        %v4611 = vadd.f32 %v4584, %v4608
        %v4612 = vmul.f32 %v4603, %v4399
        %v4613 = vmul.f32 %v4604, %v4403
        %v4614 = vmul.f32 %v4605, %v4407
        %v4615 = vadd.f32 %v4588, %v4612
        %v4616 = vadd.f32 %v4589, %v4613
        %v4617 = vadd.f32 %v4590, %v4614
        %v4618 = vmul.f32 %v4603, %v4417
        %v4619 = vmul.f32 %v4604, %v4421
        %v4620 = vmul.f32 %v4605, %v4425
        %v4621 = vadd.f32 %v4594, %v4618
        %v4622 = vadd.f32 %v4595, %v4619
        %v4623 = vadd.f32 %v4596, %v4620
        %s4624 = scalar_lea.vmem [#allocation5], 27
        %v4625 = vld [vmem:[%s4624] ss:$8 sm:$0x7]
        %v4627 = vlaneseq
        %v4628 = vshrl.u32 %v4627, 7
        %v4629 = vsub.s32 0, %v4628
        %v4630 = vrot.slane %v4625, %v4629
        %v4631 = vlaneseq
        %v4632 = vshrl.u32 %v4631, 7
        %v4633 = vsub.s32 1, %v4632
        %v4634 = vrot.slane %v4625, %v4633
        %v4635 = vlaneseq
        %v4636 = vshrl.u32 %v4635, 7
        %v4637 = vsub.s32 2, %v4636
        %v4638 = vrot.slane %v4625, %v4637
        %s4642 = scalar_lea.vmem %s2347, 27 [#allocation5]
        %v4643 = vld [vmem:[%s4642] ss:$8 sm:$0x7]
        %v4645 = vlaneseq
        %v4646 = vshrl.u32 %v4645, 7
        %v4647 = vsub.s32 0, %v4646
        %v4648 = vrot.slane %v4643, %v4647
        %v4649 = vlaneseq
        %v4650 = vshrl.u32 %v4649, 7
        %v4651 = vsub.s32 1, %v4650
        %v4652 = vrot.slane %v4643, %v4651
        %v4653 = vlaneseq
        %v4654 = vshrl.u32 %v4653, 7
        %v4655 = vsub.s32 2, %v4654
        %v4656 = vrot.slane %v4643, %v4655
        %s4660 = scalar_lea.vmem %s2365, 27 [#allocation5]
        %v4661 = vld [vmem:[%s4660] ss:$8 sm:$0x7]
        %v4663 = vlaneseq
        %v4664 = vshrl.u32 %v4663, 7
        %v4665 = vsub.s32 0, %v4664
        %v4666 = vrot.slane %v4661, %v4665
        %v4667 = vlaneseq
        %v4668 = vshrl.u32 %v4667, 7
        %v4669 = vsub.s32 1, %v4668
        %v4670 = vrot.slane %v4661, %v4669
        %v4671 = vlaneseq
        %v4672 = vshrl.u32 %v4671, 7
        %v4673 = vsub.s32 2, %v4672
        %v4674 = vrot.slane %v4661, %v4673
        %s4678 = scalar_lea.vmem %s2383, 27 [#allocation5]
        %v4679 = vld [vmem:[%s4678] ss:$8 sm:$0x7]
        %v4681 = vlaneseq
        %v4682 = vshrl.u32 %v4681, 7
        %v4683 = vsub.s32 0, %v4682
        %v4684 = vrot.slane %v4679, %v4683
        %v4685 = vlaneseq
        %v4686 = vshrl.u32 %v4685, 7
        %v4687 = vsub.s32 1, %v4686
        %v4688 = vrot.slane %v4679, %v4687
        %v4689 = vlaneseq
        %v4690 = vshrl.u32 %v4689, 7
        %v4691 = vsub.s32 2, %v4690
        %v4692 = vrot.slane %v4679, %v4691
        %s4696 = scalar_lea.vmem %s2401, 27 [#allocation5]
        %v4697 = vld [vmem:[%s4696] ss:$8 sm:$0x7]
        %v4699 = vlaneseq
        %v4700 = vshrl.u32 %v4699, 7
        %v4701 = vsub.s32 0, %v4700
        %v4702 = vrot.slane %v4697, %v4701
        %v4703 = vlaneseq
        %v4704 = vshrl.u32 %v4703, 7
        %v4705 = vsub.s32 1, %v4704
        %v4706 = vrot.slane %v4697, %v4705
        %v4707 = vlaneseq
        %v4708 = vshrl.u32 %v4707, 7
        %v4709 = vsub.s32 2, %v4708
        %v4710 = vrot.slane %v4697, %v4709
        %v4714 = vld [vmem:[%s1593 + $0x18] sm:$0x7f]
        %v4715 = vld [vmem:[%s1593 + $0x20] sm:$0x7f]
        %v4716 = vld [vmem:[%s1593 + $0x28] sm:$0x7f]
        %v4717 = vmul.f32 %v4714, %v4630
        %v4718 = vmul.f32 %v4715, %v4634
        %v4719 = vmul.f32 %v4716, %v4638
        %v4720 = vadd.f32 %v4573, %v4717
        %v4721 = vadd.f32 %v4574, %v4718
        %v4722 = vadd.f32 %v4575, %v4719
        %v4723 = vmul.f32 %v4714, %v4648
        %v4724 = vmul.f32 %v4715, %v4652
        %v4725 = vmul.f32 %v4716, %v4656
        %v4726 = vadd.f32 %v4540, %v4723
        %v4727 = vadd.f32 %v4541, %v4724
        %v4728 = vadd.f32 %v4542, %v4725
        %v4729 = vmul.f32 %v4714, %v4666
        %v4730 = vmul.f32 %v4715, %v4670
        %v4731 = vmul.f32 %v4716, %v4674
        %v4732 = vadd.f32 %v4507, %v4729
        %v4733 = vadd.f32 %v4508, %v4730
        %v4734 = vadd.f32 %v4509, %v4731
        %v4735 = vld [vmem:[%s3292 + $0x18] sm:$0x7f]
        %v4736 = vld [vmem:[%s3292 + $0x20] sm:$0x7f]
        %v4737 = vld [vmem:[%s3292 + $0x28] sm:$0x7f]
        %v4738 = vmul.f32 %v4735, %v4630
        %v4739 = vmul.f32 %v4736, %v4634
        %v4740 = vmul.f32 %v4737, %v4638
        %v4741 = vadd.f32 %v4600, %v4738
        %v4742 = vadd.f32 %v4601, %v4739
        %v4743 = vadd.f32 %v4602, %v4740
        %v4744 = vmul.f32 %v4735, %v4648
        %v4745 = vmul.f32 %v4736, %v4652
        %v4746 = vmul.f32 %v4737, %v4656
        %v4747 = vadd.f32 %v4720, %v4744
        %v4748 = vadd.f32 %v4721, %v4745
        %v4749 = vadd.f32 %v4722, %v4746
        %v4750 = vmul.f32 %v4735, %v4666
        %v4751 = vmul.f32 %v4736, %v4670
        %v4752 = vmul.f32 %v4737, %v4674
        %v4753 = vadd.f32 %v4726, %v4750
        %v4754 = vadd.f32 %v4727, %v4751
        %v4755 = vadd.f32 %v4728, %v4752
        %v4756 = vmul.f32 %v4735, %v4684
        %v4757 = vmul.f32 %v4736, %v4688
        %v4758 = vmul.f32 %v4737, %v4692
        %v4759 = vadd.f32 %v4732, %v4756
        %v4760 = vadd.f32 %v4733, %v4757
        %v4761 = vadd.f32 %v4734, %v4758
        %v4762 = vld [vmem:[%s3320 + $0x18] sm:$0x7f]
        %v4763 = vld [vmem:[%s3320 + $0x20] sm:$0x7f]
        %v4764 = vld [vmem:[%s3320 + $0x28] sm:$0x7f]
        %v4765 = vmul.f32 %v4762, %v4630
        %v4766 = vmul.f32 %v4763, %v4634
        %v4767 = vmul.f32 %v4764, %v4638
        %v4768 = vadd.f32 %v4621, %v4765
        %v4769 = vadd.f32 %v4622, %v4766
        %v4770 = vadd.f32 %v4623, %v4767
        %v4771 = vmul.f32 %v4762, %v4648
        %v4772 = vmul.f32 %v4763, %v4652
        %v4773 = vmul.f32 %v4764, %v4656
        %v4774 = vadd.f32 %v4741, %v4771
        %v4775 = vadd.f32 %v4742, %v4772
        %v4776 = vadd.f32 %v4743, %v4773
        %v4777 = vmul.f32 %v4762, %v4666
        %v4778 = vmul.f32 %v4763, %v4670
        %v4779 = vmul.f32 %v4764, %v4674
        %v4780 = vadd.f32 %v4747, %v4777
        %v4781 = vadd.f32 %v4748, %v4778
        %v4782 = vadd.f32 %v4749, %v4779
        %v4783 = vmul.f32 %v4762, %v4684
        %v4784 = vmul.f32 %v4763, %v4688
        %v4785 = vmul.f32 %v4764, %v4692
        %v4786 = vadd.f32 %v4753, %v4783
        %v4787 = vadd.f32 %v4754, %v4784
        %v4788 = vadd.f32 %v4755, %v4785
        %v4789 = vmul.f32 %v4762, %v4702
        %v4790 = vmul.f32 %v4763, %v4706
        %v4791 = vmul.f32 %v4764, %v4710
        %v4792 = vadd.f32 %v4759, %v4789
        %v4793 = vadd.f32 %v4760, %v4790
        %v4794 = vadd.f32 %v4761, %v4791
        %v4795 = vld [vmem:[%s3354 + $0x18] sm:$0x7f]
        %v4796 = vld [vmem:[%s3354 + $0x20] sm:$0x7f]
        %v4797 = vld [vmem:[%s3354 + $0x28] sm:$0x7f]
        %v4798 = vmul.f32 %v4795, %v4630
        %v4799 = vmul.f32 %v4796, %v4634
        %v4800 = vmul.f32 %v4797, %v4638
        %v4801 = vadd.f32 %v4615, %v4798
        %v4802 = vadd.f32 %v4616, %v4799
        %v4803 = vadd.f32 %v4617, %v4800
        %v4804 = vmul.f32 %v4795, %v4648
        %v4805 = vmul.f32 %v4796, %v4652
        %v4806 = vmul.f32 %v4797, %v4656
        %v4807 = vadd.f32 %v4768, %v4804
        %v4808 = vadd.f32 %v4769, %v4805
        %v4809 = vadd.f32 %v4770, %v4806
        %v4810 = vmul.f32 %v4795, %v4666
        %v4811 = vmul.f32 %v4796, %v4670
        %v4812 = vmul.f32 %v4797, %v4674
        %v4813 = vadd.f32 %v4774, %v4810
        %v4814 = vadd.f32 %v4775, %v4811
        %v4815 = vadd.f32 %v4776, %v4812
        %v4816 = vmul.f32 %v4795, %v4684
        %v4817 = vmul.f32 %v4796, %v4688
        %v4818 = vmul.f32 %v4797, %v4692
        %v4819 = vadd.f32 %v4780, %v4816
        %v4820 = vadd.f32 %v4781, %v4817
        %v4821 = vadd.f32 %v4782, %v4818
        %v4822 = vmul.f32 %v4795, %v4702
        %v4823 = vmul.f32 %v4796, %v4706
        %v4824 = vmul.f32 %v4797, %v4710
        %v4825 = vadd.f32 %v4786, %v4822
        %v4826 = vadd.f32 %v4787, %v4823
        %v4827 = vadd.f32 %v4788, %v4824
        %v4828 = vld [vmem:[%s3388 + $0x18] sm:$0x7f]
        %v4829 = vld [vmem:[%s3388 + $0x20] sm:$0x7f]
        %v4830 = vld [vmem:[%s3388 + $0x28] sm:$0x7f]
        %v4831 = vmul.f32 %v4828, %v4630
        %v4832 = vmul.f32 %v4829, %v4634
        %v4833 = vmul.f32 %v4830, %v4638
        %v4834 = vadd.f32 %v4609, %v4831
        %v4835 = vadd.f32 %v4610, %v4832
        %v4836 = vadd.f32 %v4611, %v4833
        %v4837 = vmul.f32 %v4828, %v4648
        %v4838 = vmul.f32 %v4829, %v4652
        %v4839 = vmul.f32 %v4830, %v4656
        %v4840 = vadd.f32 %v4801, %v4837
        %v4841 = vadd.f32 %v4802, %v4838
        %v4842 = vadd.f32 %v4803, %v4839
        %v4843 = vmul.f32 %v4828, %v4666
        %v4844 = vmul.f32 %v4829, %v4670
        %v4845 = vmul.f32 %v4830, %v4674
        %v4846 = vadd.f32 %v4807, %v4843
        %v4847 = vadd.f32 %v4808, %v4844
        %v4848 = vadd.f32 %v4809, %v4845
        %v4849 = vmul.f32 %v4828, %v4684
        %v4850 = vmul.f32 %v4829, %v4688
        %v4851 = vmul.f32 %v4830, %v4692
        %v4852 = vadd.f32 %v4813, %v4849
        %v4853 = vadd.f32 %v4814, %v4850
        %v4854 = vadd.f32 %v4815, %v4851
        %v4855 = vmul.f32 %v4828, %v4702
        %v4856 = vmul.f32 %v4829, %v4706
        %v4857 = vmul.f32 %v4830, %v4710
        %v4858 = vadd.f32 %v4819, %v4855
        %v4859 = vadd.f32 %v4820, %v4856
        %v4860 = vadd.f32 %v4821, %v4857
        %v4861 = vld [vmem:[%s3422 + $0x18] sm:$0x7f]
        %v4862 = vld [vmem:[%s3422 + $0x20] sm:$0x7f]
        %v4863 = vld [vmem:[%s3422 + $0x28] sm:$0x7f]
        %v4864 = vmul.f32 %v4861, %v4648
        %v4865 = vmul.f32 %v4862, %v4652
        %v4866 = vmul.f32 %v4863, %v4656
        %v4867 = vadd.f32 %v4834, %v4864
        %v4868 = vadd.f32 %v4835, %v4865
        %v4869 = vadd.f32 %v4836, %v4866
        %v4870 = vmul.f32 %v4861, %v4666
        %v4871 = vmul.f32 %v4862, %v4670
        %v4872 = vmul.f32 %v4863, %v4674
        %v4873 = vadd.f32 %v4840, %v4870
        %v4874 = vadd.f32 %v4841, %v4871
        %v4875 = vadd.f32 %v4842, %v4872
        %v4876 = vmul.f32 %v4861, %v4684
        %v4877 = vmul.f32 %v4862, %v4688
        %v4878 = vmul.f32 %v4863, %v4692
        %v4879 = vadd.f32 %v4846, %v4876
        %v4880 = vadd.f32 %v4847, %v4877
        %v4881 = vadd.f32 %v4848, %v4878
        %v4882 = vmul.f32 %v4861, %v4702
        %v4883 = vmul.f32 %v4862, %v4706
        %v4884 = vmul.f32 %v4863, %v4710
        %v4885 = vadd.f32 %v4852, %v4882
        %v4886 = vadd.f32 %v4853, %v4883
        %v4887 = vadd.f32 %v4854, %v4884
        %v4888 = vld [vmem:[%s3450 + $0x18] sm:$0x7f]
        %v4889 = vld [vmem:[%s3450 + $0x20] sm:$0x7f]
        %v4890 = vld [vmem:[%s3450 + $0x28] sm:$0x7f]
        %v4891 = vmul.f32 %v4888, %v4666
        %v4892 = vmul.f32 %v4889, %v4670
        %v4893 = vmul.f32 %v4890, %v4674
        %v4894 = vadd.f32 %v4867, %v4891
        %v4895 = vadd.f32 %v4868, %v4892
        %v4896 = vadd.f32 %v4869, %v4893
        %v4897 = vmul.f32 %v4888, %v4684
        %v4898 = vmul.f32 %v4889, %v4688
        %v4899 = vmul.f32 %v4890, %v4692
        %v4900 = vadd.f32 %v4873, %v4897
        %v4901 = vadd.f32 %v4874, %v4898
        %v4902 = vadd.f32 %v4875, %v4899
        %v4903 = vmul.f32 %v4888, %v4702
        %v4904 = vmul.f32 %v4889, %v4706
        %v4905 = vmul.f32 %v4890, %v4710
        %v4906 = vadd.f32 %v4879, %v4903
        %v4907 = vadd.f32 %v4880, %v4904
        %v4908 = vadd.f32 %v4881, %v4905
        %s4909 = scalar_lea.vmem [#allocation5], 28
        %v4910 = vld [vmem:[%s4909] ss:$8 sm:$0x7]
        %v4912 = vlaneseq
        %v4913 = vshrl.u32 %v4912, 7
        %v4914 = vsub.s32 0, %v4913
        %v4915 = vrot.slane %v4910, %v4914
        %v4916 = vlaneseq
        %v4917 = vshrl.u32 %v4916, 7
        %v4918 = vsub.s32 1, %v4917
        %v4919 = vrot.slane %v4910, %v4918
        %v4920 = vlaneseq
        %v4921 = vshrl.u32 %v4920, 7
        %v4922 = vsub.s32 2, %v4921
        %v4923 = vrot.slane %v4910, %v4922
        %s4927 = scalar_lea.vmem %s2347, 28 [#allocation5]
        %v4928 = vld [vmem:[%s4927] ss:$8 sm:$0x7]
        %v4930 = vlaneseq
        %v4931 = vshrl.u32 %v4930, 7
        %v4932 = vsub.s32 0, %v4931
        %v4933 = vrot.slane %v4928, %v4932
        %v4934 = vlaneseq
        %v4935 = vshrl.u32 %v4934, 7
        %v4936 = vsub.s32 1, %v4935
        %v4937 = vrot.slane %v4928, %v4936
        %v4938 = vlaneseq
        %v4939 = vshrl.u32 %v4938, 7
        %v4940 = vsub.s32 2, %v4939
        %v4941 = vrot.slane %v4928, %v4940
        %s4945 = scalar_lea.vmem %s2365, 28 [#allocation5]
        %v4946 = vld [vmem:[%s4945] ss:$8 sm:$0x7]
        %v4948 = vlaneseq
        %v4949 = vshrl.u32 %v4948, 7
        %v4950 = vsub.s32 0, %v4949
        %v4951 = vrot.slane %v4946, %v4950
        %v4952 = vlaneseq
        %v4953 = vshrl.u32 %v4952, 7
        %v4954 = vsub.s32 1, %v4953
        %v4955 = vrot.slane %v4946, %v4954
        %v4956 = vlaneseq
        %v4957 = vshrl.u32 %v4956, 7
        %v4958 = vsub.s32 2, %v4957
        %v4959 = vrot.slane %v4946, %v4958
        %s4963 = scalar_lea.vmem %s2383, 28 [#allocation5]
        %v4964 = vld [vmem:[%s4963] ss:$8 sm:$0x7]
        %v4966 = vlaneseq
        %v4967 = vshrl.u32 %v4966, 7
        %v4968 = vsub.s32 0, %v4967
        %v4969 = vrot.slane %v4964, %v4968
        %v4970 = vlaneseq
        %v4971 = vshrl.u32 %v4970, 7
        %v4972 = vsub.s32 1, %v4971
        %v4973 = vrot.slane %v4964, %v4972
        %v4974 = vlaneseq
        %v4975 = vshrl.u32 %v4974, 7
        %v4976 = vsub.s32 2, %v4975
        %v4977 = vrot.slane %v4964, %v4976
        %s4981 = scalar_lea.vmem %s2401, 28 [#allocation5]
        %v4982 = vld [vmem:[%s4981] ss:$8 sm:$0x7]
        %v4984 = vlaneseq
        %v4985 = vshrl.u32 %v4984, 7
        %v4986 = vsub.s32 0, %v4985
        %v4987 = vrot.slane %v4982, %v4986
        %v4988 = vlaneseq
        %v4989 = vshrl.u32 %v4988, 7
        %v4990 = vsub.s32 1, %v4989
        %v4991 = vrot.slane %v4982, %v4990
        %v4992 = vlaneseq
        %v4993 = vshrl.u32 %v4992, 7
        %v4994 = vsub.s32 2, %v4993
        %v4995 = vrot.slane %v4982, %v4994
        %v4999 = vld [vmem:[%s1951 + $0x18] sm:$0x7f]
        %v5000 = vld [vmem:[%s1951 + $0x20] sm:$0x7f]
        %v5001 = vld [vmem:[%s1951 + $0x28] sm:$0x7f]
        %v5002 = vmul.f32 %v4999, %v4915
        %v5003 = vmul.f32 %v5000, %v4919
        %v5004 = vmul.f32 %v5001, %v4923
        %v5005 = vadd.f32 %v4858, %v5002
        %v5006 = vadd.f32 %v4859, %v5003
        %v5007 = vadd.f32 %v4860, %v5004
        %v5008 = vmul.f32 %v4999, %v4933
        %v5009 = vmul.f32 %v5000, %v4937
        %v5010 = vmul.f32 %v5001, %v4941
        %v5011 = vadd.f32 %v4825, %v5008
        %v5012 = vadd.f32 %v4826, %v5009
        %v5013 = vadd.f32 %v4827, %v5010
        %v5014 = vmul.f32 %v4999, %v4951
        %v5015 = vmul.f32 %v5000, %v4955
        %v5016 = vmul.f32 %v5001, %v4959
        %v5017 = vadd.f32 %v4792, %v5014
        %v5018 = vadd.f32 %v4793, %v5015
        %v5019 = vadd.f32 %v4794, %v5016
        %v5020 = vld [vmem:[%s3583 + $0x18] sm:$0x7f]
        %v5021 = vld [vmem:[%s3583 + $0x20] sm:$0x7f]
        %v5022 = vld [vmem:[%s3583 + $0x28] sm:$0x7f]
        %v5023 = vmul.f32 %v5020, %v4915
        %v5024 = vmul.f32 %v5021, %v4919
        %v5025 = vmul.f32 %v5022, %v4923
        %v5026 = vadd.f32 %v4885, %v5023
        %v5027 = vadd.f32 %v4886, %v5024
        %v5028 = vadd.f32 %v4887, %v5025
        %v5029 = vmul.f32 %v5020, %v4933
        %v5030 = vmul.f32 %v5021, %v4937
        %v5031 = vmul.f32 %v5022, %v4941
        %v5032 = vadd.f32 %v5005, %v5029
        %v5033 = vadd.f32 %v5006, %v5030
        %v5034 = vadd.f32 %v5007, %v5031
        %v5035 = vmul.f32 %v5020, %v4951
        %v5036 = vmul.f32 %v5021, %v4955
        %v5037 = vmul.f32 %v5022, %v4959
        %v5038 = vadd.f32 %v5011, %v5035
        %v5039 = vadd.f32 %v5012, %v5036
        %v5040 = vadd.f32 %v5013, %v5037
        %v5041 = vmul.f32 %v5020, %v4969
        %v5042 = vmul.f32 %v5021, %v4973
        %v5043 = vmul.f32 %v5022, %v4977
        %v5044 = vadd.f32 %v5017, %v5041
        %v5045 = vadd.f32 %v5018, %v5042
        %v5046 = vadd.f32 %v5019, %v5043
        %v5047 = vld [vmem:[%s3611 + $0x18] sm:$0x7f]
        %v5048 = vld [vmem:[%s3611 + $0x20] sm:$0x7f]
        %v5049 = vld [vmem:[%s3611 + $0x28] sm:$0x7f]
        %v5050 = vmul.f32 %v5047, %v4915
        %v5051 = vmul.f32 %v5048, %v4919
        %v5052 = vmul.f32 %v5049, %v4923
        %v5053 = vadd.f32 %v4906, %v5050
        %v5054 = vadd.f32 %v4907, %v5051
        %v5055 = vadd.f32 %v4908, %v5052
        %v5056 = vmul.f32 %v5047, %v4933
        %v5057 = vmul.f32 %v5048, %v4937
        %v5058 = vmul.f32 %v5049, %v4941
        %v5059 = vadd.f32 %v5026, %v5056
        %v5060 = vadd.f32 %v5027, %v5057
        %v5061 = vadd.f32 %v5028, %v5058
        %v5062 = vmul.f32 %v5047, %v4951
        %v5063 = vmul.f32 %v5048, %v4955
        %v5064 = vmul.f32 %v5049, %v4959
        %v5065 = vadd.f32 %v5032, %v5062
        %v5066 = vadd.f32 %v5033, %v5063
        %v5067 = vadd.f32 %v5034, %v5064
        %v5068 = vmul.f32 %v5047, %v4969
        %v5069 = vmul.f32 %v5048, %v4973
        %v5070 = vmul.f32 %v5049, %v4977
        %v5071 = vadd.f32 %v5038, %v5068
        %v5072 = vadd.f32 %v5039, %v5069
        %v5073 = vadd.f32 %v5040, %v5070
        %v5074 = vmul.f32 %v5047, %v4987
        %v5075 = vmul.f32 %v5048, %v4991
        %v5076 = vmul.f32 %v5049, %v4995
        %v5077 = vadd.f32 %v5044, %v5074
        %v5078 = vadd.f32 %v5045, %v5075
        %v5079 = vadd.f32 %v5046, %v5076
        %v5080 = vld [vmem:[%s3645 + $0x18] sm:$0x7f]
        %v5081 = vld [vmem:[%s3645 + $0x20] sm:$0x7f]
        %v5082 = vld [vmem:[%s3645 + $0x28] sm:$0x7f]
        %v5083 = vmul.f32 %v5080, %v4915
        %v5084 = vmul.f32 %v5081, %v4919
        %v5085 = vmul.f32 %v5082, %v4923
        %v5086 = vadd.f32 %v4900, %v5083
        %v5087 = vadd.f32 %v4901, %v5084
        %v5088 = vadd.f32 %v4902, %v5085
        %v5089 = vmul.f32 %v5080, %v4933
        %v5090 = vmul.f32 %v5081, %v4937
        %v5091 = vmul.f32 %v5082, %v4941
        %v5092 = vadd.f32 %v5053, %v5089
        %v5093 = vadd.f32 %v5054, %v5090
        %v5094 = vadd.f32 %v5055, %v5091
        %v5095 = vmul.f32 %v5080, %v4951
        %v5096 = vmul.f32 %v5081, %v4955
        %v5097 = vmul.f32 %v5082, %v4959
        %v5098 = vadd.f32 %v5059, %v5095
        %v5099 = vadd.f32 %v5060, %v5096
        %v5100 = vadd.f32 %v5061, %v5097
        %v5101 = vmul.f32 %v5080, %v4969
        %v5102 = vmul.f32 %v5081, %v4973
        %v5103 = vmul.f32 %v5082, %v4977
        %v5104 = vadd.f32 %v5065, %v5101
        %v5105 = vadd.f32 %v5066, %v5102
        %v5106 = vadd.f32 %v5067, %v5103
        %v5107 = vmul.f32 %v5080, %v4987
        %v5108 = vmul.f32 %v5081, %v4991
        %v5109 = vmul.f32 %v5082, %v4995
        %v5110 = vadd.f32 %v5071, %v5107
        %v5111 = vadd.f32 %v5072, %v5108
        %v5112 = vadd.f32 %v5073, %v5109
        %v5113 = vld [vmem:[%s3679 + $0x18] sm:$0x7f]
        %v5114 = vld [vmem:[%s3679 + $0x20] sm:$0x7f]
        %v5115 = vld [vmem:[%s3679 + $0x28] sm:$0x7f]
        %v5116 = vmul.f32 %v5113, %v4915
        %v5117 = vmul.f32 %v5114, %v4919
        %v5118 = vmul.f32 %v5115, %v4923
        %v5119 = vadd.f32 %v4894, %v5116
        %v5120 = vadd.f32 %v4895, %v5117
        %v5121 = vadd.f32 %v4896, %v5118
        %v5122 = vmul.f32 %v5113, %v4933
        %v5123 = vmul.f32 %v5114, %v4937
        %v5124 = vmul.f32 %v5115, %v4941
        %v5125 = vadd.f32 %v5086, %v5122
        %v5126 = vadd.f32 %v5087, %v5123
        %v5127 = vadd.f32 %v5088, %v5124
        %v5128 = vmul.f32 %v5113, %v4951
        %v5129 = vmul.f32 %v5114, %v4955
        %v5130 = vmul.f32 %v5115, %v4959
        %v5131 = vadd.f32 %v5092, %v5128
        %v5132 = vadd.f32 %v5093, %v5129
        %v5133 = vadd.f32 %v5094, %v5130
        %v5134 = vmul.f32 %v5113, %v4969
        %v5135 = vmul.f32 %v5114, %v4973
        %v5136 = vmul.f32 %v5115, %v4977
        %v5137 = vadd.f32 %v5098, %v5134
        %v5138 = vadd.f32 %v5099, %v5135
        %v5139 = vadd.f32 %v5100, %v5136
        %v5140 = vmul.f32 %v5113, %v4987
        %v5141 = vmul.f32 %v5114, %v4991
        %v5142 = vmul.f32 %v5115, %v4995
        %v5143 = vadd.f32 %v5104, %v5140
        %v5144 = vadd.f32 %v5105, %v5141
        %v5145 = vadd.f32 %v5106, %v5142
        %v5146 = vld [vmem:[%s3713 + $0x18] sm:$0x7f]
        %v5147 = vld [vmem:[%s3713 + $0x20] sm:$0x7f]
        %v5148 = vld [vmem:[%s3713 + $0x28] sm:$0x7f]
        %v5149 = vmul.f32 %v5146, %v4933
        %v5150 = vmul.f32 %v5147, %v4937
        %v5151 = vmul.f32 %v5148, %v4941
        %v5152 = vadd.f32 %v5119, %v5149
        %v5153 = vadd.f32 %v5120, %v5150
        %v5154 = vadd.f32 %v5121, %v5151
        %v5155 = vmul.f32 %v5146, %v4951
        %v5156 = vmul.f32 %v5147, %v4955
        %v5157 = vmul.f32 %v5148, %v4959
        %v5158 = vadd.f32 %v5125, %v5155
        %v5159 = vadd.f32 %v5126, %v5156
        %v5160 = vadd.f32 %v5127, %v5157
        %v5161 = vmul.f32 %v5146, %v4969
        %v5162 = vmul.f32 %v5147, %v4973
        %v5163 = vmul.f32 %v5148, %v4977
        %v5164 = vadd.f32 %v5131, %v5161
        %v5165 = vadd.f32 %v5132, %v5162
        %v5166 = vadd.f32 %v5133, %v5163
        %v5167 = vmul.f32 %v5146, %v4987
        %v5168 = vmul.f32 %v5147, %v4991
        %v5169 = vmul.f32 %v5148, %v4995
        %v5170 = vadd.f32 %v5137, %v5167
        %v5171 = vadd.f32 %v5138, %v5168
        %v5172 = vadd.f32 %v5139, %v5169
        %v5173 = vld [vmem:[%s3741 + $0x18] sm:$0x7f]
        %v5174 = vld [vmem:[%s3741 + $0x20] sm:$0x7f]
        %v5175 = vld [vmem:[%s3741 + $0x28] sm:$0x7f]
        %v5176 = vmul.f32 %v5173, %v4951
        %v5177 = vmul.f32 %v5174, %v4955
        %v5178 = vmul.f32 %v5175, %v4959
        %v5179 = vadd.f32 %v5152, %v5176
        %v5180 = vadd.f32 %v5153, %v5177
        %v5181 = vadd.f32 %v5154, %v5178
        %v5182 = vmul.f32 %v5173, %v4969
        %v5183 = vmul.f32 %v5174, %v4973
        %v5184 = vmul.f32 %v5175, %v4977
        %v5185 = vadd.f32 %v5158, %v5182
        %v5186 = vadd.f32 %v5159, %v5183
        %v5187 = vadd.f32 %v5160, %v5184
        %v5188 = vmul.f32 %v5173, %v4987
        %v5189 = vmul.f32 %v5174, %v4991
        %v5190 = vmul.f32 %v5175, %v4995
        %v5191 = vadd.f32 %v5164, %v5188
        %v5192 = vadd.f32 %v5165, %v5189
        %v5193 = vadd.f32 %v5166, %v5190
        %5194 = vst [vmem:[%s173 + $0x18] sm:$0x7f] %v5077
        %5195 = vst [vmem:[%s173 + $0x20] sm:$0x7f] %v5078
        %5196 = vst [vmem:[%s173 + $0x28] sm:$0x7f] %v5079
        %5197 = vst [vmem:[%s3766 + $0x18] sm:$0x7f] %v5110
        %5198 = vst [vmem:[%s3766 + $0x20] sm:$0x7f] %v5111
        %5199 = vst [vmem:[%s3766 + $0x28] sm:$0x7f] %v5112
        %5200 = vst [vmem:[%s3770 + $0x18] sm:$0x7f] %v5143
        %5201 = vst [vmem:[%s3770 + $0x20] sm:$0x7f] %v5144
        %5202 = vst [vmem:[%s3770 + $0x28] sm:$0x7f] %v5145
        %5203 = vst [vmem:[%s3774 + $0x18] sm:$0x7f] %v5170
        %5204 = vst [vmem:[%s3774 + $0x20] sm:$0x7f] %v5171
        %5205 = vst [vmem:[%s3774 + $0x28] sm:$0x7f] %v5172
        %5206 = vst [vmem:[%s3778 + $0x18] sm:$0x7f] %v5191
        %5207 = vst [vmem:[%s3778 + $0x20] sm:$0x7f] %v5192
        %5208 = vst [vmem:[%s3778 + $0x28] sm:$0x7f] %v5193
        %5209 = vst [vmem:[%s3782 + $0x18] sm:$0x7f] %v5185
        %5210 = vst [vmem:[%s3782 + $0x20] sm:$0x7f] %v5186
        %5211 = vst [vmem:[%s3782 + $0x28] sm:$0x7f] %v5187
        %5212 = vst [vmem:[%s3786 + $0x18] sm:$0x7f] %v5179
        %5213 = vst [vmem:[%s3786 + $0x20] sm:$0x7f] %v5180
        %5214 = vst [vmem:[%s3786 + $0x28] sm:$0x7f] %v5181
        %s5215 = scalar_lea.vmem [#allocation5], 48
        %v5216 = vld [vmem:[%s5215] ss:$8 sm:$0x7]
        %v5218 = vlaneseq
        %v5219 = vshrl.u32 %v5218, 7
        %v5220 = vsub.s32 0, %v5219
        %v5221 = vrot.slane %v5216, %v5220
        %v5222 = vlaneseq
        %v5223 = vshrl.u32 %v5222, 7
        %v5224 = vsub.s32 1, %v5223
        %v5225 = vrot.slane %v5216, %v5224
        %v5226 = vlaneseq
        %v5227 = vshrl.u32 %v5226, 7
        %v5228 = vsub.s32 2, %v5227
        %v5229 = vrot.slane %v5216, %v5228
        %s5233 = scalar_lea.vmem %s2347, 48 [#allocation5]
        %v5234 = vld [vmem:[%s5233] ss:$8 sm:$0x7]
        %v5236 = vlaneseq
        %v5237 = vshrl.u32 %v5236, 7
        %v5238 = vsub.s32 0, %v5237
        %v5239 = vrot.slane %v5234, %v5238
        %v5240 = vlaneseq
        %v5241 = vshrl.u32 %v5240, 7
        %v5242 = vsub.s32 1, %v5241
        %v5243 = vrot.slane %v5234, %v5242
        %v5244 = vlaneseq
        %v5245 = vshrl.u32 %v5244, 7
        %v5246 = vsub.s32 2, %v5245
        %v5247 = vrot.slane %v5234, %v5246
        %s5251 = scalar_lea.vmem %s2365, 48 [#allocation5]
        %v5252 = vld [vmem:[%s5251] ss:$8 sm:$0x7]
        %v5254 = vlaneseq
        %v5255 = vshrl.u32 %v5254, 7
        %v5256 = vsub.s32 0, %v5255
        %v5257 = vrot.slane %v5252, %v5256
        %v5258 = vlaneseq
        %v5259 = vshrl.u32 %v5258, 7
        %v5260 = vsub.s32 1, %v5259
        %v5261 = vrot.slane %v5252, %v5260
        %v5262 = vlaneseq
        %v5263 = vshrl.u32 %v5262, 7
        %v5264 = vsub.s32 2, %v5263
        %v5265 = vrot.slane %v5252, %v5264
        %s5269 = scalar_lea.vmem %s2383, 48 [#allocation5]
        %v5270 = vld [vmem:[%s5269] ss:$8 sm:$0x7]
        %v5272 = vlaneseq
        %v5273 = vshrl.u32 %v5272, 7
        %v5274 = vsub.s32 0, %v5273
        %v5275 = vrot.slane %v5270, %v5274
        %v5276 = vlaneseq
        %v5277 = vshrl.u32 %v5276, 7
        %v5278 = vsub.s32 1, %v5277
        %v5279 = vrot.slane %v5270, %v5278
        %v5280 = vlaneseq
        %v5281 = vshrl.u32 %v5280, 7
        %v5282 = vsub.s32 2, %v5281
        %v5283 = vrot.slane %v5270, %v5282
        %s5287 = scalar_lea.vmem %s2401, 48 [#allocation5]
        %v5288 = vld [vmem:[%s5287] ss:$8 sm:$0x7]
        %v5290 = vlaneseq
        %v5291 = vshrl.u32 %v5290, 7
        %v5292 = vsub.s32 0, %v5291
        %v5293 = vrot.slane %v5288, %v5292
        %v5294 = vlaneseq
        %v5295 = vshrl.u32 %v5294, 7
        %v5296 = vsub.s32 1, %v5295
        %v5297 = vrot.slane %v5288, %v5296
        %v5298 = vlaneseq
        %v5299 = vshrl.u32 %v5298, 7
        %v5300 = vsub.s32 2, %v5299
        %v5301 = vrot.slane %v5288, %v5300
        %v5305 = vld [vmem:[#allocation2 + $0x30] sm:$0x7f]
        %v5306 = vld [vmem:[#allocation2 + $0x38] sm:$0x7f]
        %v5307 = vld [vmem:[#allocation2 + $0x40] sm:$0x7f]
        %v5308 = vmul.f32 %v5305, %v5221
        %v5309 = vmul.f32 %v5306, %v5225
        %v5310 = vmul.f32 %v5307, %v5229
        %v5311 = vmul.f32 %v5305, %v5239
        %v5312 = vmul.f32 %v5306, %v5243
        %v5313 = vmul.f32 %v5307, %v5247
        %v5314 = vmul.f32 %v5305, %v5257
        %v5315 = vmul.f32 %v5306, %v5261
        %v5316 = vmul.f32 %v5307, %v5265
        %v5317 = vld [vmem:[%s2431 + $0x30] sm:$0x7f]
        %v5318 = vld [vmem:[%s2431 + $0x38] sm:$0x7f]
        %v5319 = vld [vmem:[%s2431 + $0x40] sm:$0x7f]
        %v5320 = vmul.f32 %v5317, %v5221
        %v5321 = vmul.f32 %v5318, %v5225
        %v5322 = vmul.f32 %v5319, %v5229
        %v5323 = vmul.f32 %v5317, %v5239
        %v5324 = vmul.f32 %v5318, %v5243
        %v5325 = vmul.f32 %v5319, %v5247
        %v5326 = vadd.f32 %v5308, %v5323
        %v5327 = vadd.f32 %v5309, %v5324
        %v5328 = vadd.f32 %v5310, %v5325
        %v5329 = vmul.f32 %v5317, %v5257
        %v5330 = vmul.f32 %v5318, %v5261
        %v5331 = vmul.f32 %v5319, %v5265
        %v5332 = vadd.f32 %v5311, %v5329
        %v5333 = vadd.f32 %v5312, %v5330
        %v5334 = vadd.f32 %v5313, %v5331
        %v5335 = vmul.f32 %v5317, %v5275
        %v5336 = vmul.f32 %v5318, %v5279
        %v5337 = vmul.f32 %v5319, %v5283
        %v5338 = vadd.f32 %v5314, %v5335
        %v5339 = vadd.f32 %v5315, %v5336
        %v5340 = vadd.f32 %v5316, %v5337
        %v5341 = vld [vmem:[%s2456 + $0x30] sm:$0x7f]
        %v5342 = vld [vmem:[%s2456 + $0x38] sm:$0x7f]
        %v5343 = vld [vmem:[%s2456 + $0x40] sm:$0x7f]
        %v5344 = vmul.f32 %v5341, %v5221
        %v5345 = vmul.f32 %v5342, %v5225
        %v5346 = vmul.f32 %v5343, %v5229
        %v5347 = vmul.f32 %v5341, %v5239
        %v5348 = vmul.f32 %v5342, %v5243
        %v5349 = vmul.f32 %v5343, %v5247
        %v5350 = vadd.f32 %v5320, %v5347
        %v5351 = vadd.f32 %v5321, %v5348
        %v5352 = vadd.f32 %v5322, %v5349
        %v5353 = vmul.f32 %v5341, %v5257
        %v5354 = vmul.f32 %v5342, %v5261
        %v5355 = vmul.f32 %v5343, %v5265
        %v5356 = vadd.f32 %v5326, %v5353
        %v5357 = vadd.f32 %v5327, %v5354
        %v5358 = vadd.f32 %v5328, %v5355
        %v5359 = vmul.f32 %v5341, %v5275
        %v5360 = vmul.f32 %v5342, %v5279
        %v5361 = vmul.f32 %v5343, %v5283
        %v5362 = vadd.f32 %v5332, %v5359
        %v5363 = vadd.f32 %v5333, %v5360
        %v5364 = vadd.f32 %v5334, %v5361
        %v5365 = vmul.f32 %v5341, %v5293
        %v5366 = vmul.f32 %v5342, %v5297
        %v5367 = vmul.f32 %v5343, %v5301
        %v5368 = vadd.f32 %v5338, %v5365
        %v5369 = vadd.f32 %v5339, %v5366
        %v5370 = vadd.f32 %v5340, %v5367
        %v5371 = vld [vmem:[%s2487 + $0x30] sm:$0x7f]
        %v5372 = vld [vmem:[%s2487 + $0x38] sm:$0x7f]
        %v5373 = vld [vmem:[%s2487 + $0x40] sm:$0x7f]
        %v5374 = vmul.f32 %v5371, %v5221
        %v5375 = vmul.f32 %v5372, %v5225
        %v5376 = vmul.f32 %v5373, %v5229
        %v5377 = vmul.f32 %v5371, %v5239
        %v5378 = vmul.f32 %v5372, %v5243
        %v5379 = vmul.f32 %v5373, %v5247
        %v5380 = vadd.f32 %v5344, %v5377
        %v5381 = vadd.f32 %v5345, %v5378
        %v5382 = vadd.f32 %v5346, %v5379
        %v5383 = vmul.f32 %v5371, %v5257
        %v5384 = vmul.f32 %v5372, %v5261
        %v5385 = vmul.f32 %v5373, %v5265
        %v5386 = vadd.f32 %v5350, %v5383
        %v5387 = vadd.f32 %v5351, %v5384
        %v5388 = vadd.f32 %v5352, %v5385
        %v5389 = vmul.f32 %v5371, %v5275
        %v5390 = vmul.f32 %v5372, %v5279
        %v5391 = vmul.f32 %v5373, %v5283
        %v5392 = vadd.f32 %v5356, %v5389
        %v5393 = vadd.f32 %v5357, %v5390
        %v5394 = vadd.f32 %v5358, %v5391
        %v5395 = vmul.f32 %v5371, %v5293
        %v5396 = vmul.f32 %v5372, %v5297
        %v5397 = vmul.f32 %v5373, %v5301
        %v5398 = vadd.f32 %v5362, %v5395
        %v5399 = vadd.f32 %v5363, %v5396
        %v5400 = vadd.f32 %v5364, %v5397
        %v5401 = vld [vmem:[%s2518 + $0x30] sm:$0x7f]
        %v5402 = vld [vmem:[%s2518 + $0x38] sm:$0x7f]
        %v5403 = vld [vmem:[%s2518 + $0x40] sm:$0x7f]
        %v5404 = vmul.f32 %v5401, %v5221
        %v5405 = vmul.f32 %v5402, %v5225
        %v5406 = vmul.f32 %v5403, %v5229
        %v5407 = vmul.f32 %v5401, %v5239
        %v5408 = vmul.f32 %v5402, %v5243
        %v5409 = vmul.f32 %v5403, %v5247
        %v5410 = vadd.f32 %v5374, %v5407
        %v5411 = vadd.f32 %v5375, %v5408
        %v5412 = vadd.f32 %v5376, %v5409
        %v5413 = vmul.f32 %v5401, %v5257
        %v5414 = vmul.f32 %v5402, %v5261
        %v5415 = vmul.f32 %v5403, %v5265
        %v5416 = vadd.f32 %v5380, %v5413
        %v5417 = vadd.f32 %v5381, %v5414
        %v5418 = vadd.f32 %v5382, %v5415
        %v5419 = vmul.f32 %v5401, %v5275
        %v5420 = vmul.f32 %v5402, %v5279
        %v5421 = vmul.f32 %v5403, %v5283
        %v5422 = vadd.f32 %v5386, %v5419
        %v5423 = vadd.f32 %v5387, %v5420
        %v5424 = vadd.f32 %v5388, %v5421
        %v5425 = vmul.f32 %v5401, %v5293
        %v5426 = vmul.f32 %v5402, %v5297
        %v5427 = vmul.f32 %v5403, %v5301
        %v5428 = vadd.f32 %v5392, %v5425
        %v5429 = vadd.f32 %v5393, %v5426
        %v5430 = vadd.f32 %v5394, %v5427
        %v5431 = vld [vmem:[%s2549 + $0x30] sm:$0x7f]
        %v5432 = vld [vmem:[%s2549 + $0x38] sm:$0x7f]
        %v5433 = vld [vmem:[%s2549 + $0x40] sm:$0x7f]
        %v5434 = vmul.f32 %v5431, %v5239
        %v5435 = vmul.f32 %v5432, %v5243
        %v5436 = vmul.f32 %v5433, %v5247
        %v5437 = vadd.f32 %v5404, %v5434
        %v5438 = vadd.f32 %v5405, %v5435
        %v5439 = vadd.f32 %v5406, %v5436
        %v5440 = vmul.f32 %v5431, %v5257
        %v5441 = vmul.f32 %v5432, %v5261
        %v5442 = vmul.f32 %v5433, %v5265
        %v5443 = vadd.f32 %v5410, %v5440
        %v5444 = vadd.f32 %v5411, %v5441
        %v5445 = vadd.f32 %v5412, %v5442
        %v5446 = vmul.f32 %v5431, %v5275
        %v5447 = vmul.f32 %v5432, %v5279
        %v5448 = vmul.f32 %v5433, %v5283
        %v5449 = vadd.f32 %v5416, %v5446
        %v5450 = vadd.f32 %v5417, %v5447
        %v5451 = vadd.f32 %v5418, %v5448
        %v5452 = vmul.f32 %v5431, %v5293
        %v5453 = vmul.f32 %v5432, %v5297
        %v5454 = vmul.f32 %v5433, %v5301
        %v5455 = vadd.f32 %v5422, %v5452
        %v5456 = vadd.f32 %v5423, %v5453
        %v5457 = vadd.f32 %v5424, %v5454
        %v5458 = vld [vmem:[%s2577 + $0x30] sm:$0x7f]
        %v5459 = vld [vmem:[%s2577 + $0x38] sm:$0x7f]
        %v5460 = vld [vmem:[%s2577 + $0x40] sm:$0x7f]
        %v5461 = vmul.f32 %v5458, %v5257
        %v5462 = vmul.f32 %v5459, %v5261
        %v5463 = vmul.f32 %v5460, %v5265
        %v5464 = vadd.f32 %v5437, %v5461
        %v5465 = vadd.f32 %v5438, %v5462
        %v5466 = vadd.f32 %v5439, %v5463
        %v5467 = vmul.f32 %v5458, %v5275
        %v5468 = vmul.f32 %v5459, %v5279
        %v5469 = vmul.f32 %v5460, %v5283
        %v5470 = vadd.f32 %v5443, %v5467
        %v5471 = vadd.f32 %v5444, %v5468
        %v5472 = vadd.f32 %v5445, %v5469
        %v5473 = vmul.f32 %v5458, %v5293
        %v5474 = vmul.f32 %v5459, %v5297
        %v5475 = vmul.f32 %v5460, %v5301
        %v5476 = vadd.f32 %v5449, %v5473
        %v5477 = vadd.f32 %v5450, %v5474
        %v5478 = vadd.f32 %v5451, %v5475
        %s5479 = scalar_lea.vmem [#allocation5], 49
        %v5480 = vld [vmem:[%s5479] ss:$8 sm:$0x7]
        %v5482 = vlaneseq
        %v5483 = vshrl.u32 %v5482, 7
        %v5484 = vsub.s32 0, %v5483
        %v5485 = vrot.slane %v5480, %v5484
        %v5486 = vlaneseq
        %v5487 = vshrl.u32 %v5486, 7
        %v5488 = vsub.s32 1, %v5487
        %v5489 = vrot.slane %v5480, %v5488
        %v5490 = vlaneseq
        %v5491 = vshrl.u32 %v5490, 7
        %v5492 = vsub.s32 2, %v5491
        %v5493 = vrot.slane %v5480, %v5492
        %s5497 = scalar_lea.vmem %s2347, 49 [#allocation5]
        %v5498 = vld [vmem:[%s5497] ss:$8 sm:$0x7]
        %v5500 = vlaneseq
        %v5501 = vshrl.u32 %v5500, 7
        %v5502 = vsub.s32 0, %v5501
        %v5503 = vrot.slane %v5498, %v5502
        %v5504 = vlaneseq
        %v5505 = vshrl.u32 %v5504, 7
        %v5506 = vsub.s32 1, %v5505
        %v5507 = vrot.slane %v5498, %v5506
        %v5508 = vlaneseq
        %v5509 = vshrl.u32 %v5508, 7
        %v5510 = vsub.s32 2, %v5509
        %v5511 = vrot.slane %v5498, %v5510
        %s5515 = scalar_lea.vmem %s2365, 49 [#allocation5]
        %v5516 = vld [vmem:[%s5515] ss:$8 sm:$0x7]
        %v5518 = vlaneseq
        %v5519 = vshrl.u32 %v5518, 7
        %v5520 = vsub.s32 0, %v5519
        %v5521 = vrot.slane %v5516, %v5520
        %v5522 = vlaneseq
        %v5523 = vshrl.u32 %v5522, 7
        %v5524 = vsub.s32 1, %v5523
        %v5525 = vrot.slane %v5516, %v5524
        %v5526 = vlaneseq
        %v5527 = vshrl.u32 %v5526, 7
        %v5528 = vsub.s32 2, %v5527
        %v5529 = vrot.slane %v5516, %v5528
        %s5533 = scalar_lea.vmem %s2383, 49 [#allocation5]
        %v5534 = vld [vmem:[%s5533] ss:$8 sm:$0x7]
        %v5536 = vlaneseq
        %v5537 = vshrl.u32 %v5536, 7
        %v5538 = vsub.s32 0, %v5537
        %v5539 = vrot.slane %v5534, %v5538
        %v5540 = vlaneseq
        %v5541 = vshrl.u32 %v5540, 7
        %v5542 = vsub.s32 1, %v5541
        %v5543 = vrot.slane %v5534, %v5542
        %v5544 = vlaneseq
        %v5545 = vshrl.u32 %v5544, 7
        %v5546 = vsub.s32 2, %v5545
        %v5547 = vrot.slane %v5534, %v5546
        %s5551 = scalar_lea.vmem %s2401, 49 [#allocation5]
        %v5552 = vld [vmem:[%s5551] ss:$8 sm:$0x7]
        %v5554 = vlaneseq
        %v5555 = vshrl.u32 %v5554, 7
        %v5556 = vsub.s32 0, %v5555
        %v5557 = vrot.slane %v5552, %v5556
        %v5558 = vlaneseq
        %v5559 = vshrl.u32 %v5558, 7
        %v5560 = vsub.s32 1, %v5559
        %v5561 = vrot.slane %v5552, %v5560
        %v5562 = vlaneseq
        %v5563 = vshrl.u32 %v5562, 7
        %v5564 = vsub.s32 2, %v5563
        %v5565 = vrot.slane %v5552, %v5564
        %v5569 = vld [vmem:[%s1105 + $0x30] sm:$0x7f]
        %v5570 = vld [vmem:[%s1105 + $0x38] sm:$0x7f]
        %v5571 = vld [vmem:[%s1105 + $0x40] sm:$0x7f]
        %v5572 = vmul.f32 %v5569, %v5485
        %v5573 = vmul.f32 %v5570, %v5489
        %v5574 = vmul.f32 %v5571, %v5493
        %v5575 = vadd.f32 %v5428, %v5572
        %v5576 = vadd.f32 %v5429, %v5573
        %v5577 = vadd.f32 %v5430, %v5574
        %v5578 = vmul.f32 %v5569, %v5503
        %v5579 = vmul.f32 %v5570, %v5507
        %v5580 = vmul.f32 %v5571, %v5511
        %v5581 = vadd.f32 %v5398, %v5578
        %v5582 = vadd.f32 %v5399, %v5579
        %v5583 = vadd.f32 %v5400, %v5580
        %v5584 = vmul.f32 %v5569, %v5521
        %v5585 = vmul.f32 %v5570, %v5525
        %v5586 = vmul.f32 %v5571, %v5529
        %v5587 = vadd.f32 %v5368, %v5584
        %v5588 = vadd.f32 %v5369, %v5585
        %v5589 = vadd.f32 %v5370, %v5586
        %v5590 = vld [vmem:[%s2710 + $0x30] sm:$0x7f]
        %v5591 = vld [vmem:[%s2710 + $0x38] sm:$0x7f]
        %v5592 = vld [vmem:[%s2710 + $0x40] sm:$0x7f]
        %v5593 = vmul.f32 %v5590, %v5485
        %v5594 = vmul.f32 %v5591, %v5489
        %v5595 = vmul.f32 %v5592, %v5493
        %v5596 = vadd.f32 %v5455, %v5593
        %v5597 = vadd.f32 %v5456, %v5594
        %v5598 = vadd.f32 %v5457, %v5595
        %v5599 = vmul.f32 %v5590, %v5503
        %v5600 = vmul.f32 %v5591, %v5507
        %v5601 = vmul.f32 %v5592, %v5511
        %v5602 = vadd.f32 %v5575, %v5599
        %v5603 = vadd.f32 %v5576, %v5600
        %v5604 = vadd.f32 %v5577, %v5601
        %v5605 = vmul.f32 %v5590, %v5521
        %v5606 = vmul.f32 %v5591, %v5525
        %v5607 = vmul.f32 %v5592, %v5529
        %v5608 = vadd.f32 %v5581, %v5605
        %v5609 = vadd.f32 %v5582, %v5606
        %v5610 = vadd.f32 %v5583, %v5607
        %v5611 = vmul.f32 %v5590, %v5539
        %v5612 = vmul.f32 %v5591, %v5543
        %v5613 = vmul.f32 %v5592, %v5547
        %v5614 = vadd.f32 %v5587, %v5611
        %v5615 = vadd.f32 %v5588, %v5612
        %v5616 = vadd.f32 %v5589, %v5613
        %v5617 = vld [vmem:[%s2738 + $0x30] sm:$0x7f]
        %v5618 = vld [vmem:[%s2738 + $0x38] sm:$0x7f]
        %v5619 = vld [vmem:[%s2738 + $0x40] sm:$0x7f]
        %v5620 = vmul.f32 %v5617, %v5485
        %v5621 = vmul.f32 %v5618, %v5489
        %v5622 = vmul.f32 %v5619, %v5493
        %v5623 = vadd.f32 %v5476, %v5620
        %v5624 = vadd.f32 %v5477, %v5621
        %v5625 = vadd.f32 %v5478, %v5622
        %v5626 = vmul.f32 %v5617, %v5503
        %v5627 = vmul.f32 %v5618, %v5507
        %v5628 = vmul.f32 %v5619, %v5511
        %v5629 = vadd.f32 %v5596, %v5626
        %v5630 = vadd.f32 %v5597, %v5627
        %v5631 = vadd.f32 %v5598, %v5628
        %v5632 = vmul.f32 %v5617, %v5521
        %v5633 = vmul.f32 %v5618, %v5525
        %v5634 = vmul.f32 %v5619, %v5529
        %v5635 = vadd.f32 %v5602, %v5632
        %v5636 = vadd.f32 %v5603, %v5633
        %v5637 = vadd.f32 %v5604, %v5634
        %v5638 = vmul.f32 %v5617, %v5539
        %v5639 = vmul.f32 %v5618, %v5543
        %v5640 = vmul.f32 %v5619, %v5547
        %v5641 = vadd.f32 %v5608, %v5638
        %v5642 = vadd.f32 %v5609, %v5639
        %v5643 = vadd.f32 %v5610, %v5640
        %v5644 = vmul.f32 %v5617, %v5557
        %v5645 = vmul.f32 %v5618, %v5561
        %v5646 = vmul.f32 %v5619, %v5565
        %v5647 = vadd.f32 %v5614, %v5644
        %v5648 = vadd.f32 %v5615, %v5645
        %v5649 = vadd.f32 %v5616, %v5646
        %v5650 = vld [vmem:[%s2772 + $0x30] sm:$0x7f]
        %v5651 = vld [vmem:[%s2772 + $0x38] sm:$0x7f]
        %v5652 = vld [vmem:[%s2772 + $0x40] sm:$0x7f]
        %v5653 = vmul.f32 %v5650, %v5485
        %v5654 = vmul.f32 %v5651, %v5489
        %v5655 = vmul.f32 %v5652, %v5493
        %v5656 = vadd.f32 %v5470, %v5653
        %v5657 = vadd.f32 %v5471, %v5654
        %v5658 = vadd.f32 %v5472, %v5655
        %v5659 = vmul.f32 %v5650, %v5503
        %v5660 = vmul.f32 %v5651, %v5507
        %v5661 = vmul.f32 %v5652, %v5511
        %v5662 = vadd.f32 %v5623, %v5659
        %v5663 = vadd.f32 %v5624, %v5660
        %v5664 = vadd.f32 %v5625, %v5661
        %v5665 = vmul.f32 %v5650, %v5521
        %v5666 = vmul.f32 %v5651, %v5525
        %v5667 = vmul.f32 %v5652, %v5529
        %v5668 = vadd.f32 %v5629, %v5665
        %v5669 = vadd.f32 %v5630, %v5666
        %v5670 = vadd.f32 %v5631, %v5667
        %v5671 = vmul.f32 %v5650, %v5539
        %v5672 = vmul.f32 %v5651, %v5543
        %v5673 = vmul.f32 %v5652, %v5547
        %v5674 = vadd.f32 %v5635, %v5671
        %v5675 = vadd.f32 %v5636, %v5672
        %v5676 = vadd.f32 %v5637, %v5673
        %v5677 = vmul.f32 %v5650, %v5557
        %v5678 = vmul.f32 %v5651, %v5561
        %v5679 = vmul.f32 %v5652, %v5565
        %v5680 = vadd.f32 %v5641, %v5677
        %v5681 = vadd.f32 %v5642, %v5678
        %v5682 = vadd.f32 %v5643, %v5679
        %v5683 = vld [vmem:[%s2806 + $0x30] sm:$0x7f]
        %v5684 = vld [vmem:[%s2806 + $0x38] sm:$0x7f]
        %v5685 = vld [vmem:[%s2806 + $0x40] sm:$0x7f]
        %v5686 = vmul.f32 %v5683, %v5485
        %v5687 = vmul.f32 %v5684, %v5489
        %v5688 = vmul.f32 %v5685, %v5493
        %v5689 = vadd.f32 %v5464, %v5686
        %v5690 = vadd.f32 %v5465, %v5687
        %v5691 = vadd.f32 %v5466, %v5688
        %v5692 = vmul.f32 %v5683, %v5503
        %v5693 = vmul.f32 %v5684, %v5507
        %v5694 = vmul.f32 %v5685, %v5511
        %v5695 = vadd.f32 %v5656, %v5692
        %v5696 = vadd.f32 %v5657, %v5693
        %v5697 = vadd.f32 %v5658, %v5694
        %v5698 = vmul.f32 %v5683, %v5521
        %v5699 = vmul.f32 %v5684, %v5525
        %v5700 = vmul.f32 %v5685, %v5529
        %v5701 = vadd.f32 %v5662, %v5698
        %v5702 = vadd.f32 %v5663, %v5699
        %v5703 = vadd.f32 %v5664, %v5700
        %v5704 = vmul.f32 %v5683, %v5539
        %v5705 = vmul.f32 %v5684, %v5543
        %v5706 = vmul.f32 %v5685, %v5547
        %v5707 = vadd.f32 %v5668, %v5704
        %v5708 = vadd.f32 %v5669, %v5705
        %v5709 = vadd.f32 %v5670, %v5706
        %v5710 = vmul.f32 %v5683, %v5557
        %v5711 = vmul.f32 %v5684, %v5561
        %v5712 = vmul.f32 %v5685, %v5565
        %v5713 = vadd.f32 %v5674, %v5710
        %v5714 = vadd.f32 %v5675, %v5711
        %v5715 = vadd.f32 %v5676, %v5712
        %v5716 = vld [vmem:[%s2840 + $0x30] sm:$0x7f]
        %v5717 = vld [vmem:[%s2840 + $0x38] sm:$0x7f]
        %v5718 = vld [vmem:[%s2840 + $0x40] sm:$0x7f]
        %v5719 = vmul.f32 %v5716, %v5503
        %v5720 = vmul.f32 %v5717, %v5507
        %v5721 = vmul.f32 %v5718, %v5511
        %v5722 = vadd.f32 %v5689, %v5719
        %v5723 = vadd.f32 %v5690, %v5720
        %v5724 = vadd.f32 %v5691, %v5721
        %v5725 = vmul.f32 %v5716, %v5521
        %v5726 = vmul.f32 %v5717, %v5525
        %v5727 = vmul.f32 %v5718, %v5529
        %v5728 = vadd.f32 %v5695, %v5725
        %v5729 = vadd.f32 %v5696, %v5726
        %v5730 = vadd.f32 %v5697, %v5727
        %v5731 = vmul.f32 %v5716, %v5539
        %v5732 = vmul.f32 %v5717, %v5543
        %v5733 = vmul.f32 %v5718, %v5547
        %v5734 = vadd.f32 %v5701, %v5731
        %v5735 = vadd.f32 %v5702, %v5732
        %v5736 = vadd.f32 %v5703, %v5733
        %v5737 = vmul.f32 %v5716, %v5557
        %v5738 = vmul.f32 %v5717, %v5561
        %v5739 = vmul.f32 %v5718, %v5565
        %v5740 = vadd.f32 %v5707, %v5737
        %v5741 = vadd.f32 %v5708, %v5738
        %v5742 = vadd.f32 %v5709, %v5739
        %v5743 = vld [vmem:[%s2868 + $0x30] sm:$0x7f]
        %v5744 = vld [vmem:[%s2868 + $0x38] sm:$0x7f]
        %v5745 = vld [vmem:[%s2868 + $0x40] sm:$0x7f]
        %v5746 = vmul.f32 %v5743, %v5521
        %v5747 = vmul.f32 %v5744, %v5525
        %v5748 = vmul.f32 %v5745, %v5529
        %v5749 = vadd.f32 %v5722, %v5746
        %v5750 = vadd.f32 %v5723, %v5747
        %v5751 = vadd.f32 %v5724, %v5748
        %v5752 = vmul.f32 %v5743, %v5539
        %v5753 = vmul.f32 %v5744, %v5543
        %v5754 = vmul.f32 %v5745, %v5547
        %v5755 = vadd.f32 %v5728, %v5752
        %v5756 = vadd.f32 %v5729, %v5753
        %v5757 = vadd.f32 %v5730, %v5754
        %v5758 = vmul.f32 %v5743, %v5557
        %v5759 = vmul.f32 %v5744, %v5561
        %v5760 = vmul.f32 %v5745, %v5565
        %v5761 = vadd.f32 %v5734, %v5758
        %v5762 = vadd.f32 %v5735, %v5759
        %v5763 = vadd.f32 %v5736, %v5760
        %s5764 = scalar_lea.vmem [#allocation5], 50
        %v5765 = vld [vmem:[%s5764] ss:$8 sm:$0x7]
        %v5767 = vlaneseq
        %v5768 = vshrl.u32 %v5767, 7
        %v5769 = vsub.s32 0, %v5768
        %v5770 = vrot.slane %v5765, %v5769
        %v5771 = vlaneseq
        %v5772 = vshrl.u32 %v5771, 7
        %v5773 = vsub.s32 1, %v5772
        %v5774 = vrot.slane %v5765, %v5773
        %v5775 = vlaneseq
        %v5776 = vshrl.u32 %v5775, 7
        %v5777 = vsub.s32 2, %v5776
        %v5778 = vrot.slane %v5765, %v5777
        %s5782 = scalar_lea.vmem %s2347, 50 [#allocation5]
        %v5783 = vld [vmem:[%s5782] ss:$8 sm:$0x7]
        %v5785 = vlaneseq
        %v5786 = vshrl.u32 %v5785, 7
        %v5787 = vsub.s32 0, %v5786
        %v5788 = vrot.slane %v5783, %v5787
        %v5789 = vlaneseq
        %v5790 = vshrl.u32 %v5789, 7
        %v5791 = vsub.s32 1, %v5790
        %v5792 = vrot.slane %v5783, %v5791
        %v5793 = vlaneseq
        %v5794 = vshrl.u32 %v5793, 7
        %v5795 = vsub.s32 2, %v5794
        %v5796 = vrot.slane %v5783, %v5795
        %s5800 = scalar_lea.vmem %s2365, 50 [#allocation5]
        %v5801 = vld [vmem:[%s5800] ss:$8 sm:$0x7]
        %v5803 = vlaneseq
        %v5804 = vshrl.u32 %v5803, 7
        %v5805 = vsub.s32 0, %v5804
        %v5806 = vrot.slane %v5801, %v5805
        %v5807 = vlaneseq
        %v5808 = vshrl.u32 %v5807, 7
        %v5809 = vsub.s32 1, %v5808
        %v5810 = vrot.slane %v5801, %v5809
        %v5811 = vlaneseq
        %v5812 = vshrl.u32 %v5811, 7
        %v5813 = vsub.s32 2, %v5812
        %v5814 = vrot.slane %v5801, %v5813
        %s5818 = scalar_lea.vmem %s2383, 50 [#allocation5]
        %v5819 = vld [vmem:[%s5818] ss:$8 sm:$0x7]
        %v5821 = vlaneseq
        %v5822 = vshrl.u32 %v5821, 7
        %v5823 = vsub.s32 0, %v5822
        %v5824 = vrot.slane %v5819, %v5823
        %v5825 = vlaneseq
        %v5826 = vshrl.u32 %v5825, 7
        %v5827 = vsub.s32 1, %v5826
        %v5828 = vrot.slane %v5819, %v5827
        %v5829 = vlaneseq
        %v5830 = vshrl.u32 %v5829, 7
        %v5831 = vsub.s32 2, %v5830
        %v5832 = vrot.slane %v5819, %v5831
        %s5836 = scalar_lea.vmem %s2401, 50 [#allocation5]
        %v5837 = vld [vmem:[%s5836] ss:$8 sm:$0x7]
        %v5839 = vlaneseq
        %v5840 = vshrl.u32 %v5839, 7
        %v5841 = vsub.s32 0, %v5840
        %v5842 = vrot.slane %v5837, %v5841
        %v5843 = vlaneseq
        %v5844 = vshrl.u32 %v5843, 7
        %v5845 = vsub.s32 1, %v5844
        %v5846 = vrot.slane %v5837, %v5845
        %v5847 = vlaneseq
        %v5848 = vshrl.u32 %v5847, 7
        %v5849 = vsub.s32 2, %v5848
        %v5850 = vrot.slane %v5837, %v5849
        %v5854 = vld [vmem:[%s1529 + $0x30] sm:$0x7f]
        %v5855 = vld [vmem:[%s1529 + $0x38] sm:$0x7f]
        %v5856 = vld [vmem:[%s1529 + $0x40] sm:$0x7f]
        %v5857 = vmul.f32 %v5854, %v5770
        %v5858 = vmul.f32 %v5855, %v5774
        %v5859 = vmul.f32 %v5856, %v5778
        %v5860 = vadd.f32 %v5713, %v5857
        %v5861 = vadd.f32 %v5714, %v5858
        %v5862 = vadd.f32 %v5715, %v5859
        %v5863 = vmul.f32 %v5854, %v5788
        %v5864 = vmul.f32 %v5855, %v5792
        %v5865 = vmul.f32 %v5856, %v5796
        %v5866 = vadd.f32 %v5680, %v5863
        %v5867 = vadd.f32 %v5681, %v5864
        %v5868 = vadd.f32 %v5682, %v5865
        %v5869 = vmul.f32 %v5854, %v5806
        %v5870 = vmul.f32 %v5855, %v5810
        %v5871 = vmul.f32 %v5856, %v5814
        %v5872 = vadd.f32 %v5647, %v5869
        %v5873 = vadd.f32 %v5648, %v5870
        %v5874 = vadd.f32 %v5649, %v5871
        %v5875 = vld [vmem:[%s3001 + $0x30] sm:$0x7f]
        %v5876 = vld [vmem:[%s3001 + $0x38] sm:$0x7f]
        %v5877 = vld [vmem:[%s3001 + $0x40] sm:$0x7f]
        %v5878 = vmul.f32 %v5875, %v5770
        %v5879 = vmul.f32 %v5876, %v5774
        %v5880 = vmul.f32 %v5877, %v5778
        %v5881 = vadd.f32 %v5740, %v5878
        %v5882 = vadd.f32 %v5741, %v5879
        %v5883 = vadd.f32 %v5742, %v5880
        %v5884 = vmul.f32 %v5875, %v5788
        %v5885 = vmul.f32 %v5876, %v5792
        %v5886 = vmul.f32 %v5877, %v5796
        %v5887 = vadd.f32 %v5860, %v5884
        %v5888 = vadd.f32 %v5861, %v5885
        %v5889 = vadd.f32 %v5862, %v5886
        %v5890 = vmul.f32 %v5875, %v5806
        %v5891 = vmul.f32 %v5876, %v5810
        %v5892 = vmul.f32 %v5877, %v5814
        %v5893 = vadd.f32 %v5866, %v5890
        %v5894 = vadd.f32 %v5867, %v5891
        %v5895 = vadd.f32 %v5868, %v5892
        %v5896 = vmul.f32 %v5875, %v5824
        %v5897 = vmul.f32 %v5876, %v5828
        %v5898 = vmul.f32 %v5877, %v5832
        %v5899 = vadd.f32 %v5872, %v5896
        %v5900 = vadd.f32 %v5873, %v5897
        %v5901 = vadd.f32 %v5874, %v5898
        %v5902 = vld [vmem:[%s3029 + $0x30] sm:$0x7f]
        %v5903 = vld [vmem:[%s3029 + $0x38] sm:$0x7f]
        %v5904 = vld [vmem:[%s3029 + $0x40] sm:$0x7f]
        %v5905 = vmul.f32 %v5902, %v5770
        %v5906 = vmul.f32 %v5903, %v5774
        %v5907 = vmul.f32 %v5904, %v5778
        %v5908 = vadd.f32 %v5761, %v5905
        %v5909 = vadd.f32 %v5762, %v5906
        %v5910 = vadd.f32 %v5763, %v5907
        %v5911 = vmul.f32 %v5902, %v5788
        %v5912 = vmul.f32 %v5903, %v5792
        %v5913 = vmul.f32 %v5904, %v5796
        %v5914 = vadd.f32 %v5881, %v5911
        %v5915 = vadd.f32 %v5882, %v5912
        %v5916 = vadd.f32 %v5883, %v5913
        %v5917 = vmul.f32 %v5902, %v5806
        %v5918 = vmul.f32 %v5903, %v5810
        %v5919 = vmul.f32 %v5904, %v5814
        %v5920 = vadd.f32 %v5887, %v5917
        %v5921 = vadd.f32 %v5888, %v5918
        %v5922 = vadd.f32 %v5889, %v5919
        %v5923 = vmul.f32 %v5902, %v5824
        %v5924 = vmul.f32 %v5903, %v5828
        %v5925 = vmul.f32 %v5904, %v5832
        %v5926 = vadd.f32 %v5893, %v5923
        %v5927 = vadd.f32 %v5894, %v5924
        %v5928 = vadd.f32 %v5895, %v5925
        %v5929 = vmul.f32 %v5902, %v5842
        %v5930 = vmul.f32 %v5903, %v5846
        %v5931 = vmul.f32 %v5904, %v5850
        %v5932 = vadd.f32 %v5899, %v5929
        %v5933 = vadd.f32 %v5900, %v5930
        %v5934 = vadd.f32 %v5901, %v5931
        %v5935 = vld [vmem:[%s3063 + $0x30] sm:$0x7f]
        %v5936 = vld [vmem:[%s3063 + $0x38] sm:$0x7f]
        %v5937 = vld [vmem:[%s3063 + $0x40] sm:$0x7f]
        %v5938 = vmul.f32 %v5935, %v5770
        %v5939 = vmul.f32 %v5936, %v5774
        %v5940 = vmul.f32 %v5937, %v5778
        %v5941 = vadd.f32 %v5755, %v5938
        %v5942 = vadd.f32 %v5756, %v5939
        %v5943 = vadd.f32 %v5757, %v5940
        %v5944 = vmul.f32 %v5935, %v5788
        %v5945 = vmul.f32 %v5936, %v5792
        %v5946 = vmul.f32 %v5937, %v5796
        %v5947 = vadd.f32 %v5908, %v5944
        %v5948 = vadd.f32 %v5909, %v5945
        %v5949 = vadd.f32 %v5910, %v5946
        %v5950 = vmul.f32 %v5935, %v5806
        %v5951 = vmul.f32 %v5936, %v5810
        %v5952 = vmul.f32 %v5937, %v5814
        %v5953 = vadd.f32 %v5914, %v5950
        %v5954 = vadd.f32 %v5915, %v5951
        %v5955 = vadd.f32 %v5916, %v5952
        %v5956 = vmul.f32 %v5935, %v5824
        %v5957 = vmul.f32 %v5936, %v5828
        %v5958 = vmul.f32 %v5937, %v5832
        %v5959 = vadd.f32 %v5920, %v5956
        %v5960 = vadd.f32 %v5921, %v5957
        %v5961 = vadd.f32 %v5922, %v5958
        %v5962 = vmul.f32 %v5935, %v5842
        %v5963 = vmul.f32 %v5936, %v5846
        %v5964 = vmul.f32 %v5937, %v5850
        %v5965 = vadd.f32 %v5926, %v5962
        %v5966 = vadd.f32 %v5927, %v5963
        %v5967 = vadd.f32 %v5928, %v5964
        %v5968 = vld [vmem:[%s3097 + $0x30] sm:$0x7f]
        %v5969 = vld [vmem:[%s3097 + $0x38] sm:$0x7f]
        %v5970 = vld [vmem:[%s3097 + $0x40] sm:$0x7f]
        %v5971 = vmul.f32 %v5968, %v5770
        %v5972 = vmul.f32 %v5969, %v5774
        %v5973 = vmul.f32 %v5970, %v5778
        %v5974 = vadd.f32 %v5749, %v5971
        %v5975 = vadd.f32 %v5750, %v5972
        %v5976 = vadd.f32 %v5751, %v5973
        %v5977 = vmul.f32 %v5968, %v5788
        %v5978 = vmul.f32 %v5969, %v5792
        %v5979 = vmul.f32 %v5970, %v5796
        %v5980 = vadd.f32 %v5941, %v5977
        %v5981 = vadd.f32 %v5942, %v5978
        %v5982 = vadd.f32 %v5943, %v5979
        %v5983 = vmul.f32 %v5968, %v5806
        %v5984 = vmul.f32 %v5969, %v5810
        %v5985 = vmul.f32 %v5970, %v5814
        %v5986 = vadd.f32 %v5947, %v5983
        %v5987 = vadd.f32 %v5948, %v5984
        %v5988 = vadd.f32 %v5949, %v5985
        %v5989 = vmul.f32 %v5968, %v5824
        %v5990 = vmul.f32 %v5969, %v5828
        %v5991 = vmul.f32 %v5970, %v5832
        %v5992 = vadd.f32 %v5953, %v5989
        %v5993 = vadd.f32 %v5954, %v5990
        %v5994 = vadd.f32 %v5955, %v5991
        %v5995 = vmul.f32 %v5968, %v5842
        %v5996 = vmul.f32 %v5969, %v5846
        %v5997 = vmul.f32 %v5970, %v5850
        %v5998 = vadd.f32 %v5959, %v5995
        %v5999 = vadd.f32 %v5960, %v5996
        %v6000 = vadd.f32 %v5961, %v5997
        %v6001 = vld [vmem:[%s3131 + $0x30] sm:$0x7f]
        %v6002 = vld [vmem:[%s3131 + $0x38] sm:$0x7f]
        %v6003 = vld [vmem:[%s3131 + $0x40] sm:$0x7f]
        %v6004 = vmul.f32 %v6001, %v5788
        %v6005 = vmul.f32 %v6002, %v5792
        %v6006 = vmul.f32 %v6003, %v5796
        %v6007 = vadd.f32 %v5974, %v6004
        %v6008 = vadd.f32 %v5975, %v6005
        %v6009 = vadd.f32 %v5976, %v6006
        %v6010 = vmul.f32 %v6001, %v5806
        %v6011 = vmul.f32 %v6002, %v5810
        %v6012 = vmul.f32 %v6003, %v5814
        %v6013 = vadd.f32 %v5980, %v6010
        %v6014 = vadd.f32 %v5981, %v6011
        %v6015 = vadd.f32 %v5982, %v6012
        %v6016 = vmul.f32 %v6001, %v5824
        %v6017 = vmul.f32 %v6002, %v5828
        %v6018 = vmul.f32 %v6003, %v5832
        %v6019 = vadd.f32 %v5986, %v6016
        %v6020 = vadd.f32 %v5987, %v6017
        %v6021 = vadd.f32 %v5988, %v6018
        %v6022 = vmul.f32 %v6001, %v5842
        %v6023 = vmul.f32 %v6002, %v5846
        %v6024 = vmul.f32 %v6003, %v5850
        %v6025 = vadd.f32 %v5992, %v6022
        %v6026 = vadd.f32 %v5993, %v6023
        %v6027 = vadd.f32 %v5994, %v6024
        %v6028 = vld [vmem:[%s3159 + $0x30] sm:$0x7f]
        %v6029 = vld [vmem:[%s3159 + $0x38] sm:$0x7f]
        %v6030 = vld [vmem:[%s3159 + $0x40] sm:$0x7f]
        %v6031 = vmul.f32 %v6028, %v5806
        %v6032 = vmul.f32 %v6029, %v5810
        %v6033 = vmul.f32 %v6030, %v5814
        %v6034 = vadd.f32 %v6007, %v6031
        %v6035 = vadd.f32 %v6008, %v6032
        %v6036 = vadd.f32 %v6009, %v6033
        %v6037 = vmul.f32 %v6028, %v5824
        %v6038 = vmul.f32 %v6029, %v5828
        %v6039 = vmul.f32 %v6030, %v5832
        %v6040 = vadd.f32 %v6013, %v6037
        %v6041 = vadd.f32 %v6014, %v6038
        %v6042 = vadd.f32 %v6015, %v6039
        %v6043 = vmul.f32 %v6028, %v5842
        %v6044 = vmul.f32 %v6029, %v5846
        %v6045 = vmul.f32 %v6030, %v5850
        %v6046 = vadd.f32 %v6019, %v6043
        %v6047 = vadd.f32 %v6020, %v6044
        %v6048 = vadd.f32 %v6021, %v6045
        %s6049 = scalar_lea.vmem [#allocation5], 51
        %v6050 = vld [vmem:[%s6049] ss:$8 sm:$0x7]
        %v6052 = vlaneseq
        %v6053 = vshrl.u32 %v6052, 7
        %v6054 = vsub.s32 0, %v6053
        %v6055 = vrot.slane %v6050, %v6054
        %v6056 = vlaneseq
        %v6057 = vshrl.u32 %v6056, 7
        %v6058 = vsub.s32 1, %v6057
        %v6059 = vrot.slane %v6050, %v6058
        %v6060 = vlaneseq
        %v6061 = vshrl.u32 %v6060, 7
        %v6062 = vsub.s32 2, %v6061
        %v6063 = vrot.slane %v6050, %v6062
        %s6067 = scalar_lea.vmem %s2347, 51 [#allocation5]
        %v6068 = vld [vmem:[%s6067] ss:$8 sm:$0x7]
        %v6070 = vlaneseq
        %v6071 = vshrl.u32 %v6070, 7
        %v6072 = vsub.s32 0, %v6071
        %v6073 = vrot.slane %v6068, %v6072
        %v6074 = vlaneseq
        %v6075 = vshrl.u32 %v6074, 7
        %v6076 = vsub.s32 1, %v6075
        %v6077 = vrot.slane %v6068, %v6076
        %v6078 = vlaneseq
        %v6079 = vshrl.u32 %v6078, 7
        %v6080 = vsub.s32 2, %v6079
        %v6081 = vrot.slane %v6068, %v6080
        %s6085 = scalar_lea.vmem %s2365, 51 [#allocation5]
        %v6086 = vld [vmem:[%s6085] ss:$8 sm:$0x7]
        %v6088 = vlaneseq
        %v6089 = vshrl.u32 %v6088, 7
        %v6090 = vsub.s32 0, %v6089
        %v6091 = vrot.slane %v6086, %v6090
        %v6092 = vlaneseq
        %v6093 = vshrl.u32 %v6092, 7
        %v6094 = vsub.s32 1, %v6093
        %v6095 = vrot.slane %v6086, %v6094
        %v6096 = vlaneseq
        %v6097 = vshrl.u32 %v6096, 7
        %v6098 = vsub.s32 2, %v6097
        %v6099 = vrot.slane %v6086, %v6098
        %s6103 = scalar_lea.vmem %s2383, 51 [#allocation5]
        %v6104 = vld [vmem:[%s6103] ss:$8 sm:$0x7]
        %v6106 = vlaneseq
        %v6107 = vshrl.u32 %v6106, 7
        %v6108 = vsub.s32 0, %v6107
        %v6109 = vrot.slane %v6104, %v6108
        %v6110 = vlaneseq
        %v6111 = vshrl.u32 %v6110, 7
        %v6112 = vsub.s32 1, %v6111
        %v6113 = vrot.slane %v6104, %v6112
        %v6114 = vlaneseq
        %v6115 = vshrl.u32 %v6114, 7
        %v6116 = vsub.s32 2, %v6115
        %v6117 = vrot.slane %v6104, %v6116
        %s6121 = scalar_lea.vmem %s2401, 51 [#allocation5]
        %v6122 = vld [vmem:[%s6121] ss:$8 sm:$0x7]
        %v6124 = vlaneseq
        %v6125 = vshrl.u32 %v6124, 7
        %v6126 = vsub.s32 0, %v6125
        %v6127 = vrot.slane %v6122, %v6126
        %v6128 = vlaneseq
        %v6129 = vshrl.u32 %v6128, 7
        %v6130 = vsub.s32 1, %v6129
        %v6131 = vrot.slane %v6122, %v6130
        %v6132 = vlaneseq
        %v6133 = vshrl.u32 %v6132, 7
        %v6134 = vsub.s32 2, %v6133
        %v6135 = vrot.slane %v6122, %v6134
        %v6139 = vld [vmem:[%s1593 + $0x30] sm:$0x7f]
        %v6140 = vld [vmem:[%s1593 + $0x38] sm:$0x7f]
        %v6141 = vld [vmem:[%s1593 + $0x40] sm:$0x7f]
        %v6142 = vmul.f32 %v6139, %v6055
        %v6143 = vmul.f32 %v6140, %v6059
        %v6144 = vmul.f32 %v6141, %v6063
        %v6145 = vadd.f32 %v5998, %v6142
        %v6146 = vadd.f32 %v5999, %v6143
        %v6147 = vadd.f32 %v6000, %v6144
        %v6148 = vmul.f32 %v6139, %v6073
        %v6149 = vmul.f32 %v6140, %v6077
        %v6150 = vmul.f32 %v6141, %v6081
        %v6151 = vadd.f32 %v5965, %v6148
        %v6152 = vadd.f32 %v5966, %v6149
        %v6153 = vadd.f32 %v5967, %v6150
        %v6154 = vmul.f32 %v6139, %v6091
        %v6155 = vmul.f32 %v6140, %v6095
        %v6156 = vmul.f32 %v6141, %v6099
        %v6157 = vadd.f32 %v5932, %v6154
        %v6158 = vadd.f32 %v5933, %v6155
        %v6159 = vadd.f32 %v5934, %v6156
        %v6160 = vld [vmem:[%s3292 + $0x30] sm:$0x7f]
        %v6161 = vld [vmem:[%s3292 + $0x38] sm:$0x7f]
        %v6162 = vld [vmem:[%s3292 + $0x40] sm:$0x7f]
        %v6163 = vmul.f32 %v6160, %v6055
        %v6164 = vmul.f32 %v6161, %v6059
        %v6165 = vmul.f32 %v6162, %v6063
        %v6166 = vadd.f32 %v6025, %v6163
        %v6167 = vadd.f32 %v6026, %v6164
        %v6168 = vadd.f32 %v6027, %v6165
        %v6169 = vmul.f32 %v6160, %v6073
        %v6170 = vmul.f32 %v6161, %v6077
        %v6171 = vmul.f32 %v6162, %v6081
        %v6172 = vadd.f32 %v6145, %v6169
        %v6173 = vadd.f32 %v6146, %v6170
        %v6174 = vadd.f32 %v6147, %v6171
        %v6175 = vmul.f32 %v6160, %v6091
        %v6176 = vmul.f32 %v6161, %v6095
        %v6177 = vmul.f32 %v6162, %v6099
        %v6178 = vadd.f32 %v6151, %v6175
        %v6179 = vadd.f32 %v6152, %v6176
        %v6180 = vadd.f32 %v6153, %v6177
        %v6181 = vmul.f32 %v6160, %v6109
        %v6182 = vmul.f32 %v6161, %v6113
        %v6183 = vmul.f32 %v6162, %v6117
        %v6184 = vadd.f32 %v6157, %v6181
        %v6185 = vadd.f32 %v6158, %v6182
        %v6186 = vadd.f32 %v6159, %v6183
        %v6187 = vld [vmem:[%s3320 + $0x30] sm:$0x7f]
        %v6188 = vld [vmem:[%s3320 + $0x38] sm:$0x7f]
        %v6189 = vld [vmem:[%s3320 + $0x40] sm:$0x7f]
        %v6190 = vmul.f32 %v6187, %v6055
        %v6191 = vmul.f32 %v6188, %v6059
        %v6192 = vmul.f32 %v6189, %v6063
        %v6193 = vadd.f32 %v6046, %v6190
        %v6194 = vadd.f32 %v6047, %v6191
        %v6195 = vadd.f32 %v6048, %v6192
        %v6196 = vmul.f32 %v6187, %v6073
        %v6197 = vmul.f32 %v6188, %v6077
        %v6198 = vmul.f32 %v6189, %v6081
        %v6199 = vadd.f32 %v6166, %v6196
        %v6200 = vadd.f32 %v6167, %v6197
        %v6201 = vadd.f32 %v6168, %v6198
        %v6202 = vmul.f32 %v6187, %v6091
        %v6203 = vmul.f32 %v6188, %v6095
        %v6204 = vmul.f32 %v6189, %v6099
        %v6205 = vadd.f32 %v6172, %v6202
        %v6206 = vadd.f32 %v6173, %v6203
        %v6207 = vadd.f32 %v6174, %v6204
        %v6208 = vmul.f32 %v6187, %v6109
        %v6209 = vmul.f32 %v6188, %v6113
        %v6210 = vmul.f32 %v6189, %v6117
        %v6211 = vadd.f32 %v6178, %v6208
        %v6212 = vadd.f32 %v6179, %v6209
        %v6213 = vadd.f32 %v6180, %v6210
        %v6214 = vmul.f32 %v6187, %v6127
        %v6215 = vmul.f32 %v6188, %v6131
        %v6216 = vmul.f32 %v6189, %v6135
        %v6217 = vadd.f32 %v6184, %v6214
        %v6218 = vadd.f32 %v6185, %v6215
        %v6219 = vadd.f32 %v6186, %v6216
        %v6220 = vld [vmem:[%s3354 + $0x30] sm:$0x7f]
        %v6221 = vld [vmem:[%s3354 + $0x38] sm:$0x7f]
        %v6222 = vld [vmem:[%s3354 + $0x40] sm:$0x7f]
        %v6223 = vmul.f32 %v6220, %v6055
        %v6224 = vmul.f32 %v6221, %v6059
        %v6225 = vmul.f32 %v6222, %v6063
        %v6226 = vadd.f32 %v6040, %v6223
        %v6227 = vadd.f32 %v6041, %v6224
        %v6228 = vadd.f32 %v6042, %v6225
        %v6229 = vmul.f32 %v6220, %v6073
        %v6230 = vmul.f32 %v6221, %v6077
        %v6231 = vmul.f32 %v6222, %v6081
        %v6232 = vadd.f32 %v6193, %v6229
        %v6233 = vadd.f32 %v6194, %v6230
        %v6234 = vadd.f32 %v6195, %v6231
        %v6235 = vmul.f32 %v6220, %v6091
        %v6236 = vmul.f32 %v6221, %v6095
        %v6237 = vmul.f32 %v6222, %v6099
        %v6238 = vadd.f32 %v6199, %v6235
        %v6239 = vadd.f32 %v6200, %v6236
        %v6240 = vadd.f32 %v6201, %v6237
        %v6241 = vmul.f32 %v6220, %v6109
        %v6242 = vmul.f32 %v6221, %v6113
        %v6243 = vmul.f32 %v6222, %v6117
        %v6244 = vadd.f32 %v6205, %v6241
        %v6245 = vadd.f32 %v6206, %v6242
        %v6246 = vadd.f32 %v6207, %v6243
        %v6247 = vmul.f32 %v6220, %v6127
        %v6248 = vmul.f32 %v6221, %v6131
        %v6249 = vmul.f32 %v6222, %v6135
        %v6250 = vadd.f32 %v6211, %v6247
        %v6251 = vadd.f32 %v6212, %v6248
        %v6252 = vadd.f32 %v6213, %v6249
        %v6253 = vld [vmem:[%s3388 + $0x30] sm:$0x7f]
        %v6254 = vld [vmem:[%s3388 + $0x38] sm:$0x7f]
        %v6255 = vld [vmem:[%s3388 + $0x40] sm:$0x7f]
        %v6256 = vmul.f32 %v6253, %v6055
        %v6257 = vmul.f32 %v6254, %v6059
        %v6258 = vmul.f32 %v6255, %v6063
        %v6259 = vadd.f32 %v6034, %v6256
        %v6260 = vadd.f32 %v6035, %v6257
        %v6261 = vadd.f32 %v6036, %v6258
        %v6262 = vmul.f32 %v6253, %v6073
        %v6263 = vmul.f32 %v6254, %v6077
        %v6264 = vmul.f32 %v6255, %v6081
        %v6265 = vadd.f32 %v6226, %v6262
        %v6266 = vadd.f32 %v6227, %v6263
        %v6267 = vadd.f32 %v6228, %v6264
        %v6268 = vmul.f32 %v6253, %v6091
        %v6269 = vmul.f32 %v6254, %v6095
        %v6270 = vmul.f32 %v6255, %v6099
        %v6271 = vadd.f32 %v6232, %v6268
        %v6272 = vadd.f32 %v6233, %v6269
        %v6273 = vadd.f32 %v6234, %v6270
        %v6274 = vmul.f32 %v6253, %v6109
        %v6275 = vmul.f32 %v6254, %v6113
        %v6276 = vmul.f32 %v6255, %v6117
        %v6277 = vadd.f32 %v6238, %v6274
        %v6278 = vadd.f32 %v6239, %v6275
        %v6279 = vadd.f32 %v6240, %v6276
        %v6280 = vmul.f32 %v6253, %v6127
        %v6281 = vmul.f32 %v6254, %v6131
        %v6282 = vmul.f32 %v6255, %v6135
        %v6283 = vadd.f32 %v6244, %v6280
        %v6284 = vadd.f32 %v6245, %v6281
        %v6285 = vadd.f32 %v6246, %v6282
        %v6286 = vld [vmem:[%s3422 + $0x30] sm:$0x7f]
        %v6287 = vld [vmem:[%s3422 + $0x38] sm:$0x7f]
        %v6288 = vld [vmem:[%s3422 + $0x40] sm:$0x7f]
        %v6289 = vmul.f32 %v6286, %v6073
        %v6290 = vmul.f32 %v6287, %v6077
        %v6291 = vmul.f32 %v6288, %v6081
        %v6292 = vadd.f32 %v6259, %v6289
        %v6293 = vadd.f32 %v6260, %v6290
        %v6294 = vadd.f32 %v6261, %v6291
        %v6295 = vmul.f32 %v6286, %v6091
        %v6296 = vmul.f32 %v6287, %v6095
        %v6297 = vmul.f32 %v6288, %v6099
        %v6298 = vadd.f32 %v6265, %v6295
        %v6299 = vadd.f32 %v6266, %v6296
        %v6300 = vadd.f32 %v6267, %v6297
        %v6301 = vmul.f32 %v6286, %v6109
        %v6302 = vmul.f32 %v6287, %v6113
        %v6303 = vmul.f32 %v6288, %v6117
        %v6304 = vadd.f32 %v6271, %v6301
        %v6305 = vadd.f32 %v6272, %v6302
        %v6306 = vadd.f32 %v6273, %v6303
        %v6307 = vmul.f32 %v6286, %v6127
        %v6308 = vmul.f32 %v6287, %v6131
        %v6309 = vmul.f32 %v6288, %v6135
        %v6310 = vadd.f32 %v6277, %v6307
        %v6311 = vadd.f32 %v6278, %v6308
        %v6312 = vadd.f32 %v6279, %v6309
        %v6313 = vld [vmem:[%s3450 + $0x30] sm:$0x7f]
        %v6314 = vld [vmem:[%s3450 + $0x38] sm:$0x7f]
        %v6315 = vld [vmem:[%s3450 + $0x40] sm:$0x7f]
        %v6316 = vmul.f32 %v6313, %v6091
        %v6317 = vmul.f32 %v6314, %v6095
        %v6318 = vmul.f32 %v6315, %v6099
        %v6319 = vadd.f32 %v6292, %v6316
        %v6320 = vadd.f32 %v6293, %v6317
        %v6321 = vadd.f32 %v6294, %v6318
        %v6322 = vmul.f32 %v6313, %v6109
        %v6323 = vmul.f32 %v6314, %v6113
        %v6324 = vmul.f32 %v6315, %v6117
        %v6325 = vadd.f32 %v6298, %v6322
        %v6326 = vadd.f32 %v6299, %v6323
        %v6327 = vadd.f32 %v6300, %v6324
        %v6328 = vmul.f32 %v6313, %v6127
        %v6329 = vmul.f32 %v6314, %v6131
        %v6330 = vmul.f32 %v6315, %v6135
        %v6331 = vadd.f32 %v6304, %v6328
        %v6332 = vadd.f32 %v6305, %v6329
        %v6333 = vadd.f32 %v6306, %v6330
        %s6334 = scalar_lea.vmem [#allocation5], 52
        %v6335 = vld [vmem:[%s6334] ss:$8 sm:$0x7]
        %v6337 = vlaneseq
        %v6338 = vshrl.u32 %v6337, 7
        %v6339 = vsub.s32 0, %v6338
        %v6340 = vrot.slane %v6335, %v6339
        %v6341 = vlaneseq
        %v6342 = vshrl.u32 %v6341, 7
        %v6343 = vsub.s32 1, %v6342
        %v6344 = vrot.slane %v6335, %v6343
        %v6345 = vlaneseq
        %v6346 = vshrl.u32 %v6345, 7
        %v6347 = vsub.s32 2, %v6346
        %v6348 = vrot.slane %v6335, %v6347
        %s6352 = scalar_lea.vmem %s2347, 52 [#allocation5]
        %v6353 = vld [vmem:[%s6352] ss:$8 sm:$0x7]
        %v6355 = vlaneseq
        %v6356 = vshrl.u32 %v6355, 7
        %v6357 = vsub.s32 0, %v6356
        %v6358 = vrot.slane %v6353, %v6357
        %v6359 = vlaneseq
        %v6360 = vshrl.u32 %v6359, 7
        %v6361 = vsub.s32 1, %v6360
        %v6362 = vrot.slane %v6353, %v6361
        %v6363 = vlaneseq
        %v6364 = vshrl.u32 %v6363, 7
        %v6365 = vsub.s32 2, %v6364
        %v6366 = vrot.slane %v6353, %v6365
        %s6370 = scalar_lea.vmem %s2365, 52 [#allocation5]
        %v6371 = vld [vmem:[%s6370] ss:$8 sm:$0x7]
        %v6373 = vlaneseq
        %v6374 = vshrl.u32 %v6373, 7
        %v6375 = vsub.s32 0, %v6374
        %v6376 = vrot.slane %v6371, %v6375
        %v6377 = vlaneseq
        %v6378 = vshrl.u32 %v6377, 7
        %v6379 = vsub.s32 1, %v6378
        %v6380 = vrot.slane %v6371, %v6379
        %v6381 = vlaneseq
        %v6382 = vshrl.u32 %v6381, 7
        %v6383 = vsub.s32 2, %v6382
        %v6384 = vrot.slane %v6371, %v6383
        %s6388 = scalar_lea.vmem %s2383, 52 [#allocation5]
        %v6389 = vld [vmem:[%s6388] ss:$8 sm:$0x7]
        %v6391 = vlaneseq
        %v6392 = vshrl.u32 %v6391, 7
        %v6393 = vsub.s32 0, %v6392
        %v6394 = vrot.slane %v6389, %v6393
        %v6395 = vlaneseq
        %v6396 = vshrl.u32 %v6395, 7
        %v6397 = vsub.s32 1, %v6396
        %v6398 = vrot.slane %v6389, %v6397
        %v6399 = vlaneseq
        %v6400 = vshrl.u32 %v6399, 7
        %v6401 = vsub.s32 2, %v6400
        %v6402 = vrot.slane %v6389, %v6401
        %s6406 = scalar_lea.vmem %s2401, 52 [#allocation5]
        %v6407 = vld [vmem:[%s6406] ss:$8 sm:$0x7]
        %v6409 = vlaneseq
        %v6410 = vshrl.u32 %v6409, 7
        %v6411 = vsub.s32 0, %v6410
        %v6412 = vrot.slane %v6407, %v6411
        %v6413 = vlaneseq
        %v6414 = vshrl.u32 %v6413, 7
        %v6415 = vsub.s32 1, %v6414
        %v6416 = vrot.slane %v6407, %v6415
        %v6417 = vlaneseq
        %v6418 = vshrl.u32 %v6417, 7
        %v6419 = vsub.s32 2, %v6418
        %v6420 = vrot.slane %v6407, %v6419
        %v6424 = vld [vmem:[%s1951 + $0x30] sm:$0x7f]
        %v6425 = vld [vmem:[%s1951 + $0x38] sm:$0x7f]
        %v6426 = vld [vmem:[%s1951 + $0x40] sm:$0x7f]
        %v6427 = vmul.f32 %v6424, %v6340
        %v6428 = vmul.f32 %v6425, %v6344
        %v6429 = vmul.f32 %v6426, %v6348
        %v6430 = vadd.f32 %v6283, %v6427
        %v6431 = vadd.f32 %v6284, %v6428
        %v6432 = vadd.f32 %v6285, %v6429
        %v6433 = vmul.f32 %v6424, %v6358
        %v6434 = vmul.f32 %v6425, %v6362
        %v6435 = vmul.f32 %v6426, %v6366
        %v6436 = vadd.f32 %v6250, %v6433
        %v6437 = vadd.f32 %v6251, %v6434
        %v6438 = vadd.f32 %v6252, %v6435
        %v6439 = vmul.f32 %v6424, %v6376
        %v6440 = vmul.f32 %v6425, %v6380
        %v6441 = vmul.f32 %v6426, %v6384
        %v6442 = vadd.f32 %v6217, %v6439
        %v6443 = vadd.f32 %v6218, %v6440
        %v6444 = vadd.f32 %v6219, %v6441
        %v6445 = vld [vmem:[%s3583 + $0x30] sm:$0x7f]
        %v6446 = vld [vmem:[%s3583 + $0x38] sm:$0x7f]
        %v6447 = vld [vmem:[%s3583 + $0x40] sm:$0x7f]
        %v6448 = vmul.f32 %v6445, %v6340
        %v6449 = vmul.f32 %v6446, %v6344
        %v6450 = vmul.f32 %v6447, %v6348
        %v6451 = vadd.f32 %v6310, %v6448
        %v6452 = vadd.f32 %v6311, %v6449
        %v6453 = vadd.f32 %v6312, %v6450
        %v6454 = vmul.f32 %v6445, %v6358
        %v6455 = vmul.f32 %v6446, %v6362
        %v6456 = vmul.f32 %v6447, %v6366
        %v6457 = vadd.f32 %v6430, %v6454
        %v6458 = vadd.f32 %v6431, %v6455
        %v6459 = vadd.f32 %v6432, %v6456
        %v6460 = vmul.f32 %v6445, %v6376
        %v6461 = vmul.f32 %v6446, %v6380
        %v6462 = vmul.f32 %v6447, %v6384
        %v6463 = vadd.f32 %v6436, %v6460
        %v6464 = vadd.f32 %v6437, %v6461
        %v6465 = vadd.f32 %v6438, %v6462
        %v6466 = vmul.f32 %v6445, %v6394
        %v6467 = vmul.f32 %v6446, %v6398
        %v6468 = vmul.f32 %v6447, %v6402
        %v6469 = vadd.f32 %v6442, %v6466
        %v6470 = vadd.f32 %v6443, %v6467
        %v6471 = vadd.f32 %v6444, %v6468
        %v6472 = vld [vmem:[%s3611 + $0x30] sm:$0x7f]
        %v6473 = vld [vmem:[%s3611 + $0x38] sm:$0x7f]
        %v6474 = vld [vmem:[%s3611 + $0x40] sm:$0x7f]
        %v6475 = vmul.f32 %v6472, %v6340
        %v6476 = vmul.f32 %v6473, %v6344
        %v6477 = vmul.f32 %v6474, %v6348
        %v6478 = vadd.f32 %v6331, %v6475
        %v6479 = vadd.f32 %v6332, %v6476
        %v6480 = vadd.f32 %v6333, %v6477
        %v6481 = vmul.f32 %v6472, %v6358
        %v6482 = vmul.f32 %v6473, %v6362
        %v6483 = vmul.f32 %v6474, %v6366
        %v6484 = vadd.f32 %v6451, %v6481
        %v6485 = vadd.f32 %v6452, %v6482
        %v6486 = vadd.f32 %v6453, %v6483
        %v6487 = vmul.f32 %v6472, %v6376
        %v6488 = vmul.f32 %v6473, %v6380
        %v6489 = vmul.f32 %v6474, %v6384
        %v6490 = vadd.f32 %v6457, %v6487
        %v6491 = vadd.f32 %v6458, %v6488
        %v6492 = vadd.f32 %v6459, %v6489
        %v6493 = vmul.f32 %v6472, %v6394
        %v6494 = vmul.f32 %v6473, %v6398
        %v6495 = vmul.f32 %v6474, %v6402
        %v6496 = vadd.f32 %v6463, %v6493
        %v6497 = vadd.f32 %v6464, %v6494
        %v6498 = vadd.f32 %v6465, %v6495
        %v6499 = vmul.f32 %v6472, %v6412
        %v6500 = vmul.f32 %v6473, %v6416
        %v6501 = vmul.f32 %v6474, %v6420
        %v6502 = vadd.f32 %v6469, %v6499
        %v6503 = vadd.f32 %v6470, %v6500
        %v6504 = vadd.f32 %v6471, %v6501
        %v6505 = vld [vmem:[%s3645 + $0x30] sm:$0x7f]
        %v6506 = vld [vmem:[%s3645 + $0x38] sm:$0x7f]
        %v6507 = vld [vmem:[%s3645 + $0x40] sm:$0x7f]
        %v6508 = vmul.f32 %v6505, %v6340
        %v6509 = vmul.f32 %v6506, %v6344
        %v6510 = vmul.f32 %v6507, %v6348
        %v6511 = vadd.f32 %v6325, %v6508
        %v6512 = vadd.f32 %v6326, %v6509
        %v6513 = vadd.f32 %v6327, %v6510
        %v6514 = vmul.f32 %v6505, %v6358
        %v6515 = vmul.f32 %v6506, %v6362
        %v6516 = vmul.f32 %v6507, %v6366
        %v6517 = vadd.f32 %v6478, %v6514
        %v6518 = vadd.f32 %v6479, %v6515
        %v6519 = vadd.f32 %v6480, %v6516
        %v6520 = vmul.f32 %v6505, %v6376
        %v6521 = vmul.f32 %v6506, %v6380
        %v6522 = vmul.f32 %v6507, %v6384
        %v6523 = vadd.f32 %v6484, %v6520
        %v6524 = vadd.f32 %v6485, %v6521
        %v6525 = vadd.f32 %v6486, %v6522
        %v6526 = vmul.f32 %v6505, %v6394
        %v6527 = vmul.f32 %v6506, %v6398
        %v6528 = vmul.f32 %v6507, %v6402
        %v6529 = vadd.f32 %v6490, %v6526
        %v6530 = vadd.f32 %v6491, %v6527
        %v6531 = vadd.f32 %v6492, %v6528
        %v6532 = vmul.f32 %v6505, %v6412
        %v6533 = vmul.f32 %v6506, %v6416
        %v6534 = vmul.f32 %v6507, %v6420
        %v6535 = vadd.f32 %v6496, %v6532
        %v6536 = vadd.f32 %v6497, %v6533
        %v6537 = vadd.f32 %v6498, %v6534
        %v6538 = vld [vmem:[%s3679 + $0x30] sm:$0x7f]
        %v6539 = vld [vmem:[%s3679 + $0x38] sm:$0x7f]
        %v6540 = vld [vmem:[%s3679 + $0x40] sm:$0x7f]
        %v6541 = vmul.f32 %v6538, %v6340
        %v6542 = vmul.f32 %v6539, %v6344
        %v6543 = vmul.f32 %v6540, %v6348
        %v6544 = vadd.f32 %v6319, %v6541
        %v6545 = vadd.f32 %v6320, %v6542
        %v6546 = vadd.f32 %v6321, %v6543
        %v6547 = vmul.f32 %v6538, %v6358
        %v6548 = vmul.f32 %v6539, %v6362
        %v6549 = vmul.f32 %v6540, %v6366
        %v6550 = vadd.f32 %v6511, %v6547
        %v6551 = vadd.f32 %v6512, %v6548
        %v6552 = vadd.f32 %v6513, %v6549
        %v6553 = vmul.f32 %v6538, %v6376
        %v6554 = vmul.f32 %v6539, %v6380
        %v6555 = vmul.f32 %v6540, %v6384
        %v6556 = vadd.f32 %v6517, %v6553
        %v6557 = vadd.f32 %v6518, %v6554
        %v6558 = vadd.f32 %v6519, %v6555
        %v6559 = vmul.f32 %v6538, %v6394
        %v6560 = vmul.f32 %v6539, %v6398
        %v6561 = vmul.f32 %v6540, %v6402
        %v6562 = vadd.f32 %v6523, %v6559
        %v6563 = vadd.f32 %v6524, %v6560
        %v6564 = vadd.f32 %v6525, %v6561
        %v6565 = vmul.f32 %v6538, %v6412
        %v6566 = vmul.f32 %v6539, %v6416
        %v6567 = vmul.f32 %v6540, %v6420
        %v6568 = vadd.f32 %v6529, %v6565
        %v6569 = vadd.f32 %v6530, %v6566
        %v6570 = vadd.f32 %v6531, %v6567
        %v6571 = vld [vmem:[%s3713 + $0x30] sm:$0x7f]
        %v6572 = vld [vmem:[%s3713 + $0x38] sm:$0x7f]
        %v6573 = vld [vmem:[%s3713 + $0x40] sm:$0x7f]
        %v6574 = vmul.f32 %v6571, %v6358
        %v6575 = vmul.f32 %v6572, %v6362
        %v6576 = vmul.f32 %v6573, %v6366
        %v6577 = vadd.f32 %v6544, %v6574
        %v6578 = vadd.f32 %v6545, %v6575
        %v6579 = vadd.f32 %v6546, %v6576
        %v6580 = vmul.f32 %v6571, %v6376
        %v6581 = vmul.f32 %v6572, %v6380
        %v6582 = vmul.f32 %v6573, %v6384
        %v6583 = vadd.f32 %v6550, %v6580
        %v6584 = vadd.f32 %v6551, %v6581
        %v6585 = vadd.f32 %v6552, %v6582
        %v6586 = vmul.f32 %v6571, %v6394
        %v6587 = vmul.f32 %v6572, %v6398
        %v6588 = vmul.f32 %v6573, %v6402
        %v6589 = vadd.f32 %v6556, %v6586
        %v6590 = vadd.f32 %v6557, %v6587
        %v6591 = vadd.f32 %v6558, %v6588
        %v6592 = vmul.f32 %v6571, %v6412
        %v6593 = vmul.f32 %v6572, %v6416
        %v6594 = vmul.f32 %v6573, %v6420
        %v6595 = vadd.f32 %v6562, %v6592
        %v6596 = vadd.f32 %v6563, %v6593
        %v6597 = vadd.f32 %v6564, %v6594
        %v6598 = vld [vmem:[%s3741 + $0x30] sm:$0x7f]
        %v6599 = vld [vmem:[%s3741 + $0x38] sm:$0x7f]
        %v6600 = vld [vmem:[%s3741 + $0x40] sm:$0x7f]
        %v6601 = vmul.f32 %v6598, %v6376
        %v6602 = vmul.f32 %v6599, %v6380
        %v6603 = vmul.f32 %v6600, %v6384
        %v6604 = vadd.f32 %v6577, %v6601
        %v6605 = vadd.f32 %v6578, %v6602
        %v6606 = vadd.f32 %v6579, %v6603
        %v6607 = vmul.f32 %v6598, %v6394
        %v6608 = vmul.f32 %v6599, %v6398
        %v6609 = vmul.f32 %v6600, %v6402
        %v6610 = vadd.f32 %v6583, %v6607
        %v6611 = vadd.f32 %v6584, %v6608
        %v6612 = vadd.f32 %v6585, %v6609
        %v6613 = vmul.f32 %v6598, %v6412
        %v6614 = vmul.f32 %v6599, %v6416
        %v6615 = vmul.f32 %v6600, %v6420
        %v6616 = vadd.f32 %v6589, %v6613
        %v6617 = vadd.f32 %v6590, %v6614
        %v6618 = vadd.f32 %v6591, %v6615
        %6619 = vst [vmem:[%s173 + $0x30] sm:$0x7f] %v6502
        %6620 = vst [vmem:[%s173 + $0x38] sm:$0x7f] %v6503
        %6621 = vst [vmem:[%s173 + $0x40] sm:$0x7f] %v6504
        %6622 = vst [vmem:[%s3766 + $0x30] sm:$0x7f] %v6535
        %6623 = vst [vmem:[%s3766 + $0x38] sm:$0x7f] %v6536
        %6624 = vst [vmem:[%s3766 + $0x40] sm:$0x7f] %v6537
        %6625 = vst [vmem:[%s3770 + $0x30] sm:$0x7f] %v6568
        %6626 = vst [vmem:[%s3770 + $0x38] sm:$0x7f] %v6569
        %6627 = vst [vmem:[%s3770 + $0x40] sm:$0x7f] %v6570
        %6628 = vst [vmem:[%s3774 + $0x30] sm:$0x7f] %v6595
        %6629 = vst [vmem:[%s3774 + $0x38] sm:$0x7f] %v6596
        %6630 = vst [vmem:[%s3774 + $0x40] sm:$0x7f] %v6597
        %6631 = vst [vmem:[%s3778 + $0x30] sm:$0x7f] %v6616
        %6632 = vst [vmem:[%s3778 + $0x38] sm:$0x7f] %v6617
        %6633 = vst [vmem:[%s3778 + $0x40] sm:$0x7f] %v6618
        %6634 = vst [vmem:[%s3782 + $0x30] sm:$0x7f] %v6610
        %6635 = vst [vmem:[%s3782 + $0x38] sm:$0x7f] %v6611
        %6636 = vst [vmem:[%s3782 + $0x40] sm:$0x7f] %v6612
        %6637 = vst [vmem:[%s3786 + $0x30] sm:$0x7f] %v6604
        %6638 = vst [vmem:[%s3786 + $0x38] sm:$0x7f] %v6605
        %6639 = vst [vmem:[%s3786 + $0x40] sm:$0x7f] %v6606
        %s6640 = sand.u32 %s89, 1
        %s6641 = sand.u32 %s89, 1
        %s6642 = smul.addr %s6641, 504
        %s6643 = scalar_lea.vmem [#allocation3], %s6642
        // Predicated region
        $region29: #{depthwise_conv2d.2} parent=27 // pred_check
          %p6644 = pneg %p99
        $region30: #{depthwise_conv2d.2} parent=27 // pred_check_branch
          %6646 = sbr.rel (%p6644) target = $region32
        $region31: #{depthwise_conv2d.2} parent=27 // pred_region
          %s6647 = smul.u32 9, %s17
          %s6648 = smul.addr %s18, 126
          %s6649 = sadd.s32 %s6647, %s6648
          %s6650 = smul.addr %s6649, 8
          %s6651 = scalar_lea.vmem %s2, %s6650
          // Predicated region
          $region33: #{depthwise_conv2d.2} parent=31 // pred_check
            _
          $region34: #{depthwise_conv2d.2} parent=31 // pred_check_branch
            %6653 = sbr.rel (0) target = $region36
          $region35: #{depthwise_conv2d.2} parent=31 // pred_region
            // Predicated region
            $region37: #{depthwise_conv2d.2} parent=35 // pred_check
              _
            $region38: #{depthwise_conv2d.2} parent=35 // pred_check_branch
              %6655 = sbr.rel (0) target = $region40
            $region39: #{depthwise_conv2d.2} parent=35 // pred_region
              loop: start=0, step=1, limit=1
              $region41: #{depthwise_conv2d.2} parent=39 // loop_pre_header
                _
              $region42: #{depthwise_conv2d.2} parent=39 // loop_header
                %s6657 = sphi 0, %s6661
                %p6658 = scmp.ge.s32.totalorder %s6657, 1
                %s6662 = sphi %s6643, %s6643
                %s6663 = sphi %s6651, %s6651
              $region43: #{depthwise_conv2d.2} parent=39 // loop_header_branch
                %6660 = sbr.rel (%p6658) target = $region47
              $region44: #{depthwise_conv2d.2} parent=39 // loop_body
                %v6664 = vld [vmem:[%s6662] sm:$0xff]
                %6665 = vst [vmem:[%s6663] sm:$0xff] %v6664
                %v6666 = vld [vmem:[%s6662 + $0x8] sm:$0xff]
                %6667 = vst [vmem:[%s6663 + $0x8] sm:$0xff] %v6666
                %v6668 = vld [vmem:[%s6662 + $0x10] sm:$0xff]
                %6669 = vst [vmem:[%s6663 + $0x10] sm:$0xff] %v6668
                %v6670 = vld [vmem:[%s6662 + $0x18] sm:$0xff]
                %6671 = vst [vmem:[%s6663 + $0x18] sm:$0xff] %v6670
                %v6672 = vld [vmem:[%s6662 + $0x20] sm:$0xff]
                %6673 = vst [vmem:[%s6663 + $0x20] sm:$0xff] %v6672
                %v6674 = vld [vmem:[%s6662 + $0x28] sm:$0xff]
                %6675 = vst [vmem:[%s6663 + $0x28] sm:$0xff] %v6674
                %v6676 = vld [vmem:[%s6662 + $0x30] sm:$0xff]
                %6677 = vst [vmem:[%s6663 + $0x30] sm:$0xff] %v6676
                %v6678 = vld [vmem:[%s6662 + $0x38] sm:$0xff]
                %6679 = vst [vmem:[%s6663 + $0x38] sm:$0xff] %v6678
                %v6680 = vld [vmem:[%s6662 + $0x40] sm:$0xff]
                %6681 = vst [vmem:[%s6663 + $0x40] sm:$0xff] %v6680
                %v6682 = vld [vmem:[%s6662 + $0x48] sm:$0xff]
                %6683 = vst [vmem:[%s6663 + $0x90] sm:$0xff] %v6682
                %v6684 = vld [vmem:[%s6662 + $0x50] sm:$0xff]
                %6685 = vst [vmem:[%s6663 + $0x98] sm:$0xff] %v6684
                %v6686 = vld [vmem:[%s6662 + $0x58] sm:$0xff]
                %6687 = vst [vmem:[%s6663 + $0xa0] sm:$0xff] %v6686
                %v6688 = vld [vmem:[%s6662 + $0x60] sm:$0xff]
                %6689 = vst [vmem:[%s6663 + $0xa8] sm:$0xff] %v6688
                %v6690 = vld [vmem:[%s6662 + $0x68] sm:$0xff]
                %6691 = vst [vmem:[%s6663 + $0xb0] sm:$0xff] %v6690
                %v6692 = vld [vmem:[%s6662 + $0x70] sm:$0xff]
                %6693 = vst [vmem:[%s6663 + $0xb8] sm:$0xff] %v6692
                %v6694 = vld [vmem:[%s6662 + $0x78] sm:$0xff]
                %6695 = vst [vmem:[%s6663 + $0xc0] sm:$0xff] %v6694
                %v6696 = vld [vmem:[%s6662 + $0x80] sm:$0xff]
                %6697 = vst [vmem:[%s6663 + $0xc8] sm:$0xff] %v6696
                %v6698 = vld [vmem:[%s6662 + $0x88] sm:$0xff]
                %6699 = vst [vmem:[%s6663 + $0xd0] sm:$0xff] %v6698
                %v6700 = vld [vmem:[%s6662 + $0x90] sm:$0xff]
                %6701 = vst [vmem:[%s6663 + $0x120] sm:$0xff] %v6700
                %v6702 = vld [vmem:[%s6662 + $0x98] sm:$0xff]
                %6703 = vst [vmem:[%s6663 + $0x128] sm:$0xff] %v6702
                %v6704 = vld [vmem:[%s6662 + $0xa0] sm:$0xff]
                %6705 = vst [vmem:[%s6663 + $0x130] sm:$0xff] %v6704
                %v6706 = vld [vmem:[%s6662 + $0xa8] sm:$0xff]
                %6707 = vst [vmem:[%s6663 + $0x138] sm:$0xff] %v6706
                %v6708 = vld [vmem:[%s6662 + $0xb0] sm:$0xff]
                %6709 = vst [vmem:[%s6663 + $0x140] sm:$0xff] %v6708
                %v6710 = vld [vmem:[%s6662 + $0xb8] sm:$0xff]
                %6711 = vst [vmem:[%s6663 + $0x148] sm:$0xff] %v6710
                %v6712 = vld [vmem:[%s6662 + $0xc0] sm:$0xff]
                %6713 = vst [vmem:[%s6663 + $0x150] sm:$0xff] %v6712
                %v6714 = vld [vmem:[%s6662 + $0xc8] sm:$0xff]
                %6715 = vst [vmem:[%s6663 + $0x158] sm:$0xff] %v6714
                %v6716 = vld [vmem:[%s6662 + $0xd0] sm:$0xff]
                %6717 = vst [vmem:[%s6663 + $0x160] sm:$0xff] %v6716
                %v6718 = vld [vmem:[%s6662 + $0xd8] sm:$0xff]
                %6719 = vst [vmem:[%s6663 + $0x1b0] sm:$0xff] %v6718
                %v6720 = vld [vmem:[%s6662 + $0xe0] sm:$0xff]
                %6721 = vst [vmem:[%s6663 + $0x1b8] sm:$0xff] %v6720
                %v6722 = vld [vmem:[%s6662 + $0xe8] sm:$0xff]
                %6723 = vst [vmem:[%s6663 + $0x1c0] sm:$0xff] %v6722
                %v6724 = vld [vmem:[%s6662 + $0xf0] sm:$0xff]
                %6725 = vst [vmem:[%s6663 + $0x1c8] sm:$0xff] %v6724
                %v6726 = vld [vmem:[%s6662 + $0xf8] sm:$0xff]
                %6727 = vst [vmem:[%s6663 + $0x1d0] sm:$0xff] %v6726
                %v6728 = vld [vmem:[%s6662 + $0x100] sm:$0xff]
                %6729 = vst [vmem:[%s6663 + $0x1d8] sm:$0xff] %v6728
                %v6730 = vld [vmem:[%s6662 + $0x108] sm:$0xff]
                %6731 = vst [vmem:[%s6663 + $0x1e0] sm:$0xff] %v6730
                %v6732 = vld [vmem:[%s6662 + $0x110] sm:$0xff]
                %6733 = vst [vmem:[%s6663 + $0x1e8] sm:$0xff] %v6732
                %v6734 = vld [vmem:[%s6662 + $0x118] sm:$0xff]
                %6735 = vst [vmem:[%s6663 + $0x1f0] sm:$0xff] %v6734
                %v6736 = vld [vmem:[%s6662 + $0x120] sm:$0xff]
                %6737 = vst [vmem:[%s6663 + $0x240] sm:$0xff] %v6736
                %v6738 = vld [vmem:[%s6662 + $0x128] sm:$0xff]
                %6739 = vst [vmem:[%s6663 + $0x248] sm:$0xff] %v6738
                %v6740 = vld [vmem:[%s6662 + $0x130] sm:$0xff]
                %6741 = vst [vmem:[%s6663 + $0x250] sm:$0xff] %v6740
                %v6742 = vld [vmem:[%s6662 + $0x138] sm:$0xff]
                %6743 = vst [vmem:[%s6663 + $0x258] sm:$0xff] %v6742
                %v6744 = vld [vmem:[%s6662 + $0x140] sm:$0xff]
                %6745 = vst [vmem:[%s6663 + $0x260] sm:$0xff] %v6744
                %v6746 = vld [vmem:[%s6662 + $0x148] sm:$0xff]
                %6747 = vst [vmem:[%s6663 + $0x268] sm:$0xff] %v6746
                %v6748 = vld [vmem:[%s6662 + $0x150] sm:$0xff]
                %6749 = vst [vmem:[%s6663 + $0x270] sm:$0xff] %v6748
                %v6750 = vld [vmem:[%s6662 + $0x158] sm:$0xff]
                %6751 = vst [vmem:[%s6663 + $0x278] sm:$0xff] %v6750
                %v6752 = vld [vmem:[%s6662 + $0x160] sm:$0xff]
                %6753 = vst [vmem:[%s6663 + $0x280] sm:$0xff] %v6752
                %v6754 = vld [vmem:[%s6662 + $0x168] sm:$0xff]
                %6755 = vst [vmem:[%s6663 + $0x2d0] sm:$0xff] %v6754
                %v6756 = vld [vmem:[%s6662 + $0x170] sm:$0xff]
                %6757 = vst [vmem:[%s6663 + $0x2d8] sm:$0xff] %v6756
                %v6758 = vld [vmem:[%s6662 + $0x178] sm:$0xff]
                %6759 = vst [vmem:[%s6663 + $0x2e0] sm:$0xff] %v6758
                %v6760 = vld [vmem:[%s6662 + $0x180] sm:$0xff]
                %6761 = vst [vmem:[%s6663 + $0x2e8] sm:$0xff] %v6760
                %v6762 = vld [vmem:[%s6662 + $0x188] sm:$0xff]
                %6763 = vst [vmem:[%s6663 + $0x2f0] sm:$0xff] %v6762
                %v6764 = vld [vmem:[%s6662 + $0x190] sm:$0xff]
                %6765 = vst [vmem:[%s6663 + $0x2f8] sm:$0xff] %v6764
                %v6766 = vld [vmem:[%s6662 + $0x198] sm:$0xff]
                %6767 = vst [vmem:[%s6663 + $0x300] sm:$0xff] %v6766
                %v6768 = vld [vmem:[%s6662 + $0x1a0] sm:$0xff]
                %6769 = vst [vmem:[%s6663 + $0x308] sm:$0xff] %v6768
                %v6770 = vld [vmem:[%s6662 + $0x1a8] sm:$0xff]
                %6771 = vst [vmem:[%s6663 + $0x310] sm:$0xff] %v6770
                %v6772 = vld [vmem:[%s6662 + $0x1b0] sm:$0xff]
                %6773 = vst [vmem:[%s6663 + $0x360] sm:$0xff] %v6772
                %v6774 = vld [vmem:[%s6662 + $0x1b8] sm:$0xff]
                %6775 = vst [vmem:[%s6663 + $0x368] sm:$0xff] %v6774
                %v6776 = vld [vmem:[%s6662 + $0x1c0] sm:$0xff]
                %6777 = vst [vmem:[%s6663 + $0x370] sm:$0xff] %v6776
                %v6778 = vld [vmem:[%s6662 + $0x1c8] sm:$0xff]
                %6779 = vst [vmem:[%s6663 + $0x378] sm:$0xff] %v6778
                %v6780 = vld [vmem:[%s6662 + $0x1d0] sm:$0xff]
                %6781 = vst [vmem:[%s6663 + $0x380] sm:$0xff] %v6780
                %v6782 = vld [vmem:[%s6662 + $0x1d8] sm:$0xff]
                %6783 = vst [vmem:[%s6663 + $0x388] sm:$0xff] %v6782
                %v6784 = vld [vmem:[%s6662 + $0x1e0] sm:$0xff]
                %6785 = vst [vmem:[%s6663 + $0x390] sm:$0xff] %v6784
                %v6786 = vld [vmem:[%s6662 + $0x1e8] sm:$0xff]
                %6787 = vst [vmem:[%s6663 + $0x398] sm:$0xff] %v6786
                %v6788 = vld [vmem:[%s6662 + $0x1f0] sm:$0xff]
                %6789 = vst [vmem:[%s6663 + $0x3a0] sm:$0xff] %v6788
              $region45: #{depthwise_conv2d.2} parent=39 // loop_footer
                %s6661 = sadd.s32 1, %s6657
              $region46: #{depthwise_conv2d.2} parent=39 // loop_footer_branch
                %6656 = sbr.rel target = $region42
              $region47: #{depthwise_conv2d.2} parent=39 // loop_exit
                _
            $region40: #{depthwise_conv2d.2} parent=35 // pred_fallthru
              _
            // Predicated region
            $region48: #{depthwise_conv2d.2} parent=35 // pred_check
              _
            $region49: #{depthwise_conv2d.2} parent=35 // pred_check_branch
              %6791 = sbr.rel target = $region51
            $region50: #{depthwise_conv2d.2} parent=35 // pred_region
              _
            $region51: #{depthwise_conv2d.2} parent=35 // pred_fallthru
              _
          $region36: #{depthwise_conv2d.2} parent=31 // pred_fallthru
            _
          %6792 = vnop
        $region32: #{depthwise_conv2d.2} parent=27 // pred_fallthru
          _
      $region28: #{depthwise_conv2d.2} parent=5 // pred_fallthru
        _
      %p6793 = scmp.le.s32.totalorder 2, %s8
      // Predicated region
      $region52: #{depthwise_conv2d.2} parent=5 // pred_check
        %p6794 = pneg %p6793
      $region53: #{depthwise_conv2d.2} parent=5 // pred_check_branch
        %6796 = sbr.rel (%p6794) target = $region55
      $region54: #{depthwise_conv2d.2} parent=5 // pred_region
        %s6797 = ssub.s32 %s8, 2
        // Predicated region
        $region56: #{depthwise_conv2d.2} parent=54 // pred_check
          %p6798 = pneg %p105
        $region57: #{depthwise_conv2d.2} parent=54 // pred_check_branch
          %6800 = sbr.rel (%p6798) target = $region59
        $region58: #{depthwise_conv2d.2} parent=54 // pred_region
          %s6801 = sand.u32 %s90, 1
          %s6802 = sand.u32 %s90, 1
          %s6803 = smul.addr %s6802, 504
          %s6804 = scalar_lea.vmem [#allocation3], %s6803
        $region59: #{depthwise_conv2d.2} parent=54 // pred_fallthru
          _
      $region55: #{depthwise_conv2d.2} parent=5 // pred_fallthru
        _
    $region6: #{depthwise_conv2d.2} parent=1 // loop_footer
      %s12 = sadd.s32 1, %s8
    $region7: #{depthwise_conv2d.2} parent=1 // loop_footer_branch
      %7 = sbr.rel target = $region3
    $region8: #{depthwise_conv2d.2} parent=1 // loop_exit
      _

</llo_original>
